<compile_context>
chip_gen: v5e
topology: v5e:2x2
jax: 0.10.0
libtpu: 0.0.40
codegen_flags: <defaults>
</compile_context>

<pallas_src>
import functools

import jax
import jax.numpy as jnp
from jax.experimental import pallas as pl
from jax.experimental.pallas import tpu as pltpu

PAD_VAL = -999.0
LN_EPS = 1e-5


def _round_up(x, m):
    return ((x + m - 1) // m) * m


def _layer_norm(h, gamma, beta):
    mu = jnp.mean(h, axis=-1, keepdims=True)
    var = jnp.mean(jnp.square(h - mu), axis=-1, keepdims=True)
    return (h - mu) * jax.lax.rsqrt(var + LN_EPS) * gamma + beta


def _vmem_limit_bytes():
    """Per-generation scoped-VMEM sizing: ~75% of physical capacity, capped at 96 MiB."""
    try:
        cap = pltpu.get_tpu_info().vmem_capacity_bytes
        return min((cap * 3) // 4, 96 * 1024 * 1024)
    except Exception:
        return None   # let the compiler default stand


# ------------------------------ fused kernel --------------------------------

def _fused_message_kernel(x_ref, edges_ref, ang_ref, pc_ref, pr_ref, aidx_ref,
                          w1_ref, b1_ref, g1_ref, be1_ref,
                          w2_ref, b2_ref, g2_ref, be2_ref,
                          w3_ref, b3_ref, g3_ref, be3_ref,
                          w4_ref, b4_ref,
                          aw1_ref, ab1_ref, ag1_ref, abe1_ref,
                          aw2_ref, ab2_ref,
                          out_ref, *, kernel_sz, n_chunks, chunk, e_real):
    """m_i = sum_j attn_ij * (A_ij x_j) for `G` graphs per grid step.

    A_ij = enn(edge_ij) and attn = ann(angles) are computed in-kernel (never hit
    HBM); gather / scatter / scatter_mean ride the MXU via in-kernel one-hots;
    the per-edge contraction is an accumulating lane-dense (chunk, K) FMA loop.
    """
    f32 = jnp.float32
    K = kernel_sz
    G, N, D = x_ref.shape
    A = ang_ref.shape[1]
    scale = 1.0 / (K ** 0.5)

    for g in range(G):                                   # graphs per grid step
        x = x_ref[g]                                     # (N, D)
        ang = ang_ref[g]                                 # (A, 1)
        aidx = aidx_ref[g]                               # (1, A) int32

        # ---- ann: Linear(1,D) -> ReLU -> LN -> Linear(D,D) -> Tanh, PAD mask ----
        h = jnp.maximum(ang * aw1_ref[...] + ab1_ref[...], 0.0)
        h = _layer_norm(h, ag1_ref[...], abe1_ref[...])
        attn = jnp.tanh(jnp.dot(h, aw2_ref[...], preferred_element_type=f32)
                        + ab2_ref[...])
        attn = jnp.where(ang == PAD_VAL, 0.0, attn)      # (A, D)

        m = jnp.zeros((N, D), f32)
        for c in range(n_chunks):                        # bounded-VMEM edge chunks
            lo, hi = c * chunk, (c + 1) * chunk
            e = edges_ref[g, lo:hi, :]                   # (chunk, d_edge)
            dst_c = pc_ref[g, lo:hi, 0:1]                # (chunk, 1) int32
            src_c = pc_ref[g, lo:hi, 1:2]                # (chunk, 1) int32
            dst_r = pr_ref[g, 0:1, lo:hi]                # (1, chunk) int32
            src_r = pr_ref[g, 1:2, lo:hi]                # (1, chunk) int32

            # ---- enn: 3x[Linear -> ReLU -> LN] -> Linear(D, D*K), fused ----
            h = jnp.maximum(jnp.dot(e, w1_ref[...], preferred_element_type=f32)
                            + b1_ref[...], 0.0)
            h = _layer_norm(h, g1_ref[...], be1_ref[...])
            h = jnp.maximum(jnp.dot(h, w2_ref[...], preferred_element_type=f32)
                            + b2_ref[...], 0.0)
            h = _layer_norm(h, g2_ref[...], be2_ref[...])
            h = jnp.maximum(jnp.dot(h, w3_ref[...], preferred_element_type=f32)
                            + b3_ref[...], 0.0)
            h = _layer_norm(h, g3_ref[...], be3_ref[...])
            a = jnp.dot(h, w4_ref[...], preferred_element_type=f32) + b4_ref[...]
            # a: (chunk, D*K) with a[:, d*K + k] == A[:, d, k]; stays in VMEM/vregs.

            # ---- gather x[src] / x[dst] via in-kernel one-hot matmuls (MXU) ----
            iota_en = jax.lax.broadcasted_iota(jnp.int32, (chunk, N), 1)
            x_src = jnp.dot((src_c == iota_en).astype(f32), x,
                            preferred_element_type=f32)            # (chunk, D)
            x_dst = jnp.dot((dst_c == iota_en).astype(f32), x,
                            preferred_element_type=f32)            # (chunk, D)

            # ---- scatter_mean(attn, angles_idx) -> per-pair attention scale ----
            pidx = jax.lax.broadcasted_iota(jnp.int32, (chunk, A), 0) + lo
            aoh_f = (pidx == aidx).astype(f32)                      # fwd pairs [0, E)
            aoh_r = ((pidx + e_real) == aidx).astype(f32)           # rev pairs [E, 2E)
            ones_a = jnp.ones((A, 1), f32)
            cnt_f = jnp.maximum(jnp.dot(aoh_f, ones_a, preferred_element_type=f32), 1.0)
            cnt_r = jnp.maximum(jnp.dot(aoh_r, ones_a, preferred_element_type=f32), 1.0)
            s_f = (1.0 + jnp.dot(aoh_f, attn, preferred_element_type=f32)) / cnt_f
            s_r = (1.0 + jnp.dot(aoh_r, attn, preferred_element_type=f32)) / cnt_r

            # ---- ax[e,k] = sum_d x_in[e,d] * A[e,d,k]: lane-dense FMA loop ----
            acc_f = jnp.zeros((chunk, K), f32)
            acc_r = jnp.zeros((chunk, K), f32)
            for d in range(D):
                a_d = a[:, d * K:(d + 1) * K]                       # (chunk, K)
                acc_f = acc_f + x_src[:, d:d + 1] * a_d
                acc_r = acc_r + x_dst[:, d:d + 1] * a_d

            pad = e[:, 0:1] == PAD_VAL                              # (chunk, 1)
            msg_f = jnp.where(pad, 0.0, acc_f) * (s_f * scale)      # (chunk, K)
            msg_r = jnp.where(pad, 0.0, acc_r) * (s_r * scale)

            # ---- scatter-add to destination nodes via one-hot matmuls (MXU) ----
            iota_ne = jax.lax.broadcasted_iota(jnp.int32, (N, chunk), 0)
            m = m + jnp.dot((iota_ne == dst_r).astype(f32), msg_f,
                            preferred_element_type=f32)
            m = m + jnp.dot((iota_ne == src_r).astype(f32), msg_r,
                            preferred_element_type=f32)

        out_ref[g, :, :] = m


# ------------------------------- module wrapper -----------------------------

class ENNMessagePallas:
    """Pallas implementation of ENNMessage.forward (t == 0, kernel_sz == d_model, with ann)."""

    def __init__(self, d_model, d_edge, kernel_sz, params,
                 edge_chunk=128, graphs_per_step=1, single_buffer_weights=True):
        assert kernel_sz <= d_model
        # TODO(synk): kernel_sz < d_model unfold/sliding-window path not implemented;
        # this covers the full-matrix (kernel_sz == d_model) MPNN edge network.
        assert kernel_sz == d_model
        self.d_model, self.d_edge, self.kernel_sz = d_model, d_edge, kernel_sz
        self.params = params
        self.edge_chunk = edge_chunk
        self.graphs_per_step = graphs_per_step
        self.single_buffer_weights = single_buffer_weights

    def __call__(self, x, edges, pairs_idx, angles, angles_idx):
        if self.single_buffer_weights:
            try:
                # pl.Buffered(1): grid-invariant weights single-buffered in VMEM.
                return jax.block_until_ready(
                    self._forward(x, edges, pairs_idx, angles, angles_idx, True))
            except Exception:
                pass   # this Pallas build rejects buffer_count=1 -> default buffering
        return jax.block_until_ready(
            self._forward(x, edges, pairs_idx, angles, angles_idx, False))

    def _forward(self, x, edges, pairs_idx, angles, angles_idx, single_buffer):
        p = self.params
        B, N, D = x.shape
        E = edges.shape[1]
        A = angles.shape[1]
        K = self.kernel_sz
        G = self.graphs_per_step
        assert B % G == 0, "graphs_per_step must divide the batch"

        # Bounded-VMEM edge chunking (pad E with PAD edges; padded rows add zero).
        if E <= self.edge_chunk:
            chunk, e_pad = E, E
        else:
            chunk = _round_up(self.edge_chunk, 128)
            e_pad = _round_up(E, chunk)
        n_chunks = e_pad // chunk
        if e_pad != E:
            edges = jnp.pad(edges, ((0, 0), (0, e_pad - E), (0, 0)),
                            constant_values=PAD_VAL)
            pairs_idx = jnp.pad(pairs_idx, ((0, 0), (0, e_pad - E), (0, 0)))

        pairs_c = pairs_idx.astype(jnp.int32)                  # (B, E', 2) [dst, src]
        pairs_r = jnp.swapaxes(pairs_c, 1, 2)                  # (B, 2, E')
        aidx = angles_idx.astype(jnp.int32)[:, None, :]        # (B, 1, A)
        ang3 = angles[..., None].astype(jnp.float32)           # (B, A, 1)

        def data_spec(*tail):
            return pl.BlockSpec((G,) + tail, lambda i: (i,) + (0,) * len(tail))

        def weight_spec(arr):
            nd = arr.ndim
            imap = lambda i: (0,) * nd
            if single_buffer:
                return pl.BlockSpec(arr.shape, imap, pipeline_mode=pl.Buffered(1))
            return pl.BlockSpec(arr.shape, imap)

        weights = [p["enn_w1"], p["enn_b1"], p["enn_g1"], p["enn_be1"],
                   p["enn_w2"], p["enn_b2"], p["enn_g2"], p["enn_be2"],
                   p["enn_w3"], p["enn_b3"], p["enn_g3"], p["enn_be3"],
                   p["enn_w4"], p["enn_b4"],
                   p["ann_w1"], p["ann_b1"], p["ann_g1"], p["ann_be1"],
                   p["ann_w2"], p["ann_b2"]]

        kernel = functools.partial(_fused_message_kernel, kernel_sz=K,
                                   n_chunks=n_chunks, chunk=chunk, e_real=E)

        return pl.pallas_call(
            kernel,
            out_shape=jax.ShapeDtypeStruct((B, N, D), jnp.float32),
            grid=(B // G,),
            in_specs=[data_spec(N, D),                      # x
                      data_spec(e_pad, self.d_edge),        # edges
                      data_spec(A, 1),                      # angles
                      data_spec(e_pad, 2),                  # pair indices (columns)
                      data_spec(2, e_pad),                  # pair indices (rows)
                      data_spec(1, A),                      # angles_idx
                      ] + [weight_spec(w) for w in weights],
            out_specs=data_spec(N, D),
            compiler_params=pltpu.CompilerParams(
                dimension_semantics=("parallel",),
                vmem_limit_bytes=_vmem_limit_bytes()),
        )(x, edges, ang3, pairs_c, pairs_r, aidx, *weights)


# --------------------------- parameters & reference -------------------------

def init_params(key, d_edge, d_model, kernel_sz):
    ks = jax.random.split(key, 10)

    def linear(k, din, dout):
        kw, kb = jax.random.split(k)
        bound = 1.0 / (din ** 0.5)
        w = jax.random.uniform(kw, (din, dout), jnp.float32, -bound, bound)
        b = jax.random.uniform(kb, (1, dout), jnp.float32, -bound, bound)
        return w, b

    def lnorm(k, d):
        g = jax.random.uniform(k, (1, d), jnp.float32, 0.0, 1.0)   # LayerNorm.reset_parameters
        return g, jnp.zeros((1, d), jnp.float32)

    p = {}
    p["enn_w1"], p["enn_b1"] = linear(ks[0], d_edge, d_model)
    p["enn_g1"], p["enn_be1"] = lnorm(ks[1], d_model)
    p["enn_w2"], p["enn_b2"] = linear(ks[2], d_model, d_model)
    p["enn_g2"], p["enn_be2"] = lnorm(ks[3], d_model)
    p["enn_w3"], p["enn_b3"] = linear(ks[4], d_model, d_model)
    p["enn_g3"], p["enn_be3"] = lnorm(ks[5], d_model)
    p["enn_w4"], p["enn_b4"] = linear(ks[6], d_model, d_model * kernel_sz)
    p["ann_w1"], p["ann_b1"] = linear(ks[7], 1, d_model)
    p["ann_g1"], p["ann_be1"] = lnorm(ks[8], d_model)
    p["ann_w2"], p["ann_b2"] = linear(ks[9], d_model, d_model)
    return p


def reference_forward(p, x, edges, pairs_idx, angles, angles_idx, d_model, kernel_sz):
    """Pure-JAX mirror of the PyTorch forward (for correctness checking)."""
    B, N, D = x.shape
    E = edges.shape[1]
    A = angles.shape[1]
    K = kernel_sz
    P = 2 * E

    def ln(h, g, b):
        mu = h.mean(-1, keepdims=True)
        var = ((h - mu) ** 2).mean(-1, keepdims=True)
        return (h - mu) / jnp.sqrt(var + LN_EPS) * g + b

    with jax.default_matmul_precision("highest"):
        h = jnp.maximum(edges @ p["enn_w1"] + p["enn_b1"], 0.0)
        h = ln(h, p["enn_g1"], p["enn_be1"])
        h = jnp.maximum(h @ p["enn_w2"] + p["enn_b2"], 0.0)
        h = ln(h, p["enn_g2"], p["enn_be2"])
        h = jnp.maximum(h @ p["enn_w3"] + p["enn_b3"], 0.0)
        h = ln(h, p["enn_g3"], p["enn_be3"])
        a_vect = h @ p["enn_w4"] + p["enn_b4"]
        a_vect = a_vect / (K ** 0.5)
        a_vect = jnp.where(edges[:, :, 0:1] == PAD_VAL, 0.0, a_vect)
        a_mat = jnp.concatenate([a_vect.reshape(B, E, D, K)] * 2, axis=1)

        ang = angles[..., None]
        h = jnp.maximum(ang * p["ann_w1"] + p["ann_b1"], 0.0)
        h = ln(h, p["ann_g1"], p["ann_be1"])
        attn = jnp.tanh(h @ p["ann_w2"] + p["ann_b2"])
        attn = jnp.where(ang == PAD_VAL, 0.0, attn)

        pairs2 = jnp.concatenate([pairs_idx, pairs_idx[:, :, ::-1]], axis=1)
        idx_src = jnp.broadcast_to(pairs2[:, :, 1][:, :, None], (B, P, D))
        x_in = jnp.take_along_axis(x, idx_src, axis=1)
        ax = jnp.einsum("bpd,bpdk->bpk", x_in, a_mat)

        num = jax.vmap(lambda s, i: jnp.ones((P, D)).at[i].add(s))(attn, angles_idx)
        cnt = jax.vmap(lambda i: jnp.zeros((P, D)).at[i].add(jnp.ones((A, D))))(angles_idx)
        ax = (num / jnp.maximum(cnt, 1.0)) * ax

        m = jax.vmap(lambda a, i: jnp.zeros((N, D)).at[i].add(a))(ax, pairs2[:, :, 0])
    return m


# ------------------------------------ main ----------------------------------

if __name__ == "__main__":
    d_model = 32
    d_edge = 8
    kernel_sz = 32          # kernel_sz == d_model -> full-matrix message path
    B, N, E, A = 2, 8, 6, 10

    key = jax.random.PRNGKey(0)
    kp, kx, ke, kpi, ka, kai = jax.random.split(key, 6)
    params = init_params(kp, d_edge, d_model, kernel_sz)

    x = jax.random.normal(kx, (B, N, d_model), jnp.float32)
    edges = jax.random.normal(ke, (B, E, d_edge), jnp.float32)
    edges = edges.at[:, -1, :].set(PAD_VAL)                      # one padded edge per graph
    pairs_idx = jax.random.randint(kpi, (B, E, 2), 0, N, jnp.int32)
    pairs_idx = pairs_idx.at[:, -1, :].set(0)                    # padded edge points at node 0
    angles = jax.random.normal(ka, (B, A), jnp.float32)
    angles = angles.at[:, -1].set(PAD_VAL)                       # one padded angle per graph
    angles_idx = jax.random.randint(kai, (B, A), 0, 2 * E, jnp.int32)

    model = ENNMessagePallas(d_model, d_edge, kernel_sz, params)
    m = model(x, edges, pairs_idx, angles, angles_idx)
    m = jax.block_until_ready(m)

    ref = reference_forward(params, x, edges, pairs_idx, angles, angles_idx,
                            d_model, kernel_sz)
    if not bool(jnp.allclose(m, ref, atol=5e-3, rtol=5e-3)):
        raise AssertionError("Pallas ENNMessage does not match reference")
    print("KERNEL_OK")
</pallas_src>

<mosaic_0001>
module attributes {stable_mosaic.version = 11 : i64} {
  func.func @_fused_message_kernel(%arg0: i32, %arg1: memref<1x8x32xf32, #tpu.memory_space<vmem>>, %arg2: memref<1x6x8xf32, #tpu.memory_space<vmem>>, %arg3: memref<1x10x1xf32, #tpu.memory_space<vmem>>, %arg4: memref<1x6x2xi32, #tpu.memory_space<vmem>>, %arg5: memref<1x2x6xi32, #tpu.memory_space<vmem>>, %arg6: memref<1x1x10xi32, #tpu.memory_space<vmem>>, %arg7: memref<8x32xf32, #tpu.memory_space<vmem>>, %arg8: memref<1x32xf32, #tpu.memory_space<vmem>>, %arg9: memref<1x32xf32, #tpu.memory_space<vmem>>, %arg10: memref<1x32xf32, #tpu.memory_space<vmem>>, %arg11: memref<32x32xf32, #tpu.memory_space<vmem>>, %arg12: memref<1x32xf32, #tpu.memory_space<vmem>>, %arg13: memref<1x32xf32, #tpu.memory_space<vmem>>, %arg14: memref<1x32xf32, #tpu.memory_space<vmem>>, %arg15: memref<32x32xf32, #tpu.memory_space<vmem>>, %arg16: memref<1x32xf32, #tpu.memory_space<vmem>>, %arg17: memref<1x32xf32, #tpu.memory_space<vmem>>, %arg18: memref<1x32xf32, #tpu.memory_space<vmem>>, %arg19: memref<32x1024xf32, #tpu.memory_space<vmem>>, %arg20: memref<1x1024xf32, #tpu.memory_space<vmem>>, %arg21: memref<1x32xf32, #tpu.memory_space<vmem>>, %arg22: memref<1x32xf32, #tpu.memory_space<vmem>>, %arg23: memref<1x32xf32, #tpu.memory_space<vmem>>, %arg24: memref<1x32xf32, #tpu.memory_space<vmem>>, %arg25: memref<32x32xf32, #tpu.memory_space<vmem>>, %arg26: memref<1x32xf32, #tpu.memory_space<vmem>>, %arg27: memref<1x8x32xf32, #tpu.memory_space<vmem>>) attributes {dimension_semantics = [#tpu.dimension_semantics<parallel>], iteration_bounds = array<i64: 2>, scalar_prefetch = 0 : i64, scratch_operands = 0 : i64, tpu.core_type = #tpu.core_type<tc>, window_params = [{transform_indices = @transform_0, window_bounds = array<i64: 1, 8, 32>}, {transform_indices = @transform_1, window_bounds = array<i64: 1, 6, 8>}, {transform_indices = @transform_2, window_bounds = array<i64: 1, 10, 1>}, {transform_indices = @transform_3, window_bounds = array<i64: 1, 6, 2>}, {transform_indices = @transform_4, window_bounds = array<i64: 1, 2, 6>}, {transform_indices = @transform_5, window_bounds = array<i64: 1, 1, 10>}, {pipeline_mode = #tpu.pipeline_mode<synchronous>, transform_indices = @transform_6, window_bounds = array<i64: 8, 32>}, {pipeline_mode = #tpu.pipeline_mode<synchronous>, transform_indices = @transform_7, window_bounds = array<i64: 1, 32>}, {pipeline_mode = #tpu.pipeline_mode<synchronous>, transform_indices = @transform_8, window_bounds = array<i64: 1, 32>}, {pipeline_mode = #tpu.pipeline_mode<synchronous>, transform_indices = @transform_9, window_bounds = array<i64: 1, 32>}, {pipeline_mode = #tpu.pipeline_mode<synchronous>, transform_indices = @transform_10, window_bounds = array<i64: 32, 32>}, {pipeline_mode = #tpu.pipeline_mode<synchronous>, transform_indices = @transform_11, window_bounds = array<i64: 1, 32>}, {pipeline_mode = #tpu.pipeline_mode<synchronous>, transform_indices = @transform_12, window_bounds = array<i64: 1, 32>}, {pipeline_mode = #tpu.pipeline_mode<synchronous>, transform_indices = @transform_13, window_bounds = array<i64: 1, 32>}, {pipeline_mode = #tpu.pipeline_mode<synchronous>, transform_indices = @transform_14, window_bounds = array<i64: 32, 32>}, {pipeline_mode = #tpu.pipeline_mode<synchronous>, transform_indices = @transform_15, window_bounds = array<i64: 1, 32>}, {pipeline_mode = #tpu.pipeline_mode<synchronous>, transform_indices = @transform_16, window_bounds = array<i64: 1, 32>}, {pipeline_mode = #tpu.pipeline_mode<synchronous>, transform_indices = @transform_17, window_bounds = array<i64: 1, 32>}, {pipeline_mode = #tpu.pipeline_mode<synchronous>, transform_indices = @transform_18, window_bounds = array<i64: 32, 1024>}, {pipeline_mode = #tpu.pipeline_mode<synchronous>, transform_indices = @transform_19, window_bounds = array<i64: 1, 1024>}, {pipeline_mode = #tpu.pipeline_mode<synchronous>, transform_indices = @transform_20, window_bounds = array<i64: 1, 32>}, {pipeline_mode = #tpu.pipeline_mode<synchronous>, transform_indices = @transform_21, window_bounds = array<i64: 1, 32>}, {pipeline_mode = #tpu.pipeline_mode<synchronous>, transform_indices = @transform_22, window_bounds = array<i64: 1, 32>}, {pipeline_mode = #tpu.pipeline_mode<synchronous>, transform_indices = @transform_23, window_bounds = array<i64: 1, 32>}, {pipeline_mode = #tpu.pipeline_mode<synchronous>, transform_indices = @transform_24, window_bounds = array<i64: 32, 32>}, {pipeline_mode = #tpu.pipeline_mode<synchronous>, transform_indices = @transform_25, window_bounds = array<i64: 1, 32>}, {transform_indices = @transform_26, window_bounds = array<i64: 1, 8, 32>}]} {
    %c0 = arith.constant 0 : index
    %c0_0 = arith.constant 0 : index
    %c0_1 = arith.constant 0 : index
    %0 = vector.load %arg1[%c0, %c0_0, %c0_1] : memref<1x8x32xf32, #tpu.memory_space<vmem>>, vector<1x8x32xf32>
    %1 = vector.shape_cast %0 : vector<1x8x32xf32> to vector<8x32xf32>
    %c0_2 = arith.constant 0 : index
    %c0_3 = arith.constant 0 : index
    %c0_4 = arith.constant 0 : index
    %2 = vector.load %arg3[%c0_2, %c0_3, %c0_4] : memref<1x10x1xf32, #tpu.memory_space<vmem>>, vector<1x10x1xf32>
    %3 = vector.shape_cast %2 : vector<1x10x1xf32> to vector<10x1xf32>
    %c0_5 = arith.constant 0 : index
    %c0_6 = arith.constant 0 : index
    %c0_7 = arith.constant 0 : index
    %4 = vector.load %arg6[%c0_5, %c0_6, %c0_7] : memref<1x1x10xi32, #tpu.memory_space<vmem>>, vector<1x1x10xi32>
    %5 = vector.shape_cast %4 : vector<1x1x10xi32> to vector<1x10xi32>
    %c0_8 = arith.constant 0 : index
    %c0_9 = arith.constant 0 : index
    %6 = vector.load %arg21[%c0_8, %c0_9] : memref<1x32xf32, #tpu.memory_space<vmem>>, vector<1x32xf32>
    %7 = vector.broadcast %3 : vector<10x1xf32> to vector<10x32xf32>
    %8 = vector.broadcast %6 : vector<1x32xf32> to vector<10x32xf32>
    %9 = arith.mulf %7, %8 : vector<10x32xf32>
    %c0_10 = arith.constant 0 : index
    %c0_11 = arith.constant 0 : index
    %10 = vector.load %arg22[%c0_10, %c0_11] : memref<1x32xf32, #tpu.memory_space<vmem>>, vector<1x32xf32>
    %11 = vector.broadcast %10 : vector<1x32xf32> to vector<10x32xf32>
    %12 = arith.addf %9, %11 : vector<10x32xf32>
    %cst = arith.constant 0.000000e+00 : f32
    %13 = vector.broadcast %cst : f32 to vector<10x32xf32>
    %14 = arith.maximumf %12, %13 : vector<10x32xf32>
    %c0_12 = arith.constant 0 : index
    %c0_13 = arith.constant 0 : index
    %15 = vector.load %arg23[%c0_12, %c0_13] : memref<1x32xf32, #tpu.memory_space<vmem>>, vector<1x32xf32>
    %c0_14 = arith.constant 0 : index
    %c0_15 = arith.constant 0 : index
    %16 = vector.load %arg24[%c0_14, %c0_15] : memref<1x32xf32, #tpu.memory_space<vmem>>, vector<1x32xf32>
    %cst_16 = arith.constant dense<0.000000e+00> : vector<10xf32>
    %17 = vector.multi_reduction <add>, %14, %cst_16 [1] : vector<10x32xf32> to vector<10xf32>
    %18 = vector.shape_cast %17 : vector<10xf32> to vector<10x1xf32>
    %cst_17 = arith.constant 3.200000e+01 : f32
    %19 = vector.broadcast %cst_17 : f32 to vector<10x1xf32>
    %20 = arith.divf %18, %19 : vector<10x1xf32>
    %21 = vector.broadcast %20 : vector<10x1xf32> to vector<10x32xf32>
    %22 = arith.subf %14, %21 : vector<10x32xf32>
    %23 = arith.mulf %22, %22 : vector<10x32xf32>
    %cst_18 = arith.constant dense<0.000000e+00> : vector<10xf32>
    %24 = vector.multi_reduction <add>, %23, %cst_18 [1] : vector<10x32xf32> to vector<10xf32>
    %25 = vector.shape_cast %24 : vector<10xf32> to vector<10x1xf32>
    %cst_19 = arith.constant 3.200000e+01 : f32
    %26 = vector.broadcast %cst_19 : f32 to vector<10x1xf32>
    %27 = arith.divf %25, %26 : vector<10x1xf32>
    %28 = vector.broadcast %20 : vector<10x1xf32> to vector<10x32xf32>
    %29 = arith.subf %14, %28 : vector<10x32xf32>
    %cst_20 = arith.constant 9.99999974E-6 : f32
    %30 = vector.broadcast %cst_20 : f32 to vector<10x1xf32>
    %31 = arith.addf %27, %30 : vector<10x1xf32>
    %32 = math.rsqrt %31 : vector<10x1xf32>
    %33 = vector.broadcast %32 : vector<10x1xf32> to vector<10x32xf32>
    %34 = arith.mulf %29, %33 : vector<10x32xf32>
    %35 = vector.broadcast %15 : vector<1x32xf32> to vector<10x32xf32>
    %36 = arith.mulf %34, %35 : vector<10x32xf32>
    %37 = vector.broadcast %16 : vector<1x32xf32> to vector<10x32xf32>
    %38 = arith.addf %36, %37 : vector<10x32xf32>
    %c0_21 = arith.constant 0 : index
    %c0_22 = arith.constant 0 : index
    %39 = vector.load %arg25[%c0_21, %c0_22] : memref<32x32xf32, #tpu.memory_space<vmem>>, vector<32x32xf32>
    %cst_23 = arith.constant dense<0.000000e+00> : vector<10x32xf32>
    %40 = tpu.matmul %38, %39, %cst_23 {dimension_numbers = #tpu.dot_dimension_numbers<[1], [0], [0], [1], [0, 0, 1, 1], [], []>} : vector<10x32xf32>, vector<32x32xf32>, vector<10x32xf32> -> vector<10x32xf32>
    %c0_24 = arith.constant 0 : index
    %c0_25 = arith.constant 0 : index
    %41 = vector.load %arg26[%c0_24, %c0_25] : memref<1x32xf32, #tpu.memory_space<vmem>>, vector<1x32xf32>
    %42 = vector.broadcast %41 : vector<1x32xf32> to vector<10x32xf32>
    %43 = arith.addf %40, %42 : vector<10x32xf32>
    %44 = math.tanh %43 : vector<10x32xf32>
    %cst_26 = arith.constant -9.990000e+02 : f32
    %45 = vector.broadcast %cst_26 : f32 to vector<10x1xf32>
    %46 = arith.cmpf oeq, %3, %45 : vector<10x1xf32>
    %cst_27 = arith.constant 0.000000e+00 : f32
    %47 = vector.shape_cast %46 : vector<10x1xi1> to vector<10x1xi1>
    %48 = vector.broadcast %47 : vector<10x1xi1> to vector<10x32xi1>
    %49 = vector.broadcast %cst_27 : f32 to vector<10x32xf32>
    %50 = arith.select %48, %49, %44 : vector<10x32xi1>, vector<10x32xf32>
    %cst_28 = arith.constant 0.000000e+00 : f32
    %51 = vector.broadcast %cst_28 : f32 to vector<8x32xf32>
    %c0_29 = arith.constant 0 : index
    %c0_30 = arith.constant 0 : index
    %c0_31 = arith.constant 0 : index
    %52 = vector.load %arg2[%c0_29, %c0_30, %c0_31] : memref<1x6x8xf32, #tpu.memory_space<vmem>>, vector<1x6x8xf32>
    %53 = vector.shape_cast %52 : vector<1x6x8xf32> to vector<6x8xf32>
    %c0_32 = arith.constant 0 : index
    %c0_33 = arith.constant 0 : index
    %c0_34 = arith.constant 0 : index
    %54 = vector.load %arg4[%c0_32, %c0_33, %c0_34] : memref<1x6x2xi32, #tpu.memory_space<vmem>>, vector<1x6x1xi32>
    %55 = vector.shape_cast %54 : vector<1x6x1xi32> to vector<6x1xi32>
    %c0_35 = arith.constant 0 : index
    %c0_36 = arith.constant 0 : index
    %c1 = arith.constant 1 : index
    %56 = vector.load %arg4[%c0_35, %c0_36, %c1] : memref<1x6x2xi32, #tpu.memory_space<vmem>>, vector<1x6x1xi32>
    %57 = vector.shape_cast %56 : vector<1x6x1xi32> to vector<6x1xi32>
    %c0_37 = arith.constant 0 : index
    %c0_38 = arith.constant 0 : index
    %c0_39 = arith.constant 0 : index
    %58 = vector.load %arg5[%c0_37, %c0_38, %c0_39] : memref<1x2x6xi32, #tpu.memory_space<vmem>>, vector<1x1x6xi32>
    %59 = vector.shape_cast %58 : vector<1x1x6xi32> to vector<1x6xi32>
    %c0_40 = arith.constant 0 : index
    %c1_41 = arith.constant 1 : index
    %c0_42 = arith.constant 0 : index
    %60 = vector.load %arg5[%c0_40, %c1_41, %c0_42] : memref<1x2x6xi32, #tpu.memory_space<vmem>>, vector<1x1x6xi32>
    %61 = vector.shape_cast %60 : vector<1x1x6xi32> to vector<1x6xi32>
    %c0_43 = arith.constant 0 : index
    %c0_44 = arith.constant 0 : index
    %62 = vector.load %arg7[%c0_43, %c0_44] : memref<8x32xf32, #tpu.memory_space<vmem>>, vector<8x32xf32>
    %cst_45 = arith.constant dense<0.000000e+00> : vector<6x32xf32>
    %63 = tpu.matmul %53, %62, %cst_45 {dimension_numbers = #tpu.dot_dimension_numbers<[1], [0], [0], [1], [0, 0, 1, 1], [], []>} : vector<6x8xf32>, vector<8x32xf32>, vector<6x32xf32> -> vector<6x32xf32>
    %c0_46 = arith.constant 0 : index
    %c0_47 = arith.constant 0 : index
    %64 = vector.load %arg8[%c0_46, %c0_47] : memref<1x32xf32, #tpu.memory_space<vmem>>, vector<1x32xf32>
    %65 = vector.broadcast %64 : vector<1x32xf32> to vector<6x32xf32>
    %66 = arith.addf %63, %65 : vector<6x32xf32>
    %cst_48 = arith.constant 0.000000e+00 : f32
    %67 = vector.broadcast %cst_48 : f32 to vector<6x32xf32>
    %68 = arith.maximumf %66, %67 : vector<6x32xf32>
    %c0_49 = arith.constant 0 : index
    %c0_50 = arith.constant 0 : index
    %69 = vector.load %arg9[%c0_49, %c0_50] : memref<1x32xf32, #tpu.memory_space<vmem>>, vector<1x32xf32>
    %c0_51 = arith.constant 0 : index
    %c0_52 = arith.constant 0 : index
    %70 = vector.load %arg10[%c0_51, %c0_52] : memref<1x32xf32, #tpu.memory_space<vmem>>, vector<1x32xf32>
    %cst_53 = arith.constant dense<0.000000e+00> : vector<6xf32>
    %71 = vector.multi_reduction <add>, %68, %cst_53 [1] : vector<6x32xf32> to vector<6xf32>
    %72 = vector.shape_cast %71 : vector<6xf32> to vector<6x1xf32>
    %cst_54 = arith.constant 3.200000e+01 : f32
    %73 = vector.broadcast %cst_54 : f32 to vector<6x1xf32>
    %74 = arith.divf %72, %73 : vector<6x1xf32>
    %75 = vector.broadcast %74 : vector<6x1xf32> to vector<6x32xf32>
    %76 = arith.subf %68, %75 : vector<6x32xf32>
    %77 = arith.mulf %76, %76 : vector<6x32xf32>
    %cst_55 = arith.constant dense<0.000000e+00> : vector<6xf32>
    %78 = vector.multi_reduction <add>, %77, %cst_55 [1] : vector<6x32xf32> to vector<6xf32>
    %79 = vector.shape_cast %78 : vector<6xf32> to vector<6x1xf32>
    %cst_56 = arith.constant 3.200000e+01 : f32
    %80 = vector.broadcast %cst_56 : f32 to vector<6x1xf32>
    %81 = arith.divf %79, %80 : vector<6x1xf32>
    %82 = vector.broadcast %74 : vector<6x1xf32> to vector<6x32xf32>
    %83 = arith.subf %68, %82 : vector<6x32xf32>
    %cst_57 = arith.constant 9.99999974E-6 : f32
    %84 = vector.broadcast %cst_57 : f32 to vector<6x1xf32>
    %85 = arith.addf %81, %84 : vector<6x1xf32>
    %86 = math.rsqrt %85 : vector<6x1xf32>
    %87 = vector.broadcast %86 : vector<6x1xf32> to vector<6x32xf32>
    %88 = arith.mulf %83, %87 : vector<6x32xf32>
    %89 = vector.broadcast %69 : vector<1x32xf32> to vector<6x32xf32>
    %90 = arith.mulf %88, %89 : vector<6x32xf32>
    %91 = vector.broadcast %70 : vector<1x32xf32> to vector<6x32xf32>
    %92 = arith.addf %90, %91 : vector<6x32xf32>
    %c0_58 = arith.constant 0 : index
    %c0_59 = arith.constant 0 : index
    %93 = vector.load %arg11[%c0_58, %c0_59] : memref<32x32xf32, #tpu.memory_space<vmem>>, vector<32x32xf32>
    %cst_60 = arith.constant dense<0.000000e+00> : vector<6x32xf32>
    %94 = tpu.matmul %92, %93, %cst_60 {dimension_numbers = #tpu.dot_dimension_numbers<[1], [0], [0], [1], [0, 0, 1, 1], [], []>} : vector<6x32xf32>, vector<32x32xf32>, vector<6x32xf32> -> vector<6x32xf32>
    %c0_61 = arith.constant 0 : index
    %c0_62 = arith.constant 0 : index
    %95 = vector.load %arg12[%c0_61, %c0_62] : memref<1x32xf32, #tpu.memory_space<vmem>>, vector<1x32xf32>
    %96 = vector.broadcast %95 : vector<1x32xf32> to vector<6x32xf32>
    %97 = arith.addf %94, %96 : vector<6x32xf32>
    %cst_63 = arith.constant 0.000000e+00 : f32
    %98 = vector.broadcast %cst_63 : f32 to vector<6x32xf32>
    %99 = arith.maximumf %97, %98 : vector<6x32xf32>
    %c0_64 = arith.constant 0 : index
    %c0_65 = arith.constant 0 : index
    %100 = vector.load %arg13[%c0_64, %c0_65] : memref<1x32xf32, #tpu.memory_space<vmem>>, vector<1x32xf32>
    %c0_66 = arith.constant 0 : index
    %c0_67 = arith.constant 0 : index
    %101 = vector.load %arg14[%c0_66, %c0_67] : memref<1x32xf32, #tpu.memory_space<vmem>>, vector<1x32xf32>
    %cst_68 = arith.constant dense<0.000000e+00> : vector<6xf32>
    %102 = vector.multi_reduction <add>, %99, %cst_68 [1] : vector<6x32xf32> to vector<6xf32>
    %103 = vector.shape_cast %102 : vector<6xf32> to vector<6x1xf32>
    %cst_69 = arith.constant 3.200000e+01 : f32
    %104 = vector.broadcast %cst_69 : f32 to vector<6x1xf32>
    %105 = arith.divf %103, %104 : vector<6x1xf32>
    %106 = vector.broadcast %105 : vector<6x1xf32> to vector<6x32xf32>
    %107 = arith.subf %99, %106 : vector<6x32xf32>
    %108 = arith.mulf %107, %107 : vector<6x32xf32>
    %cst_70 = arith.constant dense<0.000000e+00> : vector<6xf32>
    %109 = vector.multi_reduction <add>, %108, %cst_70 [1] : vector<6x32xf32> to vector<6xf32>
    %110 = vector.shape_cast %109 : vector<6xf32> to vector<6x1xf32>
    %cst_71 = arith.constant 3.200000e+01 : f32
    %111 = vector.broadcast %cst_71 : f32 to vector<6x1xf32>
    %112 = arith.divf %110, %111 : vector<6x1xf32>
    %113 = vector.broadcast %105 : vector<6x1xf32> to vector<6x32xf32>
    %114 = arith.subf %99, %113 : vector<6x32xf32>
    %cst_72 = arith.constant 9.99999974E-6 : f32
    %115 = vector.broadcast %cst_72 : f32 to vector<6x1xf32>
    %116 = arith.addf %112, %115 : vector<6x1xf32>
    %117 = math.rsqrt %116 : vector<6x1xf32>
    %118 = vector.broadcast %117 : vector<6x1xf32> to vector<6x32xf32>
    %119 = arith.mulf %114, %118 : vector<6x32xf32>
    %120 = vector.broadcast %100 : vector<1x32xf32> to vector<6x32xf32>
    %121 = arith.mulf %119, %120 : vector<6x32xf32>
    %122 = vector.broadcast %101 : vector<1x32xf32> to vector<6x32xf32>
    %123 = arith.addf %121, %122 : vector<6x32xf32>
    %c0_73 = arith.constant 0 : index
    %c0_74 = arith.constant 0 : index
    %124 = vector.load %arg15[%c0_73, %c0_74] : memref<32x32xf32, #tpu.memory_space<vmem>>, vector<32x32xf32>
    %cst_75 = arith.constant dense<0.000000e+00> : vector<6x32xf32>
    %125 = tpu.matmul %123, %124, %cst_75 {dimension_numbers = #tpu.dot_dimension_numbers<[1], [0], [0], [1], [0, 0, 1, 1], [], []>} : vector<6x32xf32>, vector<32x32xf32>, vector<6x32xf32> -> vector<6x32xf32>
    %c0_76 = arith.constant 0 : index
    %c0_77 = arith.constant 0 : index
    %126 = vector.load %arg16[%c0_76, %c0_77] : memref<1x32xf32, #tpu.memory_space<vmem>>, vector<1x32xf32>
    %127 = vector.broadcast %126 : vector<1x32xf32> to vector<6x32xf32>
    %128 = arith.addf %125, %127 : vector<6x32xf32>
    %cst_78 = arith.constant 0.000000e+00 : f32
    %129 = vector.broadcast %cst_78 : f32 to vector<6x32xf32>
    %130 = arith.maximumf %128, %129 : vector<6x32xf32>
    %c0_79 = arith.constant 0 : index
    %c0_80 = arith.constant 0 : index
    %131 = vector.load %arg17[%c0_79, %c0_80] : memref<1x32xf32, #tpu.memory_space<vmem>>, vector<1x32xf32>
    %c0_81 = arith.constant 0 : index
    %c0_82 = arith.constant 0 : index
    %132 = vector.load %arg18[%c0_81, %c0_82] : memref<1x32xf32, #tpu.memory_space<vmem>>, vector<1x32xf32>
    %cst_83 = arith.constant dense<0.000000e+00> : vector<6xf32>
    %133 = vector.multi_reduction <add>, %130, %cst_83 [1] : vector<6x32xf32> to vector<6xf32>
    %134 = vector.shape_cast %133 : vector<6xf32> to vector<6x1xf32>
    %cst_84 = arith.constant 3.200000e+01 : f32
    %135 = vector.broadcast %cst_84 : f32 to vector<6x1xf32>
    %136 = arith.divf %134, %135 : vector<6x1xf32>
    %137 = vector.broadcast %136 : vector<6x1xf32> to vector<6x32xf32>
    %138 = arith.subf %130, %137 : vector<6x32xf32>
    %139 = arith.mulf %138, %138 : vector<6x32xf32>
    %cst_85 = arith.constant dense<0.000000e+00> : vector<6xf32>
    %140 = vector.multi_reduction <add>, %139, %cst_85 [1] : vector<6x32xf32> to vector<6xf32>
    %141 = vector.shape_cast %140 : vector<6xf32> to vector<6x1xf32>
    %cst_86 = arith.constant 3.200000e+01 : f32
    %142 = vector.broadcast %cst_86 : f32 to vector<6x1xf32>
    %143 = arith.divf %141, %142 : vector<6x1xf32>
    %144 = vector.broadcast %136 : vector<6x1xf32> to vector<6x32xf32>
    %145 = arith.subf %130, %144 : vector<6x32xf32>
    %cst_87 = arith.constant 9.99999974E-6 : f32
    %146 = vector.broadcast %cst_87 : f32 to vector<6x1xf32>
    %147 = arith.addf %143, %146 : vector<6x1xf32>
    %148 = math.rsqrt %147 : vector<6x1xf32>
    %149 = vector.broadcast %148 : vector<6x1xf32> to vector<6x32xf32>
    %150 = arith.mulf %145, %149 : vector<6x32xf32>
    %151 = vector.broadcast %131 : vector<1x32xf32> to vector<6x32xf32>
    %152 = arith.mulf %150, %151 : vector<6x32xf32>
    %153 = vector.broadcast %132 : vector<1x32xf32> to vector<6x32xf32>
    %154 = arith.addf %152, %153 : vector<6x32xf32>
    %c0_88 = arith.constant 0 : index
    %c0_89 = arith.constant 0 : index
    %155 = vector.load %arg19[%c0_88, %c0_89] : memref<32x1024xf32, #tpu.memory_space<vmem>>, vector<32x1024xf32>
    %cst_90 = arith.constant dense<0.000000e+00> : vector<6x1024xf32>
    %156 = tpu.matmul %154, %155, %cst_90 {dimension_numbers = #tpu.dot_dimension_numbers<[1], [0], [0], [1], [0, 0, 1, 1], [], []>} : vector<6x32xf32>, vector<32x1024xf32>, vector<6x1024xf32> -> vector<6x1024xf32>
    %c0_91 = arith.constant 0 : index
    %c0_92 = arith.constant 0 : index
    %157 = vector.load %arg20[%c0_91, %c0_92] : memref<1x1024xf32, #tpu.memory_space<vmem>>, vector<1x1024xf32>
    %158 = vector.broadcast %157 : vector<1x1024xf32> to vector<6x1024xf32>
    %159 = arith.addf %156, %158 : vector<6x1024xf32>
    %160 = tpu.iota {dimensions = array<i32: 1>} : vector<6x8xi32>
    %161 = vector.broadcast %57 : vector<6x1xi32> to vector<6x8xi32>
    %162 = arith.cmpi eq, %161, %160 : vector<6x8xi32>
    %163 = arith.extui %162 : vector<6x8xi1> to vector<6x8xi32>
    %164 = arith.sitofp %163 : vector<6x8xi32> to vector<6x8xf32>
    %cst_93 = arith.constant dense<0.000000e+00> : vector<6x32xf32>
    %165 = tpu.matmul %164, %1, %cst_93 {dimension_numbers = #tpu.dot_dimension_numbers<[1], [0], [0], [1], [0, 0, 1, 1], [], []>} : vector<6x8xf32>, vector<8x32xf32>, vector<6x32xf32> -> vector<6x32xf32>
    %166 = vector.broadcast %55 : vector<6x1xi32> to vector<6x8xi32>
    %167 = arith.cmpi eq, %166, %160 : vector<6x8xi32>
    %168 = arith.extui %167 : vector<6x8xi1> to vector<6x8xi32>
    %169 = arith.sitofp %168 : vector<6x8xi32> to vector<6x8xf32>
    %cst_94 = arith.constant dense<0.000000e+00> : vector<6x32xf32>
    %170 = tpu.matmul %169, %1, %cst_94 {dimension_numbers = #tpu.dot_dimension_numbers<[1], [0], [0], [1], [0, 0, 1, 1], [], []>} : vector<6x8xf32>, vector<8x32xf32>, vector<6x32xf32> -> vector<6x32xf32>
    %171 = tpu.iota {dimensions = array<i32: 0>} : vector<6x10xi32>
    %c0_i32 = arith.constant 0 : i32
    %172 = vector.broadcast %c0_i32 : i32 to vector<6x10xi32>
    %173 = arith.addi %171, %172 : vector<6x10xi32>
    %174 = vector.broadcast %5 : vector<1x10xi32> to vector<6x10xi32>
    %175 = arith.cmpi eq, %173, %174 : vector<6x10xi32>
    %176 = arith.extui %175 : vector<6x10xi1> to vector<6x10xi32>
    %177 = arith.sitofp %176 : vector<6x10xi32> to vector<6x10xf32>
    %c6_i32 = arith.constant 6 : i32
    %178 = vector.broadcast %c6_i32 : i32 to vector<6x10xi32>
    %179 = arith.addi %173, %178 : vector<6x10xi32>
    %180 = vector.broadcast %5 : vector<1x10xi32> to vector<6x10xi32>
    %181 = arith.cmpi eq, %179, %180 : vector<6x10xi32>
    %182 = arith.extui %181 : vector<6x10xi1> to vector<6x10xi32>
    %183 = arith.sitofp %182 : vector<6x10xi32> to vector<6x10xf32>
    %cst_95 = arith.constant 1.000000e+00 : f32
    %184 = vector.broadcast %cst_95 : f32 to vector<10x1xf32>
    %cst_96 = arith.constant dense<0.000000e+00> : vector<6x1xf32>
    %185 = tpu.matmul %177, %184, %cst_96 {dimension_numbers = #tpu.dot_dimension_numbers<[1], [0], [0], [1], [0, 0, 1, 1], [], []>} : vector<6x10xf32>, vector<10x1xf32>, vector<6x1xf32> -> vector<6x1xf32>
    %cst_97 = arith.constant 1.000000e+00 : f32
    %186 = vector.broadcast %cst_97 : f32 to vector<6x1xf32>
    %187 = arith.maximumf %185, %186 : vector<6x1xf32>
    %cst_98 = arith.constant dense<0.000000e+00> : vector<6x1xf32>
    %188 = tpu.matmul %183, %184, %cst_98 {dimension_numbers = #tpu.dot_dimension_numbers<[1], [0], [0], [1], [0, 0, 1, 1], [], []>} : vector<6x10xf32>, vector<10x1xf32>, vector<6x1xf32> -> vector<6x1xf32>
    %cst_99 = arith.constant 1.000000e+00 : f32
    %189 = vector.broadcast %cst_99 : f32 to vector<6x1xf32>
    %190 = arith.maximumf %188, %189 : vector<6x1xf32>
    %cst_100 = arith.constant dense<0.000000e+00> : vector<6x32xf32>
    %191 = tpu.matmul %177, %50, %cst_100 {dimension_numbers = #tpu.dot_dimension_numbers<[1], [0], [0], [1], [0, 0, 1, 1], [], []>} : vector<6x10xf32>, vector<10x32xf32>, vector<6x32xf32> -> vector<6x32xf32>
    %cst_101 = arith.constant 1.000000e+00 : f32
    %192 = vector.broadcast %cst_101 : f32 to vector<6x32xf32>
    %193 = arith.addf %192, %191 : vector<6x32xf32>
    %194 = vector.broadcast %187 : vector<6x1xf32> to vector<6x32xf32>
    %195 = arith.divf %193, %194 : vector<6x32xf32>
    %cst_102 = arith.constant dense<0.000000e+00> : vector<6x32xf32>
    %196 = tpu.matmul %183, %50, %cst_102 {dimension_numbers = #tpu.dot_dimension_numbers<[1], [0], [0], [1], [0, 0, 1, 1], [], []>} : vector<6x10xf32>, vector<10x32xf32>, vector<6x32xf32> -> vector<6x32xf32>
    %cst_103 = arith.constant 1.000000e+00 : f32
    %197 = vector.broadcast %cst_103 : f32 to vector<6x32xf32>
    %198 = arith.addf %197, %196 : vector<6x32xf32>
    %199 = vector.broadcast %190 : vector<6x1xf32> to vector<6x32xf32>
    %200 = arith.divf %198, %199 : vector<6x32xf32>
    %cst_104 = arith.constant 0.000000e+00 : f32
    %201 = vector.broadcast %cst_104 : f32 to vector<6x32xf32>
    %cst_105 = arith.constant 0.000000e+00 : f32
    %202 = vector.broadcast %cst_105 : f32 to vector<6x32xf32>
    %203 = vector.extract_strided_slice %159 {offsets = [0, 0], sizes = [6, 32], strides = [1, 1]} : vector<6x1024xf32> to vector<6x32xf32>
    %204 = vector.extract_strided_slice %165 {offsets = [0, 0], sizes = [6, 1], strides = [1, 1]} : vector<6x32xf32> to vector<6x1xf32>
    %205 = vector.broadcast %204 : vector<6x1xf32> to vector<6x32xf32>
    %206 = arith.mulf %205, %203 : vector<6x32xf32>
    %207 = arith.addf %201, %206 : vector<6x32xf32>
    %208 = vector.extract_strided_slice %170 {offsets = [0, 0], sizes = [6, 1], strides = [1, 1]} : vector<6x32xf32> to vector<6x1xf32>
    %209 = vector.broadcast %208 : vector<6x1xf32> to vector<6x32xf32>
    %210 = arith.mulf %209, %203 : vector<6x32xf32>
    %211 = arith.addf %202, %210 : vector<6x32xf32>
    %212 = vector.extract_strided_slice %159 {offsets = [0, 32], sizes = [6, 32], strides = [1, 1]} : vector<6x1024xf32> to vector<6x32xf32>
    %213 = vector.extract_strided_slice %165 {offsets = [0, 1], sizes = [6, 1], strides = [1, 1]} : vector<6x32xf32> to vector<6x1xf32>
    %214 = vector.broadcast %213 : vector<6x1xf32> to vector<6x32xf32>
    %215 = arith.mulf %214, %212 : vector<6x32xf32>
    %216 = arith.addf %207, %215 : vector<6x32xf32>
    %217 = vector.extract_strided_slice %170 {offsets = [0, 1], sizes = [6, 1], strides = [1, 1]} : vector<6x32xf32> to vector<6x1xf32>
    %218 = vector.broadcast %217 : vector<6x1xf32> to vector<6x32xf32>
    %219 = arith.mulf %218, %212 : vector<6x32xf32>
    %220 = arith.addf %211, %219 : vector<6x32xf32>
    %221 = vector.extract_strided_slice %159 {offsets = [0, 64], sizes = [6, 32], strides = [1, 1]} : vector<6x1024xf32> to vector<6x32xf32>
    %222 = vector.extract_strided_slice %165 {offsets = [0, 2], sizes = [6, 1], strides = [1, 1]} : vector<6x32xf32> to vector<6x1xf32>
    %223 = vector.broadcast %222 : vector<6x1xf32> to vector<6x32xf32>
    %224 = arith.mulf %223, %221 : vector<6x32xf32>
    %225 = arith.addf %216, %224 : vector<6x32xf32>
    %226 = vector.extract_strided_slice %170 {offsets = [0, 2], sizes = [6, 1], strides = [1, 1]} : vector<6x32xf32> to vector<6x1xf32>
    %227 = vector.broadcast %226 : vector<6x1xf32> to vector<6x32xf32>
    %228 = arith.mulf %227, %221 : vector<6x32xf32>
    %229 = arith.addf %220, %228 : vector<6x32xf32>
    %230 = vector.extract_strided_slice %159 {offsets = [0, 96], sizes = [6, 32], strides = [1, 1]} : vector<6x1024xf32> to vector<6x32xf32>
    %231 = vector.extract_strided_slice %165 {offsets = [0, 3], sizes = [6, 1], strides = [1, 1]} : vector<6x32xf32> to vector<6x1xf32>
    %232 = vector.broadcast %231 : vector<6x1xf32> to vector<6x32xf32>
    %233 = arith.mulf %232, %230 : vector<6x32xf32>
    %234 = arith.addf %225, %233 : vector<6x32xf32>
    %235 = vector.extract_strided_slice %170 {offsets = [0, 3], sizes = [6, 1], strides = [1, 1]} : vector<6x32xf32> to vector<6x1xf32>
    %236 = vector.broadcast %235 : vector<6x1xf32> to vector<6x32xf32>
    %237 = arith.mulf %236, %230 : vector<6x32xf32>
    %238 = arith.addf %229, %237 : vector<6x32xf32>
    %239 = vector.extract_strided_slice %159 {offsets = [0, 128], sizes = [6, 32], strides = [1, 1]} : vector<6x1024xf32> to vector<6x32xf32>
    %240 = vector.extract_strided_slice %165 {offsets = [0, 4], sizes = [6, 1], strides = [1, 1]} : vector<6x32xf32> to vector<6x1xf32>
    %241 = vector.broadcast %240 : vector<6x1xf32> to vector<6x32xf32>
    %242 = arith.mulf %241, %239 : vector<6x32xf32>
    %243 = arith.addf %234, %242 : vector<6x32xf32>
    %244 = vector.extract_strided_slice %170 {offsets = [0, 4], sizes = [6, 1], strides = [1, 1]} : vector<6x32xf32> to vector<6x1xf32>
    %245 = vector.broadcast %244 : vector<6x1xf32> to vector<6x32xf32>
    %246 = arith.mulf %245, %239 : vector<6x32xf32>
    %247 = arith.addf %238, %246 : vector<6x32xf32>
    %248 = vector.extract_strided_slice %159 {offsets = [0, 160], sizes = [6, 32], strides = [1, 1]} : vector<6x1024xf32> to vector<6x32xf32>
    %249 = vector.extract_strided_slice %165 {offsets = [0, 5], sizes = [6, 1], strides = [1, 1]} : vector<6x32xf32> to vector<6x1xf32>
    %250 = vector.broadcast %249 : vector<6x1xf32> to vector<6x32xf32>
    %251 = arith.mulf %250, %248 : vector<6x32xf32>
    %252 = arith.addf %243, %251 : vector<6x32xf32>
    %253 = vector.extract_strided_slice %170 {offsets = [0, 5], sizes = [6, 1], strides = [1, 1]} : vector<6x32xf32> to vector<6x1xf32>
    %254 = vector.broadcast %253 : vector<6x1xf32> to vector<6x32xf32>
    %255 = arith.mulf %254, %248 : vector<6x32xf32>
    %256 = arith.addf %247, %255 : vector<6x32xf32>
    %257 = vector.extract_strided_slice %159 {offsets = [0, 192], sizes = [6, 32], strides = [1, 1]} : vector<6x1024xf32> to vector<6x32xf32>
    %258 = vector.extract_strided_slice %165 {offsets = [0, 6], sizes = [6, 1], strides = [1, 1]} : vector<6x32xf32> to vector<6x1xf32>
    %259 = vector.broadcast %258 : vector<6x1xf32> to vector<6x32xf32>
    %260 = arith.mulf %259, %257 : vector<6x32xf32>
    %261 = arith.addf %252, %260 : vector<6x32xf32>
    %262 = vector.extract_strided_slice %170 {offsets = [0, 6], sizes = [6, 1], strides = [1, 1]} : vector<6x32xf32> to vector<6x1xf32>
    %263 = vector.broadcast %262 : vector<6x1xf32> to vector<6x32xf32>
    %264 = arith.mulf %263, %257 : vector<6x32xf32>
    %265 = arith.addf %256, %264 : vector<6x32xf32>
    %266 = vector.extract_strided_slice %159 {offsets = [0, 224], sizes = [6, 32], strides = [1, 1]} : vector<6x1024xf32> to vector<6x32xf32>
    %267 = vector.extract_strided_slice %165 {offsets = [0, 7], sizes = [6, 1], strides = [1, 1]} : vector<6x32xf32> to vector<6x1xf32>
    %268 = vector.broadcast %267 : vector<6x1xf32> to vector<6x32xf32>
    %269 = arith.mulf %268, %266 : vector<6x32xf32>
    %270 = arith.addf %261, %269 : vector<6x32xf32>
    %271 = vector.extract_strided_slice %170 {offsets = [0, 7], sizes = [6, 1], strides = [1, 1]} : vector<6x32xf32> to vector<6x1xf32>
    %272 = vector.broadcast %271 : vector<6x1xf32> to vector<6x32xf32>
    %273 = arith.mulf %272, %266 : vector<6x32xf32>
    %274 = arith.addf %265, %273 : vector<6x32xf32>
    %275 = vector.extract_strided_slice %159 {offsets = [0, 256], sizes = [6, 32], strides = [1, 1]} : vector<6x1024xf32> to vector<6x32xf32>
    %276 = vector.extract_strided_slice %165 {offsets = [0, 8], sizes = [6, 1], strides = [1, 1]} : vector<6x32xf32> to vector<6x1xf32>
    %277 = vector.broadcast %276 : vector<6x1xf32> to vector<6x32xf32>
    %278 = arith.mulf %277, %275 : vector<6x32xf32>
    %279 = arith.addf %270, %278 : vector<6x32xf32>
    %280 = vector.extract_strided_slice %170 {offsets = [0, 8], sizes = [6, 1], strides = [1, 1]} : vector<6x32xf32> to vector<6x1xf32>
    %281 = vector.broadcast %280 : vector<6x1xf32> to vector<6x32xf32>
    %282 = arith.mulf %281, %275 : vector<6x32xf32>
    %283 = arith.addf %274, %282 : vector<6x32xf32>
    %284 = vector.extract_strided_slice %159 {offsets = [0, 288], sizes = [6, 32], strides = [1, 1]} : vector<6x1024xf32> to vector<6x32xf32>
    %285 = vector.extract_strided_slice %165 {offsets = [0, 9], sizes = [6, 1], strides = [1, 1]} : vector<6x32xf32> to vector<6x1xf32>
    %286 = vector.broadcast %285 : vector<6x1xf32> to vector<6x32xf32>
    %287 = arith.mulf %286, %284 : vector<6x32xf32>
    %288 = arith.addf %279, %287 : vector<6x32xf32>
    %289 = vector.extract_strided_slice %170 {offsets = [0, 9], sizes = [6, 1], strides = [1, 1]} : vector<6x32xf32> to vector<6x1xf32>
    %290 = vector.broadcast %289 : vector<6x1xf32> to vector<6x32xf32>
    %291 = arith.mulf %290, %284 : vector<6x32xf32>
    %292 = arith.addf %283, %291 : vector<6x32xf32>
    %293 = vector.extract_strided_slice %159 {offsets = [0, 320], sizes = [6, 32], strides = [1, 1]} : vector<6x1024xf32> to vector<6x32xf32>
    %294 = vector.extract_strided_slice %165 {offsets = [0, 10], sizes = [6, 1], strides = [1, 1]} : vector<6x32xf32> to vector<6x1xf32>
    %295 = vector.broadcast %294 : vector<6x1xf32> to vector<6x32xf32>
    %296 = arith.mulf %295, %293 : vector<6x32xf32>
    %297 = arith.addf %288, %296 : vector<6x32xf32>
    %298 = vector.extract_strided_slice %170 {offsets = [0, 10], sizes = [6, 1], strides = [1, 1]} : vector<6x32xf32> to vector<6x1xf32>
    %299 = vector.broadcast %298 : vector<6x1xf32> to vector<6x32xf32>
    %300 = arith.mulf %299, %293 : vector<6x32xf32>
    %301 = arith.addf %292, %300 : vector<6x32xf32>
    %302 = vector.extract_strided_slice %159 {offsets = [0, 352], sizes = [6, 32], strides = [1, 1]} : vector<6x1024xf32> to vector<6x32xf32>
    %303 = vector.extract_strided_slice %165 {offsets = [0, 11], sizes = [6, 1], strides = [1, 1]} : vector<6x32xf32> to vector<6x1xf32>
    %304 = vector.broadcast %303 : vector<6x1xf32> to vector<6x32xf32>
    %305 = arith.mulf %304, %302 : vector<6x32xf32>
    %306 = arith.addf %297, %305 : vector<6x32xf32>
    %307 = vector.extract_strided_slice %170 {offsets = [0, 11], sizes = [6, 1], strides = [1, 1]} : vector<6x32xf32> to vector<6x1xf32>
    %308 = vector.broadcast %307 : vector<6x1xf32> to vector<6x32xf32>
    %309 = arith.mulf %308, %302 : vector<6x32xf32>
    %310 = arith.addf %301, %309 : vector<6x32xf32>
    %311 = vector.extract_strided_slice %159 {offsets = [0, 384], sizes = [6, 32], strides = [1, 1]} : vector<6x1024xf32> to vector<6x32xf32>
    %312 = vector.extract_strided_slice %165 {offsets = [0, 12], sizes = [6, 1], strides = [1, 1]} : vector<6x32xf32> to vector<6x1xf32>
    %313 = vector.broadcast %312 : vector<6x1xf32> to vector<6x32xf32>
    %314 = arith.mulf %313, %311 : vector<6x32xf32>
    %315 = arith.addf %306, %314 : vector<6x32xf32>
    %316 = vector.extract_strided_slice %170 {offsets = [0, 12], sizes = [6, 1], strides = [1, 1]} : vector<6x32xf32> to vector<6x1xf32>
    %317 = vector.broadcast %316 : vector<6x1xf32> to vector<6x32xf32>
    %318 = arith.mulf %317, %311 : vector<6x32xf32>
    %319 = arith.addf %310, %318 : vector<6x32xf32>
    %320 = vector.extract_strided_slice %159 {offsets = [0, 416], sizes = [6, 32], strides = [1, 1]} : vector<6x1024xf32> to vector<6x32xf32>
    %321 = vector.extract_strided_slice %165 {offsets = [0, 13], sizes = [6, 1], strides = [1, 1]} : vector<6x32xf32> to vector<6x1xf32>
    %322 = vector.broadcast %321 : vector<6x1xf32> to vector<6x32xf32>
    %323 = arith.mulf %322, %320 : vector<6x32xf32>
    %324 = arith.addf %315, %323 : vector<6x32xf32>
    %325 = vector.extract_strided_slice %170 {offsets = [0, 13], sizes = [6, 1], strides = [1, 1]} : vector<6x32xf32> to vector<6x1xf32>
    %326 = vector.broadcast %325 : vector<6x1xf32> to vector<6x32xf32>
    %327 = arith.mulf %326, %320 : vector<6x32xf32>
    %328 = arith.addf %319, %327 : vector<6x32xf32>
    %329 = vector.extract_strided_slice %159 {offsets = [0, 448], sizes = [6, 32], strides = [1, 1]} : vector<6x1024xf32> to vector<6x32xf32>
    %330 = vector.extract_strided_slice %165 {offsets = [0, 14], sizes = [6, 1], strides = [1, 1]} : vector<6x32xf32> to vector<6x1xf32>
    %331 = vector.broadcast %330 : vector<6x1xf32> to vector<6x32xf32>
    %332 = arith.mulf %331, %329 : vector<6x32xf32>
    %333 = arith.addf %324, %332 : vector<6x32xf32>
    %334 = vector.extract_strided_slice %170 {offsets = [0, 14], sizes = [6, 1], strides = [1, 1]} : vector<6x32xf32> to vector<6x1xf32>
    %335 = vector.broadcast %334 : vector<6x1xf32> to vector<6x32xf32>
    %336 = arith.mulf %335, %329 : vector<6x32xf32>
    %337 = arith.addf %328, %336 : vector<6x32xf32>
    %338 = vector.extract_strided_slice %159 {offsets = [0, 480], sizes = [6, 32], strides = [1, 1]} : vector<6x1024xf32> to vector<6x32xf32>
    %339 = vector.extract_strided_slice %165 {offsets = [0, 15], sizes = [6, 1], strides = [1, 1]} : vector<6x32xf32> to vector<6x1xf32>
    %340 = vector.broadcast %339 : vector<6x1xf32> to vector<6x32xf32>
    %341 = arith.mulf %340, %338 : vector<6x32xf32>
    %342 = arith.addf %333, %341 : vector<6x32xf32>
    %343 = vector.extract_strided_slice %170 {offsets = [0, 15], sizes = [6, 1], strides = [1, 1]} : vector<6x32xf32> to vector<6x1xf32>
    %344 = vector.broadcast %343 : vector<6x1xf32> to vector<6x32xf32>
    %345 = arith.mulf %344, %338 : vector<6x32xf32>
    %346 = arith.addf %337, %345 : vector<6x32xf32>
    %347 = vector.extract_strided_slice %159 {offsets = [0, 512], sizes = [6, 32], strides = [1, 1]} : vector<6x1024xf32> to vector<6x32xf32>
    %348 = vector.extract_strided_slice %165 {offsets = [0, 16], sizes = [6, 1], strides = [1, 1]} : vector<6x32xf32> to vector<6x1xf32>
    %349 = vector.broadcast %348 : vector<6x1xf32> to vector<6x32xf32>
    %350 = arith.mulf %349, %347 : vector<6x32xf32>
    %351 = arith.addf %342, %350 : vector<6x32xf32>
    %352 = vector.extract_strided_slice %170 {offsets = [0, 16], sizes = [6, 1], strides = [1, 1]} : vector<6x32xf32> to vector<6x1xf32>
    %353 = vector.broadcast %352 : vector<6x1xf32> to vector<6x32xf32>
    %354 = arith.mulf %353, %347 : vector<6x32xf32>
    %355 = arith.addf %346, %354 : vector<6x32xf32>
    %356 = vector.extract_strided_slice %159 {offsets = [0, 544], sizes = [6, 32], strides = [1, 1]} : vector<6x1024xf32> to vector<6x32xf32>
    %357 = vector.extract_strided_slice %165 {offsets = [0, 17], sizes = [6, 1], strides = [1, 1]} : vector<6x32xf32> to vector<6x1xf32>
    %358 = vector.broadcast %357 : vector<6x1xf32> to vector<6x32xf32>
    %359 = arith.mulf %358, %356 : vector<6x32xf32>
    %360 = arith.addf %351, %359 : vector<6x32xf32>
    %361 = vector.extract_strided_slice %170 {offsets = [0, 17], sizes = [6, 1], strides = [1, 1]} : vector<6x32xf32> to vector<6x1xf32>
    %362 = vector.broadcast %361 : vector<6x1xf32> to vector<6x32xf32>
    %363 = arith.mulf %362, %356 : vector<6x32xf32>
    %364 = arith.addf %355, %363 : vector<6x32xf32>
    %365 = vector.extract_strided_slice %159 {offsets = [0, 576], sizes = [6, 32], strides = [1, 1]} : vector<6x1024xf32> to vector<6x32xf32>
    %366 = vector.extract_strided_slice %165 {offsets = [0, 18], sizes = [6, 1], strides = [1, 1]} : vector<6x32xf32> to vector<6x1xf32>
    %367 = vector.broadcast %366 : vector<6x1xf32> to vector<6x32xf32>
    %368 = arith.mulf %367, %365 : vector<6x32xf32>
    %369 = arith.addf %360, %368 : vector<6x32xf32>
    %370 = vector.extract_strided_slice %170 {offsets = [0, 18], sizes = [6, 1], strides = [1, 1]} : vector<6x32xf32> to vector<6x1xf32>
    %371 = vector.broadcast %370 : vector<6x1xf32> to vector<6x32xf32>
    %372 = arith.mulf %371, %365 : vector<6x32xf32>
    %373 = arith.addf %364, %372 : vector<6x32xf32>
    %374 = vector.extract_strided_slice %159 {offsets = [0, 608], sizes = [6, 32], strides = [1, 1]} : vector<6x1024xf32> to vector<6x32xf32>
    %375 = vector.extract_strided_slice %165 {offsets = [0, 19], sizes = [6, 1], strides = [1, 1]} : vector<6x32xf32> to vector<6x1xf32>
    %376 = vector.broadcast %375 : vector<6x1xf32> to vector<6x32xf32>
    %377 = arith.mulf %376, %374 : vector<6x32xf32>
    %378 = arith.addf %369, %377 : vector<6x32xf32>
    %379 = vector.extract_strided_slice %170 {offsets = [0, 19], sizes = [6, 1], strides = [1, 1]} : vector<6x32xf32> to vector<6x1xf32>
    %380 = vector.broadcast %379 : vector<6x1xf32> to vector<6x32xf32>
    %381 = arith.mulf %380, %374 : vector<6x32xf32>
    %382 = arith.addf %373, %381 : vector<6x32xf32>
    %383 = vector.extract_strided_slice %159 {offsets = [0, 640], sizes = [6, 32], strides = [1, 1]} : vector<6x1024xf32> to vector<6x32xf32>
    %384 = vector.extract_strided_slice %165 {offsets = [0, 20], sizes = [6, 1], strides = [1, 1]} : vector<6x32xf32> to vector<6x1xf32>
    %385 = vector.broadcast %384 : vector<6x1xf32> to vector<6x32xf32>
    %386 = arith.mulf %385, %383 : vector<6x32xf32>
    %387 = arith.addf %378, %386 : vector<6x32xf32>
    %388 = vector.extract_strided_slice %170 {offsets = [0, 20], sizes = [6, 1], strides = [1, 1]} : vector<6x32xf32> to vector<6x1xf32>
    %389 = vector.broadcast %388 : vector<6x1xf32> to vector<6x32xf32>
    %390 = arith.mulf %389, %383 : vector<6x32xf32>
    %391 = arith.addf %382, %390 : vector<6x32xf32>
    %392 = vector.extract_strided_slice %159 {offsets = [0, 672], sizes = [6, 32], strides = [1, 1]} : vector<6x1024xf32> to vector<6x32xf32>
    %393 = vector.extract_strided_slice %165 {offsets = [0, 21], sizes = [6, 1], strides = [1, 1]} : vector<6x32xf32> to vector<6x1xf32>
    %394 = vector.broadcast %393 : vector<6x1xf32> to vector<6x32xf32>
    %395 = arith.mulf %394, %392 : vector<6x32xf32>
    %396 = arith.addf %387, %395 : vector<6x32xf32>
    %397 = vector.extract_strided_slice %170 {offsets = [0, 21], sizes = [6, 1], strides = [1, 1]} : vector<6x32xf32> to vector<6x1xf32>
    %398 = vector.broadcast %397 : vector<6x1xf32> to vector<6x32xf32>
    %399 = arith.mulf %398, %392 : vector<6x32xf32>
    %400 = arith.addf %391, %399 : vector<6x32xf32>
    %401 = vector.extract_strided_slice %159 {offsets = [0, 704], sizes = [6, 32], strides = [1, 1]} : vector<6x1024xf32> to vector<6x32xf32>
    %402 = vector.extract_strided_slice %165 {offsets = [0, 22], sizes = [6, 1], strides = [1, 1]} : vector<6x32xf32> to vector<6x1xf32>
    %403 = vector.broadcast %402 : vector<6x1xf32> to vector<6x32xf32>
    %404 = arith.mulf %403, %401 : vector<6x32xf32>
    %405 = arith.addf %396, %404 : vector<6x32xf32>
    %406 = vector.extract_strided_slice %170 {offsets = [0, 22], sizes = [6, 1], strides = [1, 1]} : vector<6x32xf32> to vector<6x1xf32>
    %407 = vector.broadcast %406 : vector<6x1xf32> to vector<6x32xf32>
    %408 = arith.mulf %407, %401 : vector<6x32xf32>
    %409 = arith.addf %400, %408 : vector<6x32xf32>
    %410 = vector.extract_strided_slice %159 {offsets = [0, 736], sizes = [6, 32], strides = [1, 1]} : vector<6x1024xf32> to vector<6x32xf32>
    %411 = vector.extract_strided_slice %165 {offsets = [0, 23], sizes = [6, 1], strides = [1, 1]} : vector<6x32xf32> to vector<6x1xf32>
    %412 = vector.broadcast %411 : vector<6x1xf32> to vector<6x32xf32>
    %413 = arith.mulf %412, %410 : vector<6x32xf32>
    %414 = arith.addf %405, %413 : vector<6x32xf32>
    %415 = vector.extract_strided_slice %170 {offsets = [0, 23], sizes = [6, 1], strides = [1, 1]} : vector<6x32xf32> to vector<6x1xf32>
    %416 = vector.broadcast %415 : vector<6x1xf32> to vector<6x32xf32>
    %417 = arith.mulf %416, %410 : vector<6x32xf32>
    %418 = arith.addf %409, %417 : vector<6x32xf32>
    %419 = vector.extract_strided_slice %159 {offsets = [0, 768], sizes = [6, 32], strides = [1, 1]} : vector<6x1024xf32> to vector<6x32xf32>
    %420 = vector.extract_strided_slice %165 {offsets = [0, 24], sizes = [6, 1], strides = [1, 1]} : vector<6x32xf32> to vector<6x1xf32>
    %421 = vector.broadcast %420 : vector<6x1xf32> to vector<6x32xf32>
    %422 = arith.mulf %421, %419 : vector<6x32xf32>
    %423 = arith.addf %414, %422 : vector<6x32xf32>
    %424 = vector.extract_strided_slice %170 {offsets = [0, 24], sizes = [6, 1], strides = [1, 1]} : vector<6x32xf32> to vector<6x1xf32>
    %425 = vector.broadcast %424 : vector<6x1xf32> to vector<6x32xf32>
    %426 = arith.mulf %425, %419 : vector<6x32xf32>
    %427 = arith.addf %418, %426 : vector<6x32xf32>
    %428 = vector.extract_strided_slice %159 {offsets = [0, 800], sizes = [6, 32], strides = [1, 1]} : vector<6x1024xf32> to vector<6x32xf32>
    %429 = vector.extract_strided_slice %165 {offsets = [0, 25], sizes = [6, 1], strides = [1, 1]} : vector<6x32xf32> to vector<6x1xf32>
    %430 = vector.broadcast %429 : vector<6x1xf32> to vector<6x32xf32>
    %431 = arith.mulf %430, %428 : vector<6x32xf32>
    %432 = arith.addf %423, %431 : vector<6x32xf32>
    %433 = vector.extract_strided_slice %170 {offsets = [0, 25], sizes = [6, 1], strides = [1, 1]} : vector<6x32xf32> to vector<6x1xf32>
    %434 = vector.broadcast %433 : vector<6x1xf32> to vector<6x32xf32>
    %435 = arith.mulf %434, %428 : vector<6x32xf32>
    %436 = arith.addf %427, %435 : vector<6x32xf32>
    %437 = vector.extract_strided_slice %159 {offsets = [0, 832], sizes = [6, 32], strides = [1, 1]} : vector<6x1024xf32> to vector<6x32xf32>
    %438 = vector.extract_strided_slice %165 {offsets = [0, 26], sizes = [6, 1], strides = [1, 1]} : vector<6x32xf32> to vector<6x1xf32>
    %439 = vector.broadcast %438 : vector<6x1xf32> to vector<6x32xf32>
    %440 = arith.mulf %439, %437 : vector<6x32xf32>
    %441 = arith.addf %432, %440 : vector<6x32xf32>
    %442 = vector.extract_strided_slice %170 {offsets = [0, 26], sizes = [6, 1], strides = [1, 1]} : vector<6x32xf32> to vector<6x1xf32>
    %443 = vector.broadcast %442 : vector<6x1xf32> to vector<6x32xf32>
    %444 = arith.mulf %443, %437 : vector<6x32xf32>
    %445 = arith.addf %436, %444 : vector<6x32xf32>
    %446 = vector.extract_strided_slice %159 {offsets = [0, 864], sizes = [6, 32], strides = [1, 1]} : vector<6x1024xf32> to vector<6x32xf32>
    %447 = vector.extract_strided_slice %165 {offsets = [0, 27], sizes = [6, 1], strides = [1, 1]} : vector<6x32xf32> to vector<6x1xf32>
    %448 = vector.broadcast %447 : vector<6x1xf32> to vector<6x32xf32>
    %449 = arith.mulf %448, %446 : vector<6x32xf32>
    %450 = arith.addf %441, %449 : vector<6x32xf32>
    %451 = vector.extract_strided_slice %170 {offsets = [0, 27], sizes = [6, 1], strides = [1, 1]} : vector<6x32xf32> to vector<6x1xf32>
    %452 = vector.broadcast %451 : vector<6x1xf32> to vector<6x32xf32>
    %453 = arith.mulf %452, %446 : vector<6x32xf32>
    %454 = arith.addf %445, %453 : vector<6x32xf32>
    %455 = vector.extract_strided_slice %159 {offsets = [0, 896], sizes = [6, 32], strides = [1, 1]} : vector<6x1024xf32> to vector<6x32xf32>
    %456 = vector.extract_strided_slice %165 {offsets = [0, 28], sizes = [6, 1], strides = [1, 1]} : vector<6x32xf32> to vector<6x1xf32>
    %457 = vector.broadcast %456 : vector<6x1xf32> to vector<6x32xf32>
    %458 = arith.mulf %457, %455 : vector<6x32xf32>
    %459 = arith.addf %450, %458 : vector<6x32xf32>
    %460 = vector.extract_strided_slice %170 {offsets = [0, 28], sizes = [6, 1], strides = [1, 1]} : vector<6x32xf32> to vector<6x1xf32>
    %461 = vector.broadcast %460 : vector<6x1xf32> to vector<6x32xf32>
    %462 = arith.mulf %461, %455 : vector<6x32xf32>
    %463 = arith.addf %454, %462 : vector<6x32xf32>
    %464 = vector.extract_strided_slice %159 {offsets = [0, 928], sizes = [6, 32], strides = [1, 1]} : vector<6x1024xf32> to vector<6x32xf32>
    %465 = vector.extract_strided_slice %165 {offsets = [0, 29], sizes = [6, 1], strides = [1, 1]} : vector<6x32xf32> to vector<6x1xf32>
    %466 = vector.broadcast %465 : vector<6x1xf32> to vector<6x32xf32>
    %467 = arith.mulf %466, %464 : vector<6x32xf32>
    %468 = arith.addf %459, %467 : vector<6x32xf32>
    %469 = vector.extract_strided_slice %170 {offsets = [0, 29], sizes = [6, 1], strides = [1, 1]} : vector<6x32xf32> to vector<6x1xf32>
    %470 = vector.broadcast %469 : vector<6x1xf32> to vector<6x32xf32>
    %471 = arith.mulf %470, %464 : vector<6x32xf32>
    %472 = arith.addf %463, %471 : vector<6x32xf32>
    %473 = vector.extract_strided_slice %159 {offsets = [0, 960], sizes = [6, 32], strides = [1, 1]} : vector<6x1024xf32> to vector<6x32xf32>
    %474 = vector.extract_strided_slice %165 {offsets = [0, 30], sizes = [6, 1], strides = [1, 1]} : vector<6x32xf32> to vector<6x1xf32>
    %475 = vector.broadcast %474 : vector<6x1xf32> to vector<6x32xf32>
    %476 = arith.mulf %475, %473 : vector<6x32xf32>
    %477 = arith.addf %468, %476 : vector<6x32xf32>
    %478 = vector.extract_strided_slice %170 {offsets = [0, 30], sizes = [6, 1], strides = [1, 1]} : vector<6x32xf32> to vector<6x1xf32>
    %479 = vector.broadcast %478 : vector<6x1xf32> to vector<6x32xf32>
    %480 = arith.mulf %479, %473 : vector<6x32xf32>
    %481 = arith.addf %472, %480 : vector<6x32xf32>
    %482 = vector.extract_strided_slice %159 {offsets = [0, 992], sizes = [6, 32], strides = [1, 1]} : vector<6x1024xf32> to vector<6x32xf32>
    %483 = vector.extract_strided_slice %165 {offsets = [0, 31], sizes = [6, 1], strides = [1, 1]} : vector<6x32xf32> to vector<6x1xf32>
    %484 = vector.broadcast %483 : vector<6x1xf32> to vector<6x32xf32>
    %485 = arith.mulf %484, %482 : vector<6x32xf32>
    %486 = arith.addf %477, %485 : vector<6x32xf32>
    %487 = vector.extract_strided_slice %170 {offsets = [0, 31], sizes = [6, 1], strides = [1, 1]} : vector<6x32xf32> to vector<6x1xf32>
    %488 = vector.broadcast %487 : vector<6x1xf32> to vector<6x32xf32>
    %489 = arith.mulf %488, %482 : vector<6x32xf32>
    %490 = arith.addf %481, %489 : vector<6x32xf32>
    %491 = vector.extract_strided_slice %53 {offsets = [0, 0], sizes = [6, 1], strides = [1, 1]} : vector<6x8xf32> to vector<6x1xf32>
    %cst_106 = arith.constant -9.990000e+02 : f32
    %492 = vector.broadcast %cst_106 : f32 to vector<6x1xf32>
    %493 = arith.cmpf oeq, %491, %492 : vector<6x1xf32>
    %cst_107 = arith.constant 0.000000e+00 : f32
    %494 = vector.shape_cast %493 : vector<6x1xi1> to vector<6x1xi1>
    %495 = vector.broadcast %494 : vector<6x1xi1> to vector<6x32xi1>
    %496 = vector.broadcast %cst_107 : f32 to vector<6x32xf32>
    %497 = arith.select %495, %496, %486 : vector<6x32xi1>, vector<6x32xf32>
    %cst_108 = arith.constant 0.176776692 : f32
    %498 = vector.broadcast %cst_108 : f32 to vector<6x32xf32>
    %499 = arith.mulf %195, %498 : vector<6x32xf32>
    %500 = arith.mulf %497, %499 : vector<6x32xf32>
    %cst_109 = arith.constant 0.000000e+00 : f32
    %501 = vector.shape_cast %493 : vector<6x1xi1> to vector<6x1xi1>
    %502 = vector.broadcast %501 : vector<6x1xi1> to vector<6x32xi1>
    %503 = vector.broadcast %cst_109 : f32 to vector<6x32xf32>
    %504 = arith.select %502, %503, %490 : vector<6x32xi1>, vector<6x32xf32>
    %cst_110 = arith.constant 0.176776692 : f32
    %505 = vector.broadcast %cst_110 : f32 to vector<6x32xf32>
    %506 = arith.mulf %200, %505 : vector<6x32xf32>
    %507 = arith.mulf %504, %506 : vector<6x32xf32>
    %508 = tpu.iota {dimensions = array<i32: 0>} : vector<8x6xi32>
    %509 = vector.broadcast %59 : vector<1x6xi32> to vector<8x6xi32>
    %510 = arith.cmpi eq, %508, %509 : vector<8x6xi32>
    %511 = arith.extui %510 : vector<8x6xi1> to vector<8x6xi32>
    %512 = arith.sitofp %511 : vector<8x6xi32> to vector<8x6xf32>
    %cst_111 = arith.constant dense<0.000000e+00> : vector<8x32xf32>
    %513 = tpu.matmul %512, %500, %cst_111 {dimension_numbers = #tpu.dot_dimension_numbers<[1], [0], [0], [1], [0, 0, 1, 1], [], []>} : vector<8x6xf32>, vector<6x32xf32>, vector<8x32xf32> -> vector<8x32xf32>
    %514 = arith.addf %51, %513 : vector<8x32xf32>
    %515 = vector.broadcast %61 : vector<1x6xi32> to vector<8x6xi32>
    %516 = arith.cmpi eq, %508, %515 : vector<8x6xi32>
    %517 = arith.extui %516 : vector<8x6xi1> to vector<8x6xi32>
    %518 = arith.sitofp %517 : vector<8x6xi32> to vector<8x6xf32>
    %cst_112 = arith.constant dense<0.000000e+00> : vector<8x32xf32>
    %519 = tpu.matmul %518, %507, %cst_112 {dimension_numbers = #tpu.dot_dimension_numbers<[1], [0], [0], [1], [0, 0, 1, 1], [], []>} : vector<8x6xf32>, vector<6x32xf32>, vector<8x32xf32> -> vector<8x32xf32>
    %520 = arith.addf %514, %519 : vector<8x32xf32>
    %c0_113 = arith.constant 0 : index
    %c0_114 = arith.constant 0 : index
    %c0_115 = arith.constant 0 : index
    %521 = vector.load %arg27[%c0_113, %c0_114, %c0_115] : memref<1x8x32xf32, #tpu.memory_space<vmem>>, vector<1x8x32xf32>
    %522 = vector.shape_cast %521 : vector<1x8x32xf32> to vector<8x32xf32>
    %523 = vector.shape_cast %520 : vector<8x32xf32> to vector<1x8x32xf32>
    tpu.vector_store %arg27[%c0_113, %c0_114, %c0_115], %523 {strides = array<i32>} : memref<1x8x32xf32, #tpu.memory_space<vmem>>, vector<1x8x32xf32>,
    return
  }
  func.func @transform_0(%arg0: i32) -> (i32, i32, i32) {
    %c0_i32 = arith.constant 0 : i32
    %c0_i32_0 = arith.constant 0 : i32
    %c0_i32_1 = arith.constant 0 : i32
    return %arg0, %c0_i32, %c0_i32_0 : i32, i32, i32
  }
  func.func @transform_1(%arg0: i32) -> (i32, i32, i32) {
    %c0_i32 = arith.constant 0 : i32
    %c0_i32_0 = arith.constant 0 : i32
    %c0_i32_1 = arith.constant 0 : i32
    return %arg0, %c0_i32, %c0_i32_0 : i32, i32, i32
  }
  func.func @transform_2(%arg0: i32) -> (i32, i32, i32) {
    %c0_i32 = arith.constant 0 : i32
    %c0_i32_0 = arith.constant 0 : i32
    %c0_i32_1 = arith.constant 0 : i32
    return %arg0, %c0_i32, %c0_i32_0 : i32, i32, i32
  }
  func.func @transform_3(%arg0: i32) -> (i32, i32, i32) {
    %c0_i32 = arith.constant 0 : i32
    %c0_i32_0 = arith.constant 0 : i32
    %c0_i32_1 = arith.constant 0 : i32
    return %arg0, %c0_i32, %c0_i32_0 : i32, i32, i32
  }
  func.func @transform_4(%arg0: i32) -> (i32, i32, i32) {
    %c0_i32 = arith.constant 0 : i32
    %c0_i32_0 = arith.constant 0 : i32
    %c0_i32_1 = arith.constant 0 : i32
    return %arg0, %c0_i32, %c0_i32_0 : i32, i32, i32
  }
  func.func @transform_5(%arg0: i32) -> (i32, i32, i32) {
    %c0_i32 = arith.constant 0 : i32
    %c0_i32_0 = arith.constant 0 : i32
    %c0_i32_1 = arith.constant 0 : i32
    return %arg0, %c0_i32, %c0_i32_0 : i32, i32, i32
  }
  func.func @transform_6(%arg0: i32) -> (i32, i32) {
    %c0_i32 = arith.constant 0 : i32
    %c0_i32_0 = arith.constant 0 : i32
    %c0_i32_1 = arith.constant 0 : i32
    return %c0_i32, %c0_i32_0 : i32, i32
  }
  func.func @transform_7(%arg0: i32) -> (i32, i32) {
    %c0_i32 = arith.constant 0 : i32
    %c0_i32_0 = arith.constant 0 : i32
    %c0_i32_1 = arith.constant 0 : i32
    return %c0_i32, %c0_i32_0 : i32, i32
  }
  func.func @transform_8(%arg0: i32) -> (i32, i32) {
    %c0_i32 = arith.constant 0 : i32
    %c0_i32_0 = arith.constant 0 : i32
    %c0_i32_1 = arith.constant 0 : i32
    return %c0_i32, %c0_i32_0 : i32, i32
  }
  func.func @transform_9(%arg0: i32) -> (i32, i32) {
    %c0_i32 = arith.constant 0 : i32
    %c0_i32_0 = arith.constant 0 : i32
    %c0_i32_1 = arith.constant 0 : i32
    return %c0_i32, %c0_i32_0 : i32, i32
  }
  func.func @transform_10(%arg0: i32) -> (i32, i32) {
    %c0_i32 = arith.constant 0 : i32
    %c0_i32_0 = arith.constant 0 : i32
    %c0_i32_1 = arith.constant 0 : i32
    return %c0_i32, %c0_i32_0 : i32, i32
  }
  func.func @transform_11(%arg0: i32) -> (i32, i32) {
    %c0_i32 = arith.constant 0 : i32
    %c0_i32_0 = arith.constant 0 : i32
    %c0_i32_1 = arith.constant 0 : i32
    return %c0_i32, %c0_i32_0 : i32, i32
  }
  func.func @transform_12(%arg0: i32) -> (i32, i32) {
    %c0_i32 = arith.constant 0 : i32
    %c0_i32_0 = arith.constant 0 : i32
    %c0_i32_1 = arith.constant 0 : i32
    return %c0_i32, %c0_i32_0 : i32, i32
  }
  func.func @transform_13(%arg0: i32) -> (i32, i32) {
    %c0_i32 = arith.constant 0 : i32
    %c0_i32_0 = arith.constant 0 : i32
    %c0_i32_1 = arith.constant 0 : i32
    return %c0_i32, %c0_i32_0 : i32, i32
  }
  func.func @transform_14(%arg0: i32) -> (i32, i32) {
    %c0_i32 = arith.constant 0 : i32
    %c0_i32_0 = arith.constant 0 : i32
    %c0_i32_1 = arith.constant 0 : i32
    return %c0_i32, %c0_i32_0 : i32, i32
  }
  func.func @transform_15(%arg0: i32) -> (i32, i32) {
    %c0_i32 = arith.constant 0 : i32
    %c0_i32_0 = arith.constant 0 : i32
    %c0_i32_1 = arith.constant 0 : i32
    return %c0_i32, %c0_i32_0 : i32, i32
  }
  func.func @transform_16(%arg0: i32) -> (i32, i32) {
    %c0_i32 = arith.constant 0 : i32
    %c0_i32_0 = arith.constant 0 : i32
    %c0_i32_1 = arith.constant 0 : i32
    return %c0_i32, %c0_i32_0 : i32, i32
  }
  func.func @transform_17(%arg0: i32) -> (i32, i32) {
    %c0_i32 = arith.constant 0 : i32
    %c0_i32_0 = arith.constant 0 : i32
    %c0_i32_1 = arith.constant 0 : i32
    return %c0_i32, %c0_i32_0 : i32, i32
  }
  func.func @transform_18(%arg0: i32) -> (i32, i32) {
    %c0_i32 = arith.constant 0 : i32
    %c0_i32_0 = arith.constant 0 : i32
    %c0_i32_1 = arith.constant 0 : i32
    return %c0_i32, %c0_i32_0 : i32, i32
  }
  func.func @transform_19(%arg0: i32) -> (i32, i32) {
    %c0_i32 = arith.constant 0 : i32
    %c0_i32_0 = arith.constant 0 : i32
    %c0_i32_1 = arith.constant 0 : i32
    return %c0_i32, %c0_i32_0 : i32, i32
  }
  func.func @transform_20(%arg0: i32) -> (i32, i32) {
    %c0_i32 = arith.constant 0 : i32
    %c0_i32_0 = arith.constant 0 : i32
    %c0_i32_1 = arith.constant 0 : i32
    return %c0_i32, %c0_i32_0 : i32, i32
  }
  func.func @transform_21(%arg0: i32) -> (i32, i32) {
    %c0_i32 = arith.constant 0 : i32
    %c0_i32_0 = arith.constant 0 : i32
    %c0_i32_1 = arith.constant 0 : i32
    return %c0_i32, %c0_i32_0 : i32, i32
  }
  func.func @transform_22(%arg0: i32) -> (i32, i32) {
    %c0_i32 = arith.constant 0 : i32
    %c0_i32_0 = arith.constant 0 : i32
    %c0_i32_1 = arith.constant 0 : i32
    return %c0_i32, %c0_i32_0 : i32, i32
  }
  func.func @transform_23(%arg0: i32) -> (i32, i32) {
    %c0_i32 = arith.constant 0 : i32
    %c0_i32_0 = arith.constant 0 : i32
    %c0_i32_1 = arith.constant 0 : i32
    return %c0_i32, %c0_i32_0 : i32, i32
  }
  func.func @transform_24(%arg0: i32) -> (i32, i32) {
    %c0_i32 = arith.constant 0 : i32
    %c0_i32_0 = arith.constant 0 : i32
    %c0_i32_1 = arith.constant 0 : i32
    return %c0_i32, %c0_i32_0 : i32, i32
  }
  func.func @transform_25(%arg0: i32) -> (i32, i32) {
    %c0_i32 = arith.constant 0 : i32
    %c0_i32_0 = arith.constant 0 : i32
    %c0_i32_1 = arith.constant 0 : i32
    return %c0_i32, %c0_i32_0 : i32, i32
  }
  func.func @transform_26(%arg0: i32) -> (i32, i32, i32) {
    %c0_i32 = arith.constant 0 : i32
    %c0_i32_0 = arith.constant 0 : i32
    %c0_i32_1 = arith.constant 0 : i32
    return %arg0, %c0_i32, %c0_i32_0 : i32, i32, i32
  }
}

module attributes {stable_mosaic.version = 11 : i64} {
  func.func @_fused_message_kernel(%arg0: i32, %arg1: memref<1x8x32xf32, #tpu.memory_space<vmem>>, %arg2: memref<1x6x8xf32, #tpu.memory_space<vmem>>, %arg3: memref<1x10x1xf32, #tpu.memory_space<vmem>>, %arg4: memref<1x6x2xi32, #tpu.memory_space<vmem>>, %arg5: memref<1x2x6xi32, #tpu.memory_space<vmem>>, %arg6: memref<1x1x10xi32, #tpu.memory_space<vmem>>, %arg7: memref<8x32xf32, #tpu.memory_space<vmem>>, %arg8: memref<1x32xf32, #tpu.memory_space<vmem>>, %arg9: memref<1x32xf32, #tpu.memory_space<vmem>>, %arg10: memref<1x32xf32, #tpu.memory_space<vmem>>, %arg11: memref<32x32xf32, #tpu.memory_space<vmem>>, %arg12: memref<1x32xf32, #tpu.memory_space<vmem>>, %arg13: memref<1x32xf32, #tpu.memory_space<vmem>>, %arg14: memref<1x32xf32, #tpu.memory_space<vmem>>, %arg15: memref<32x32xf32, #tpu.memory_space<vmem>>, %arg16: memref<1x32xf32, #tpu.memory_space<vmem>>, %arg17: memref<1x32xf32, #tpu.memory_space<vmem>>, %arg18: memref<1x32xf32, #tpu.memory_space<vmem>>, %arg19: memref<32x1024xf32, #tpu.memory_space<vmem>>, %arg20: memref<1x1024xf32, #tpu.memory_space<vmem>>, %arg21: memref<1x32xf32, #tpu.memory_space<vmem>>, %arg22: memref<1x32xf32, #tpu.memory_space<vmem>>, %arg23: memref<1x32xf32, #tpu.memory_space<vmem>>, %arg24: memref<1x32xf32, #tpu.memory_space<vmem>>, %arg25: memref<32x32xf32, #tpu.memory_space<vmem>>, %arg26: memref<1x32xf32, #tpu.memory_space<vmem>>, %arg27: memref<1x8x32xf32, #tpu.memory_space<vmem>>) attributes {dimension_semantics = [#tpu.dimension_semantics<parallel>], iteration_bounds = array<i64: 2>, scalar_prefetch = 0 : i64, scratch_operands = 0 : i64, tpu.core_type = #tpu.core_type<tc>, window_params = [{transform_indices = @transform_0, window_bounds = array<i64: 1, 8, 32>}, {transform_indices = @transform_1, window_bounds = array<i64: 1, 6, 8>}, {transform_indices = @transform_2, window_bounds = array<i64: 1, 10, 1>}, {transform_indices = @transform_3, window_bounds = array<i64: 1, 6, 2>}, {transform_indices = @transform_4, window_bounds = array<i64: 1, 2, 6>}, {transform_indices = @transform_5, window_bounds = array<i64: 1, 1, 10>}, {pipeline_mode = #tpu.pipeline_mode<synchronous>, transform_indices = @transform_6, window_bounds = array<i64: 8, 32>}, {pipeline_mode = #tpu.pipeline_mode<synchronous>, transform_indices = @transform_7, window_bounds = array<i64: 1, 32>}, {pipeline_mode = #tpu.pipeline_mode<synchronous>, transform_indices = @transform_8, window_bounds = array<i64: 1, 32>}, {pipeline_mode = #tpu.pipeline_mode<synchronous>, transform_indices = @transform_9, window_bounds = array<i64: 1, 32>}, {pipeline_mode = #tpu.pipeline_mode<synchronous>, transform_indices = @transform_10, window_bounds = array<i64: 32, 32>}, {pipeline_mode = #tpu.pipeline_mode<synchronous>, transform_indices = @transform_11, window_bounds = array<i64: 1, 32>}, {pipeline_mode = #tpu.pipeline_mode<synchronous>, transform_indices = @transform_12, window_bounds = array<i64: 1, 32>}, {pipeline_mode = #tpu.pipeline_mode<synchronous>, transform_indices = @transform_13, window_bounds = array<i64: 1, 32>}, {pipeline_mode = #tpu.pipeline_mode<synchronous>, transform_indices = @transform_14, window_bounds = array<i64: 32, 32>}, {pipeline_mode = #tpu.pipeline_mode<synchronous>, transform_indices = @transform_15, window_bounds = array<i64: 1, 32>}, {pipeline_mode = #tpu.pipeline_mode<synchronous>, transform_indices = @transform_16, window_bounds = array<i64: 1, 32>}, {pipeline_mode = #tpu.pipeline_mode<synchronous>, transform_indices = @transform_17, window_bounds = array<i64: 1, 32>}, {pipeline_mode = #tpu.pipeline_mode<synchronous>, transform_indices = @transform_18, window_bounds = array<i64: 32, 1024>}, {pipeline_mode = #tpu.pipeline_mode<synchronous>, transform_indices = @transform_19, window_bounds = array<i64: 1, 1024>}, {pipeline_mode = #tpu.pipeline_mode<synchronous>, transform_indices = @transform_20, window_bounds = array<i64: 1, 32>}, {pipeline_mode = #tpu.pipeline_mode<synchronous>, transform_indices = @transform_21, window_bounds = array<i64: 1, 32>}, {pipeline_mode = #tpu.pipeline_mode<synchronous>, transform_indices = @transform_22, window_bounds = array<i64: 1, 32>}, {pipeline_mode = #tpu.pipeline_mode<synchronous>, transform_indices = @transform_23, window_bounds = array<i64: 1, 32>}, {pipeline_mode = #tpu.pipeline_mode<synchronous>, transform_indices = @transform_24, window_bounds = array<i64: 32, 32>}, {pipeline_mode = #tpu.pipeline_mode<synchronous>, transform_indices = @transform_25, window_bounds = array<i64: 1, 32>}, {transform_indices = @transform_26, window_bounds = array<i64: 1, 8, 32>}]} {
    %c0 = arith.constant 0 : index
    %c0_0 = arith.constant 0 : index
    %c0_1 = arith.constant 0 : index
    %0 = vector.load %arg1[%c0, %c0_0, %c0_1] : memref<1x8x32xf32, #tpu.memory_space<vmem>>, vector<1x8x32xf32>
    %1 = vector.shape_cast %0 : vector<1x8x32xf32> to vector<8x32xf32>
    %c0_2 = arith.constant 0 : index
    %c0_3 = arith.constant 0 : index
    %c0_4 = arith.constant 0 : index
    %2 = vector.load %arg3[%c0_2, %c0_3, %c0_4] : memref<1x10x1xf32, #tpu.memory_space<vmem>>, vector<1x10x1xf32>
    %3 = vector.shape_cast %2 : vector<1x10x1xf32> to vector<10x1xf32>
    %c0_5 = arith.constant 0 : index
    %c0_6 = arith.constant 0 : index
    %c0_7 = arith.constant 0 : index
    %4 = vector.load %arg6[%c0_5, %c0_6, %c0_7] : memref<1x1x10xi32, #tpu.memory_space<vmem>>, vector<1x1x10xi32>
    %5 = vector.shape_cast %4 : vector<1x1x10xi32> to vector<1x10xi32>
    %c0_8 = arith.constant 0 : index
    %c0_9 = arith.constant 0 : index
    %6 = vector.load %arg21[%c0_8, %c0_9] : memref<1x32xf32, #tpu.memory_space<vmem>>, vector<1x32xf32>
    %7 = vector.broadcast %3 : vector<10x1xf32> to vector<10x32xf32>
    %8 = vector.broadcast %6 : vector<1x32xf32> to vector<10x32xf32>
    %9 = arith.mulf %7, %8 : vector<10x32xf32>
    %c0_10 = arith.constant 0 : index
    %c0_11 = arith.constant 0 : index
    %10 = vector.load %arg22[%c0_10, %c0_11] : memref<1x32xf32, #tpu.memory_space<vmem>>, vector<1x32xf32>
    %11 = vector.broadcast %10 : vector<1x32xf32> to vector<10x32xf32>
    %12 = arith.addf %9, %11 : vector<10x32xf32>
    %cst = arith.constant 0.000000e+00 : f32
    %13 = vector.broadcast %cst : f32 to vector<10x32xf32>
    %14 = arith.maximumf %12, %13 : vector<10x32xf32>
    %c0_12 = arith.constant 0 : index
    %c0_13 = arith.constant 0 : index
    %15 = vector.load %arg23[%c0_12, %c0_13] : memref<1x32xf32, #tpu.memory_space<vmem>>, vector<1x32xf32>
    %c0_14 = arith.constant 0 : index
    %c0_15 = arith.constant 0 : index
    %16 = vector.load %arg24[%c0_14, %c0_15] : memref<1x32xf32, #tpu.memory_space<vmem>>, vector<1x32xf32>
    %cst_16 = arith.constant dense<0.000000e+00> : vector<10xf32>
    %17 = vector.multi_reduction <add>, %14, %cst_16 [1] : vector<10x32xf32> to vector<10xf32>
    %18 = vector.shape_cast %17 : vector<10xf32> to vector<10x1xf32>
    %cst_17 = arith.constant 3.200000e+01 : f32
    %19 = vector.broadcast %cst_17 : f32 to vector<10x1xf32>
    %20 = arith.divf %18, %19 : vector<10x1xf32>
    %21 = vector.broadcast %20 : vector<10x1xf32> to vector<10x32xf32>
    %22 = arith.subf %14, %21 : vector<10x32xf32>
    %23 = arith.mulf %22, %22 : vector<10x32xf32>
    %cst_18 = arith.constant dense<0.000000e+00> : vector<10xf32>
    %24 = vector.multi_reduction <add>, %23, %cst_18 [1] : vector<10x32xf32> to vector<10xf32>
    %25 = vector.shape_cast %24 : vector<10xf32> to vector<10x1xf32>
    %cst_19 = arith.constant 3.200000e+01 : f32
    %26 = vector.broadcast %cst_19 : f32 to vector<10x1xf32>
    %27 = arith.divf %25, %26 : vector<10x1xf32>
    %28 = vector.broadcast %20 : vector<10x1xf32> to vector<10x32xf32>
    %29 = arith.subf %14, %28 : vector<10x32xf32>
    %cst_20 = arith.constant 9.99999974E-6 : f32
    %30 = vector.broadcast %cst_20 : f32 to vector<10x1xf32>
    %31 = arith.addf %27, %30 : vector<10x1xf32>
    %32 = math.rsqrt %31 : vector<10x1xf32>
    %33 = vector.broadcast %32 : vector<10x1xf32> to vector<10x32xf32>
    %34 = arith.mulf %29, %33 : vector<10x32xf32>
    %35 = vector.broadcast %15 : vector<1x32xf32> to vector<10x32xf32>
    %36 = arith.mulf %34, %35 : vector<10x32xf32>
    %37 = vector.broadcast %16 : vector<1x32xf32> to vector<10x32xf32>
    %38 = arith.addf %36, %37 : vector<10x32xf32>
    %c0_21 = arith.constant 0 : index
    %c0_22 = arith.constant 0 : index
    %39 = vector.load %arg25[%c0_21, %c0_22] : memref<32x32xf32, #tpu.memory_space<vmem>>, vector<32x32xf32>
    %cst_23 = arith.constant dense<0.000000e+00> : vector<10x32xf32>
    %40 = tpu.matmul %38, %39, %cst_23 {dimension_numbers = #tpu.dot_dimension_numbers<[1], [0], [0], [1], [0, 0, 1, 1], [], []>} : vector<10x32xf32>, vector<32x32xf32>, vector<10x32xf32> -> vector<10x32xf32>
    %c0_24 = arith.constant 0 : index
    %c0_25 = arith.constant 0 : index
    %41 = vector.load %arg26[%c0_24, %c0_25] : memref<1x32xf32, #tpu.memory_space<vmem>>, vector<1x32xf32>
    %42 = vector.broadcast %41 : vector<1x32xf32> to vector<10x32xf32>
    %43 = arith.addf %40, %42 : vector<10x32xf32>
    %44 = math.tanh %43 : vector<10x32xf32>
    %cst_26 = arith.constant -9.990000e+02 : f32
    %45 = vector.broadcast %cst_26 : f32 to vector<10x1xf32>
    %46 = arith.cmpf oeq, %3, %45 : vector<10x1xf32>
    %cst_27 = arith.constant 0.000000e+00 : f32
    %47 = vector.shape_cast %46 : vector<10x1xi1> to vector<10x1xi1>
    %48 = vector.broadcast %47 : vector<10x1xi1> to vector<10x32xi1>
    %49 = vector.broadcast %cst_27 : f32 to vector<10x32xf32>
    %50 = arith.select %48, %49, %44 : vector<10x32xi1>, vector<10x32xf32>
    %cst_28 = arith.constant 0.000000e+00 : f32
    %51 = vector.broadcast %cst_28 : f32 to vector<8x32xf32>
    %c0_29 = arith.constant 0 : index
    %c0_30 = arith.constant 0 : index
    %c0_31 = arith.constant 0 : index
    %52 = vector.load %arg2[%c0_29, %c0_30, %c0_31] : memref<1x6x8xf32, #tpu.memory_space<vmem>>, vector<1x6x8xf32>
    %53 = vector.shape_cast %52 : vector<1x6x8xf32> to vector<6x8xf32>
    %c0_32 = arith.constant 0 : index
    %c0_33 = arith.constant 0 : index
    %c0_34 = arith.constant 0 : index
    %54 = vector.load %arg4[%c0_32, %c0_33, %c0_34] : memref<1x6x2xi32, #tpu.memory_space<vmem>>, vector<1x6x1xi32>
    %55 = vector.shape_cast %54 : vector<1x6x1xi32> to vector<6x1xi32>
    %c0_35 = arith.constant 0 : index
    %c0_36 = arith.constant 0 : index
    %c1 = arith.constant 1 : index
    %56 = vector.load %arg4[%c0_35, %c0_36, %c1] : memref<1x6x2xi32, #tpu.memory_space<vmem>>, vector<1x6x1xi32>
    %57 = vector.shape_cast %56 : vector<1x6x1xi32> to vector<6x1xi32>
    %c0_37 = arith.constant 0 : index
    %c0_38 = arith.constant 0 : index
    %c0_39 = arith.constant 0 : index
    %58 = vector.load %arg5[%c0_37, %c0_38, %c0_39] : memref<1x2x6xi32, #tpu.memory_space<vmem>>, vector<1x1x6xi32>
    %59 = vector.shape_cast %58 : vector<1x1x6xi32> to vector<1x6xi32>
    %c0_40 = arith.constant 0 : index
    %c1_41 = arith.constant 1 : index
    %c0_42 = arith.constant 0 : index
    %60 = vector.load %arg5[%c0_40, %c1_41, %c0_42] : memref<1x2x6xi32, #tpu.memory_space<vmem>>, vector<1x1x6xi32>
    %61 = vector.shape_cast %60 : vector<1x1x6xi32> to vector<1x6xi32>
    %c0_43 = arith.constant 0 : index
    %c0_44 = arith.constant 0 : index
    %62 = vector.load %arg7[%c0_43, %c0_44] : memref<8x32xf32, #tpu.memory_space<vmem>>, vector<8x32xf32>
    %cst_45 = arith.constant dense<0.000000e+00> : vector<6x32xf32>
    %63 = tpu.matmul %53, %62, %cst_45 {dimension_numbers = #tpu.dot_dimension_numbers<[1], [0], [0], [1], [0, 0, 1, 1], [], []>} : vector<6x8xf32>, vector<8x32xf32>, vector<6x32xf32> -> vector<6x32xf32>
    %c0_46 = arith.constant 0 : index
    %c0_47 = arith.constant 0 : index
    %64 = vector.load %arg8[%c0_46, %c0_47] : memref<1x32xf32, #tpu.memory_space<vmem>>, vector<1x32xf32>
    %65 = vector.broadcast %64 : vector<1x32xf32> to vector<6x32xf32>
    %66 = arith.addf %63, %65 : vector<6x32xf32>
    %cst_48 = arith.constant 0.000000e+00 : f32
    %67 = vector.broadcast %cst_48 : f32 to vector<6x32xf32>
    %68 = arith.maximumf %66, %67 : vector<6x32xf32>
    %c0_49 = arith.constant 0 : index
    %c0_50 = arith.constant 0 : index
    %69 = vector.load %arg9[%c0_49, %c0_50] : memref<1x32xf32, #tpu.memory_space<vmem>>, vector<1x32xf32>
    %c0_51 = arith.constant 0 : index
    %c0_52 = arith.constant 0 : index
    %70 = vector.load %arg10[%c0_51, %c0_52] : memref<1x32xf32, #tpu.memory_space<vmem>>, vector<1x32xf32>
    %cst_53 = arith.constant dense<0.000000e+00> : vector<6xf32>
    %71 = vector.multi_reduction <add>, %68, %cst_53 [1] : vector<6x32xf32> to vector<6xf32>
    %72 = vector.shape_cast %71 : vector<6xf32> to vector<6x1xf32>
    %cst_54 = arith.constant 3.200000e+01 : f32
    %73 = vector.broadcast %cst_54 : f32 to vector<6x1xf32>
    %74 = arith.divf %72, %73 : vector<6x1xf32>
    %75 = vector.broadcast %74 : vector<6x1xf32> to vector<6x32xf32>
    %76 = arith.subf %68, %75 : vector<6x32xf32>
    %77 = arith.mulf %76, %76 : vector<6x32xf32>
    %cst_55 = arith.constant dense<0.000000e+00> : vector<6xf32>
    %78 = vector.multi_reduction <add>, %77, %cst_55 [1] : vector<6x32xf32> to vector<6xf32>
    %79 = vector.shape_cast %78 : vector<6xf32> to vector<6x1xf32>
    %cst_56 = arith.constant 3.200000e+01 : f32
    %80 = vector.broadcast %cst_56 : f32 to vector<6x1xf32>
    %81 = arith.divf %79, %80 : vector<6x1xf32>
    %82 = vector.broadcast %74 : vector<6x1xf32> to vector<6x32xf32>
    %83 = arith.subf %68, %82 : vector<6x32xf32>
    %cst_57 = arith.constant 9.99999974E-6 : f32
    %84 = vector.broadcast %cst_57 : f32 to vector<6x1xf32>
    %85 = arith.addf %81, %84 : vector<6x1xf32>
    %86 = math.rsqrt %85 : vector<6x1xf32>
    %87 = vector.broadcast %86 : vector<6x1xf32> to vector<6x32xf32>
    %88 = arith.mulf %83, %87 : vector<6x32xf32>
    %89 = vector.broadcast %69 : vector<1x32xf32> to vector<6x32xf32>
    %90 = arith.mulf %88, %89 : vector<6x32xf32>
    %91 = vector.broadcast %70 : vector<1x32xf32> to vector<6x32xf32>
    %92 = arith.addf %90, %91 : vector<6x32xf32>
    %c0_58 = arith.constant 0 : index
    %c0_59 = arith.constant 0 : index
    %93 = vector.load %arg11[%c0_58, %c0_59] : memref<32x32xf32, #tpu.memory_space<vmem>>, vector<32x32xf32>
    %cst_60 = arith.constant dense<0.000000e+00> : vector<6x32xf32>
    %94 = tpu.matmul %92, %93, %cst_60 {dimension_numbers = #tpu.dot_dimension_numbers<[1], [0], [0], [1], [0, 0, 1, 1], [], []>} : vector<6x32xf32>, vector<32x32xf32>, vector<6x32xf32> -> vector<6x32xf32>
    %c0_61 = arith.constant 0 : index
    %c0_62 = arith.constant 0 : index
    %95 = vector.load %arg12[%c0_61, %c0_62] : memref<1x32xf32, #tpu.memory_space<vmem>>, vector<1x32xf32>
    %96 = vector.broadcast %95 : vector<1x32xf32> to vector<6x32xf32>
    %97 = arith.addf %94, %96 : vector<6x32xf32>
    %cst_63 = arith.constant 0.000000e+00 : f32
    %98 = vector.broadcast %cst_63 : f32 to vector<6x32xf32>
    %99 = arith.maximumf %97, %98 : vector<6x32xf32>
    %c0_64 = arith.constant 0 : index
    %c0_65 = arith.constant 0 : index
    %100 = vector.load %arg13[%c0_64, %c0_65] : memref<1x32xf32, #tpu.memory_space<vmem>>, vector<1x32xf32>
    %c0_66 = arith.constant 0 : index
    %c0_67 = arith.constant 0 : index
    %101 = vector.load %arg14[%c0_66, %c0_67] : memref<1x32xf32, #tpu.memory_space<vmem>>, vector<1x32xf32>
    %cst_68 = arith.constant dense<0.000000e+00> : vector<6xf32>
    %102 = vector.multi_reduction <add>, %99, %cst_68 [1] : vector<6x32xf32> to vector<6xf32>
    %103 = vector.shape_cast %102 : vector<6xf32> to vector<6x1xf32>
    %cst_69 = arith.constant 3.200000e+01 : f32
    %104 = vector.broadcast %cst_69 : f32 to vector<6x1xf32>
    %105 = arith.divf %103, %104 : vector<6x1xf32>
    %106 = vector.broadcast %105 : vector<6x1xf32> to vector<6x32xf32>
    %107 = arith.subf %99, %106 : vector<6x32xf32>
    %108 = arith.mulf %107, %107 : vector<6x32xf32>
    %cst_70 = arith.constant dense<0.000000e+00> : vector<6xf32>
    %109 = vector.multi_reduction <add>, %108, %cst_70 [1] : vector<6x32xf32> to vector<6xf32>
    %110 = vector.shape_cast %109 : vector<6xf32> to vector<6x1xf32>
    %cst_71 = arith.constant 3.200000e+01 : f32
    %111 = vector.broadcast %cst_71 : f32 to vector<6x1xf32>
    %112 = arith.divf %110, %111 : vector<6x1xf32>
    %113 = vector.broadcast %105 : vector<6x1xf32> to vector<6x32xf32>
    %114 = arith.subf %99, %113 : vector<6x32xf32>
    %cst_72 = arith.constant 9.99999974E-6 : f32
    %115 = vector.broadcast %cst_72 : f32 to vector<6x1xf32>
    %116 = arith.addf %112, %115 : vector<6x1xf32>
    %117 = math.rsqrt %116 : vector<6x1xf32>
    %118 = vector.broadcast %117 : vector<6x1xf32> to vector<6x32xf32>
    %119 = arith.mulf %114, %118 : vector<6x32xf32>
    %120 = vector.broadcast %100 : vector<1x32xf32> to vector<6x32xf32>
    %121 = arith.mulf %119, %120 : vector<6x32xf32>
    %122 = vector.broadcast %101 : vector<1x32xf32> to vector<6x32xf32>
    %123 = arith.addf %121, %122 : vector<6x32xf32>
    %c0_73 = arith.constant 0 : index
    %c0_74 = arith.constant 0 : index
    %124 = vector.load %arg15[%c0_73, %c0_74] : memref<32x32xf32, #tpu.memory_space<vmem>>, vector<32x32xf32>
    %cst_75 = arith.constant dense<0.000000e+00> : vector<6x32xf32>
    %125 = tpu.matmul %123, %124, %cst_75 {dimension_numbers = #tpu.dot_dimension_numbers<[1], [0], [0], [1], [0, 0, 1, 1], [], []>} : vector<6x32xf32>, vector<32x32xf32>, vector<6x32xf32> -> vector<6x32xf32>
    %c0_76 = arith.constant 0 : index
    %c0_77 = arith.constant 0 : index
    %126 = vector.load %arg16[%c0_76, %c0_77] : memref<1x32xf32, #tpu.memory_space<vmem>>, vector<1x32xf32>
    %127 = vector.broadcast %126 : vector<1x32xf32> to vector<6x32xf32>
    %128 = arith.addf %125, %127 : vector<6x32xf32>
    %cst_78 = arith.constant 0.000000e+00 : f32
    %129 = vector.broadcast %cst_78 : f32 to vector<6x32xf32>
    %130 = arith.maximumf %128, %129 : vector<6x32xf32>
    %c0_79 = arith.constant 0 : index
    %c0_80 = arith.constant 0 : index
    %131 = vector.load %arg17[%c0_79, %c0_80] : memref<1x32xf32, #tpu.memory_space<vmem>>, vector<1x32xf32>
    %c0_81 = arith.constant 0 : index
    %c0_82 = arith.constant 0 : index
    %132 = vector.load %arg18[%c0_81, %c0_82] : memref<1x32xf32, #tpu.memory_space<vmem>>, vector<1x32xf32>
    %cst_83 = arith.constant dense<0.000000e+00> : vector<6xf32>
    %133 = vector.multi_reduction <add>, %130, %cst_83 [1] : vector<6x32xf32> to vector<6xf32>
    %134 = vector.shape_cast %133 : vector<6xf32> to vector<6x1xf32>
    %cst_84 = arith.constant 3.200000e+01 : f32
    %135 = vector.broadcast %cst_84 : f32 to vector<6x1xf32>
    %136 = arith.divf %134, %135 : vector<6x1xf32>
    %137 = vector.broadcast %136 : vector<6x1xf32> to vector<6x32xf32>
    %138 = arith.subf %130, %137 : vector<6x32xf32>
    %139 = arith.mulf %138, %138 : vector<6x32xf32>
    %cst_85 = arith.constant dense<0.000000e+00> : vector<6xf32>
    %140 = vector.multi_reduction <add>, %139, %cst_85 [1] : vector<6x32xf32> to vector<6xf32>
    %141 = vector.shape_cast %140 : vector<6xf32> to vector<6x1xf32>
    %cst_86 = arith.constant 3.200000e+01 : f32
    %142 = vector.broadcast %cst_86 : f32 to vector<6x1xf32>
    %143 = arith.divf %141, %142 : vector<6x1xf32>
    %144 = vector.broadcast %136 : vector<6x1xf32> to vector<6x32xf32>
    %145 = arith.subf %130, %144 : vector<6x32xf32>
    %cst_87 = arith.constant 9.99999974E-6 : f32
    %146 = vector.broadcast %cst_87 : f32 to vector<6x1xf32>
    %147 = arith.addf %143, %146 : vector<6x1xf32>
    %148 = math.rsqrt %147 : vector<6x1xf32>
    %149 = vector.broadcast %148 : vector<6x1xf32> to vector<6x32xf32>
    %150 = arith.mulf %145, %149 : vector<6x32xf32>
    %151 = vector.broadcast %131 : vector<1x32xf32> to vector<6x32xf32>
    %152 = arith.mulf %150, %151 : vector<6x32xf32>
    %153 = vector.broadcast %132 : vector<1x32xf32> to vector<6x32xf32>
    %154 = arith.addf %152, %153 : vector<6x32xf32>
    %c0_88 = arith.constant 0 : index
    %c0_89 = arith.constant 0 : index
    %155 = vector.load %arg19[%c0_88, %c0_89] : memref<32x1024xf32, #tpu.memory_space<vmem>>, vector<32x1024xf32>
    %cst_90 = arith.constant dense<0.000000e+00> : vector<6x1024xf32>
    %156 = tpu.matmul %154, %155, %cst_90 {dimension_numbers = #tpu.dot_dimension_numbers<[1], [0], [0], [1], [0, 0, 1, 1], [], []>} : vector<6x32xf32>, vector<32x1024xf32>, vector<6x1024xf32> -> vector<6x1024xf32>
    %c0_91 = arith.constant 0 : index
    %c0_92 = arith.constant 0 : index
    %157 = vector.load %arg20[%c0_91, %c0_92] : memref<1x1024xf32, #tpu.memory_space<vmem>>, vector<1x1024xf32>
    %158 = vector.broadcast %157 : vector<1x1024xf32> to vector<6x1024xf32>
    %159 = arith.addf %156, %158 : vector<6x1024xf32>
    %160 = tpu.iota {dimensions = array<i32: 1>} : vector<6x8xi32>
    %161 = vector.broadcast %57 : vector<6x1xi32> to vector<6x8xi32>
    %162 = arith.cmpi eq, %161, %160 : vector<6x8xi32>
    %163 = arith.extui %162 : vector<6x8xi1> to vector<6x8xi32>
    %164 = arith.sitofp %163 : vector<6x8xi32> to vector<6x8xf32>
    %cst_93 = arith.constant dense<0.000000e+00> : vector<6x32xf32>
    %165 = tpu.matmul %164, %1, %cst_93 {dimension_numbers = #tpu.dot_dimension_numbers<[1], [0], [0], [1], [0, 0, 1, 1], [], []>} : vector<6x8xf32>, vector<8x32xf32>, vector<6x32xf32> -> vector<6x32xf32>
    %166 = vector.broadcast %55 : vector<6x1xi32> to vector<6x8xi32>
    %167 = arith.cmpi eq, %166, %160 : vector<6x8xi32>
    %168 = arith.extui %167 : vector<6x8xi1> to vector<6x8xi32>
    %169 = arith.sitofp %168 : vector<6x8xi32> to vector<6x8xf32>
    %cst_94 = arith.constant dense<0.000000e+00> : vector<6x32xf32>
    %170 = tpu.matmul %169, %1, %cst_94 {dimension_numbers = #tpu.dot_dimension_numbers<[1], [0], [0], [1], [0, 0, 1, 1], [], []>} : vector<6x8xf32>, vector<8x32xf32>, vector<6x32xf32> -> vector<6x32xf32>
    %171 = tpu.iota {dimensions = array<i32: 0>} : vector<6x10xi32>
    %c0_i32 = arith.constant 0 : i32
    %172 = vector.broadcast %c0_i32 : i32 to vector<6x10xi32>
    %173 = arith.addi %171, %172 : vector<6x10xi32>
    %174 = vector.broadcast %5 : vector<1x10xi32> to vector<6x10xi32>
    %175 = arith.cmpi eq, %173, %174 : vector<6x10xi32>
    %176 = arith.extui %175 : vector<6x10xi1> to vector<6x10xi32>
    %177 = arith.sitofp %176 : vector<6x10xi32> to vector<6x10xf32>
    %c6_i32 = arith.constant 6 : i32
    %178 = vector.broadcast %c6_i32 : i32 to vector<6x10xi32>
    %179 = arith.addi %173, %178 : vector<6x10xi32>
    %180 = vector.broadcast %5 : vector<1x10xi32> to vector<6x10xi32>
    %181 = arith.cmpi eq, %179, %180 : vector<6x10xi32>
    %182 = arith.extui %181 : vector<6x10xi1> to vector<6x10xi32>
    %183 = arith.sitofp %182 : vector<6x10xi32> to vector<6x10xf32>
    %cst_95 = arith.constant 1.000000e+00 : f32
    %184 = vector.broadcast %cst_95 : f32 to vector<10x1xf32>
    %cst_96 = arith.constant dense<0.000000e+00> : vector<6x1xf32>
    %185 = tpu.matmul %177, %184, %cst_96 {dimension_numbers = #tpu.dot_dimension_numbers<[1], [0], [0], [1], [0, 0, 1, 1], [], []>} : vector<6x10xf32>, vector<10x1xf32>, vector<6x1xf32> -> vector<6x1xf32>
    %cst_97 = arith.constant 1.000000e+00 : f32
    %186 = vector.broadcast %cst_97 : f32 to vector<6x1xf32>
    %187 = arith.maximumf %185, %186 : vector<6x1xf32>
    %cst_98 = arith.constant dense<0.000000e+00> : vector<6x1xf32>
    %188 = tpu.matmul %183, %184, %cst_98 {dimension_numbers = #tpu.dot_dimension_numbers<[1], [0], [0], [1], [0, 0, 1, 1], [], []>} : vector<6x10xf32>, vector<10x1xf32>, vector<6x1xf32> -> vector<6x1xf32>
    %cst_99 = arith.constant 1.000000e+00 : f32
    %189 = vector.broadcast %cst_99 : f32 to vector<6x1xf32>
    %190 = arith.maximumf %188, %189 : vector<6x1xf32>
    %cst_100 = arith.constant dense<0.000000e+00> : vector<6x32xf32>
    %191 = tpu.matmul %177, %50, %cst_100 {dimension_numbers = #tpu.dot_dimension_numbers<[1], [0], [0], [1], [0, 0, 1, 1], [], []>} : vector<6x10xf32>, vector<10x32xf32>, vector<6x32xf32> -> vector<6x32xf32>
    %cst_101 = arith.constant 1.000000e+00 : f32
    %192 = vector.broadcast %cst_101 : f32 to vector<6x32xf32>
    %193 = arith.addf %192, %191 : vector<6x32xf32>
    %194 = vector.broadcast %187 : vector<6x1xf32> to vector<6x32xf32>
    %195 = arith.divf %193, %194 : vector<6x32xf32>
    %cst_102 = arith.constant dense<0.000000e+00> : vector<6x32xf32>
    %196 = tpu.matmul %183, %50, %cst_102 {dimension_numbers = #tpu.dot_dimension_numbers<[1], [0], [0], [1], [0, 0, 1, 1], [], []>} : vector<6x10xf32>, vector<10x32xf32>, vector<6x32xf32> -> vector<6x32xf32>
    %cst_103 = arith.constant 1.000000e+00 : f32
    %197 = vector.broadcast %cst_103 : f32 to vector<6x32xf32>
    %198 = arith.addf %197, %196 : vector<6x32xf32>
    %199 = vector.broadcast %190 : vector<6x1xf32> to vector<6x32xf32>
    %200 = arith.divf %198, %199 : vector<6x32xf32>
    %cst_104 = arith.constant 0.000000e+00 : f32
    %201 = vector.broadcast %cst_104 : f32 to vector<6x32xf32>
    %cst_105 = arith.constant 0.000000e+00 : f32
    %202 = vector.broadcast %cst_105 : f32 to vector<6x32xf32>
    %203 = vector.extract_strided_slice %159 {offsets = [0, 0], sizes = [6, 32], strides = [1, 1]} : vector<6x1024xf32> to vector<6x32xf32>
    %204 = vector.extract_strided_slice %165 {offsets = [0, 0], sizes = [6, 1], strides = [1, 1]} : vector<6x32xf32> to vector<6x1xf32>
    %205 = vector.broadcast %204 : vector<6x1xf32> to vector<6x32xf32>
    %206 = arith.mulf %205, %203 : vector<6x32xf32>
    %207 = arith.addf %201, %206 : vector<6x32xf32>
    %208 = vector.extract_strided_slice %170 {offsets = [0, 0], sizes = [6, 1], strides = [1, 1]} : vector<6x32xf32> to vector<6x1xf32>
    %209 = vector.broadcast %208 : vector<6x1xf32> to vector<6x32xf32>
    %210 = arith.mulf %209, %203 : vector<6x32xf32>
    %211 = arith.addf %202, %210 : vector<6x32xf32>
    %212 = vector.extract_strided_slice %159 {offsets = [0, 32], sizes = [6, 32], strides = [1, 1]} : vector<6x1024xf32> to vector<6x32xf32>
    %213 = vector.extract_strided_slice %165 {offsets = [0, 1], sizes = [6, 1], strides = [1, 1]} : vector<6x32xf32> to vector<6x1xf32>
    %214 = vector.broadcast %213 : vector<6x1xf32> to vector<6x32xf32>
    %215 = arith.mulf %214, %212 : vector<6x32xf32>
    %216 = arith.addf %207, %215 : vector<6x32xf32>
    %217 = vector.extract_strided_slice %170 {offsets = [0, 1], sizes = [6, 1], strides = [1, 1]} : vector<6x32xf32> to vector<6x1xf32>
    %218 = vector.broadcast %217 : vector<6x1xf32> to vector<6x32xf32>
    %219 = arith.mulf %218, %212 : vector<6x32xf32>
    %220 = arith.addf %211, %219 : vector<6x32xf32>
    %221 = vector.extract_strided_slice %159 {offsets = [0, 64], sizes = [6, 32], strides = [1, 1]} : vector<6x1024xf32> to vector<6x32xf32>
    %222 = vector.extract_strided_slice %165 {offsets = [0, 2], sizes = [6, 1], strides = [1, 1]} : vector<6x32xf32> to vector<6x1xf32>
    %223 = vector.broadcast %222 : vector<6x1xf32> to vector<6x32xf32>
    %224 = arith.mulf %223, %221 : vector<6x32xf32>
    %225 = arith.addf %216, %224 : vector<6x32xf32>
    %226 = vector.extract_strided_slice %170 {offsets = [0, 2], sizes = [6, 1], strides = [1, 1]} : vector<6x32xf32> to vector<6x1xf32>
    %227 = vector.broadcast %226 : vector<6x1xf32> to vector<6x32xf32>
    %228 = arith.mulf %227, %221 : vector<6x32xf32>
    %229 = arith.addf %220, %228 : vector<6x32xf32>
    %230 = vector.extract_strided_slice %159 {offsets = [0, 96], sizes = [6, 32], strides = [1, 1]} : vector<6x1024xf32> to vector<6x32xf32>
    %231 = vector.extract_strided_slice %165 {offsets = [0, 3], sizes = [6, 1], strides = [1, 1]} : vector<6x32xf32> to vector<6x1xf32>
    %232 = vector.broadcast %231 : vector<6x1xf32> to vector<6x32xf32>
    %233 = arith.mulf %232, %230 : vector<6x32xf32>
    %234 = arith.addf %225, %233 : vector<6x32xf32>
    %235 = vector.extract_strided_slice %170 {offsets = [0, 3], sizes = [6, 1], strides = [1, 1]} : vector<6x32xf32> to vector<6x1xf32>
    %236 = vector.broadcast %235 : vector<6x1xf32> to vector<6x32xf32>
    %237 = arith.mulf %236, %230 : vector<6x32xf32>
    %238 = arith.addf %229, %237 : vector<6x32xf32>
    %239 = vector.extract_strided_slice %159 {offsets = [0, 128], sizes = [6, 32], strides = [1, 1]} : vector<6x1024xf32> to vector<6x32xf32>
    %240 = vector.extract_strided_slice %165 {offsets = [0, 4], sizes = [6, 1], strides = [1, 1]} : vector<6x32xf32> to vector<6x1xf32>
    %241 = vector.broadcast %240 : vector<6x1xf32> to vector<6x32xf32>
    %242 = arith.mulf %241, %239 : vector<6x32xf32>
    %243 = arith.addf %234, %242 : vector<6x32xf32>
    %244 = vector.extract_strided_slice %170 {offsets = [0, 4], sizes = [6, 1], strides = [1, 1]} : vector<6x32xf32> to vector<6x1xf32>
    %245 = vector.broadcast %244 : vector<6x1xf32> to vector<6x32xf32>
    %246 = arith.mulf %245, %239 : vector<6x32xf32>
    %247 = arith.addf %238, %246 : vector<6x32xf32>
    %248 = vector.extract_strided_slice %159 {offsets = [0, 160], sizes = [6, 32], strides = [1, 1]} : vector<6x1024xf32> to vector<6x32xf32>
    %249 = vector.extract_strided_slice %165 {offsets = [0, 5], sizes = [6, 1], strides = [1, 1]} : vector<6x32xf32> to vector<6x1xf32>
    %250 = vector.broadcast %249 : vector<6x1xf32> to vector<6x32xf32>
    %251 = arith.mulf %250, %248 : vector<6x32xf32>
    %252 = arith.addf %243, %251 : vector<6x32xf32>
    %253 = vector.extract_strided_slice %170 {offsets = [0, 5], sizes = [6, 1], strides = [1, 1]} : vector<6x32xf32> to vector<6x1xf32>
    %254 = vector.broadcast %253 : vector<6x1xf32> to vector<6x32xf32>
    %255 = arith.mulf %254, %248 : vector<6x32xf32>
    %256 = arith.addf %247, %255 : vector<6x32xf32>
    %257 = vector.extract_strided_slice %159 {offsets = [0, 192], sizes = [6, 32], strides = [1, 1]} : vector<6x1024xf32> to vector<6x32xf32>
    %258 = vector.extract_strided_slice %165 {offsets = [0, 6], sizes = [6, 1], strides = [1, 1]} : vector<6x32xf32> to vector<6x1xf32>
    %259 = vector.broadcast %258 : vector<6x1xf32> to vector<6x32xf32>
    %260 = arith.mulf %259, %257 : vector<6x32xf32>
    %261 = arith.addf %252, %260 : vector<6x32xf32>
    %262 = vector.extract_strided_slice %170 {offsets = [0, 6], sizes = [6, 1], strides = [1, 1]} : vector<6x32xf32> to vector<6x1xf32>
    %263 = vector.broadcast %262 : vector<6x1xf32> to vector<6x32xf32>
    %264 = arith.mulf %263, %257 : vector<6x32xf32>
    %265 = arith.addf %256, %264 : vector<6x32xf32>
    %266 = vector.extract_strided_slice %159 {offsets = [0, 224], sizes = [6, 32], strides = [1, 1]} : vector<6x1024xf32> to vector<6x32xf32>
    %267 = vector.extract_strided_slice %165 {offsets = [0, 7], sizes = [6, 1], strides = [1, 1]} : vector<6x32xf32> to vector<6x1xf32>
    %268 = vector.broadcast %267 : vector<6x1xf32> to vector<6x32xf32>
    %269 = arith.mulf %268, %266 : vector<6x32xf32>
    %270 = arith.addf %261, %269 : vector<6x32xf32>
    %271 = vector.extract_strided_slice %170 {offsets = [0, 7], sizes = [6, 1], strides = [1, 1]} : vector<6x32xf32> to vector<6x1xf32>
    %272 = vector.broadcast %271 : vector<6x1xf32> to vector<6x32xf32>
    %273 = arith.mulf %272, %266 : vector<6x32xf32>
    %274 = arith.addf %265, %273 : vector<6x32xf32>
    %275 = vector.extract_strided_slice %159 {offsets = [0, 256], sizes = [6, 32], strides = [1, 1]} : vector<6x1024xf32> to vector<6x32xf32>
    %276 = vector.extract_strided_slice %165 {offsets = [0, 8], sizes = [6, 1], strides = [1, 1]} : vector<6x32xf32> to vector<6x1xf32>
    %277 = vector.broadcast %276 : vector<6x1xf32> to vector<6x32xf32>
    %278 = arith.mulf %277, %275 : vector<6x32xf32>
    %279 = arith.addf %270, %278 : vector<6x32xf32>
    %280 = vector.extract_strided_slice %170 {offsets = [0, 8], sizes = [6, 1], strides = [1, 1]} : vector<6x32xf32> to vector<6x1xf32>
    %281 = vector.broadcast %280 : vector<6x1xf32> to vector<6x32xf32>
    %282 = arith.mulf %281, %275 : vector<6x32xf32>
    %283 = arith.addf %274, %282 : vector<6x32xf32>
    %284 = vector.extract_strided_slice %159 {offsets = [0, 288], sizes = [6, 32], strides = [1, 1]} : vector<6x1024xf32> to vector<6x32xf32>
    %285 = vector.extract_strided_slice %165 {offsets = [0, 9], sizes = [6, 1], strides = [1, 1]} : vector<6x32xf32> to vector<6x1xf32>
    %286 = vector.broadcast %285 : vector<6x1xf32> to vector<6x32xf32>
    %287 = arith.mulf %286, %284 : vector<6x32xf32>
    %288 = arith.addf %279, %287 : vector<6x32xf32>
    %289 = vector.extract_strided_slice %170 {offsets = [0, 9], sizes = [6, 1], strides = [1, 1]} : vector<6x32xf32> to vector<6x1xf32>
    %290 = vector.broadcast %289 : vector<6x1xf32> to vector<6x32xf32>
    %291 = arith.mulf %290, %284 : vector<6x32xf32>
    %292 = arith.addf %283, %291 : vector<6x32xf32>
    %293 = vector.extract_strided_slice %159 {offsets = [0, 320], sizes = [6, 32], strides = [1, 1]} : vector<6x1024xf32> to vector<6x32xf32>
    %294 = vector.extract_strided_slice %165 {offsets = [0, 10], sizes = [6, 1], strides = [1, 1]} : vector<6x32xf32> to vector<6x1xf32>
    %295 = vector.broadcast %294 : vector<6x1xf32> to vector<6x32xf32>
    %296 = arith.mulf %295, %293 : vector<6x32xf32>
    %297 = arith.addf %288, %296 : vector<6x32xf32>
    %298 = vector.extract_strided_slice %170 {offsets = [0, 10], sizes = [6, 1], strides = [1, 1]} : vector<6x32xf32> to vector<6x1xf32>
    %299 = vector.broadcast %298 : vector<6x1xf32> to vector<6x32xf32>
    %300 = arith.mulf %299, %293 : vector<6x32xf32>
    %301 = arith.addf %292, %300 : vector<6x32xf32>
    %302 = vector.extract_strided_slice %159 {offsets = [0, 352], sizes = [6, 32], strides = [1, 1]} : vector<6x1024xf32> to vector<6x32xf32>
    %303 = vector.extract_strided_slice %165 {offsets = [0, 11], sizes = [6, 1], strides = [1, 1]} : vector<6x32xf32> to vector<6x1xf32>
    %304 = vector.broadcast %303 : vector<6x1xf32> to vector<6x32xf32>
    %305 = arith.mulf %304, %302 : vector<6x32xf32>
    %306 = arith.addf %297, %305 : vector<6x32xf32>
    %307 = vector.extract_strided_slice %170 {offsets = [0, 11], sizes = [6, 1], strides = [1, 1]} : vector<6x32xf32> to vector<6x1xf32>
    %308 = vector.broadcast %307 : vector<6x1xf32> to vector<6x32xf32>
    %309 = arith.mulf %308, %302 : vector<6x32xf32>
    %310 = arith.addf %301, %309 : vector<6x32xf32>
    %311 = vector.extract_strided_slice %159 {offsets = [0, 384], sizes = [6, 32], strides = [1, 1]} : vector<6x1024xf32> to vector<6x32xf32>
    %312 = vector.extract_strided_slice %165 {offsets = [0, 12], sizes = [6, 1], strides = [1, 1]} : vector<6x32xf32> to vector<6x1xf32>
    %313 = vector.broadcast %312 : vector<6x1xf32> to vector<6x32xf32>
    %314 = arith.mulf %313, %311 : vector<6x32xf32>
    %315 = arith.addf %306, %314 : vector<6x32xf32>
    %316 = vector.extract_strided_slice %170 {offsets = [0, 12], sizes = [6, 1], strides = [1, 1]} : vector<6x32xf32> to vector<6x1xf32>
    %317 = vector.broadcast %316 : vector<6x1xf32> to vector<6x32xf32>
    %318 = arith.mulf %317, %311 : vector<6x32xf32>
    %319 = arith.addf %310, %318 : vector<6x32xf32>
    %320 = vector.extract_strided_slice %159 {offsets = [0, 416], sizes = [6, 32], strides = [1, 1]} : vector<6x1024xf32> to vector<6x32xf32>
    %321 = vector.extract_strided_slice %165 {offsets = [0, 13], sizes = [6, 1], strides = [1, 1]} : vector<6x32xf32> to vector<6x1xf32>
    %322 = vector.broadcast %321 : vector<6x1xf32> to vector<6x32xf32>
    %323 = arith.mulf %322, %320 : vector<6x32xf32>
    %324 = arith.addf %315, %323 : vector<6x32xf32>
    %325 = vector.extract_strided_slice %170 {offsets = [0, 13], sizes = [6, 1], strides = [1, 1]} : vector<6x32xf32> to vector<6x1xf32>
    %326 = vector.broadcast %325 : vector<6x1xf32> to vector<6x32xf32>
    %327 = arith.mulf %326, %320 : vector<6x32xf32>
    %328 = arith.addf %319, %327 : vector<6x32xf32>
    %329 = vector.extract_strided_slice %159 {offsets = [0, 448], sizes = [6, 32], strides = [1, 1]} : vector<6x1024xf32> to vector<6x32xf32>
    %330 = vector.extract_strided_slice %165 {offsets = [0, 14], sizes = [6, 1], strides = [1, 1]} : vector<6x32xf32> to vector<6x1xf32>
    %331 = vector.broadcast %330 : vector<6x1xf32> to vector<6x32xf32>
    %332 = arith.mulf %331, %329 : vector<6x32xf32>
    %333 = arith.addf %324, %332 : vector<6x32xf32>
    %334 = vector.extract_strided_slice %170 {offsets = [0, 14], sizes = [6, 1], strides = [1, 1]} : vector<6x32xf32> to vector<6x1xf32>
    %335 = vector.broadcast %334 : vector<6x1xf32> to vector<6x32xf32>
    %336 = arith.mulf %335, %329 : vector<6x32xf32>
    %337 = arith.addf %328, %336 : vector<6x32xf32>
    %338 = vector.extract_strided_slice %159 {offsets = [0, 480], sizes = [6, 32], strides = [1, 1]} : vector<6x1024xf32> to vector<6x32xf32>
    %339 = vector.extract_strided_slice %165 {offsets = [0, 15], sizes = [6, 1], strides = [1, 1]} : vector<6x32xf32> to vector<6x1xf32>
    %340 = vector.broadcast %339 : vector<6x1xf32> to vector<6x32xf32>
    %341 = arith.mulf %340, %338 : vector<6x32xf32>
    %342 = arith.addf %333, %341 : vector<6x32xf32>
    %343 = vector.extract_strided_slice %170 {offsets = [0, 15], sizes = [6, 1], strides = [1, 1]} : vector<6x32xf32> to vector<6x1xf32>
    %344 = vector.broadcast %343 : vector<6x1xf32> to vector<6x32xf32>
    %345 = arith.mulf %344, %338 : vector<6x32xf32>
    %346 = arith.addf %337, %345 : vector<6x32xf32>
    %347 = vector.extract_strided_slice %159 {offsets = [0, 512], sizes = [6, 32], strides = [1, 1]} : vector<6x1024xf32> to vector<6x32xf32>
    %348 = vector.extract_strided_slice %165 {offsets = [0, 16], sizes = [6, 1], strides = [1, 1]} : vector<6x32xf32> to vector<6x1xf32>
    %349 = vector.broadcast %348 : vector<6x1xf32> to vector<6x32xf32>
    %350 = arith.mulf %349, %347 : vector<6x32xf32>
    %351 = arith.addf %342, %350 : vector<6x32xf32>
    %352 = vector.extract_strided_slice %170 {offsets = [0, 16], sizes = [6, 1], strides = [1, 1]} : vector<6x32xf32> to vector<6x1xf32>
    %353 = vector.broadcast %352 : vector<6x1xf32> to vector<6x32xf32>
    %354 = arith.mulf %353, %347 : vector<6x32xf32>
    %355 = arith.addf %346, %354 : vector<6x32xf32>
    %356 = vector.extract_strided_slice %159 {offsets = [0, 544], sizes = [6, 32], strides = [1, 1]} : vector<6x1024xf32> to vector<6x32xf32>
    %357 = vector.extract_strided_slice %165 {offsets = [0, 17], sizes = [6, 1], strides = [1, 1]} : vector<6x32xf32> to vector<6x1xf32>
    %358 = vector.broadcast %357 : vector<6x1xf32> to vector<6x32xf32>
    %359 = arith.mulf %358, %356 : vector<6x32xf32>
    %360 = arith.addf %351, %359 : vector<6x32xf32>
    %361 = vector.extract_strided_slice %170 {offsets = [0, 17], sizes = [6, 1], strides = [1, 1]} : vector<6x32xf32> to vector<6x1xf32>
    %362 = vector.broadcast %361 : vector<6x1xf32> to vector<6x32xf32>
    %363 = arith.mulf %362, %356 : vector<6x32xf32>
    %364 = arith.addf %355, %363 : vector<6x32xf32>
    %365 = vector.extract_strided_slice %159 {offsets = [0, 576], sizes = [6, 32], strides = [1, 1]} : vector<6x1024xf32> to vector<6x32xf32>
    %366 = vector.extract_strided_slice %165 {offsets = [0, 18], sizes = [6, 1], strides = [1, 1]} : vector<6x32xf32> to vector<6x1xf32>
    %367 = vector.broadcast %366 : vector<6x1xf32> to vector<6x32xf32>
    %368 = arith.mulf %367, %365 : vector<6x32xf32>
    %369 = arith.addf %360, %368 : vector<6x32xf32>
    %370 = vector.extract_strided_slice %170 {offsets = [0, 18], sizes = [6, 1], strides = [1, 1]} : vector<6x32xf32> to vector<6x1xf32>
    %371 = vector.broadcast %370 : vector<6x1xf32> to vector<6x32xf32>
    %372 = arith.mulf %371, %365 : vector<6x32xf32>
    %373 = arith.addf %364, %372 : vector<6x32xf32>
    %374 = vector.extract_strided_slice %159 {offsets = [0, 608], sizes = [6, 32], strides = [1, 1]} : vector<6x1024xf32> to vector<6x32xf32>
    %375 = vector.extract_strided_slice %165 {offsets = [0, 19], sizes = [6, 1], strides = [1, 1]} : vector<6x32xf32> to vector<6x1xf32>
    %376 = vector.broadcast %375 : vector<6x1xf32> to vector<6x32xf32>
    %377 = arith.mulf %376, %374 : vector<6x32xf32>
    %378 = arith.addf %369, %377 : vector<6x32xf32>
    %379 = vector.extract_strided_slice %170 {offsets = [0, 19], sizes = [6, 1], strides = [1, 1]} : vector<6x32xf32> to vector<6x1xf32>
    %380 = vector.broadcast %379 : vector<6x1xf32> to vector<6x32xf32>
    %381 = arith.mulf %380, %374 : vector<6x32xf32>
    %382 = arith.addf %373, %381 : vector<6x32xf32>
    %383 = vector.extract_strided_slice %159 {offsets = [0, 640], sizes = [6, 32], strides = [1, 1]} : vector<6x1024xf32> to vector<6x32xf32>
    %384 = vector.extract_strided_slice %165 {offsets = [0, 20], sizes = [6, 1], strides = [1, 1]} : vector<6x32xf32> to vector<6x1xf32>
    %385 = vector.broadcast %384 : vector<6x1xf32> to vector<6x32xf32>
    %386 = arith.mulf %385, %383 : vector<6x32xf32>
    %387 = arith.addf %378, %386 : vector<6x32xf32>
    %388 = vector.extract_strided_slice %170 {offsets = [0, 20], sizes = [6, 1], strides = [1, 1]} : vector<6x32xf32> to vector<6x1xf32>
    %389 = vector.broadcast %388 : vector<6x1xf32> to vector<6x32xf32>
    %390 = arith.mulf %389, %383 : vector<6x32xf32>
    %391 = arith.addf %382, %390 : vector<6x32xf32>
    %392 = vector.extract_strided_slice %159 {offsets = [0, 672], sizes = [6, 32], strides = [1, 1]} : vector<6x1024xf32> to vector<6x32xf32>
    %393 = vector.extract_strided_slice %165 {offsets = [0, 21], sizes = [6, 1], strides = [1, 1]} : vector<6x32xf32> to vector<6x1xf32>
    %394 = vector.broadcast %393 : vector<6x1xf32> to vector<6x32xf32>
    %395 = arith.mulf %394, %392 : vector<6x32xf32>
    %396 = arith.addf %387, %395 : vector<6x32xf32>
    %397 = vector.extract_strided_slice %170 {offsets = [0, 21], sizes = [6, 1], strides = [1, 1]} : vector<6x32xf32> to vector<6x1xf32>
    %398 = vector.broadcast %397 : vector<6x1xf32> to vector<6x32xf32>
    %399 = arith.mulf %398, %392 : vector<6x32xf32>
    %400 = arith.addf %391, %399 : vector<6x32xf32>
    %401 = vector.extract_strided_slice %159 {offsets = [0, 704], sizes = [6, 32], strides = [1, 1]} : vector<6x1024xf32> to vector<6x32xf32>
    %402 = vector.extract_strided_slice %165 {offsets = [0, 22], sizes = [6, 1], strides = [1, 1]} : vector<6x32xf32> to vector<6x1xf32>
    %403 = vector.broadcast %402 : vector<6x1xf32> to vector<6x32xf32>
    %404 = arith.mulf %403, %401 : vector<6x32xf32>
    %405 = arith.addf %396, %404 : vector<6x32xf32>
    %406 = vector.extract_strided_slice %170 {offsets = [0, 22], sizes = [6, 1], strides = [1, 1]} : vector<6x32xf32> to vector<6x1xf32>
    %407 = vector.broadcast %406 : vector<6x1xf32> to vector<6x32xf32>
    %408 = arith.mulf %407, %401 : vector<6x32xf32>
    %409 = arith.addf %400, %408 : vector<6x32xf32>
    %410 = vector.extract_strided_slice %159 {offsets = [0, 736], sizes = [6, 32], strides = [1, 1]} : vector<6x1024xf32> to vector<6x32xf32>
    %411 = vector.extract_strided_slice %165 {offsets = [0, 23], sizes = [6, 1], strides = [1, 1]} : vector<6x32xf32> to vector<6x1xf32>
    %412 = vector.broadcast %411 : vector<6x1xf32> to vector<6x32xf32>
    %413 = arith.mulf %412, %410 : vector<6x32xf32>
    %414 = arith.addf %405, %413 : vector<6x32xf32>
    %415 = vector.extract_strided_slice %170 {offsets = [0, 23], sizes = [6, 1], strides = [1, 1]} : vector<6x32xf32> to vector<6x1xf32>
    %416 = vector.broadcast %415 : vector<6x1xf32> to vector<6x32xf32>
    %417 = arith.mulf %416, %410 : vector<6x32xf32>
    %418 = arith.addf %409, %417 : vector<6x32xf32>
    %419 = vector.extract_strided_slice %159 {offsets = [0, 768], sizes = [6, 32], strides = [1, 1]} : vector<6x1024xf32> to vector<6x32xf32>
    %420 = vector.extract_strided_slice %165 {offsets = [0, 24], sizes = [6, 1], strides = [1, 1]} : vector<6x32xf32> to vector<6x1xf32>
    %421 = vector.broadcast %420 : vector<6x1xf32> to vector<6x32xf32>
    %422 = arith.mulf %421, %419 : vector<6x32xf32>
    %423 = arith.addf %414, %422 : vector<6x32xf32>
    %424 = vector.extract_strided_slice %170 {offsets = [0, 24], sizes = [6, 1], strides = [1, 1]} : vector<6x32xf32> to vector<6x1xf32>
    %425 = vector.broadcast %424 : vector<6x1xf32> to vector<6x32xf32>
    %426 = arith.mulf %425, %419 : vector<6x32xf32>
    %427 = arith.addf %418, %426 : vector<6x32xf32>
    %428 = vector.extract_strided_slice %159 {offsets = [0, 800], sizes = [6, 32], strides = [1, 1]} : vector<6x1024xf32> to vector<6x32xf32>
    %429 = vector.extract_strided_slice %165 {offsets = [0, 25], sizes = [6, 1], strides = [1, 1]} : vector<6x32xf32> to vector<6x1xf32>
    %430 = vector.broadcast %429 : vector<6x1xf32> to vector<6x32xf32>
    %431 = arith.mulf %430, %428 : vector<6x32xf32>
    %432 = arith.addf %423, %431 : vector<6x32xf32>
    %433 = vector.extract_strided_slice %170 {offsets = [0, 25], sizes = [6, 1], strides = [1, 1]} : vector<6x32xf32> to vector<6x1xf32>
    %434 = vector.broadcast %433 : vector<6x1xf32> to vector<6x32xf32>
    %435 = arith.mulf %434, %428 : vector<6x32xf32>
    %436 = arith.addf %427, %435 : vector<6x32xf32>
    %437 = vector.extract_strided_slice %159 {offsets = [0, 832], sizes = [6, 32], strides = [1, 1]} : vector<6x1024xf32> to vector<6x32xf32>
    %438 = vector.extract_strided_slice %165 {offsets = [0, 26], sizes = [6, 1], strides = [1, 1]} : vector<6x32xf32> to vector<6x1xf32>
    %439 = vector.broadcast %438 : vector<6x1xf32> to vector<6x32xf32>
    %440 = arith.mulf %439, %437 : vector<6x32xf32>
    %441 = arith.addf %432, %440 : vector<6x32xf32>
    %442 = vector.extract_strided_slice %170 {offsets = [0, 26], sizes = [6, 1], strides = [1, 1]} : vector<6x32xf32> to vector<6x1xf32>
    %443 = vector.broadcast %442 : vector<6x1xf32> to vector<6x32xf32>
    %444 = arith.mulf %443, %437 : vector<6x32xf32>
    %445 = arith.addf %436, %444 : vector<6x32xf32>
    %446 = vector.extract_strided_slice %159 {offsets = [0, 864], sizes = [6, 32], strides = [1, 1]} : vector<6x1024xf32> to vector<6x32xf32>
    %447 = vector.extract_strided_slice %165 {offsets = [0, 27], sizes = [6, 1], strides = [1, 1]} : vector<6x32xf32> to vector<6x1xf32>
    %448 = vector.broadcast %447 : vector<6x1xf32> to vector<6x32xf32>
    %449 = arith.mulf %448, %446 : vector<6x32xf32>
    %450 = arith.addf %441, %449 : vector<6x32xf32>
    %451 = vector.extract_strided_slice %170 {offsets = [0, 27], sizes = [6, 1], strides = [1, 1]} : vector<6x32xf32> to vector<6x1xf32>
    %452 = vector.broadcast %451 : vector<6x1xf32> to vector<6x32xf32>
    %453 = arith.mulf %452, %446 : vector<6x32xf32>
    %454 = arith.addf %445, %453 : vector<6x32xf32>
    %455 = vector.extract_strided_slice %159 {offsets = [0, 896], sizes = [6, 32], strides = [1, 1]} : vector<6x1024xf32> to vector<6x32xf32>
    %456 = vector.extract_strided_slice %165 {offsets = [0, 28], sizes = [6, 1], strides = [1, 1]} : vector<6x32xf32> to vector<6x1xf32>
    %457 = vector.broadcast %456 : vector<6x1xf32> to vector<6x32xf32>
    %458 = arith.mulf %457, %455 : vector<6x32xf32>
    %459 = arith.addf %450, %458 : vector<6x32xf32>
    %460 = vector.extract_strided_slice %170 {offsets = [0, 28], sizes = [6, 1], strides = [1, 1]} : vector<6x32xf32> to vector<6x1xf32>
    %461 = vector.broadcast %460 : vector<6x1xf32> to vector<6x32xf32>
    %462 = arith.mulf %461, %455 : vector<6x32xf32>
    %463 = arith.addf %454, %462 : vector<6x32xf32>
    %464 = vector.extract_strided_slice %159 {offsets = [0, 928], sizes = [6, 32], strides = [1, 1]} : vector<6x1024xf32> to vector<6x32xf32>
    %465 = vector.extract_strided_slice %165 {offsets = [0, 29], sizes = [6, 1], strides = [1, 1]} : vector<6x32xf32> to vector<6x1xf32>
    %466 = vector.broadcast %465 : vector<6x1xf32> to vector<6x32xf32>
    %467 = arith.mulf %466, %464 : vector<6x32xf32>
    %468 = arith.addf %459, %467 : vector<6x32xf32>
    %469 = vector.extract_strided_slice %170 {offsets = [0, 29], sizes = [6, 1], strides = [1, 1]} : vector<6x32xf32> to vector<6x1xf32>
    %470 = vector.broadcast %469 : vector<6x1xf32> to vector<6x32xf32>
    %471 = arith.mulf %470, %464 : vector<6x32xf32>
    %472 = arith.addf %463, %471 : vector<6x32xf32>
    %473 = vector.extract_strided_slice %159 {offsets = [0, 960], sizes = [6, 32], strides = [1, 1]} : vector<6x1024xf32> to vector<6x32xf32>
    %474 = vector.extract_strided_slice %165 {offsets = [0, 30], sizes = [6, 1], strides = [1, 1]} : vector<6x32xf32> to vector<6x1xf32>
    %475 = vector.broadcast %474 : vector<6x1xf32> to vector<6x32xf32>
    %476 = arith.mulf %475, %473 : vector<6x32xf32>
    %477 = arith.addf %468, %476 : vector<6x32xf32>
    %478 = vector.extract_strided_slice %170 {offsets = [0, 30], sizes = [6, 1], strides = [1, 1]} : vector<6x32xf32> to vector<6x1xf32>
    %479 = vector.broadcast %478 : vector<6x1xf32> to vector<6x32xf32>
    %480 = arith.mulf %479, %473 : vector<6x32xf32>
    %481 = arith.addf %472, %480 : vector<6x32xf32>
    %482 = vector.extract_strided_slice %159 {offsets = [0, 992], sizes = [6, 32], strides = [1, 1]} : vector<6x1024xf32> to vector<6x32xf32>
    %483 = vector.extract_strided_slice %165 {offsets = [0, 31], sizes = [6, 1], strides = [1, 1]} : vector<6x32xf32> to vector<6x1xf32>
    %484 = vector.broadcast %483 : vector<6x1xf32> to vector<6x32xf32>
    %485 = arith.mulf %484, %482 : vector<6x32xf32>
    %486 = arith.addf %477, %485 : vector<6x32xf32>
    %487 = vector.extract_strided_slice %170 {offsets = [0, 31], sizes = [6, 1], strides = [1, 1]} : vector<6x32xf32> to vector<6x1xf32>
    %488 = vector.broadcast %487 : vector<6x1xf32> to vector<6x32xf32>
    %489 = arith.mulf %488, %482 : vector<6x32xf32>
    %490 = arith.addf %481, %489 : vector<6x32xf32>
    %491 = vector.extract_strided_slice %53 {offsets = [0, 0], sizes = [6, 1], strides = [1, 1]} : vector<6x8xf32> to vector<6x1xf32>
    %cst_106 = arith.constant -9.990000e+02 : f32
    %492 = vector.broadcast %cst_106 : f32 to vector<6x1xf32>
    %493 = arith.cmpf oeq, %491, %492 : vector<6x1xf32>
    %cst_107 = arith.constant 0.000000e+00 : f32
    %494 = vector.shape_cast %493 : vector<6x1xi1> to vector<6x1xi1>
    %495 = vector.broadcast %494 : vector<6x1xi1> to vector<6x32xi1>
    %496 = vector.broadcast %cst_107 : f32 to vector<6x32xf32>
    %497 = arith.select %495, %496, %486 : vector<6x32xi1>, vector<6x32xf32>
    %cst_108 = arith.constant 0.176776692 : f32
    %498 = vector.broadcast %cst_108 : f32 to vector<6x32xf32>
    %499 = arith.mulf %195, %498 : vector<6x32xf32>
    %500 = arith.mulf %497, %499 : vector<6x32xf32>
    %cst_109 = arith.constant 0.000000e+00 : f32
    %501 = vector.shape_cast %493 : vector<6x1xi1> to vector<6x1xi1>
    %502 = vector.broadcast %501 : vector<6x1xi1> to vector<6x32xi1>
    %503 = vector.broadcast %cst_109 : f32 to vector<6x32xf32>
    %504 = arith.select %502, %503, %490 : vector<6x32xi1>, vector<6x32xf32>
    %cst_110 = arith.constant 0.176776692 : f32
    %505 = vector.broadcast %cst_110 : f32 to vector<6x32xf32>
    %506 = arith.mulf %200, %505 : vector<6x32xf32>
    %507 = arith.mulf %504, %506 : vector<6x32xf32>
    %508 = tpu.iota {dimensions = array<i32: 0>} : vector<8x6xi32>
    %509 = vector.broadcast %59 : vector<1x6xi32> to vector<8x6xi32>
    %510 = arith.cmpi eq, %508, %509 : vector<8x6xi32>
    %511 = arith.extui %510 : vector<8x6xi1> to vector<8x6xi32>
    %512 = arith.sitofp %511 : vector<8x6xi32> to vector<8x6xf32>
    %cst_111 = arith.constant dense<0.000000e+00> : vector<8x32xf32>
    %513 = tpu.matmul %512, %500, %cst_111 {dimension_numbers = #tpu.dot_dimension_numbers<[1], [0], [0], [1], [0, 0, 1, 1], [], []>} : vector<8x6xf32>, vector<6x32xf32>, vector<8x32xf32> -> vector<8x32xf32>
    %514 = arith.addf %51, %513 : vector<8x32xf32>
    %515 = vector.broadcast %61 : vector<1x6xi32> to vector<8x6xi32>
    %516 = arith.cmpi eq, %508, %515 : vector<8x6xi32>
    %517 = arith.extui %516 : vector<8x6xi1> to vector<8x6xi32>
    %518 = arith.sitofp %517 : vector<8x6xi32> to vector<8x6xf32>
    %cst_112 = arith.constant dense<0.000000e+00> : vector<8x32xf32>
    %519 = tpu.matmul %518, %507, %cst_112 {dimension_numbers = #tpu.dot_dimension_numbers<[1], [0], [0], [1], [0, 0, 1, 1], [], []>} : vector<8x6xf32>, vector<6x32xf32>, vector<8x32xf32> -> vector<8x32xf32>
    %520 = arith.addf %514, %519 : vector<8x32xf32>
    %c0_113 = arith.constant 0 : index
    %c0_114 = arith.constant 0 : index
    %c0_115 = arith.constant 0 : index
    %521 = vector.load %arg27[%c0_113, %c0_114, %c0_115] : memref<1x8x32xf32, #tpu.memory_space<vmem>>, vector<1x8x32xf32>
    %522 = vector.shape_cast %521 : vector<1x8x32xf32> to vector<8x32xf32>
    %523 = vector.shape_cast %520 : vector<8x32xf32> to vector<1x8x32xf32>
    tpu.vector_store %arg27[%c0_113, %c0_114, %c0_115], %523 {strides = array<i32>} : memref<1x8x32xf32, #tpu.memory_space<vmem>>, vector<1x8x32xf32>,
    return
  }
  func.func @transform_0(%arg0: i32) -> (i32, i32, i32) {
    %c0_i32 = arith.constant 0 : i32
    %c0_i32_0 = arith.constant 0 : i32
    %c0_i32_1 = arith.constant 0 : i32
    return %arg0, %c0_i32, %c0_i32_0 : i32, i32, i32
  }
  func.func @transform_1(%arg0: i32) -> (i32, i32, i32) {
    %c0_i32 = arith.constant 0 : i32
    %c0_i32_0 = arith.constant 0 : i32
    %c0_i32_1 = arith.constant 0 : i32
    return %arg0, %c0_i32, %c0_i32_0 : i32, i32, i32
  }
  func.func @transform_2(%arg0: i32) -> (i32, i32, i32) {
    %c0_i32 = arith.constant 0 : i32
    %c0_i32_0 = arith.constant 0 : i32
    %c0_i32_1 = arith.constant 0 : i32
    return %arg0, %c0_i32, %c0_i32_0 : i32, i32, i32
  }
  func.func @transform_3(%arg0: i32) -> (i32, i32, i32) {
    %c0_i32 = arith.constant 0 : i32
    %c0_i32_0 = arith.constant 0 : i32
    %c0_i32_1 = arith.constant 0 : i32
    return %arg0, %c0_i32, %c0_i32_0 : i32, i32, i32
  }
  func.func @transform_4(%arg0: i32) -> (i32, i32, i32) {
    %c0_i32 = arith.constant 0 : i32
    %c0_i32_0 = arith.constant 0 : i32
    %c0_i32_1 = arith.constant 0 : i32
    return %arg0, %c0_i32, %c0_i32_0 : i32, i32, i32
  }
  func.func @transform_5(%arg0: i32) -> (i32, i32, i32) {
    %c0_i32 = arith.constant 0 : i32
    %c0_i32_0 = arith.constant 0 : i32
    %c0_i32_1 = arith.constant 0 : i32
    return %arg0, %c0_i32, %c0_i32_0 : i32, i32, i32
  }
  func.func @transform_6(%arg0: i32) -> (i32, i32) {
    %c0_i32 = arith.constant 0 : i32
    %c0_i32_0 = arith.constant 0 : i32
    %c0_i32_1 = arith.constant 0 : i32
    return %c0_i32, %c0_i32_0 : i32, i32
  }
  func.func @transform_7(%arg0: i32) -> (i32, i32) {
    %c0_i32 = arith.constant 0 : i32
    %c0_i32_0 = arith.constant 0 : i32
    %c0_i32_1 = arith.constant 0 : i32
    return %c0_i32, %c0_i32_0 : i32, i32
  }
  func.func @transform_8(%arg0: i32) -> (i32, i32) {
    %c0_i32 = arith.constant 0 : i32
    %c0_i32_0 = arith.constant 0 : i32
    %c0_i32_1 = arith.constant 0 : i32
    return %c0_i32, %c0_i32_0 : i32, i32
  }
  func.func @transform_9(%arg0: i32) -> (i32, i32) {
    %c0_i32 = arith.constant 0 : i32
    %c0_i32_0 = arith.constant 0 : i32
    %c0_i32_1 = arith.constant 0 : i32
    return %c0_i32, %c0_i32_0 : i32, i32
  }
  func.func @transform_10(%arg0: i32) -> (i32, i32) {
    %c0_i32 = arith.constant 0 : i32
    %c0_i32_0 = arith.constant 0 : i32
    %c0_i32_1 = arith.constant 0 : i32
    return %c0_i32, %c0_i32_0 : i32, i32
  }
  func.func @transform_11(%arg0: i32) -> (i32, i32) {
    %c0_i32 = arith.constant 0 : i32
    %c0_i32_0 = arith.constant 0 : i32
    %c0_i32_1 = arith.constant 0 : i32
    return %c0_i32, %c0_i32_0 : i32, i32
  }
  func.func @transform_12(%arg0: i32) -> (i32, i32) {
    %c0_i32 = arith.constant 0 : i32
    %c0_i32_0 = arith.constant 0 : i32
    %c0_i32_1 = arith.constant 0 : i32
    return %c0_i32, %c0_i32_0 : i32, i32
  }
  func.func @transform_13(%arg0: i32) -> (i32, i32) {
    %c0_i32 = arith.constant 0 : i32
    %c0_i32_0 = arith.constant 0 : i32
    %c0_i32_1 = arith.constant 0 : i32
    return %c0_i32, %c0_i32_0 : i32, i32
  }
  func.func @transform_14(%arg0: i32) -> (i32, i32) {
    %c0_i32 = arith.constant 0 : i32
    %c0_i32_0 = arith.constant 0 : i32
    %c0_i32_1 = arith.constant 0 : i32
    return %c0_i32, %c0_i32_0 : i32, i32
  }
  func.func @transform_15(%arg0: i32) -> (i32, i32) {
    %c0_i32 = arith.constant 0 : i32
    %c0_i32_0 = arith.constant 0 : i32
    %c0_i32_1 = arith.constant 0 : i32
    return %c0_i32, %c0_i32_0 : i32, i32
  }
  func.func @transform_16(%arg0: i32) -> (i32, i32) {
    %c0_i32 = arith.constant 0 : i32
    %c0_i32_0 = arith.constant 0 : i32
    %c0_i32_1 = arith.constant 0 : i32
    return %c0_i32, %c0_i32_0 : i32, i32
  }
  func.func @transform_17(%arg0: i32) -> (i32, i32) {
    %c0_i32 = arith.constant 0 : i32
    %c0_i32_0 = arith.constant 0 : i32
    %c0_i32_1 = arith.constant 0 : i32
    return %c0_i32, %c0_i32_0 : i32, i32
  }
  func.func @transform_18(%arg0: i32) -> (i32, i32) {
    %c0_i32 = arith.constant 0 : i32
    %c0_i32_0 = arith.constant 0 : i32
    %c0_i32_1 = arith.constant 0 : i32
    return %c0_i32, %c0_i32_0 : i32, i32
  }
  func.func @transform_19(%arg0: i32) -> (i32, i32) {
    %c0_i32 = arith.constant 0 : i32
    %c0_i32_0 = arith.constant 0 : i32
    %c0_i32_1 = arith.constant 0 : i32
    return %c0_i32, %c0_i32_0 : i32, i32
  }
  func.func @transform_20(%arg0: i32) -> (i32, i32) {
    %c0_i32 = arith.constant 0 : i32
    %c0_i32_0 = arith.constant 0 : i32
    %c0_i32_1 = arith.constant 0 : i32
    return %c0_i32, %c0_i32_0 : i32, i32
  }
  func.func @transform_21(%arg0: i32) -> (i32, i32) {
    %c0_i32 = arith.constant 0 : i32
    %c0_i32_0 = arith.constant 0 : i32
    %c0_i32_1 = arith.constant 0 : i32
    return %c0_i32, %c0_i32_0 : i32, i32
  }
  func.func @transform_22(%arg0: i32) -> (i32, i32) {
    %c0_i32 = arith.constant 0 : i32
    %c0_i32_0 = arith.constant 0 : i32
    %c0_i32_1 = arith.constant 0 : i32
    return %c0_i32, %c0_i32_0 : i32, i32
  }
  func.func @transform_23(%arg0: i32) -> (i32, i32) {
    %c0_i32 = arith.constant 0 : i32
    %c0_i32_0 = arith.constant 0 : i32
    %c0_i32_1 = arith.constant 0 : i32
    return %c0_i32, %c0_i32_0 : i32, i32
  }
  func.func @transform_24(%arg0: i32) -> (i32, i32) {
    %c0_i32 = arith.constant 0 : i32
    %c0_i32_0 = arith.constant 0 : i32
    %c0_i32_1 = arith.constant 0 : i32
    return %c0_i32, %c0_i32_0 : i32, i32
  }
  func.func @transform_25(%arg0: i32) -> (i32, i32) {
    %c0_i32 = arith.constant 0 : i32
    %c0_i32_0 = arith.constant 0 : i32
    %c0_i32_1 = arith.constant 0 : i32
    return %c0_i32, %c0_i32_0 : i32, i32
  }
  func.func @transform_26(%arg0: i32) -> (i32, i32, i32) {
    %c0_i32 = arith.constant 0 : i32
    %c0_i32_0 = arith.constant 0 : i32
    %c0_i32_1 = arith.constant 0 : i32
    return %arg0, %c0_i32, %c0_i32_0 : i32, i32, i32
  }
}

</mosaic_0001>

<llo_original>
// kernel: tpu_custom_call.1
$region0: #{tpu_custom_call.1}
  #allocation0 [shape = 'u32[]', space=smem, size = 0x4, offset = 0x4, fixed_abs, tag = 'smem constant byte address 0x4 - core index']
  #allocation1 [shape = 'u32[72,128]{1,0:T(1,128)}', space=vmem, size = 0x9000, scoped, tag = 'internal scratch']
  %s0 = inlined_call_operand.hbm [shape: f32[2,8,32], index: 0, kind: input, shape index: {}]
  %s1 = inlined_call_operand.vmem [shape: f32[2,6,8], index: 1, kind: input, shape index: {}]
  %s2 = inlined_call_operand.vmem [shape: f32[2,10,1], index: 2, kind: input, shape index: {}]
  %s3 = inlined_call_operand.vmem [shape: s32[2,6,2], index: 3, kind: input, shape index: {}]
  %s4 = inlined_call_operand.hbm [shape: s32[2,2,6], index: 4, kind: input, shape index: {}]
  %s5 = inlined_call_operand.vmem [shape: s32[2,1,10], index: 5, kind: input, shape index: {}]
  %s6 = inlined_call_operand.hbm [shape: f32[8,32], index: 6, kind: input, shape index: {}]
  %s7 = inlined_call_operand.vmem [shape: f32[1,32], index: 7, kind: input, shape index: {}]
  %s8 = inlined_call_operand.hbm [shape: f32[1,32], index: 8, kind: input, shape index: {}]
  %s9 = inlined_call_operand.hbm [shape: f32[1,32], index: 9, kind: input, shape index: {}]
  %s10 = inlined_call_operand.vmem [shape: f32[32,32], index: 10, kind: input, shape index: {}]
  %s11 = inlined_call_operand.hbm [shape: f32[1,32], index: 11, kind: input, shape index: {}]
  %s12 = inlined_call_operand.hbm [shape: f32[1,32], index: 12, kind: input, shape index: {}]
  %s13 = inlined_call_operand.hbm [shape: f32[1,32], index: 13, kind: input, shape index: {}]
  %s14 = inlined_call_operand.vmem [shape: f32[32,32], index: 14, kind: input, shape index: {}]
  %s15 = inlined_call_operand.hbm [shape: f32[1,32], index: 15, kind: input, shape index: {}]
  %s16 = inlined_call_operand.hbm [shape: f32[1,32], index: 16, kind: input, shape index: {}]
  %s17 = inlined_call_operand.hbm [shape: f32[1,32], index: 17, kind: input, shape index: {}]
  %s18 = inlined_call_operand.hbm [shape: f32[32,1024], index: 18, kind: input, shape index: {}]
  %s19 = inlined_call_operand.hbm [shape: f32[1,1024], index: 19, kind: input, shape index: {}]
  %s20 = inlined_call_operand.hbm [shape: f32[1,32], index: 20, kind: input, shape index: {}]
  %s21 = inlined_call_operand.hbm [shape: f32[1,32], index: 21, kind: input, shape index: {}]
  %s22 = inlined_call_operand.hbm [shape: f32[1,32], index: 22, kind: input, shape index: {}]
  %s23 = inlined_call_operand.hbm [shape: f32[1,32], index: 23, kind: input, shape index: {}]
  %s24 = inlined_call_operand.vmem [shape: f32[32,32], index: 24, kind: input, shape index: {}]
  %s25 = inlined_call_operand.hbm [shape: f32[1,32], index: 25, kind: input, shape index: {}]
  %s26 = inlined_call_operand.hbm [shape: f32[2,8,32], index: 26, kind: output, shape index: {}]
  %s27 = sld [smem:[#allocation0]]
  $region209: #{tpu_custom_call.1} parent=0
    _
  %s29 = ssub.s32 1, %s27
  %s30 = scalar_select 0, %s29, %s27
  $region1: #{tpu_custom_call.1} parent=0
    #allocation2 [shape = 'u8[8192]{0}', space=vmem, size = 0x2000, scoped, tag = 'input window, operand 0']
    #allocation3 [shape = 's32[2]{0}', space=sflag, size = 0x8, scoped, tag = 'scoped memory for tpu_custom_call.1']
    #allocation4 [shape = 's32[2]{0}', space=sflag, size = 0x8, scoped, tag = 'scoped memory for tpu_custom_call.1']
    #allocation5 [shape = 'u8[2048]{0}', space=vmem, size = 0x800, scoped, tag = 'input window, operand 4']
    #allocation6 [shape = 's32[2]{0}', space=sflag, size = 0x8, scoped, tag = 'scoped memory for tpu_custom_call.1']
    #allocation7 [shape = 'u8[4096]{0}', space=vmem, size = 0x1000, scoped, tag = 'input window, operand 6, single buffered']
    #allocation8 [shape = 'u8[512]{0}', space=vmem, size = 0x400, scoped, tag = 'input window, operand 8, single buffered']
    #allocation9 [shape = 's32[1]{0}', space=sflag, size = 0x4, scoped, tag = 'scoped memory for tpu_custom_call.1']
    #allocation10 [shape = 'u8[512]{0}', space=vmem, size = 0x400, scoped, tag = 'input window, operand 9, single buffered']
    #allocation11 [shape = 'u8[512]{0}', space=vmem, size = 0x400, scoped, tag = 'input window, operand 11, single buffered']
    #allocation12 [shape = 's32[1]{0}', space=sflag, size = 0x4, scoped, tag = 'scoped memory for tpu_custom_call.1']
    #allocation13 [shape = 'u8[512]{0}', space=vmem, size = 0x400, scoped, tag = 'input window, operand 12, single buffered']
    #allocation14 [shape = 'u8[512]{0}', space=vmem, size = 0x400, scoped, tag = 'input window, operand 13, single buffered']
    #allocation15 [shape = 's32[1]{0}', space=sflag, size = 0x4, scoped, tag = 'scoped memory for tpu_custom_call.1']
    #allocation16 [shape = 'u8[512]{0}', space=vmem, size = 0x400, scoped, tag = 'input window, operand 15, single buffered']
    #allocation17 [shape = 'u8[512]{0}', space=vmem, size = 0x400, scoped, tag = 'input window, operand 16, single buffered']
    #allocation18 [shape = 's32[1]{0}', space=sflag, size = 0x4, scoped, tag = 'scoped memory for tpu_custom_call.1']
    #allocation19 [shape = 'u8[512]{0}', space=vmem, size = 0x400, scoped, tag = 'input window, operand 17, single buffered']
    #allocation20 [shape = 'u8[131072]{0}', space=vmem, size = 0x20000, scoped, tag = 'input window, operand 18, single buffered']
    #allocation21 [shape = 's32[1]{0}', space=sflag, size = 0x4, scoped, tag = 'scoped memory for tpu_custom_call.1']
    #allocation22 [shape = 'u8[4096]{0}', space=vmem, size = 0x1000, scoped, tag = 'input window, operand 19, single buffered']
    #allocation23 [shape = 'u8[512]{0}', space=vmem, size = 0x400, scoped, tag = 'input window, operand 20, single buffered']
    #allocation24 [shape = 's32[1]{0}', space=sflag, size = 0x4, scoped, tag = 'scoped memory for tpu_custom_call.1']
    #allocation25 [shape = 'u8[512]{0}', space=vmem, size = 0x400, scoped, tag = 'input window, operand 21, single buffered']
    #allocation26 [shape = 'u8[512]{0}', space=vmem, size = 0x400, scoped, tag = 'input window, operand 22, single buffered']
    #allocation27 [shape = 's32[1]{0}', space=sflag, size = 0x4, scoped, tag = 'scoped memory for tpu_custom_call.1']
    #allocation28 [shape = 'u8[512]{0}', space=vmem, size = 0x400, scoped, tag = 'input window, operand 23, single buffered']
    #allocation29 [shape = 'u8[512]{0}', space=vmem, size = 0x400, scoped, tag = 'input window, operand 25, single buffered']
    #allocation30 [shape = 's32[1]{0}', space=sflag, size = 0x4, scoped, tag = 'scoped memory for tpu_custom_call.1']
    #allocation31 [shape = 'u8[8192]{0}', space=vmem, size = 0x2000, scoped, tag = 'output window, operand 0']
    %31 = vsyncpa [#allocation3], 0
    %s32 = scalar_lea.sflag [#allocation3], 1
    %33 = vsyncpa %s32, 0
    %34 = vsyncpa [#allocation6], 0
    %s35 = scalar_lea.sflag [#allocation6], 1
    %36 = vsyncpa %s35, 0
    %37 = vsyncpa [#allocation9], 0
    %38 = vsyncpa [#allocation12], 0
    %39 = vsyncpa [#allocation15], 0
    %40 = vsyncpa [#allocation18], 0
    %41 = vsyncpa [#allocation21], 0
    %42 = vsyncpa [#allocation24], 0
    %43 = vsyncpa [#allocation27], 0
    %44 = vsyncpa [#allocation30], 0
    %45 = vsyncpa [#allocation4], 0
    %s46 = scalar_lea.sflag [#allocation4], 1
    %47 = vsyncpa %s46, 0
    loop: start=0, step=1, limit=4
    $region2: #{tpu_custom_call.1} parent=1 // loop_pre_header
      _
    $region3: #{tpu_custom_call.1} parent=1 // loop_header
      %s49 = sphi 0, %s53
      %p50 = scmp.ge.s32.totalorder %s49, 4
      %s59 = sphi 0, %s61
      %s62 = sphi 0, %s59
      %s63 = sphi 0, %s62
      %s79 = sphi 0, %s63
      %s85 = sphi 0, %s87
      %s88 = sphi 0, %s85
      %s89 = sphi 0, %s88
      %s105 = sphi 0, %s89
      %s111 = sphi 0, %s113
      %s114 = sphi 0, %s111
      %s115 = sphi 0, %s114
      %s131 = sphi 0, %s115
      %s137 = sphi 0, %s139
      %s140 = sphi 0, %s137
      %s141 = sphi 0, %s140
      %s157 = sphi 0, %s141
      %s163 = sphi 0, %s165
      %s166 = sphi 0, %s163
      %s167 = sphi 0, %s166
      %s183 = sphi 0, %s167
      %s189 = sphi 0, %s191
      %s192 = sphi 0, %s189
      %s193 = sphi 0, %s192
      %s209 = sphi 0, %s193
      %s213 = sphi 0, %s213
      %s215 = sphi 0, %s213
      %s216 = sphi 0, %s215
      %s230 = sphi 0, %s216
      %s234 = sphi 0, %s234
      %s236 = sphi 0, %s234
      %s237 = sphi 0, %s236
      %s251 = sphi 0, %s237
      %s255 = sphi 0, %s255
      %s257 = sphi 0, %s255
      %s258 = sphi 0, %s257
      %s272 = sphi 0, %s258
      %s276 = sphi 0, %s276
      %s278 = sphi 0, %s276
      %s279 = sphi 0, %s278
      %s293 = sphi 0, %s279
      %s297 = sphi 0, %s297
      %s299 = sphi 0, %s297
      %s300 = sphi 0, %s299
      %s314 = sphi 0, %s300
      %s318 = sphi 0, %s318
      %s320 = sphi 0, %s318
      %s321 = sphi 0, %s320
      %s335 = sphi 0, %s321
      %s339 = sphi 0, %s339
      %s341 = sphi 0, %s339
      %s342 = sphi 0, %s341
      %s356 = sphi 0, %s342
      %s360 = sphi 0, %s360
      %s362 = sphi 0, %s360
      %s363 = sphi 0, %s362
      %s377 = sphi 0, %s363
      %s381 = sphi 0, %s381
      %s383 = sphi 0, %s381
      %s384 = sphi 0, %s383
      %s398 = sphi 0, %s384
      %s402 = sphi 0, %s402
      %s404 = sphi 0, %s402
      %s405 = sphi 0, %s404
      %s419 = sphi 0, %s405
      %s423 = sphi 0, %s423
      %s425 = sphi 0, %s423
      %s426 = sphi 0, %s425
      %s440 = sphi 0, %s426
      %s444 = sphi 0, %s444
      %s446 = sphi 0, %s444
      %s447 = sphi 0, %s446
      %s461 = sphi 0, %s447
      %s465 = sphi 0, %s465
      %s467 = sphi 0, %s465
      %s468 = sphi 0, %s467
      %s482 = sphi 0, %s468
      %s486 = sphi 0, %s486
      %s488 = sphi 0, %s486
      %s489 = sphi 0, %s488
      %s503 = sphi 0, %s489
      %s507 = sphi 0, %s507
      %s509 = sphi 0, %s507
      %s510 = sphi 0, %s509
      %s524 = sphi 0, %s510
      %s528 = sphi 0, %s528
      %s530 = sphi 0, %s528
      %s531 = sphi 0, %s530
      %s545 = sphi 0, %s531
      %s549 = sphi 0, %s549
      %s551 = sphi 0, %s549
      %s552 = sphi 0, %s551
      %s566 = sphi 0, %s552
      %s570 = sphi 0, %s570
      %s572 = sphi 0, %s570
      %s573 = sphi 0, %s572
      %s587 = sphi 0, %s573
      %s591 = sphi 0, %s591
      %s593 = sphi 0, %s591
      %s594 = sphi 0, %s593
      %s608 = sphi 0, %s594
      %s612 = sphi 0, %s612
      %s614 = sphi 0, %s612
      %s615 = sphi 0, %s614
      %s629 = sphi 0, %s615
      %s635 = sphi 0, %s637
      %s638 = sphi 0, %s635
      %s639 = sphi 0, %s638
      %s655 = sphi 0, %s639
    $region4: #{tpu_custom_call.1} parent=1 // loop_header_branch
      %52 = sbr.rel (%p50) target = $region8
    $region5: #{tpu_custom_call.1} parent=1 // loop_body
      %s54 = ssub.s32 %s49, 1
      %s55 = ssub.s32 %s49, 2
      %s56 = sadd.s32 %s49, 1
      %s57 = ssub.s32 %s49, %s56
      %p58 = scmp.eq.s32.totalorder %s57, 0
      %s60 = sadd.s32 %s59, 1
      %s61 = scalar_select %p58, %s59, %s60
      %p64 = pneg %p58
      %p65 = scmp.eq.s32.totalorder %s49, 1
      %p66 = por %p64, %p65
      %p67 = scmp.ne.s32.totalorder %s59, %s62
      %p68 = scmp.eq.s32.totalorder %s49, 0
      %p69 = por %p67, %p68
      %p70 = scmp.ne.s32.totalorder %s59, %s62
      %p71 = scmp.eq.s32.totalorder %s54, 1
      %p72 = por %p70, %p71
      %p73 = scmp.ne.s32.totalorder %s62, %s63
      %p74 = scmp.eq.s32.totalorder %s54, 0
      %p75 = por %p73, %p74
      %p76 = scmp.ne.s32.totalorder %s62, %s63
      %p77 = scmp.eq.s32.totalorder %s55, 1
      %p78 = por %p76, %p77
      %p80 = scmp.ne.s32.totalorder %s63, %s79
      %p81 = scmp.eq.s32.totalorder %s55, 0
      %p82 = por %p80, %p81
      %s83 = ssub.s32 %s49, %s56
      %p84 = scmp.eq.s32.totalorder %s83, 0
      %s86 = sadd.s32 %s85, 1
      %s87 = scalar_select %p84, %s85, %s86
      %p90 = pneg %p84
      %p91 = scmp.eq.s32.totalorder %s49, 1
      %p92 = por %p90, %p91
      %p93 = scmp.ne.s32.totalorder %s85, %s88
      %p94 = scmp.eq.s32.totalorder %s49, 0
      %p95 = por %p93, %p94
      %p96 = scmp.ne.s32.totalorder %s85, %s88
      %p97 = scmp.eq.s32.totalorder %s54, 1
      %p98 = por %p96, %p97
      %p99 = scmp.ne.s32.totalorder %s88, %s89
      %p100 = scmp.eq.s32.totalorder %s54, 0
      %p101 = por %p99, %p100
      %p102 = scmp.ne.s32.totalorder %s88, %s89
      %p103 = scmp.eq.s32.totalorder %s55, 1
      %p104 = por %p102, %p103
      %p106 = scmp.ne.s32.totalorder %s89, %s105
      %p107 = scmp.eq.s32.totalorder %s55, 0
      %p108 = por %p106, %p107
      %s109 = ssub.s32 %s49, %s56
      %p110 = scmp.eq.s32.totalorder %s109, 0
      %s112 = sadd.s32 %s111, 1
      %s113 = scalar_select %p110, %s111, %s112
      %p116 = pneg %p110
      %p117 = scmp.eq.s32.totalorder %s49, 1
      %p118 = por %p116, %p117
      %p119 = scmp.ne.s32.totalorder %s111, %s114
      %p120 = scmp.eq.s32.totalorder %s49, 0
      %p121 = por %p119, %p120
      %p122 = scmp.ne.s32.totalorder %s111, %s114
      %p123 = scmp.eq.s32.totalorder %s54, 1
      %p124 = por %p122, %p123
      %p125 = scmp.ne.s32.totalorder %s114, %s115
      %p126 = scmp.eq.s32.totalorder %s54, 0
      %p127 = por %p125, %p126
      %p128 = scmp.ne.s32.totalorder %s114, %s115
      %p129 = scmp.eq.s32.totalorder %s55, 1
      %p130 = por %p128, %p129
      %p132 = scmp.ne.s32.totalorder %s115, %s131
      %p133 = scmp.eq.s32.totalorder %s55, 0
      %p134 = por %p132, %p133
      %s135 = ssub.s32 %s49, %s56
      %p136 = scmp.eq.s32.totalorder %s135, 0
      %s138 = sadd.s32 %s137, 1
      %s139 = scalar_select %p136, %s137, %s138
      %p142 = pneg %p136
      %p143 = scmp.eq.s32.totalorder %s49, 1
      %p144 = por %p142, %p143
      %p145 = scmp.ne.s32.totalorder %s137, %s140
      %p146 = scmp.eq.s32.totalorder %s49, 0
      %p147 = por %p145, %p146
      %p148 = scmp.ne.s32.totalorder %s137, %s140
      %p149 = scmp.eq.s32.totalorder %s54, 1
      %p150 = por %p148, %p149
      %p151 = scmp.ne.s32.totalorder %s140, %s141
      %p152 = scmp.eq.s32.totalorder %s54, 0
      %p153 = por %p151, %p152
      %p154 = scmp.ne.s32.totalorder %s140, %s141
      %p155 = scmp.eq.s32.totalorder %s55, 1
      %p156 = por %p154, %p155
      %p158 = scmp.ne.s32.totalorder %s141, %s157
      %p159 = scmp.eq.s32.totalorder %s55, 0
      %p160 = por %p158, %p159
      %s161 = ssub.s32 %s49, %s56
      %p162 = scmp.eq.s32.totalorder %s161, 0
      %s164 = sadd.s32 %s163, 1
      %s165 = scalar_select %p162, %s163, %s164
      %p168 = pneg %p162
      %p169 = scmp.eq.s32.totalorder %s49, 1
      %p170 = por %p168, %p169
      %p171 = scmp.ne.s32.totalorder %s163, %s166
      %p172 = scmp.eq.s32.totalorder %s49, 0
      %p173 = por %p171, %p172
      %p174 = scmp.ne.s32.totalorder %s163, %s166
      %p175 = scmp.eq.s32.totalorder %s54, 1
      %p176 = por %p174, %p175
      %p177 = scmp.ne.s32.totalorder %s166, %s167
      %p178 = scmp.eq.s32.totalorder %s54, 0
      %p179 = por %p177, %p178
      %p180 = scmp.ne.s32.totalorder %s166, %s167
      %p181 = scmp.eq.s32.totalorder %s55, 1
      %p182 = por %p180, %p181
      %p184 = scmp.ne.s32.totalorder %s167, %s183
      %p185 = scmp.eq.s32.totalorder %s55, 0
      %p186 = por %p184, %p185
      %s187 = ssub.s32 %s49, %s56
      %p188 = scmp.eq.s32.totalorder %s187, 0
      %s190 = sadd.s32 %s189, 1
      %s191 = scalar_select %p188, %s189, %s190
      %p194 = pneg %p188
      %p195 = scmp.eq.s32.totalorder %s49, 1
      %p196 = por %p194, %p195
      %p197 = scmp.ne.s32.totalorder %s189, %s192
      %p198 = scmp.eq.s32.totalorder %s49, 0
      %p199 = por %p197, %p198
      %p200 = scmp.ne.s32.totalorder %s189, %s192
      %p201 = scmp.eq.s32.totalorder %s54, 1
      %p202 = por %p200, %p201
      %p203 = scmp.ne.s32.totalorder %s192, %s193
      %p204 = scmp.eq.s32.totalorder %s54, 0
      %p205 = por %p203, %p204
      %p206 = scmp.ne.s32.totalorder %s192, %s193
      %p207 = scmp.eq.s32.totalorder %s55, 1
      %p208 = por %p206, %p207
      %p210 = scmp.ne.s32.totalorder %s193, %s209
      %p211 = scmp.eq.s32.totalorder %s55, 0
      %p212 = por %p210, %p211
      %s214 = sadd.s32 %s213, 1
      %p217 = scmp.eq.s32.totalorder %s49, 1
      %p218 = scmp.ne.s32.totalorder %s213, %s215
      %p219 = scmp.eq.s32.totalorder %s49, 0
      %p220 = por %p218, %p219
      %p221 = scmp.ne.s32.totalorder %s213, %s215
      %p222 = scmp.eq.s32.totalorder %s54, 1
      %p223 = por %p221, %p222
      %p224 = scmp.ne.s32.totalorder %s215, %s216
      %p225 = scmp.eq.s32.totalorder %s54, 0
      %p226 = por %p224, %p225
      %p227 = scmp.ne.s32.totalorder %s215, %s216
      %p228 = scmp.eq.s32.totalorder %s55, 1
      %p229 = por %p227, %p228
      %p231 = scmp.ne.s32.totalorder %s216, %s230
      %p232 = scmp.eq.s32.totalorder %s55, 0
      %p233 = por %p231, %p232
      %s235 = sadd.s32 %s234, 1
      %p238 = scmp.eq.s32.totalorder %s49, 1
      %p239 = scmp.ne.s32.totalorder %s234, %s236
      %p240 = scmp.eq.s32.totalorder %s49, 0
      %p241 = por %p239, %p240
      %p242 = scmp.ne.s32.totalorder %s234, %s236
      %p243 = scmp.eq.s32.totalorder %s54, 1
      %p244 = por %p242, %p243
      %p245 = scmp.ne.s32.totalorder %s236, %s237
      %p246 = scmp.eq.s32.totalorder %s54, 0
      %p247 = por %p245, %p246
      %p248 = scmp.ne.s32.totalorder %s236, %s237
      %p249 = scmp.eq.s32.totalorder %s55, 1
      %p250 = por %p248, %p249
      %p252 = scmp.ne.s32.totalorder %s237, %s251
      %p253 = scmp.eq.s32.totalorder %s55, 0
      %p254 = por %p252, %p253
      %s256 = sadd.s32 %s255, 1
      %p259 = scmp.eq.s32.totalorder %s49, 1
      %p260 = scmp.ne.s32.totalorder %s255, %s257
      %p261 = scmp.eq.s32.totalorder %s49, 0
      %p262 = por %p260, %p261
      %p263 = scmp.ne.s32.totalorder %s255, %s257
      %p264 = scmp.eq.s32.totalorder %s54, 1
      %p265 = por %p263, %p264
      %p266 = scmp.ne.s32.totalorder %s257, %s258
      %p267 = scmp.eq.s32.totalorder %s54, 0
      %p268 = por %p266, %p267
      %p269 = scmp.ne.s32.totalorder %s257, %s258
      %p270 = scmp.eq.s32.totalorder %s55, 1
      %p271 = por %p269, %p270
      %p273 = scmp.ne.s32.totalorder %s258, %s272
      %p274 = scmp.eq.s32.totalorder %s55, 0
      %p275 = por %p273, %p274
      %s277 = sadd.s32 %s276, 1
      %p280 = scmp.eq.s32.totalorder %s49, 1
      %p281 = scmp.ne.s32.totalorder %s276, %s278
      %p282 = scmp.eq.s32.totalorder %s49, 0
      %p283 = por %p281, %p282
      %p284 = scmp.ne.s32.totalorder %s276, %s278
      %p285 = scmp.eq.s32.totalorder %s54, 1
      %p286 = por %p284, %p285
      %p287 = scmp.ne.s32.totalorder %s278, %s279
      %p288 = scmp.eq.s32.totalorder %s54, 0
      %p289 = por %p287, %p288
      %p290 = scmp.ne.s32.totalorder %s278, %s279
      %p291 = scmp.eq.s32.totalorder %s55, 1
      %p292 = por %p290, %p291
      %p294 = scmp.ne.s32.totalorder %s279, %s293
      %p295 = scmp.eq.s32.totalorder %s55, 0
      %p296 = por %p294, %p295
      %s298 = sadd.s32 %s297, 1
      %p301 = scmp.eq.s32.totalorder %s49, 1
      %p302 = scmp.ne.s32.totalorder %s297, %s299
      %p303 = scmp.eq.s32.totalorder %s49, 0
      %p304 = por %p302, %p303
      %p305 = scmp.ne.s32.totalorder %s297, %s299
      %p306 = scmp.eq.s32.totalorder %s54, 1
      %p307 = por %p305, %p306
      %p308 = scmp.ne.s32.totalorder %s299, %s300
      %p309 = scmp.eq.s32.totalorder %s54, 0
      %p310 = por %p308, %p309
      %p311 = scmp.ne.s32.totalorder %s299, %s300
      %p312 = scmp.eq.s32.totalorder %s55, 1
      %p313 = por %p311, %p312
      %p315 = scmp.ne.s32.totalorder %s300, %s314
      %p316 = scmp.eq.s32.totalorder %s55, 0
      %p317 = por %p315, %p316
      %s319 = sadd.s32 %s318, 1
      %p322 = scmp.eq.s32.totalorder %s49, 1
      %p323 = scmp.ne.s32.totalorder %s318, %s320
      %p324 = scmp.eq.s32.totalorder %s49, 0
      %p325 = por %p323, %p324
      %p326 = scmp.ne.s32.totalorder %s318, %s320
      %p327 = scmp.eq.s32.totalorder %s54, 1
      %p328 = por %p326, %p327
      %p329 = scmp.ne.s32.totalorder %s320, %s321
      %p330 = scmp.eq.s32.totalorder %s54, 0
      %p331 = por %p329, %p330
      %p332 = scmp.ne.s32.totalorder %s320, %s321
      %p333 = scmp.eq.s32.totalorder %s55, 1
      %p334 = por %p332, %p333
      %p336 = scmp.ne.s32.totalorder %s321, %s335
      %p337 = scmp.eq.s32.totalorder %s55, 0
      %p338 = por %p336, %p337
      %s340 = sadd.s32 %s339, 1
      %p343 = scmp.eq.s32.totalorder %s49, 1
      %p344 = scmp.ne.s32.totalorder %s339, %s341
      %p345 = scmp.eq.s32.totalorder %s49, 0
      %p346 = por %p344, %p345
      %p347 = scmp.ne.s32.totalorder %s339, %s341
      %p348 = scmp.eq.s32.totalorder %s54, 1
      %p349 = por %p347, %p348
      %p350 = scmp.ne.s32.totalorder %s341, %s342
      %p351 = scmp.eq.s32.totalorder %s54, 0
      %p352 = por %p350, %p351
      %p353 = scmp.ne.s32.totalorder %s341, %s342
      %p354 = scmp.eq.s32.totalorder %s55, 1
      %p355 = por %p353, %p354
      %p357 = scmp.ne.s32.totalorder %s342, %s356
      %p358 = scmp.eq.s32.totalorder %s55, 0
      %p359 = por %p357, %p358
      %s361 = sadd.s32 %s360, 1
      %p364 = scmp.eq.s32.totalorder %s49, 1
      %p365 = scmp.ne.s32.totalorder %s360, %s362
      %p366 = scmp.eq.s32.totalorder %s49, 0
      %p367 = por %p365, %p366
      %p368 = scmp.ne.s32.totalorder %s360, %s362
      %p369 = scmp.eq.s32.totalorder %s54, 1
      %p370 = por %p368, %p369
      %p371 = scmp.ne.s32.totalorder %s362, %s363
      %p372 = scmp.eq.s32.totalorder %s54, 0
      %p373 = por %p371, %p372
      %p374 = scmp.ne.s32.totalorder %s362, %s363
      %p375 = scmp.eq.s32.totalorder %s55, 1
      %p376 = por %p374, %p375
      %p378 = scmp.ne.s32.totalorder %s363, %s377
      %p379 = scmp.eq.s32.totalorder %s55, 0
      %p380 = por %p378, %p379
      %s382 = sadd.s32 %s381, 1
      %p385 = scmp.eq.s32.totalorder %s49, 1
      %p386 = scmp.ne.s32.totalorder %s381, %s383
      %p387 = scmp.eq.s32.totalorder %s49, 0
      %p388 = por %p386, %p387
      %p389 = scmp.ne.s32.totalorder %s381, %s383
      %p390 = scmp.eq.s32.totalorder %s54, 1
      %p391 = por %p389, %p390
      %p392 = scmp.ne.s32.totalorder %s383, %s384
      %p393 = scmp.eq.s32.totalorder %s54, 0
      %p394 = por %p392, %p393
      %p395 = scmp.ne.s32.totalorder %s383, %s384
      %p396 = scmp.eq.s32.totalorder %s55, 1
      %p397 = por %p395, %p396
      %p399 = scmp.ne.s32.totalorder %s384, %s398
      %p400 = scmp.eq.s32.totalorder %s55, 0
      %p401 = por %p399, %p400
      %s403 = sadd.s32 %s402, 1
      %p406 = scmp.eq.s32.totalorder %s49, 1
      %p407 = scmp.ne.s32.totalorder %s402, %s404
      %p408 = scmp.eq.s32.totalorder %s49, 0
      %p409 = por %p407, %p408
      %p410 = scmp.ne.s32.totalorder %s402, %s404
      %p411 = scmp.eq.s32.totalorder %s54, 1
      %p412 = por %p410, %p411
      %p413 = scmp.ne.s32.totalorder %s404, %s405
      %p414 = scmp.eq.s32.totalorder %s54, 0
      %p415 = por %p413, %p414
      %p416 = scmp.ne.s32.totalorder %s404, %s405
      %p417 = scmp.eq.s32.totalorder %s55, 1
      %p418 = por %p416, %p417
      %p420 = scmp.ne.s32.totalorder %s405, %s419
      %p421 = scmp.eq.s32.totalorder %s55, 0
      %p422 = por %p420, %p421
      %s424 = sadd.s32 %s423, 1
      %p427 = scmp.eq.s32.totalorder %s49, 1
      %p428 = scmp.ne.s32.totalorder %s423, %s425
      %p429 = scmp.eq.s32.totalorder %s49, 0
      %p430 = por %p428, %p429
      %p431 = scmp.ne.s32.totalorder %s423, %s425
      %p432 = scmp.eq.s32.totalorder %s54, 1
      %p433 = por %p431, %p432
      %p434 = scmp.ne.s32.totalorder %s425, %s426
      %p435 = scmp.eq.s32.totalorder %s54, 0
      %p436 = por %p434, %p435
      %p437 = scmp.ne.s32.totalorder %s425, %s426
      %p438 = scmp.eq.s32.totalorder %s55, 1
      %p439 = por %p437, %p438
      %p441 = scmp.ne.s32.totalorder %s426, %s440
      %p442 = scmp.eq.s32.totalorder %s55, 0
      %p443 = por %p441, %p442
      %s445 = sadd.s32 %s444, 1
      %p448 = scmp.eq.s32.totalorder %s49, 1
      %p449 = scmp.ne.s32.totalorder %s444, %s446
      %p450 = scmp.eq.s32.totalorder %s49, 0
      %p451 = por %p449, %p450
      %p452 = scmp.ne.s32.totalorder %s444, %s446
      %p453 = scmp.eq.s32.totalorder %s54, 1
      %p454 = por %p452, %p453
      %p455 = scmp.ne.s32.totalorder %s446, %s447
      %p456 = scmp.eq.s32.totalorder %s54, 0
      %p457 = por %p455, %p456
      %p458 = scmp.ne.s32.totalorder %s446, %s447
      %p459 = scmp.eq.s32.totalorder %s55, 1
      %p460 = por %p458, %p459
      %p462 = scmp.ne.s32.totalorder %s447, %s461
      %p463 = scmp.eq.s32.totalorder %s55, 0
      %p464 = por %p462, %p463
      %s466 = sadd.s32 %s465, 1
      %p469 = scmp.eq.s32.totalorder %s49, 1
      %p470 = scmp.ne.s32.totalorder %s465, %s467
      %p471 = scmp.eq.s32.totalorder %s49, 0
      %p472 = por %p470, %p471
      %p473 = scmp.ne.s32.totalorder %s465, %s467
      %p474 = scmp.eq.s32.totalorder %s54, 1
      %p475 = por %p473, %p474
      %p476 = scmp.ne.s32.totalorder %s467, %s468
      %p477 = scmp.eq.s32.totalorder %s54, 0
      %p478 = por %p476, %p477
      %p479 = scmp.ne.s32.totalorder %s467, %s468
      %p480 = scmp.eq.s32.totalorder %s55, 1
      %p481 = por %p479, %p480
      %p483 = scmp.ne.s32.totalorder %s468, %s482
      %p484 = scmp.eq.s32.totalorder %s55, 0
      %p485 = por %p483, %p484
      %s487 = sadd.s32 %s486, 1
      %p490 = scmp.eq.s32.totalorder %s49, 1
      %p491 = scmp.ne.s32.totalorder %s486, %s488
      %p492 = scmp.eq.s32.totalorder %s49, 0
      %p493 = por %p491, %p492
      %p494 = scmp.ne.s32.totalorder %s486, %s488
      %p495 = scmp.eq.s32.totalorder %s54, 1
      %p496 = por %p494, %p495
      %p497 = scmp.ne.s32.totalorder %s488, %s489
      %p498 = scmp.eq.s32.totalorder %s54, 0
      %p499 = por %p497, %p498
      %p500 = scmp.ne.s32.totalorder %s488, %s489
      %p501 = scmp.eq.s32.totalorder %s55, 1
      %p502 = por %p500, %p501
      %p504 = scmp.ne.s32.totalorder %s489, %s503
      %p505 = scmp.eq.s32.totalorder %s55, 0
      %p506 = por %p504, %p505
      %s508 = sadd.s32 %s507, 1
      %p511 = scmp.eq.s32.totalorder %s49, 1
      %p512 = scmp.ne.s32.totalorder %s507, %s509
      %p513 = scmp.eq.s32.totalorder %s49, 0
      %p514 = por %p512, %p513
      %p515 = scmp.ne.s32.totalorder %s507, %s509
      %p516 = scmp.eq.s32.totalorder %s54, 1
      %p517 = por %p515, %p516
      %p518 = scmp.ne.s32.totalorder %s509, %s510
      %p519 = scmp.eq.s32.totalorder %s54, 0
      %p520 = por %p518, %p519
      %p521 = scmp.ne.s32.totalorder %s509, %s510
      %p522 = scmp.eq.s32.totalorder %s55, 1
      %p523 = por %p521, %p522
      %p525 = scmp.ne.s32.totalorder %s510, %s524
      %p526 = scmp.eq.s32.totalorder %s55, 0
      %p527 = por %p525, %p526
      %s529 = sadd.s32 %s528, 1
      %p532 = scmp.eq.s32.totalorder %s49, 1
      %p533 = scmp.ne.s32.totalorder %s528, %s530
      %p534 = scmp.eq.s32.totalorder %s49, 0
      %p535 = por %p533, %p534
      %p536 = scmp.ne.s32.totalorder %s528, %s530
      %p537 = scmp.eq.s32.totalorder %s54, 1
      %p538 = por %p536, %p537
      %p539 = scmp.ne.s32.totalorder %s530, %s531
      %p540 = scmp.eq.s32.totalorder %s54, 0
      %p541 = por %p539, %p540
      %p542 = scmp.ne.s32.totalorder %s530, %s531
      %p543 = scmp.eq.s32.totalorder %s55, 1
      %p544 = por %p542, %p543
      %p546 = scmp.ne.s32.totalorder %s531, %s545
      %p547 = scmp.eq.s32.totalorder %s55, 0
      %p548 = por %p546, %p547
      %s550 = sadd.s32 %s549, 1
      %p553 = scmp.eq.s32.totalorder %s49, 1
      %p554 = scmp.ne.s32.totalorder %s549, %s551
      %p555 = scmp.eq.s32.totalorder %s49, 0
      %p556 = por %p554, %p555
      %p557 = scmp.ne.s32.totalorder %s549, %s551
      %p558 = scmp.eq.s32.totalorder %s54, 1
      %p559 = por %p557, %p558
      %p560 = scmp.ne.s32.totalorder %s551, %s552
      %p561 = scmp.eq.s32.totalorder %s54, 0
      %p562 = por %p560, %p561
      %p563 = scmp.ne.s32.totalorder %s551, %s552
      %p564 = scmp.eq.s32.totalorder %s55, 1
      %p565 = por %p563, %p564
      %p567 = scmp.ne.s32.totalorder %s552, %s566
      %p568 = scmp.eq.s32.totalorder %s55, 0
      %p569 = por %p567, %p568
      %s571 = sadd.s32 %s570, 1
      %p574 = scmp.eq.s32.totalorder %s49, 1
      %p575 = scmp.ne.s32.totalorder %s570, %s572
      %p576 = scmp.eq.s32.totalorder %s49, 0
      %p577 = por %p575, %p576
      %p578 = scmp.ne.s32.totalorder %s570, %s572
      %p579 = scmp.eq.s32.totalorder %s54, 1
      %p580 = por %p578, %p579
      %p581 = scmp.ne.s32.totalorder %s572, %s573
      %p582 = scmp.eq.s32.totalorder %s54, 0
      %p583 = por %p581, %p582
      %p584 = scmp.ne.s32.totalorder %s572, %s573
      %p585 = scmp.eq.s32.totalorder %s55, 1
      %p586 = por %p584, %p585
      %p588 = scmp.ne.s32.totalorder %s573, %s587
      %p589 = scmp.eq.s32.totalorder %s55, 0
      %p590 = por %p588, %p589
      %s592 = sadd.s32 %s591, 1
      %p595 = scmp.eq.s32.totalorder %s49, 1
      %p596 = scmp.ne.s32.totalorder %s591, %s593
      %p597 = scmp.eq.s32.totalorder %s49, 0
      %p598 = por %p596, %p597
      %p599 = scmp.ne.s32.totalorder %s591, %s593
      %p600 = scmp.eq.s32.totalorder %s54, 1
      %p601 = por %p599, %p600
      %p602 = scmp.ne.s32.totalorder %s593, %s594
      %p603 = scmp.eq.s32.totalorder %s54, 0
      %p604 = por %p602, %p603
      %p605 = scmp.ne.s32.totalorder %s593, %s594
      %p606 = scmp.eq.s32.totalorder %s55, 1
      %p607 = por %p605, %p606
      %p609 = scmp.ne.s32.totalorder %s594, %s608
      %p610 = scmp.eq.s32.totalorder %s55, 0
      %p611 = por %p609, %p610
      %s613 = sadd.s32 %s612, 1
      %p616 = scmp.eq.s32.totalorder %s49, 1
      %p617 = scmp.ne.s32.totalorder %s612, %s614
      %p618 = scmp.eq.s32.totalorder %s49, 0
      %p619 = por %p617, %p618
      %p620 = scmp.ne.s32.totalorder %s612, %s614
      %p621 = scmp.eq.s32.totalorder %s54, 1
      %p622 = por %p620, %p621
      %p623 = scmp.ne.s32.totalorder %s614, %s615
      %p624 = scmp.eq.s32.totalorder %s54, 0
      %p625 = por %p623, %p624
      %p626 = scmp.ne.s32.totalorder %s614, %s615
      %p627 = scmp.eq.s32.totalorder %s55, 1
      %p628 = por %p626, %p627
      %p630 = scmp.ne.s32.totalorder %s615, %s629
      %p631 = scmp.eq.s32.totalorder %s55, 0
      %p632 = por %p630, %p631
      %s633 = ssub.s32 %s49, %s56
      %p634 = scmp.eq.s32.totalorder %s633, 0
      %s636 = sadd.s32 %s635, 1
      %s637 = scalar_select %p634, %s635, %s636
      %p640 = pneg %p634
      %p641 = scmp.eq.s32.totalorder %s49, 1
      %p642 = por %p640, %p641
      %p643 = scmp.ne.s32.totalorder %s635, %s638
      %p644 = scmp.eq.s32.totalorder %s49, 0
      %p645 = por %p643, %p644
      %p646 = scmp.ne.s32.totalorder %s635, %s638
      %p647 = scmp.eq.s32.totalorder %s54, 1
      %p648 = por %p646, %p647
      %p649 = scmp.ne.s32.totalorder %s638, %s639
      %p650 = scmp.eq.s32.totalorder %s54, 0
      %p651 = por %p649, %p650
      %p652 = scmp.ne.s32.totalorder %s638, %s639
      %p653 = scmp.eq.s32.totalorder %s55, 1
      %p654 = por %p652, %p653
      %p656 = scmp.ne.s32.totalorder %s639, %s655
      %p657 = scmp.eq.s32.totalorder %s55, 0
      %p658 = por %p656, %p657
      %p659 = scmp.le.s32.totalorder 1, %s49
      %p660 = scmp.lt.s32.totalorder %s49, 3
      %p661 = pnand %p659, %p660
      %p662 = pneg %p661
      // Predicated region
      $region9: #{tpu_custom_call.1} parent=5 // pred_check
        _
      $region10: #{tpu_custom_call.1} parent=5 // pred_check_branch
        %664 = sbr.rel (%p661) target = $region12
      $region11: #{tpu_custom_call.1} parent=5 // pred_region
        %s665 = ssub.s32 %s49, 1
        // Predicated region
        $region13: #{tpu_custom_call.1} parent=11 // pred_check
          %p666 = pneg %p226
        $region14: #{tpu_custom_call.1} parent=11 // pred_check_branch
          %668 = sbr.rel (%p666) target = $region16
        $region15: #{tpu_custom_call.1} parent=11 // pred_region
          %670 = vsyncadd [#allocation6], 0
          %s672 = sshll.u32 %s6, 4
          %s673 = int_to_ptr.hbm [resolvable:$true] %s672
          %s674 = sshll.u32 [#allocation7], 4
          %s675 = int_to_ptr.vmem [resolvable:$true] %s674
          %677 = dma.hbm_to_vmem [thread:$0]  %s673, 128, %s675, [#allocation6]
        $region16: #{tpu_custom_call.1} parent=11 // pred_fallthru
          _
        // Predicated region
        $region17: #{tpu_custom_call.1} parent=11 // pred_check
          %p678 = pneg %p247
        $region18: #{tpu_custom_call.1} parent=11 // pred_check_branch
          %680 = sbr.rel (%p678) target = $region20
        $region19: #{tpu_custom_call.1} parent=11 // pred_region
          _
        $region20: #{tpu_custom_call.1} parent=11 // pred_fallthru
          _
        // Predicated region
        $region21: #{tpu_custom_call.1} parent=11 // pred_check
          %p681 = pneg %p268
        $region22: #{tpu_custom_call.1} parent=11 // pred_check_branch
          %683 = sbr.rel (%p681) target = $region24
        $region23: #{tpu_custom_call.1} parent=11 // pred_region
          %685 = vsyncadd [#allocation9], 0
          %s687 = sshll.u32 %s8, 4
          %s688 = int_to_ptr.hbm [resolvable:$true] %s687
          %s689 = sshll.u32 [#allocation8], 4
          %s690 = int_to_ptr.vmem [resolvable:$true] %s689
          %692 = dma.hbm_to_vmem [thread:$0]  %s688, 16, %s690, [#allocation9]
        $region24: #{tpu_custom_call.1} parent=11 // pred_fallthru
          _
        // Predicated region
        $region25: #{tpu_custom_call.1} parent=11 // pred_check
          %p693 = pneg %p289
        $region26: #{tpu_custom_call.1} parent=11 // pred_check_branch
          %695 = sbr.rel (%p693) target = $region28
        $region27: #{tpu_custom_call.1} parent=11 // pred_region
          %697 = vsyncadd [#allocation9], 0
          %s699 = sshll.u32 %s9, 4
          %s700 = int_to_ptr.hbm [resolvable:$true] %s699
          %s701 = sshll.u32 [#allocation10], 4
          %s702 = int_to_ptr.vmem [resolvable:$true] %s701
          %704 = dma.hbm_to_vmem [thread:$0]  %s700, 16, %s702, [#allocation9]
        $region28: #{tpu_custom_call.1} parent=11 // pred_fallthru
          _
        // Predicated region
        $region29: #{tpu_custom_call.1} parent=11 // pred_check
          %p705 = pneg %p310
        $region30: #{tpu_custom_call.1} parent=11 // pred_check_branch
          %707 = sbr.rel (%p705) target = $region32
        $region31: #{tpu_custom_call.1} parent=11 // pred_region
          _
        $region32: #{tpu_custom_call.1} parent=11 // pred_fallthru
          _
        // Predicated region
        $region33: #{tpu_custom_call.1} parent=11 // pred_check
          %p708 = pneg %p331
        $region34: #{tpu_custom_call.1} parent=11 // pred_check_branch
          %710 = sbr.rel (%p708) target = $region36
        $region35: #{tpu_custom_call.1} parent=11 // pred_region
          %712 = vsyncadd [#allocation12], 0
          %s714 = sshll.u32 %s11, 4
          %s715 = int_to_ptr.hbm [resolvable:$true] %s714
          %s716 = sshll.u32 [#allocation11], 4
          %s717 = int_to_ptr.vmem [resolvable:$true] %s716
          %719 = dma.hbm_to_vmem [thread:$0]  %s715, 16, %s717, [#allocation12]
        $region36: #{tpu_custom_call.1} parent=11 // pred_fallthru
          _
        // Predicated region
        $region37: #{tpu_custom_call.1} parent=11 // pred_check
          %p720 = pneg %p352
        $region38: #{tpu_custom_call.1} parent=11 // pred_check_branch
          %722 = sbr.rel (%p720) target = $region40
        $region39: #{tpu_custom_call.1} parent=11 // pred_region
          %724 = vsyncadd [#allocation12], 0
          %s726 = sshll.u32 %s12, 4
          %s727 = int_to_ptr.hbm [resolvable:$true] %s726
          %s728 = sshll.u32 [#allocation13], 4
          %s729 = int_to_ptr.vmem [resolvable:$true] %s728
          %731 = dma.hbm_to_vmem [thread:$0]  %s727, 16, %s729, [#allocation12]
        $region40: #{tpu_custom_call.1} parent=11 // pred_fallthru
          _
        // Predicated region
        $region41: #{tpu_custom_call.1} parent=11 // pred_check
          %p732 = pneg %p373
        $region42: #{tpu_custom_call.1} parent=11 // pred_check_branch
          %734 = sbr.rel (%p732) target = $region44
        $region43: #{tpu_custom_call.1} parent=11 // pred_region
          %736 = vsyncadd [#allocation15], 0
          %s738 = sshll.u32 %s13, 4
          %s739 = int_to_ptr.hbm [resolvable:$true] %s738
          %s740 = sshll.u32 [#allocation14], 4
          %s741 = int_to_ptr.vmem [resolvable:$true] %s740
          %743 = dma.hbm_to_vmem [thread:$0]  %s739, 16, %s741, [#allocation15]
        $region44: #{tpu_custom_call.1} parent=11 // pred_fallthru
          _
        // Predicated region
        $region45: #{tpu_custom_call.1} parent=11 // pred_check
          %p744 = pneg %p394
        $region46: #{tpu_custom_call.1} parent=11 // pred_check_branch
          %746 = sbr.rel (%p744) target = $region48
        $region47: #{tpu_custom_call.1} parent=11 // pred_region
          _
        $region48: #{tpu_custom_call.1} parent=11 // pred_fallthru
          _
        // Predicated region
        $region49: #{tpu_custom_call.1} parent=11 // pred_check
          %p747 = pneg %p415
        $region50: #{tpu_custom_call.1} parent=11 // pred_check_branch
          %749 = sbr.rel (%p747) target = $region52
        $region51: #{tpu_custom_call.1} parent=11 // pred_region
          %751 = vsyncadd [#allocation15], 0
          %s753 = sshll.u32 %s15, 4
          %s754 = int_to_ptr.hbm [resolvable:$true] %s753
          %s755 = sshll.u32 [#allocation16], 4
          %s756 = int_to_ptr.vmem [resolvable:$true] %s755
          %758 = dma.hbm_to_vmem [thread:$0]  %s754, 16, %s756, [#allocation15]
        $region52: #{tpu_custom_call.1} parent=11 // pred_fallthru
          _
        // Predicated region
        $region53: #{tpu_custom_call.1} parent=11 // pred_check
          %p759 = pneg %p436
        $region54: #{tpu_custom_call.1} parent=11 // pred_check_branch
          %761 = sbr.rel (%p759) target = $region56
        $region55: #{tpu_custom_call.1} parent=11 // pred_region
          %763 = vsyncadd [#allocation18], 0
          %s765 = sshll.u32 %s16, 4
          %s766 = int_to_ptr.hbm [resolvable:$true] %s765
          %s767 = sshll.u32 [#allocation17], 4
          %s768 = int_to_ptr.vmem [resolvable:$true] %s767
          %770 = dma.hbm_to_vmem [thread:$0]  %s766, 16, %s768, [#allocation18]
        $region56: #{tpu_custom_call.1} parent=11 // pred_fallthru
          _
        // Predicated region
        $region57: #{tpu_custom_call.1} parent=11 // pred_check
          %p771 = pneg %p457
        $region58: #{tpu_custom_call.1} parent=11 // pred_check_branch
          %773 = sbr.rel (%p771) target = $region60
        $region59: #{tpu_custom_call.1} parent=11 // pred_region
          %775 = vsyncadd [#allocation18], 0
          %s777 = sshll.u32 %s17, 4
          %s778 = int_to_ptr.hbm [resolvable:$true] %s777
          %s779 = sshll.u32 [#allocation19], 4
          %s780 = int_to_ptr.vmem [resolvable:$true] %s779
          %782 = dma.hbm_to_vmem [thread:$0]  %s778, 16, %s780, [#allocation18]
        $region60: #{tpu_custom_call.1} parent=11 // pred_fallthru
          _
        // Predicated region
        $region61: #{tpu_custom_call.1} parent=11 // pred_check
          %p783 = pneg %p478
        $region62: #{tpu_custom_call.1} parent=11 // pred_check_branch
          %785 = sbr.rel (%p783) target = $region64
        $region63: #{tpu_custom_call.1} parent=11 // pred_region
          %787 = vsyncadd [#allocation21], 0
          %s788 = sshll.u32 %s18, 4
          %s789 = int_to_ptr.hbm [resolvable:$true] %s788
          %s790 = sshll.u32 [#allocation20], 4
          %s791 = int_to_ptr.vmem [resolvable:$true] %s790
          %796 = dma.hbm_to_vmem [thread:$0]  %s789, 4096, %s791, [#allocation21], 1024, 1024, 64
        $region64: #{tpu_custom_call.1} parent=11 // pred_fallthru
          _
        // Predicated region
        $region65: #{tpu_custom_call.1} parent=11 // pred_check
          %p797 = pneg %p499
        $region66: #{tpu_custom_call.1} parent=11 // pred_check_branch
          %799 = sbr.rel (%p797) target = $region68
        $region67: #{tpu_custom_call.1} parent=11 // pred_region
          %801 = vsyncadd [#allocation21], 0
          %s803 = sshll.u32 %s19, 4
          %s804 = int_to_ptr.hbm [resolvable:$true] %s803
          %s805 = sshll.u32 [#allocation22], 4
          %s806 = int_to_ptr.vmem [resolvable:$true] %s805
          %808 = dma.hbm_to_vmem [thread:$0]  %s804, 128, %s806, [#allocation21]
        $region68: #{tpu_custom_call.1} parent=11 // pred_fallthru
          _
        // Predicated region
        $region69: #{tpu_custom_call.1} parent=11 // pred_check
          %p809 = pneg %p520
        $region70: #{tpu_custom_call.1} parent=11 // pred_check_branch
          %811 = sbr.rel (%p809) target = $region72
        $region71: #{tpu_custom_call.1} parent=11 // pred_region
          %813 = vsyncadd [#allocation24], 0
          %s815 = sshll.u32 %s20, 4
          %s816 = int_to_ptr.hbm [resolvable:$true] %s815
          %s817 = sshll.u32 [#allocation23], 4
          %s818 = int_to_ptr.vmem [resolvable:$true] %s817
          %820 = dma.hbm_to_vmem [thread:$0]  %s816, 16, %s818, [#allocation24]
        $region72: #{tpu_custom_call.1} parent=11 // pred_fallthru
          _
        // Predicated region
        $region73: #{tpu_custom_call.1} parent=11 // pred_check
          %p821 = pneg %p541
        $region74: #{tpu_custom_call.1} parent=11 // pred_check_branch
          %823 = sbr.rel (%p821) target = $region76
        $region75: #{tpu_custom_call.1} parent=11 // pred_region
          %825 = vsyncadd [#allocation24], 0
          %s827 = sshll.u32 %s21, 4
          %s828 = int_to_ptr.hbm [resolvable:$true] %s827
          %s829 = sshll.u32 [#allocation25], 4
          %s830 = int_to_ptr.vmem [resolvable:$true] %s829
          %832 = dma.hbm_to_vmem [thread:$0]  %s828, 16, %s830, [#allocation24]
        $region76: #{tpu_custom_call.1} parent=11 // pred_fallthru
          _
        // Predicated region
        $region77: #{tpu_custom_call.1} parent=11 // pred_check
          %p833 = pneg %p562
        $region78: #{tpu_custom_call.1} parent=11 // pred_check_branch
          %835 = sbr.rel (%p833) target = $region80
        $region79: #{tpu_custom_call.1} parent=11 // pred_region
          %837 = vsyncadd [#allocation27], 0
          %s839 = sshll.u32 %s22, 4
          %s840 = int_to_ptr.hbm [resolvable:$true] %s839
          %s841 = sshll.u32 [#allocation26], 4
          %s842 = int_to_ptr.vmem [resolvable:$true] %s841
          %844 = dma.hbm_to_vmem [thread:$0]  %s840, 16, %s842, [#allocation27]
        $region80: #{tpu_custom_call.1} parent=11 // pred_fallthru
          _
        // Predicated region
        $region81: #{tpu_custom_call.1} parent=11 // pred_check
          %p845 = pneg %p583
        $region82: #{tpu_custom_call.1} parent=11 // pred_check_branch
          %847 = sbr.rel (%p845) target = $region84
        $region83: #{tpu_custom_call.1} parent=11 // pred_region
          %849 = vsyncadd [#allocation27], 0
          %s851 = sshll.u32 %s23, 4
          %s852 = int_to_ptr.hbm [resolvable:$true] %s851
          %s853 = sshll.u32 [#allocation28], 4
          %s854 = int_to_ptr.vmem [resolvable:$true] %s853
          %856 = dma.hbm_to_vmem [thread:$0]  %s852, 16, %s854, [#allocation27]
        $region84: #{tpu_custom_call.1} parent=11 // pred_fallthru
          _
        // Predicated region
        $region85: #{tpu_custom_call.1} parent=11 // pred_check
          %p857 = pneg %p604
        $region86: #{tpu_custom_call.1} parent=11 // pred_check_branch
          %859 = sbr.rel (%p857) target = $region88
        $region87: #{tpu_custom_call.1} parent=11 // pred_region
          _
        $region88: #{tpu_custom_call.1} parent=11 // pred_fallthru
          _
        // Predicated region
        $region89: #{tpu_custom_call.1} parent=11 // pred_check
          %p860 = pneg %p625
        $region90: #{tpu_custom_call.1} parent=11 // pred_check_branch
          %862 = sbr.rel (%p860) target = $region92
        $region91: #{tpu_custom_call.1} parent=11 // pred_region
          %864 = vsyncadd [#allocation30], 0
          %s866 = sshll.u32 %s25, 4
          %s867 = int_to_ptr.hbm [resolvable:$true] %s866
          %s868 = sshll.u32 [#allocation29], 4
          %s869 = int_to_ptr.vmem [resolvable:$true] %s868
          %871 = dma.hbm_to_vmem [thread:$0]  %s867, 16, %s869, [#allocation30]
        $region92: #{tpu_custom_call.1} parent=11 // pred_fallthru
          _
      $region12: #{tpu_custom_call.1} parent=5 // pred_fallthru
        _
      %p872 = scmp.lt.s32.totalorder %s49, 2
      // Predicated region
      $region93: #{tpu_custom_call.1} parent=5 // pred_check
        %p873 = pneg %p872
      $region94: #{tpu_custom_call.1} parent=5 // pred_check_branch
        %875 = sbr.rel (%p873) target = $region96
      $region95: #{tpu_custom_call.1} parent=5 // pred_region
        // Predicated region
        $region97: #{tpu_custom_call.1} parent=95 // pred_check
          %p876 = pneg %p69
        $region98: #{tpu_custom_call.1} parent=95 // pred_check_branch
          %878 = sbr.rel (%p876) target = $region100
        $region99: #{tpu_custom_call.1} parent=95 // pred_region
          %s879 = sand.u32 %s59, 1
          %s880 = scalar_lea.sflag [#allocation3], %s879
          %s881 = sand.u32 %s59, 1
          %s882 = smul.addr %s881, 8
          %s883 = scalar_lea.vmem [#allocation2], %s882
          %885 = vsyncadd %s880, 0
          %s886 = smul.addr %s49, 8
          %s887 = scalar_lea.hbm %s0, %s886
          %s889 = sshll.u32 %s887, 4
          %s890 = int_to_ptr.hbm [resolvable:$true] %s889
          %s891 = sshll.u32 %s883, 4
          %s892 = int_to_ptr.vmem [resolvable:$true] %s891
          %894 = dma.hbm_to_vmem [thread:$0]  %s890, 128, %s892, %s880
        $region100: #{tpu_custom_call.1} parent=95 // pred_fallthru
          _
        // Predicated region
        $region101: #{tpu_custom_call.1} parent=95 // pred_check
          %p895 = pneg %p95
        $region102: #{tpu_custom_call.1} parent=95 // pred_check_branch
          %897 = sbr.rel (%p895) target = $region104
        $region103: #{tpu_custom_call.1} parent=95 // pred_region
          %p898 = scmp.lt.s32.totalorder %s49, 1
          %s899 = scalar_select %p898, %s49, 1
          %s900 = smul.addr %s899, 8
          %s901 = scalar_lea.vmem %s1, %s900
        $region104: #{tpu_custom_call.1} parent=95 // pred_fallthru
          _
        // Predicated region
        $region105: #{tpu_custom_call.1} parent=95 // pred_check
          %p902 = pneg %p121
        $region106: #{tpu_custom_call.1} parent=95 // pred_check_branch
          %904 = sbr.rel (%p902) target = $region108
        $region107: #{tpu_custom_call.1} parent=95 // pred_region
          %p905 = scmp.lt.s32.totalorder %s49, 1
          %s906 = scalar_select %p905, %s49, 1
          %s907 = smul.addr %s906, 2
          %s908 = smul.addr %s907, 8
          %s909 = scalar_lea.vmem %s2, %s908
        $region108: #{tpu_custom_call.1} parent=95 // pred_fallthru
          _
        // Predicated region
        $region109: #{tpu_custom_call.1} parent=95 // pred_check
          %p910 = pneg %p147
        $region110: #{tpu_custom_call.1} parent=95 // pred_check_branch
          %912 = sbr.rel (%p910) target = $region112
        $region111: #{tpu_custom_call.1} parent=95 // pred_region
          %p913 = scmp.lt.s32.totalorder %s49, 1
          %s914 = scalar_select %p913, %s49, 1
          %s915 = smul.addr %s914, 8
          %s916 = scalar_lea.vmem %s3, %s915
        $region112: #{tpu_custom_call.1} parent=95 // pred_fallthru
          _
        // Predicated region
        $region113: #{tpu_custom_call.1} parent=95 // pred_check
          %p917 = pneg %p173
        $region114: #{tpu_custom_call.1} parent=95 // pred_check_branch
          %919 = sbr.rel (%p917) target = $region116
        $region115: #{tpu_custom_call.1} parent=95 // pred_region
          %s920 = sand.u32 %s49, 1
          %s921 = scalar_lea.sflag [#allocation6], %s920
          %s922 = sand.u32 %s163, 1
          %s923 = smul.addr %s922, 2
          %s924 = scalar_lea.vmem [#allocation5], %s923
          %926 = vsyncadd %s921, 0
          %s927 = smul.addr %s49, 2
          %s928 = scalar_lea.hbm %s4, %s927
          %s930 = sshll.u32 %s928, 4
          %s931 = int_to_ptr.hbm [resolvable:$true] %s930
          %s932 = sshll.u32 %s924, 4
          %s933 = int_to_ptr.vmem [resolvable:$true] %s932
          %935 = dma.hbm_to_vmem [thread:$0]  %s931, 32, %s933, %s921
        $region116: #{tpu_custom_call.1} parent=95 // pred_fallthru
          _
        // Predicated region
        $region117: #{tpu_custom_call.1} parent=95 // pred_check
          %p936 = pneg %p199
        $region118: #{tpu_custom_call.1} parent=95 // pred_check_branch
          %938 = sbr.rel (%p936) target = $region120
        $region119: #{tpu_custom_call.1} parent=95 // pred_region
          %p939 = scmp.lt.s32.totalorder %s49, 1
          %s940 = scalar_select %p939, %s49, 1
          %s941 = scalar_lea.vmem %s5, %s940
        $region120: #{tpu_custom_call.1} parent=95 // pred_fallthru
          _
      $region96: #{tpu_custom_call.1} parent=5 // pred_fallthru
        _
      %p942 = scmp.le.s32.totalorder 1, %s49
      %p943 = scmp.lt.s32.totalorder %s49, 3
      %p944 = pnand %p942, %p943
      %p945 = pneg %p944
      // Predicated region
      $region121: #{tpu_custom_call.1} parent=5 // pred_check
        _
      $region122: #{tpu_custom_call.1} parent=5 // pred_check_branch
        %947 = sbr.rel (%p944) target = $region124
      $region123: #{tpu_custom_call.1} parent=5 // pred_region
        %s948 = ssub.s32 %s49, 1
        %s949 = sand.u32 %s62, 1
        %s950 = scalar_lea.sflag [#allocation3], %s949
        %s951 = sand.u32 %s62, 1
        %s952 = smul.addr %s951, 8
        %s953 = scalar_lea.vmem [#allocation2], %s952
        // Predicated region
        $region125: #{tpu_custom_call.1} parent=123 // pred_check
          %p954 = pneg %p75
        $region126: #{tpu_custom_call.1} parent=123 // pred_check_branch
          %956 = sbr.rel (%p954) target = $region128
        $region127: #{tpu_custom_call.1} parent=123 // pred_region
          %958 = dma.done %s950, 128
        $region128: #{tpu_custom_call.1} parent=123 // pred_fallthru
          _
        %s959 = sand.u32 %s54, 1
        %s960 = scalar_lea.sflag [#allocation6], %s959
        %s961 = sand.u32 %s166, 1
        %s962 = smul.addr %s961, 2
        %s963 = scalar_lea.vmem [#allocation5], %s962
        // Predicated region
        $region129: #{tpu_custom_call.1} parent=123 // pred_check
          %p964 = pneg %p179
        $region130: #{tpu_custom_call.1} parent=123 // pred_check_branch
          %966 = sbr.rel (%p964) target = $region132
        $region131: #{tpu_custom_call.1} parent=123 // pred_region
          %968 = dma.done %s960, 32
        $region132: #{tpu_custom_call.1} parent=123 // pred_fallthru
          _
        // Predicated region
        $region133: #{tpu_custom_call.1} parent=123 // pred_check
          %p969 = pneg %p226
        $region134: #{tpu_custom_call.1} parent=123 // pred_check_branch
          %971 = sbr.rel (%p969) target = $region136
        $region135: #{tpu_custom_call.1} parent=123 // pred_region
          %973 = dma.done [#allocation6], 128
        $region136: #{tpu_custom_call.1} parent=123 // pred_fallthru
          _
        // Predicated region
        $region137: #{tpu_custom_call.1} parent=123 // pred_check
          %p974 = pneg %p268
        $region138: #{tpu_custom_call.1} parent=123 // pred_check_branch
          %976 = sbr.rel (%p974) target = $region140
        $region139: #{tpu_custom_call.1} parent=123 // pred_region
          %978 = dma.done [#allocation9], 16
        $region140: #{tpu_custom_call.1} parent=123 // pred_fallthru
          _
        // Predicated region
        $region141: #{tpu_custom_call.1} parent=123 // pred_check
          %p979 = pneg %p289
        $region142: #{tpu_custom_call.1} parent=123 // pred_check_branch
          %981 = sbr.rel (%p979) target = $region144
        $region143: #{tpu_custom_call.1} parent=123 // pred_region
          %983 = dma.done [#allocation9], 16
        $region144: #{tpu_custom_call.1} parent=123 // pred_fallthru
          _
        // Predicated region
        $region145: #{tpu_custom_call.1} parent=123 // pred_check
          %p984 = pneg %p331
        $region146: #{tpu_custom_call.1} parent=123 // pred_check_branch
          %986 = sbr.rel (%p984) target = $region148
        $region147: #{tpu_custom_call.1} parent=123 // pred_region
          %988 = dma.done [#allocation12], 16
        $region148: #{tpu_custom_call.1} parent=123 // pred_fallthru
          _
        // Predicated region
        $region149: #{tpu_custom_call.1} parent=123 // pred_check
          %p989 = pneg %p352
        $region150: #{tpu_custom_call.1} parent=123 // pred_check_branch
          %991 = sbr.rel (%p989) target = $region152
        $region151: #{tpu_custom_call.1} parent=123 // pred_region
          %993 = dma.done [#allocation12], 16
        $region152: #{tpu_custom_call.1} parent=123 // pred_fallthru
          _
        // Predicated region
        $region153: #{tpu_custom_call.1} parent=123 // pred_check
          %p994 = pneg %p373
        $region154: #{tpu_custom_call.1} parent=123 // pred_check_branch
          %996 = sbr.rel (%p994) target = $region156
        $region155: #{tpu_custom_call.1} parent=123 // pred_region
          %998 = dma.done [#allocation15], 16
        $region156: #{tpu_custom_call.1} parent=123 // pred_fallthru
          _
        // Predicated region
        $region157: #{tpu_custom_call.1} parent=123 // pred_check
          %p999 = pneg %p415
        $region158: #{tpu_custom_call.1} parent=123 // pred_check_branch
          %1001 = sbr.rel (%p999) target = $region160
        $region159: #{tpu_custom_call.1} parent=123 // pred_region
          %1003 = dma.done [#allocation15], 16
        $region160: #{tpu_custom_call.1} parent=123 // pred_fallthru
          _
        // Predicated region
        $region161: #{tpu_custom_call.1} parent=123 // pred_check
          %p1004 = pneg %p436
        $region162: #{tpu_custom_call.1} parent=123 // pred_check_branch
          %1006 = sbr.rel (%p1004) target = $region164
        $region163: #{tpu_custom_call.1} parent=123 // pred_region
          %1008 = dma.done [#allocation18], 16
        $region164: #{tpu_custom_call.1} parent=123 // pred_fallthru
          _
        // Predicated region
        $region165: #{tpu_custom_call.1} parent=123 // pred_check
          %p1009 = pneg %p457
        $region166: #{tpu_custom_call.1} parent=123 // pred_check_branch
          %1011 = sbr.rel (%p1009) target = $region168
        $region167: #{tpu_custom_call.1} parent=123 // pred_region
          %1013 = dma.done [#allocation18], 16
        $region168: #{tpu_custom_call.1} parent=123 // pred_fallthru
          _
        // Predicated region
        $region169: #{tpu_custom_call.1} parent=123 // pred_check
          %p1014 = pneg %p478
        $region170: #{tpu_custom_call.1} parent=123 // pred_check_branch
          %1016 = sbr.rel (%p1014) target = $region172
        $region171: #{tpu_custom_call.1} parent=123 // pred_region
          %1018 = dma.done [#allocation21], 4096
        $region172: #{tpu_custom_call.1} parent=123 // pred_fallthru
          _
        // Predicated region
        $region173: #{tpu_custom_call.1} parent=123 // pred_check
          %p1019 = pneg %p499
        $region174: #{tpu_custom_call.1} parent=123 // pred_check_branch
          %1021 = sbr.rel (%p1019) target = $region176
        $region175: #{tpu_custom_call.1} parent=123 // pred_region
          %1023 = dma.done [#allocation21], 128
        $region176: #{tpu_custom_call.1} parent=123 // pred_fallthru
          _
        // Predicated region
        $region177: #{tpu_custom_call.1} parent=123 // pred_check
          %p1024 = pneg %p520
        $region178: #{tpu_custom_call.1} parent=123 // pred_check_branch
          %1026 = sbr.rel (%p1024) target = $region180
        $region179: #{tpu_custom_call.1} parent=123 // pred_region
          %1028 = dma.done [#allocation24], 16
        $region180: #{tpu_custom_call.1} parent=123 // pred_fallthru
          _
        // Predicated region
        $region181: #{tpu_custom_call.1} parent=123 // pred_check
          %p1029 = pneg %p541
        $region182: #{tpu_custom_call.1} parent=123 // pred_check_branch
          %1031 = sbr.rel (%p1029) target = $region184
        $region183: #{tpu_custom_call.1} parent=123 // pred_region
          %1033 = dma.done [#allocation24], 16
        $region184: #{tpu_custom_call.1} parent=123 // pred_fallthru
          _
        // Predicated region
        $region185: #{tpu_custom_call.1} parent=123 // pred_check
          %p1034 = pneg %p562
        $region186: #{tpu_custom_call.1} parent=123 // pred_check_branch
          %1036 = sbr.rel (%p1034) target = $region188
        $region187: #{tpu_custom_call.1} parent=123 // pred_region
          %1038 = dma.done [#allocation27], 16
        $region188: #{tpu_custom_call.1} parent=123 // pred_fallthru
          _
        // Predicated region
        $region189: #{tpu_custom_call.1} parent=123 // pred_check
          %p1039 = pneg %p583
        $region190: #{tpu_custom_call.1} parent=123 // pred_check_branch
          %1041 = sbr.rel (%p1039) target = $region192
        $region191: #{tpu_custom_call.1} parent=123 // pred_region
          %1043 = dma.done [#allocation27], 16
        $region192: #{tpu_custom_call.1} parent=123 // pred_fallthru
          _
        // Predicated region
        $region193: #{tpu_custom_call.1} parent=123 // pred_check
          %p1044 = pneg %p625
        $region194: #{tpu_custom_call.1} parent=123 // pred_check_branch
          %1046 = sbr.rel (%p1044) target = $region196
        $region195: #{tpu_custom_call.1} parent=123 // pred_region
          %1048 = dma.done [#allocation30], 16
        $region196: #{tpu_custom_call.1} parent=123 // pred_fallthru
          _
        %s1049 = sand.u32 %s62, 1
        %s1050 = scalar_lea.sflag [#allocation3], %s1049
        %s1051 = sand.u32 %s62, 1
        %s1052 = smul.addr %s1051, 8
        %s1053 = scalar_lea.vmem [#allocation2], %s1052
        %p1054 = pneg %p75
        %p1055 = pneg %p72
        %p1056 = scmp.lt.s32.totalorder %s54, 1
        %s1057 = scalar_select %p1056, %s54, 1
        %s1058 = smul.addr %s1057, 8
        %s1059 = scalar_lea.vmem %s1, %s1058
        %p1060 = pneg %p101
        %p1061 = pneg %p98
        %p1062 = scmp.lt.s32.totalorder %s54, 1
        %s1063 = scalar_select %p1062, %s54, 1
        %s1064 = smul.addr %s1063, 2
        %s1065 = smul.addr %s1064, 8
        %s1066 = scalar_lea.vmem %s2, %s1065
        %p1067 = pneg %p127
        %p1068 = pneg %p124
        %p1069 = scmp.lt.s32.totalorder %s54, 1
        %s1070 = scalar_select %p1069, %s54, 1
        %s1071 = smul.addr %s1070, 8
        %s1072 = scalar_lea.vmem %s3, %s1071
        %p1073 = pneg %p153
        %p1074 = pneg %p150
        %s1075 = sand.u32 %s54, 1
        %s1076 = scalar_lea.sflag [#allocation6], %s1075
        %s1077 = sand.u32 %s166, 1
        %s1078 = smul.addr %s1077, 2
        %s1079 = scalar_lea.vmem [#allocation5], %s1078
        %p1080 = pneg %p179
        %p1081 = pneg %p176
        %p1082 = scmp.lt.s32.totalorder %s54, 1
        %s1083 = scalar_select %p1082, %s54, 1
        %s1084 = scalar_lea.vmem %s5, %s1083
        %p1085 = pneg %p205
        %p1086 = pneg %p202
        %p1087 = pneg %p226
        %p1088 = pneg %p223
        %p1089 = pneg %p247
        %p1090 = pneg %p244
        %p1091 = pneg %p268
        %p1092 = pneg %p265
        %p1093 = pneg %p289
        %p1094 = pneg %p286
        %p1095 = pneg %p310
        %p1096 = pneg %p307
        %p1097 = pneg %p331
        %p1098 = pneg %p328
        %p1099 = pneg %p352
        %p1100 = pneg %p349
        %p1101 = pneg %p373
        %p1102 = pneg %p370
        %p1103 = pneg %p394
        %p1104 = pneg %p391
        %p1105 = pneg %p415
        %p1106 = pneg %p412
        %p1107 = pneg %p436
        %p1108 = pneg %p433
        %p1109 = pneg %p457
        %p1110 = pneg %p454
        %p1111 = pneg %p478
        %p1112 = pneg %p475
        %p1113 = pneg %p499
        %p1114 = pneg %p496
        %p1115 = pneg %p520
        %p1116 = pneg %p517
        %p1117 = pneg %p541
        %p1118 = pneg %p538
        %p1119 = pneg %p562
        %p1120 = pneg %p559
        %p1121 = pneg %p583
        %p1122 = pneg %p580
        %p1123 = pneg %p604
        %p1124 = pneg %p601
        %p1125 = pneg %p625
        %p1126 = pneg %p622
        %p1127 = pneg %p651
        %p1128 = pneg %p648
        %s1129 = sand.u32 %s638, 1
        %s1130 = scalar_lea.sflag [#allocation4], %s1129
        %s1131 = sand.u32 %s638, 1
        %s1132 = smul.addr %s1131, 8
        %s1133 = scalar_lea.vmem [#allocation31], %s1132
        %p1134 = scmp.lt.s32.totalorder %s54, 1
        %s1135 = scalar_select %p1134, %s54, 1
        %s1136 = smul.addr %s1135, 8
        %s1137 = scalar_lea.vmem %s1, %s1136
        %p1138 = scmp.lt.s32.totalorder %s54, 1
        %s1139 = scalar_select %p1138, %s54, 1
        %s1140 = smul.addr %s1139, 2
        %s1141 = smul.addr %s1140, 8
        %s1142 = scalar_lea.vmem %s2, %s1141
        %p1143 = scmp.lt.s32.totalorder %s54, 1
        %s1144 = scalar_select %p1143, %s54, 1
        %s1145 = smul.addr %s1144, 8
        %s1146 = scalar_lea.vmem %s3, %s1145
        %p1147 = scmp.lt.s32.totalorder %s54, 1
        %s1148 = scalar_select %p1147, %s54, 1
        %s1149 = scalar_lea.vmem %s5, %s1148
        %v1150 = vld [vmem:[%s953] sm:$0xff]
        %v1151 = vld [vmem:[%s1142] sm:$0xff]
        %v1152 = vld [vmem:[%s1142 + $0x8] sm:$0x3]
        %v1153 = vld [vmem:[%s1149] sm:$0x1]
        %v1154 = vld [vmem:[#allocation23] sm:$0x1]
        %1156 = vset.pattern.permute.xlu0 0
        %1157 = vperm.xlu0 %1156, %v1151
        %v1158 = vpop.permute.xlu0 %1157
        %1161 = vset.pattern.permute.xlu0 0
        %1162 = vperm.xlu0 %1161, %v1152
        %v1163 = vpop.permute.xlu0 %1162
        %v1166 = vperm.slane %v1154, 0
        %v1168 = vmul.f32 %v1158, %v1166
        %v1169 = vmul.f32 %v1163, %v1166
        %v1170 = vld [vmem:[#allocation25] sm:$0x1]
        %v1172 = vperm.slane %v1170, 0
        %v1174 = vadd.f32 %v1168, %v1172
        %v1175 = vadd.f32 %v1169, %v1172
        %v1176 = vmax.f32 %v1174, 0.0
        %v1177 = vmax.f32 %v1175, 0.0
        %v1178 = vld [vmem:[#allocation26] sm:$0x1]
        %v1179 = vld [vmem:[#allocation28] sm:$0x1]
        %vm1180 = vcmask 261120
        %v1181 = vsel %vm1180, %v1176, 0.0
        %1182 = vadd.xlane.f32.xlu0 %v1181
        %v1183 = vpop.xlane.xlu0 %1182
        %vm1184 = vcmask 254976
        %v1185 = vsel %vm1184, %v1177, 0.0
        %1186 = vadd.xlane.f32.xlu0 %v1185
        %v1187 = vpop.xlane.xlu0 %1186
        %v1188 = vrcp.pop 32.0
        %v1189 = vmul.f32 32.0, %v1188
        %v1190 = vsub.f32 1.0, %v1189
        %v1191 = vmul.f32 %v1188, %v1190
        %v1192 = vadd.f32 %v1188, %v1191
        %vm1193 = vweird.f32 %v1188
        %v1194 = vsel %vm1193, %v1188, %v1192
        %v1195 = vmul.f32 %v1183, %v1194
        %v1196 = vmul.f32 %v1187, %v1194
        %v1197 = vsub.f32 %v1176, %v1195
        %v1198 = vsub.f32 %v1177, %v1196
        %v1199 = vmul.f32 %v1197, %v1197
        %v1200 = vmul.f32 %v1198, %v1198
        %v1201 = vsel %vm1180, %v1199, 0.0
        %1202 = vadd.xlane.f32.xlu0 %v1201
        %v1203 = vpop.xlane.xlu0 %1202
        %v1204 = vsel %vm1184, %v1200, 0.0
        %1205 = vadd.xlane.f32.xlu0 %v1204
        %v1206 = vpop.xlane.xlu0 %1205
        %v1207 = vmul.f32 %v1203, %v1194
        %v1208 = vmul.f32 %v1206, %v1194
        %v1209 = vadd.f32 %v1207, 1e-05
        %v1210 = vadd.f32 %v1208, 1e-05
        %v1211 = vrsqrt.pop %v1209
        %v1212 = vmul.f32 %v1211, %v1209
        %v1213 = vmul.f32 %v1212, %v1211
        %v1214 = vmul.f32 0.5, %v1213
        %v1215 = vsub.f32 1.5, %v1214
        %v1216 = vmul.f32 %v1211, %v1215
        %vm1217 = vweird.f32 %v1209
        %vm1218 = vweird.f32 %v1211
        %vm1219 = vmor %vm1217, %vm1218
        %v1220 = vsel %vm1219, %v1211, %v1216
        %v1221 = vrsqrt.pop %v1210
        %v1222 = vmul.f32 %v1221, %v1210
        %v1223 = vmul.f32 %v1222, %v1221
        %v1224 = vmul.f32 0.5, %v1223
        %v1225 = vsub.f32 1.5, %v1224
        %v1226 = vmul.f32 %v1221, %v1225
        %vm1227 = vweird.f32 %v1210
        %vm1228 = vweird.f32 %v1221
        %vm1229 = vmor %vm1227, %vm1228
        %v1230 = vsel %vm1229, %v1221, %v1226
        %v1231 = vmul.f32 %v1197, %v1220
        %v1232 = vmul.f32 %v1198, %v1230
        %v1234 = vperm.slane %v1178, 0
        %v1236 = vmul.f32 %v1231, %v1234
        %v1237 = vmul.f32 %v1232, %v1234
        %v1239 = vperm.slane %v1179, 0
        %v1241 = vadd.f32 %v1236, %v1239
        %v1242 = vadd.f32 %v1237, %v1239
        %v1243 = vld [vmem:[%s24] sm:$0xff]
        %v1244 = vld [vmem:[%s24 + $0x8] sm:$0xff]
        %v1245 = vld [vmem:[%s24 + $0x10] sm:$0xff]
        %v1246 = vld [vmem:[%s24 + $0x18] sm:$0xff]
        %v1247 = vld [vmem:[#allocation29] sm:$0x1]
        %v1249 = vperm.slane %v1247, 0
        %v1252 = vsel %vm1180, %v1241, 0
        %v1255 = vsel %vm1180, %v1242, 0
        %1257 = vmatpush.msra.mxu0 0.0
        %1258 = vmatpush.msra.mxu0 0.0
        %1259 = vmatpush.msra.mxu0 0.0
        %1260 = vmatpush.msra.mxu0 0.0
        %1261 = vmatpush.msra.mxu0 0.0
        %1262 = vmatpush.msra.mxu0 0.0
        %1263 = vmatpush.msra.mxu0 0.0
        %1264 = vmatpush.msra.mxu0 0.0
        %1265 = vmatpush.msra.mxu0 0.0
        %1266 = vmatpush.msra.mxu0 0.0
        %1267 = vmatpush.msra.mxu0 0.0
        %1268 = vmatpush.msra.mxu0 0.0
        %1269 = vmatpush.msra.mxu0 %v1246
        %1270 = vmatpush.msra.mxu0 %v1245
        %1271 = vmatpush.msra.mxu0 %v1244
        %1272 = vmatpush.msra.mxu0 %v1243
        %1273 = vmatmul.f32.gmra.mxu0 %v1252
        %v1274 = vpop.f32.mrf.mxu0
        %v1275 = vadd.f32 %v1249, %v1274
        %1276 = vmatmul.f32.gmra.mxu0 %v1255
        %v1277 = vpop.f32.mrf.mxu0
        %v1278 = vadd.f32 %v1249, %v1277
        %1279 = vdwg.mxu0
        %v1280 = vtanh.pop %v1275
        %v1281 = vtanh.pop %v1278
        %vm1282 = vcmp.eq.f32.partialorder %v1151, -999.0
        %vm1283 = vcmp.eq.f32.partialorder %v1152, -999.0
        %v1284 = vsel %vm1282, 1, 0
        %v1285 = vsel %vm1283, 1, 0
        %1286 = vset.pattern.permute.xlu0 0
        %1287 = vperm.xlu0 %1286, %v1284
        %v1288 = vpop.permute.xlu0 %1287
        %1289 = vset.pattern.permute.xlu0 0
        %1290 = vperm.xlu0 %1289, %v1285
        %v1291 = vpop.permute.xlu0 %1290
        %vm1292 = vcmp.eq.s32.totalorder %v1288, 1
        %vm1293 = vcmp.eq.s32.totalorder %v1291, 1
        %v1294 = vsel %vm1292, 0.0, %v1280
        %v1295 = vsel %vm1293, 0.0, %v1281
        %v1296 = vld [vmem:[%s1137] sm:$0x3f]
        %v1297 = vld [vmem:[%s1146] sm:$0x3f]
        %v1298 = vld [vmem:[%s963] sm:$0x1]
        %v1299 = vld [vmem:[%s963 + $0x1] sm:$0x1]
        %v1300 = vld [vmem:[#allocation7] sm:$0xff]
        %v1301 = vld [vmem:[%s7] sm:$0x1]
        %v1303 = vperm.slane %v1301, 0
        %vm1305 = vcmask 64512
        %v1307 = vsel %vm1305, %v1296, 0
        %1309 = vmatpush.msra.mxu0 0.0
        %1310 = vmatpush.msra.mxu0 0.0
        %1311 = vmatpush.msra.mxu0 0.0
        %1312 = vmatpush.msra.mxu0 0.0
        %1313 = vmatpush.msra.mxu0 0.0
        %1314 = vmatpush.msra.mxu0 0.0
        %1315 = vmatpush.msra.mxu0 0.0
        %1316 = vmatpush.msra.mxu0 0.0
        %1317 = vmatpush.msra.mxu0 0.0
        %1318 = vmatpush.msra.mxu0 0.0
        %1319 = vmatpush.msra.mxu0 0.0
        %1320 = vmatpush.msra.mxu0 0.0
        %1321 = vmatpush.msra.mxu0 0.0
        %1322 = vmatpush.msra.mxu0 0.0
        %1323 = vmatpush.msra.mxu0 0.0
        %1324 = vmatpush.msra.mxu0 %v1300
        %1325 = vmatmul.f32.gmra.mxu0 %v1307
        %v1326 = vpop.f32.mrf.mxu0
        %v1327 = vadd.f32 %v1303, %v1326
        %1328 = vdwg.mxu0
        %v1329 = vmax.f32 %v1327, 0.0
        %v1330 = vld [vmem:[#allocation8] sm:$0x1]
        %v1331 = vld [vmem:[#allocation10] sm:$0x1]
        %vm1332 = vcmask 259072
        %v1333 = vsel %vm1332, %v1329, 0.0
        %1334 = vadd.xlane.f32.xlu0 %v1333
        %v1335 = vpop.xlane.xlu0 %1334
        %v1336 = vmul.f32 %v1335, %v1194
        %v1337 = vsub.f32 %v1329, %v1336
        %v1338 = vmul.f32 %v1337, %v1337
        %v1339 = vsel %vm1332, %v1338, 0.0
        %1340 = vadd.xlane.f32.xlu0 %v1339
        %v1341 = vpop.xlane.xlu0 %1340
        %v1342 = vmul.f32 %v1341, %v1194
        %v1343 = vadd.f32 %v1342, 1e-05
        %v1344 = vrsqrt.pop %v1343
        %v1345 = vmul.f32 %v1344, %v1343
        %v1346 = vmul.f32 %v1345, %v1344
        %v1347 = vmul.f32 0.5, %v1346
        %v1348 = vsub.f32 1.5, %v1347
        %v1349 = vmul.f32 %v1344, %v1348
        %vm1350 = vweird.f32 %v1343
        %vm1351 = vweird.f32 %v1344
        %vm1352 = vmor %vm1350, %vm1351
        %v1353 = vsel %vm1352, %v1344, %v1349
        %v1354 = vmul.f32 %v1337, %v1353
        %v1356 = vperm.slane %v1330, 0
        %v1358 = vmul.f32 %v1354, %v1356
        %v1360 = vperm.slane %v1331, 0
        %v1362 = vadd.f32 %v1358, %v1360
        %v1363 = vld [vmem:[%s10] sm:$0xff]
        %v1364 = vld [vmem:[%s10 + $0x8] sm:$0xff]
        %v1365 = vld [vmem:[%s10 + $0x10] sm:$0xff]
        %v1366 = vld [vmem:[%s10 + $0x18] sm:$0xff]
        %v1367 = vld [vmem:[#allocation11] sm:$0x1]
        %v1369 = vperm.slane %v1367, 0
        %v1372 = vsel %vm1180, %v1362, 0
        %1374 = vmatpush.msra.mxu0 0.0
        %1375 = vmatpush.msra.mxu0 0.0
        %1376 = vmatpush.msra.mxu0 0.0
        %1377 = vmatpush.msra.mxu0 0.0
        %1378 = vmatpush.msra.mxu0 0.0
        %1379 = vmatpush.msra.mxu0 0.0
        %1380 = vmatpush.msra.mxu0 0.0
        %1381 = vmatpush.msra.mxu0 0.0
        %1382 = vmatpush.msra.mxu0 0.0
        %1383 = vmatpush.msra.mxu0 0.0
        %1384 = vmatpush.msra.mxu0 0.0
        %1385 = vmatpush.msra.mxu0 0.0
        %1386 = vmatpush.msra.mxu0 %v1366
        %1387 = vmatpush.msra.mxu0 %v1365
        %1388 = vmatpush.msra.mxu0 %v1364
        %1389 = vmatpush.msra.mxu0 %v1363
        %1390 = vmatmul.f32.gmra.mxu0 %v1372
        %v1391 = vpop.f32.mrf.mxu0
        %v1392 = vadd.f32 %v1369, %v1391
        %1393 = vdwg.mxu0
        %v1394 = vmax.f32 %v1392, 0.0
        %v1395 = vld [vmem:[#allocation13] sm:$0x1]
        %v1396 = vld [vmem:[#allocation14] sm:$0x1]
        %v1397 = vsel %vm1332, %v1394, 0.0
        %1398 = vadd.xlane.f32.xlu0 %v1397
        %v1399 = vpop.xlane.xlu0 %1398
        %v1400 = vmul.f32 %v1399, %v1194
        %v1401 = vsub.f32 %v1394, %v1400
        %v1402 = vmul.f32 %v1401, %v1401
        %v1403 = vsel %vm1332, %v1402, 0.0
        %1404 = vadd.xlane.f32.xlu0 %v1403
        %v1405 = vpop.xlane.xlu0 %1404
        %v1406 = vmul.f32 %v1405, %v1194
        %v1407 = vadd.f32 %v1406, 1e-05
        %v1408 = vrsqrt.pop %v1407
        %v1409 = vmul.f32 %v1408, %v1407
        %v1410 = vmul.f32 %v1409, %v1408
        %v1411 = vmul.f32 0.5, %v1410
        %v1412 = vsub.f32 1.5, %v1411
        %v1413 = vmul.f32 %v1408, %v1412
        %vm1414 = vweird.f32 %v1407
        %vm1415 = vweird.f32 %v1408
        %vm1416 = vmor %vm1414, %vm1415
        %v1417 = vsel %vm1416, %v1408, %v1413
        %v1418 = vmul.f32 %v1401, %v1417
        %v1420 = vperm.slane %v1395, 0
        %v1422 = vmul.f32 %v1418, %v1420
        %v1424 = vperm.slane %v1396, 0
        %v1426 = vadd.f32 %v1422, %v1424
        %v1427 = vld [vmem:[%s14] sm:$0xff]
        %v1428 = vld [vmem:[%s14 + $0x8] sm:$0xff]
        %v1429 = vld [vmem:[%s14 + $0x10] sm:$0xff]
        %v1430 = vld [vmem:[%s14 + $0x18] sm:$0xff]
        %v1431 = vld [vmem:[#allocation16] sm:$0x1]
        %v1433 = vperm.slane %v1431, 0
        %v1436 = vsel %vm1180, %v1426, 0
        %1438 = vmatpush.msra.mxu0 0.0
        %1439 = vmatpush.msra.mxu0 0.0
        %1440 = vmatpush.msra.mxu0 0.0
        %1441 = vmatpush.msra.mxu0 0.0
        %1442 = vmatpush.msra.mxu0 0.0
        %1443 = vmatpush.msra.mxu0 0.0
        %1444 = vmatpush.msra.mxu0 0.0
        %1445 = vmatpush.msra.mxu0 0.0
        %1446 = vmatpush.msra.mxu0 0.0
        %1447 = vmatpush.msra.mxu0 0.0
        %1448 = vmatpush.msra.mxu0 0.0
        %1449 = vmatpush.msra.mxu0 0.0
        %1450 = vmatpush.msra.mxu0 %v1430
        %1451 = vmatpush.msra.mxu0 %v1429
        %1452 = vmatpush.msra.mxu0 %v1428
        %1453 = vmatpush.msra.mxu0 %v1427
        %1454 = vmatmul.f32.gmra.mxu0 %v1436
        %v1455 = vpop.f32.mrf.mxu0
        %v1456 = vadd.f32 %v1433, %v1455
        %1457 = vdwg.mxu0
        %v1458 = vmax.f32 %v1456, 0.0
        %v1459 = vld [vmem:[#allocation17] sm:$0x1]
        %v1460 = vld [vmem:[#allocation19] sm:$0x1]
        %v1461 = vsel %vm1332, %v1458, 0.0
        %1462 = vadd.xlane.f32.xlu0 %v1461
        %v1463 = vpop.xlane.xlu0 %1462
        %v1464 = vmul.f32 %v1463, %v1194
        %v1465 = vsub.f32 %v1458, %v1464
        %v1466 = vmul.f32 %v1465, %v1465
        %v1467 = vsel %vm1332, %v1466, 0.0
        %1468 = vadd.xlane.f32.xlu0 %v1467
        %v1469 = vpop.xlane.xlu0 %1468
        %v1470 = vmul.f32 %v1469, %v1194
        %v1471 = vadd.f32 %v1470, 1e-05
        %v1472 = vrsqrt.pop %v1471
        %v1473 = vmul.f32 %v1472, %v1471
        %v1474 = vmul.f32 %v1473, %v1472
        %v1475 = vmul.f32 0.5, %v1474
        %v1476 = vsub.f32 1.5, %v1475
        %v1477 = vmul.f32 %v1472, %v1476
        %vm1478 = vweird.f32 %v1471
        %vm1479 = vweird.f32 %v1472
        %vm1480 = vmor %vm1478, %vm1479
        %v1481 = vsel %vm1480, %v1472, %v1477
        %v1482 = vmul.f32 %v1465, %v1481
        %v1484 = vperm.slane %v1459, 0
        %v1486 = vmul.f32 %v1482, %v1484
        %v1488 = vperm.slane %v1460, 0
        %v1490 = vadd.f32 %v1486, %v1488
        %v1491 = vld [vmem:[#allocation20] sm:$0xff]
        %v1492 = vld [vmem:[#allocation20 + $0x8] sm:$0xff]
        %v1493 = vld [vmem:[#allocation20 + $0x10] sm:$0xff]
        %v1494 = vld [vmem:[#allocation20 + $0x18] sm:$0xff]
        %v1495 = vld [vmem:[#allocation20 + $0x20] sm:$0xff]
        %v1496 = vld [vmem:[#allocation20 + $0x28] sm:$0xff]
        %v1497 = vld [vmem:[#allocation20 + $0x30] sm:$0xff]
        %v1498 = vld [vmem:[#allocation20 + $0x38] sm:$0xff]
        %v1499 = vld [vmem:[#allocation20 + $0x40] sm:$0xff]
        %v1500 = vld [vmem:[#allocation20 + $0x48] sm:$0xff]
        %v1501 = vld [vmem:[#allocation20 + $0x50] sm:$0xff]
        %v1502 = vld [vmem:[#allocation20 + $0x58] sm:$0xff]
        %v1503 = vld [vmem:[#allocation20 + $0x60] sm:$0xff]
        %v1504 = vld [vmem:[#allocation20 + $0x68] sm:$0xff]
        %v1505 = vld [vmem:[#allocation20 + $0x70] sm:$0xff]
        %v1506 = vld [vmem:[#allocation20 + $0x78] sm:$0xff]
        %v1507 = vld [vmem:[#allocation20 + $0x80] sm:$0xff]
        %v1508 = vld [vmem:[#allocation20 + $0x88] sm:$0xff]
        %v1509 = vld [vmem:[#allocation20 + $0x90] sm:$0xff]
        %v1510 = vld [vmem:[#allocation20 + $0x98] sm:$0xff]
        %v1511 = vld [vmem:[#allocation20 + $0xa0] sm:$0xff]
        %v1512 = vld [vmem:[#allocation20 + $0xa8] sm:$0xff]
        %v1513 = vld [vmem:[#allocation20 + $0xb0] sm:$0xff]
        %v1514 = vld [vmem:[#allocation20 + $0xb8] sm:$0xff]
        %v1515 = vld [vmem:[#allocation20 + $0xc0] sm:$0xff]
        %v1516 = vld [vmem:[#allocation20 + $0xc8] sm:$0xff]
        %v1517 = vld [vmem:[#allocation20 + $0xd0] sm:$0xff]
        %v1518 = vld [vmem:[#allocation20 + $0xd8] sm:$0xff]
        %v1519 = vld [vmem:[#allocation20 + $0xe0] sm:$0xff]
        %v1520 = vld [vmem:[#allocation20 + $0xe8] sm:$0xff]
        %v1521 = vld [vmem:[#allocation20 + $0xf0] sm:$0xff]
        %v1522 = vld [vmem:[#allocation20 + $0xf8] sm:$0xff]
        %v1523 = vld [vmem:[#allocation22] sm:$0xff]
        %v1525 = vperm.slane %v1523, 0
        %v1526 = vperm.slane %v1523, 1
        %v1527 = vperm.slane %v1523, 2
        %v1528 = vperm.slane %v1523, 3
        %v1529 = vperm.slane %v1523, 4
        %v1530 = vperm.slane %v1523, 5
        %v1531 = vperm.slane %v1523, 6
        %v1532 = vperm.slane %v1523, 7
        %v1542 = vsel %vm1180, %v1490, 0
        %1544 = vmatpush.msra.mxu0 0.0
        %1545 = vmatpush.msra.mxu0 0.0
        %1546 = vmatpush.msra.mxu0 0.0
        %1547 = vmatpush.msra.mxu0 0.0
        %1548 = vmatpush.msra.mxu0 0.0
        %1549 = vmatpush.msra.mxu0 0.0
        %1550 = vmatpush.msra.mxu0 0.0
        %1551 = vmatpush.msra.mxu0 0.0
        %1552 = vmatpush.msra.mxu0 0.0
        %1553 = vmatpush.msra.mxu0 0.0
        %1554 = vmatpush.msra.mxu0 0.0
        %1555 = vmatpush.msra.mxu0 0.0
        %1556 = vmatpush.msra.mxu0 %v1515
        %1557 = vmatpush.msra.mxu0 %v1507
        %1558 = vmatpush.msra.mxu0 %v1499
        %1559 = vmatpush.msra.mxu0 %v1491
        %1560 = vmatmul.f32.gmra.mxu0 %v1542
        %v1561 = vpop.f32.mrf.mxu0
        %v1562 = vadd.f32 %v1525, %v1561
        %1563 = vdwg.mxu0
        %1564 = vmatpush.msra.mxu0 0.0
        %1565 = vmatpush.msra.mxu0 0.0
        %1566 = vmatpush.msra.mxu0 0.0
        %1567 = vmatpush.msra.mxu0 0.0
        %1568 = vmatpush.msra.mxu0 0.0
        %1569 = vmatpush.msra.mxu0 0.0
        %1570 = vmatpush.msra.mxu0 0.0
        %1571 = vmatpush.msra.mxu0 0.0
        %1572 = vmatpush.msra.mxu0 0.0
        %1573 = vmatpush.msra.mxu0 0.0
        %1574 = vmatpush.msra.mxu0 0.0
        %1575 = vmatpush.msra.mxu0 0.0
        %1576 = vmatpush.msra.mxu0 %v1516
        %1577 = vmatpush.msra.mxu0 %v1508
        %1578 = vmatpush.msra.mxu0 %v1500
        %1579 = vmatpush.msra.mxu0 %v1492
        %1580 = vmatmul.f32.gmra.mxu0 %v1542
        %v1581 = vpop.f32.mrf.mxu0
        %v1582 = vadd.f32 %v1526, %v1581
        %1583 = vdwg.mxu0
        %1584 = vmatpush.msra.mxu0 0.0
        %1585 = vmatpush.msra.mxu0 0.0
        %1586 = vmatpush.msra.mxu0 0.0
        %1587 = vmatpush.msra.mxu0 0.0
        %1588 = vmatpush.msra.mxu0 0.0
        %1589 = vmatpush.msra.mxu0 0.0
        %1590 = vmatpush.msra.mxu0 0.0
        %1591 = vmatpush.msra.mxu0 0.0
        %1592 = vmatpush.msra.mxu0 0.0
        %1593 = vmatpush.msra.mxu0 0.0
        %1594 = vmatpush.msra.mxu0 0.0
        %1595 = vmatpush.msra.mxu0 0.0
        %1596 = vmatpush.msra.mxu0 %v1517
        %1597 = vmatpush.msra.mxu0 %v1509
        %1598 = vmatpush.msra.mxu0 %v1501
        %1599 = vmatpush.msra.mxu0 %v1493
        %1600 = vmatmul.f32.gmra.mxu0 %v1542
        %v1601 = vpop.f32.mrf.mxu0
        %v1602 = vadd.f32 %v1527, %v1601
        %1603 = vdwg.mxu0
        %1604 = vmatpush.msra.mxu0 0.0
        %1605 = vmatpush.msra.mxu0 0.0
        %1606 = vmatpush.msra.mxu0 0.0
        %1607 = vmatpush.msra.mxu0 0.0
        %1608 = vmatpush.msra.mxu0 0.0
        %1609 = vmatpush.msra.mxu0 0.0
        %1610 = vmatpush.msra.mxu0 0.0
        %1611 = vmatpush.msra.mxu0 0.0
        %1612 = vmatpush.msra.mxu0 0.0
        %1613 = vmatpush.msra.mxu0 0.0
        %1614 = vmatpush.msra.mxu0 0.0
        %1615 = vmatpush.msra.mxu0 0.0
        %1616 = vmatpush.msra.mxu0 %v1518
        %1617 = vmatpush.msra.mxu0 %v1510
        %1618 = vmatpush.msra.mxu0 %v1502
        %1619 = vmatpush.msra.mxu0 %v1494
        %1620 = vmatmul.f32.gmra.mxu0 %v1542
        %v1621 = vpop.f32.mrf.mxu0
        %v1622 = vadd.f32 %v1528, %v1621
        %1623 = vdwg.mxu0
        %1624 = vmatpush.msra.mxu0 0.0
        %1625 = vmatpush.msra.mxu0 0.0
        %1626 = vmatpush.msra.mxu0 0.0
        %1627 = vmatpush.msra.mxu0 0.0
        %1628 = vmatpush.msra.mxu0 0.0
        %1629 = vmatpush.msra.mxu0 0.0
        %1630 = vmatpush.msra.mxu0 0.0
        %1631 = vmatpush.msra.mxu0 0.0
        %1632 = vmatpush.msra.mxu0 0.0
        %1633 = vmatpush.msra.mxu0 0.0
        %1634 = vmatpush.msra.mxu0 0.0
        %1635 = vmatpush.msra.mxu0 0.0
        %1636 = vmatpush.msra.mxu0 %v1519
        %1637 = vmatpush.msra.mxu0 %v1511
        %1638 = vmatpush.msra.mxu0 %v1503
        %1639 = vmatpush.msra.mxu0 %v1495
        %1640 = vmatmul.f32.gmra.mxu0 %v1542
        %v1641 = vpop.f32.mrf.mxu0
        %v1642 = vadd.f32 %v1529, %v1641
        %1643 = vdwg.mxu0
        %1644 = vmatpush.msra.mxu0 0.0
        %1645 = vmatpush.msra.mxu0 0.0
        %1646 = vmatpush.msra.mxu0 0.0
        %1647 = vmatpush.msra.mxu0 0.0
        %1648 = vmatpush.msra.mxu0 0.0
        %1649 = vmatpush.msra.mxu0 0.0
        %1650 = vmatpush.msra.mxu0 0.0
        %1651 = vmatpush.msra.mxu0 0.0
        %1652 = vmatpush.msra.mxu0 0.0
        %1653 = vmatpush.msra.mxu0 0.0
        %1654 = vmatpush.msra.mxu0 0.0
        %1655 = vmatpush.msra.mxu0 0.0
        %1656 = vmatpush.msra.mxu0 %v1520
        %1657 = vmatpush.msra.mxu0 %v1512
        %1658 = vmatpush.msra.mxu0 %v1504
        %1659 = vmatpush.msra.mxu0 %v1496
        %1660 = vmatmul.f32.gmra.mxu0 %v1542
        %v1661 = vpop.f32.mrf.mxu0
        %v1662 = vadd.f32 %v1530, %v1661
        %1663 = vdwg.mxu0
        %1664 = vmatpush.msra.mxu0 0.0
        %1665 = vmatpush.msra.mxu0 0.0
        %1666 = vmatpush.msra.mxu0 0.0
        %1667 = vmatpush.msra.mxu0 0.0
        %1668 = vmatpush.msra.mxu0 0.0
        %1669 = vmatpush.msra.mxu0 0.0
        %1670 = vmatpush.msra.mxu0 0.0
        %1671 = vmatpush.msra.mxu0 0.0
        %1672 = vmatpush.msra.mxu0 0.0
        %1673 = vmatpush.msra.mxu0 0.0
        %1674 = vmatpush.msra.mxu0 0.0
        %1675 = vmatpush.msra.mxu0 0.0
        %1676 = vmatpush.msra.mxu0 %v1521
        %1677 = vmatpush.msra.mxu0 %v1513
        %1678 = vmatpush.msra.mxu0 %v1505
        %1679 = vmatpush.msra.mxu0 %v1497
        %1680 = vmatmul.f32.gmra.mxu0 %v1542
        %v1681 = vpop.f32.mrf.mxu0
        %v1682 = vadd.f32 %v1531, %v1681
        %1683 = vdwg.mxu0
        %1684 = vmatpush.msra.mxu0 0.0
        %1685 = vmatpush.msra.mxu0 0.0
        %1686 = vmatpush.msra.mxu0 0.0
        %1687 = vmatpush.msra.mxu0 0.0
        %1688 = vmatpush.msra.mxu0 0.0
        %1689 = vmatpush.msra.mxu0 0.0
        %1690 = vmatpush.msra.mxu0 0.0
        %1691 = vmatpush.msra.mxu0 0.0
        %1692 = vmatpush.msra.mxu0 0.0
        %1693 = vmatpush.msra.mxu0 0.0
        %1694 = vmatpush.msra.mxu0 0.0
        %1695 = vmatpush.msra.mxu0 0.0
        %1696 = vmatpush.msra.mxu0 %v1522
        %1697 = vmatpush.msra.mxu0 %v1514
        %1698 = vmatpush.msra.mxu0 %v1506
        %1699 = vmatpush.msra.mxu0 %v1498
        %1700 = vmatmul.f32.gmra.mxu0 %v1542
        %v1701 = vpop.f32.mrf.mxu0
        %v1702 = vadd.f32 %v1532, %v1701
        %1703 = vdwg.mxu0
        %v1704 = vlaneseq
        %v1705 = vand.u32 %v1704, 127
        %1706 = vset.pattern.permute.xlu0 1
        %1707 = vperm.xlu0 %1706, %v1297
        %v1708 = vpop.permute.xlu0 %1707
        %vm1709 = vcmp.eq.s32.totalorder %v1708, %v1705
        %v1710 = vsel %vm1709, 1, 0
        %v1711 = vcvt.s32.f32 %v1710
        %v1713 = vsel %vm1305, %v1711, 0
        %1715 = vmatpush.msra.mxu0 0.0
        %1716 = vmatpush.msra.mxu0 0.0
        %1717 = vmatpush.msra.mxu0 0.0
        %1718 = vmatpush.msra.mxu0 0.0
        %1719 = vmatpush.msra.mxu0 0.0
        %1720 = vmatpush.msra.mxu0 0.0
        %1721 = vmatpush.msra.mxu0 0.0
        %1722 = vmatpush.msra.mxu0 0.0
        %1723 = vmatpush.msra.mxu0 0.0
        %1724 = vmatpush.msra.mxu0 0.0
        %1725 = vmatpush.msra.mxu0 0.0
        %1726 = vmatpush.msra.mxu0 0.0
        %1727 = vmatpush.msra.mxu0 0.0
        %1728 = vmatpush.msra.mxu0 0.0
        %1729 = vmatpush.msra.mxu0 0.0
        %1730 = vmatpush.msra.mxu0 %v1150
        %1731 = vmatmul.f32.gmra.mxu0 %v1713
        %v1732 = vpop.f32.mrf.mxu0
        %v1733 = vadd.f32 0.0, %v1732
        %1734 = vdwg.mxu0
        %1735 = vset.pattern.permute.xlu0 0
        %1736 = vperm.xlu0 %1735, %v1297
        %v1737 = vpop.permute.xlu0 %1736
        %vm1738 = vcmp.eq.s32.totalorder %v1737, %v1705
        %v1739 = vsel %vm1738, 1, 0
        %v1740 = vcvt.s32.f32 %v1739
        %v1742 = vsel %vm1305, %v1740, 0
        %1744 = vmatpush.msra.mxu0 0.0
        %1745 = vmatpush.msra.mxu0 0.0
        %1746 = vmatpush.msra.mxu0 0.0
        %1747 = vmatpush.msra.mxu0 0.0
        %1748 = vmatpush.msra.mxu0 0.0
        %1749 = vmatpush.msra.mxu0 0.0
        %1750 = vmatpush.msra.mxu0 0.0
        %1751 = vmatpush.msra.mxu0 0.0
        %1752 = vmatpush.msra.mxu0 0.0
        %1753 = vmatpush.msra.mxu0 0.0
        %1754 = vmatpush.msra.mxu0 0.0
        %1755 = vmatpush.msra.mxu0 0.0
        %1756 = vmatpush.msra.mxu0 0.0
        %1757 = vmatpush.msra.mxu0 0.0
        %1758 = vmatpush.msra.mxu0 0.0
        %1759 = vmatpush.msra.mxu0 %v1150
        %1760 = vmatmul.f32.gmra.mxu0 %v1742
        %v1761 = vpop.f32.mrf.mxu0
        %v1762 = vadd.f32 0.0, %v1761
        %1763 = vdwg.mxu0
        %v1764 = vlaneseq
        %v1765 = vshrl.u32 %v1764, 7
        %v1766 = vperm.slane %v1153, 0
        %vm1767 = vcmp.eq.s32.totalorder %v1765, %v1766
        %v1768 = vsel %vm1767, 1, 0
        %v1769 = vcvt.s32.f32 %v1768
        %v1770 = vadd.s32 %v1765, 6
        %vm1771 = vcmp.eq.s32.totalorder %v1770, %v1766
        %v1772 = vsel %vm1771, 1, 0
        %v1773 = vcvt.s32.f32 %v1772
        %vm1774 = vcmask 80896
        %v1776 = vsel %vm1774, %v1769, 0
        %vm1778 = vcmask 1041408
        %v1780 = vsel %vm1778, 1.0, 0
        %1782 = vmatpush.msra.mxu0 0.0
        %1783 = vmatpush.msra.mxu0 0.0
        %1784 = vmatpush.msra.mxu0 0.0
        %1785 = vmatpush.msra.mxu0 0.0
        %1786 = vmatpush.msra.mxu0 0.0
        %1787 = vmatpush.msra.mxu0 0.0
        %1788 = vmatpush.msra.mxu0 0.0
        %1789 = vmatpush.msra.mxu0 0.0
        %1790 = vmatpush.msra.mxu0 0.0
        %1791 = vmatpush.msra.mxu0 0.0
        %1792 = vmatpush.msra.mxu0 0.0
        %1793 = vmatpush.msra.mxu0 0.0
        %1794 = vmatpush.msra.mxu0 0.0
        %1795 = vmatpush.msra.mxu0 0.0
        %1796 = vmatpush.msra.mxu0 %v1780
        %1797 = vmatpush.msra.mxu0 1.0
        %1798 = vmatmul.f32.gmra.mxu0 %v1776
        %v1799 = vpop.f32.mrf.mxu0
        %v1800 = vadd.f32 0.0, %v1799
        %1801 = vdwg.mxu0
        %v1802 = vmax.f32 %v1800, 1.0
        %v1804 = vsel %vm1774, %v1773, 0
        %1806 = vmatpush.msra.mxu0 0.0
        %1807 = vmatpush.msra.mxu0 0.0
        %1808 = vmatpush.msra.mxu0 0.0
        %1809 = vmatpush.msra.mxu0 0.0
        %1810 = vmatpush.msra.mxu0 0.0
        %1811 = vmatpush.msra.mxu0 0.0
        %1812 = vmatpush.msra.mxu0 0.0
        %1813 = vmatpush.msra.mxu0 0.0
        %1814 = vmatpush.msra.mxu0 0.0
        %1815 = vmatpush.msra.mxu0 0.0
        %1816 = vmatpush.msra.mxu0 0.0
        %1817 = vmatpush.msra.mxu0 0.0
        %1818 = vmatpush.msra.mxu0 0.0
        %1819 = vmatpush.msra.mxu0 0.0
        %1820 = vmatpush.msra.mxu0 %v1780
        %1821 = vmatpush.msra.mxu0 1.0
        %1822 = vmatmul.f32.gmra.mxu0 %v1804
        %v1823 = vpop.f32.mrf.mxu0
        %v1824 = vadd.f32 0.0, %v1823
        %1825 = vdwg.mxu0
        %v1826 = vmax.f32 %v1824, 1.0
        %v1828 = vsel %vm1778, %v1295, 0
        %1830 = vmatpush.msra.mxu0 0.0
        %1831 = vmatpush.msra.mxu0 0.0
        %1832 = vmatpush.msra.mxu0 0.0
        %1833 = vmatpush.msra.mxu0 0.0
        %1834 = vmatpush.msra.mxu0 0.0
        %1835 = vmatpush.msra.mxu0 0.0
        %1836 = vmatpush.msra.mxu0 0.0
        %1837 = vmatpush.msra.mxu0 0.0
        %1838 = vmatpush.msra.mxu0 0.0
        %1839 = vmatpush.msra.mxu0 0.0
        %1840 = vmatpush.msra.mxu0 0.0
        %1841 = vmatpush.msra.mxu0 0.0
        %1842 = vmatpush.msra.mxu0 0.0
        %1843 = vmatpush.msra.mxu0 0.0
        %1844 = vmatpush.msra.mxu0 %v1828
        %1845 = vmatpush.msra.mxu0 %v1294
        %1846 = vmatmul.f32.gmra.mxu0 %v1776
        %v1847 = vpop.f32.mrf.mxu0
        %v1848 = vadd.f32 1.0, %v1847
        %1849 = vdwg.mxu0
        %1851 = vset.pattern.permute.xlu0 0
        %1852 = vperm.xlu0 %1851, %v1802
        %v1853 = vpop.permute.xlu0 %1852
        %v1855 = vrcp.pop %v1853
        %v1856 = vmul.f32 %v1853, %v1855
        %v1857 = vsub.f32 1.0, %v1856
        %v1858 = vmul.f32 %v1855, %v1857
        %v1859 = vadd.f32 %v1855, %v1858
        %vm1860 = vweird.f32 %v1853
        %vm1861 = vweird.f32 %v1855
        %vm1862 = vmor %vm1860, %vm1861
        %v1863 = vsel %vm1862, %v1855, %v1859
        %v1864 = vand.u32 2147483647, %v1853
        %vm1865 = vcmp.eq.f32.partialorder %v1864, 8.507059e+37
        %v1866 = vand.u32 %v1853, 2147483648
        %v1867 = vor.u32 1.1754944e-38, %v1866
        %v1868 = vsel %vm1865, %v1867, %v1863
        %v1869 = vmul.f32 %v1848, %v1868
        %1870 = vmatpush.msra.mxu0 0.0
        %1871 = vmatpush.msra.mxu0 0.0
        %1872 = vmatpush.msra.mxu0 0.0
        %1873 = vmatpush.msra.mxu0 0.0
        %1874 = vmatpush.msra.mxu0 0.0
        %1875 = vmatpush.msra.mxu0 0.0
        %1876 = vmatpush.msra.mxu0 0.0
        %1877 = vmatpush.msra.mxu0 0.0
        %1878 = vmatpush.msra.mxu0 0.0
        %1879 = vmatpush.msra.mxu0 0.0
        %1880 = vmatpush.msra.mxu0 0.0
        %1881 = vmatpush.msra.mxu0 0.0
        %1882 = vmatpush.msra.mxu0 0.0
        %1883 = vmatpush.msra.mxu0 0.0
        %1884 = vmatpush.msra.mxu0 %v1828
        %1885 = vmatpush.msra.mxu0 %v1294
        %1886 = vmatmul.f32.gmra.mxu0 %v1804
        %v1887 = vpop.f32.mrf.mxu0
        %v1888 = vadd.f32 1.0, %v1887
        %1889 = vdwg.mxu0
        %1891 = vset.pattern.permute.xlu0 0
        %1892 = vperm.xlu0 %1891, %v1826
        %v1893 = vpop.permute.xlu0 %1892
        %v1895 = vrcp.pop %v1893
        %v1896 = vmul.f32 %v1893, %v1895
        %v1897 = vsub.f32 1.0, %v1896
        %v1898 = vmul.f32 %v1895, %v1897
        %v1899 = vadd.f32 %v1895, %v1898
        %vm1900 = vweird.f32 %v1893
        %vm1901 = vweird.f32 %v1895
        %vm1902 = vmor %vm1900, %vm1901
        %v1903 = vsel %vm1902, %v1895, %v1899
        %v1904 = vand.u32 2147483647, %v1893
        %vm1905 = vcmp.eq.f32.partialorder %v1904, 8.507059e+37
        %v1906 = vand.u32 %v1893, 2147483648
        %v1907 = vor.u32 1.1754944e-38, %v1906
        %v1908 = vsel %vm1905, %v1907, %v1903
        %v1909 = vmul.f32 %v1888, %v1908
        %1911 = vset.pattern.permute.xlu0 0
        %1912 = vperm.xlu0 %1911, %v1733
        %v1913 = vpop.permute.xlu0 %1912
        %v1915 = vmul.f32 %v1913, %v1562
        %v1916 = vadd.f32 %v1915, 0.0
        %1918 = vset.pattern.permute.xlu0 0
        %1919 = vperm.xlu0 %1918, %v1762
        %v1920 = vpop.permute.xlu0 %1919
        %v1922 = vmul.f32 %v1920, %v1562
        %v1923 = vadd.f32 %v1922, 0.0
        %1924 = vset.pattern.permute.xlu0 1
        %1925 = vperm.xlu0 %1924, %v1733
        %v1926 = vpop.permute.xlu0 %1925
        %v1928 = vmul.f32 %v1926, %v1562
        %1930 = vrot.lane.b32.xlu0 %v1928, 96
        %v1931 = vpop.permute.xlu0 %1930
        %v1933 = vadd.f32 %v1916, %v1931
        %1934 = vset.pattern.permute.xlu0 1
        %1935 = vperm.xlu0 %1934, %v1762
        %v1936 = vpop.permute.xlu0 %1935
        %v1938 = vmul.f32 %v1936, %v1562
        %1940 = vrot.lane.b32.xlu0 %v1938, 96
        %v1941 = vpop.permute.xlu0 %1940
        %v1943 = vadd.f32 %v1923, %v1941
        %1944 = vset.pattern.permute.xlu0 2
        %1945 = vperm.xlu0 %1944, %v1733
        %v1946 = vpop.permute.xlu0 %1945
        %v1948 = vmul.f32 %v1946, %v1562
        %1950 = vrot.lane.b32.xlu0 %v1948, 64
        %v1951 = vpop.permute.xlu0 %1950
        %v1953 = vadd.f32 %v1933, %v1951
        %1954 = vset.pattern.permute.xlu0 2
        %1955 = vperm.xlu0 %1954, %v1762
        %v1956 = vpop.permute.xlu0 %1955
        %v1958 = vmul.f32 %v1956, %v1562
        %1960 = vrot.lane.b32.xlu0 %v1958, 64
        %v1961 = vpop.permute.xlu0 %1960
        %v1963 = vadd.f32 %v1943, %v1961
        %1964 = vset.pattern.permute.xlu0 3
        %1965 = vperm.xlu0 %1964, %v1733
        %v1966 = vpop.permute.xlu0 %1965
        %v1968 = vmul.f32 %v1966, %v1562
        %1970 = vrot.lane.b32.xlu0 %v1968, 32
        %v1971 = vpop.permute.xlu0 %1970
        %v1973 = vadd.f32 %v1953, %v1971
        %1974 = vset.pattern.permute.xlu0 3
        %1975 = vperm.xlu0 %1974, %v1762
        %v1976 = vpop.permute.xlu0 %1975
        %v1978 = vmul.f32 %v1976, %v1562
        %1980 = vrot.lane.b32.xlu0 %v1978, 32
        %v1981 = vpop.permute.xlu0 %1980
        %v1983 = vadd.f32 %v1963, %v1981
        %1984 = vset.pattern.permute.xlu0 4
        %1985 = vperm.xlu0 %1984, %v1733
        %v1986 = vpop.permute.xlu0 %1985
        %v1988 = vmul.f32 %v1986, %v1582
        %v1989 = vadd.f32 %v1973, %v1988
        %1990 = vset.pattern.permute.xlu0 4
        %1991 = vperm.xlu0 %1990, %v1762
        %v1992 = vpop.permute.xlu0 %1991
        %v1994 = vmul.f32 %v1992, %v1582
        %v1995 = vadd.f32 %v1983, %v1994
        %1996 = vset.pattern.permute.xlu0 5
        %1997 = vperm.xlu0 %1996, %v1733
        %v1998 = vpop.permute.xlu0 %1997
        %v2000 = vmul.f32 %v1998, %v1582
        %2002 = vrot.lane.b32.xlu0 %v2000, 96
        %v2003 = vpop.permute.xlu0 %2002
        %v2005 = vadd.f32 %v1989, %v2003
        %2006 = vset.pattern.permute.xlu0 5
        %2007 = vperm.xlu0 %2006, %v1762
        %v2008 = vpop.permute.xlu0 %2007
        %v2010 = vmul.f32 %v2008, %v1582
        %2012 = vrot.lane.b32.xlu0 %v2010, 96
        %v2013 = vpop.permute.xlu0 %2012
        %v2015 = vadd.f32 %v1995, %v2013
        %2016 = vset.pattern.permute.xlu0 6
        %2017 = vperm.xlu0 %2016, %v1733
        %v2018 = vpop.permute.xlu0 %2017
        %v2020 = vmul.f32 %v2018, %v1582
        %2022 = vrot.lane.b32.xlu0 %v2020, 64
        %v2023 = vpop.permute.xlu0 %2022
        %v2025 = vadd.f32 %v2005, %v2023
        %2026 = vset.pattern.permute.xlu0 6
        %2027 = vperm.xlu0 %2026, %v1762
        %v2028 = vpop.permute.xlu0 %2027
        %v2030 = vmul.f32 %v2028, %v1582
        %2032 = vrot.lane.b32.xlu0 %v2030, 64
        %v2033 = vpop.permute.xlu0 %2032
        %v2035 = vadd.f32 %v2015, %v2033
        %2036 = vset.pattern.permute.xlu0 7
        %2037 = vperm.xlu0 %2036, %v1733
        %v2038 = vpop.permute.xlu0 %2037
        %v2040 = vmul.f32 %v2038, %v1582
        %2042 = vrot.lane.b32.xlu0 %v2040, 32
        %v2043 = vpop.permute.xlu0 %2042
        %v2045 = vadd.f32 %v2025, %v2043
        %2046 = vset.pattern.permute.xlu0 7
        %2047 = vperm.xlu0 %2046, %v1762
        %v2048 = vpop.permute.xlu0 %2047
        %v2050 = vmul.f32 %v2048, %v1582
        %2052 = vrot.lane.b32.xlu0 %v2050, 32
        %v2053 = vpop.permute.xlu0 %2052
        %v2055 = vadd.f32 %v2035, %v2053
        %2056 = vset.pattern.permute.xlu0 8
        %2057 = vperm.xlu0 %2056, %v1733
        %v2058 = vpop.permute.xlu0 %2057
        %v2060 = vmul.f32 %v2058, %v1602
        %v2061 = vadd.f32 %v2045, %v2060
        %2062 = vset.pattern.permute.xlu0 8
        %2063 = vperm.xlu0 %2062, %v1762
        %v2064 = vpop.permute.xlu0 %2063
        %v2066 = vmul.f32 %v2064, %v1602
        %v2067 = vadd.f32 %v2055, %v2066
        %2068 = vset.pattern.permute.xlu0 9
        %2069 = vperm.xlu0 %2068, %v1733
        %v2070 = vpop.permute.xlu0 %2069
        %v2072 = vmul.f32 %v2070, %v1602
        %2074 = vrot.lane.b32.xlu0 %v2072, 96
        %v2075 = vpop.permute.xlu0 %2074
        %v2077 = vadd.f32 %v2061, %v2075
        %2078 = vset.pattern.permute.xlu0 9
        %2079 = vperm.xlu0 %2078, %v1762
        %v2080 = vpop.permute.xlu0 %2079
        %v2082 = vmul.f32 %v2080, %v1602
        %2084 = vrot.lane.b32.xlu0 %v2082, 96
        %v2085 = vpop.permute.xlu0 %2084
        %v2087 = vadd.f32 %v2067, %v2085
        %2088 = vset.pattern.permute.xlu0 10
        %2089 = vperm.xlu0 %2088, %v1733
        %v2090 = vpop.permute.xlu0 %2089
        %v2092 = vmul.f32 %v2090, %v1602
        %2094 = vrot.lane.b32.xlu0 %v2092, 64
        %v2095 = vpop.permute.xlu0 %2094
        %v2097 = vadd.f32 %v2077, %v2095
        %2098 = vset.pattern.permute.xlu0 10
        %2099 = vperm.xlu0 %2098, %v1762
        %v2100 = vpop.permute.xlu0 %2099
        %v2102 = vmul.f32 %v2100, %v1602
        %2104 = vrot.lane.b32.xlu0 %v2102, 64
        %v2105 = vpop.permute.xlu0 %2104
        %v2107 = vadd.f32 %v2087, %v2105
        %2108 = vset.pattern.permute.xlu0 11
        %2109 = vperm.xlu0 %2108, %v1733
        %v2110 = vpop.permute.xlu0 %2109
        %v2112 = vmul.f32 %v2110, %v1602
        %2114 = vrot.lane.b32.xlu0 %v2112, 32
        %v2115 = vpop.permute.xlu0 %2114
        %v2117 = vadd.f32 %v2097, %v2115
        %2118 = vset.pattern.permute.xlu0 11
        %2119 = vperm.xlu0 %2118, %v1762
        %v2120 = vpop.permute.xlu0 %2119
        %v2122 = vmul.f32 %v2120, %v1602
        %2124 = vrot.lane.b32.xlu0 %v2122, 32
        %v2125 = vpop.permute.xlu0 %2124
        %v2127 = vadd.f32 %v2107, %v2125
        %2128 = vset.pattern.permute.xlu0 12
        %2129 = vperm.xlu0 %2128, %v1733
        %v2130 = vpop.permute.xlu0 %2129
        %v2132 = vmul.f32 %v2130, %v1622
        %v2133 = vadd.f32 %v2117, %v2132
        %2134 = vset.pattern.permute.xlu0 12
        %2135 = vperm.xlu0 %2134, %v1762
        %v2136 = vpop.permute.xlu0 %2135
        %v2138 = vmul.f32 %v2136, %v1622
        %v2139 = vadd.f32 %v2127, %v2138
        %2140 = vset.pattern.permute.xlu0 13
        %2141 = vperm.xlu0 %2140, %v1733
        %v2142 = vpop.permute.xlu0 %2141
        %v2144 = vmul.f32 %v2142, %v1622
        %2146 = vrot.lane.b32.xlu0 %v2144, 96
        %v2147 = vpop.permute.xlu0 %2146
        %v2149 = vadd.f32 %v2133, %v2147
        %2150 = vset.pattern.permute.xlu0 13
        %2151 = vperm.xlu0 %2150, %v1762
        %v2152 = vpop.permute.xlu0 %2151
        %v2154 = vmul.f32 %v2152, %v1622
        %2156 = vrot.lane.b32.xlu0 %v2154, 96
        %v2157 = vpop.permute.xlu0 %2156
        %v2159 = vadd.f32 %v2139, %v2157
        %2160 = vset.pattern.permute.xlu0 14
        %2161 = vperm.xlu0 %2160, %v1733
        %v2162 = vpop.permute.xlu0 %2161
        %v2164 = vmul.f32 %v2162, %v1622
        %2166 = vrot.lane.b32.xlu0 %v2164, 64
        %v2167 = vpop.permute.xlu0 %2166
        %v2169 = vadd.f32 %v2149, %v2167
        %2170 = vset.pattern.permute.xlu0 14
        %2171 = vperm.xlu0 %2170, %v1762
        %v2172 = vpop.permute.xlu0 %2171
        %v2174 = vmul.f32 %v2172, %v1622
        %2176 = vrot.lane.b32.xlu0 %v2174, 64
        %v2177 = vpop.permute.xlu0 %2176
        %v2179 = vadd.f32 %v2159, %v2177
        %2180 = vset.pattern.permute.xlu0 15
        %2181 = vperm.xlu0 %2180, %v1733
        %v2182 = vpop.permute.xlu0 %2181
        %v2184 = vmul.f32 %v2182, %v1622
        %2186 = vrot.lane.b32.xlu0 %v2184, 32
        %v2187 = vpop.permute.xlu0 %2186
        %v2189 = vadd.f32 %v2169, %v2187
        %2190 = vset.pattern.permute.xlu0 15
        %2191 = vperm.xlu0 %2190, %v1762
        %v2192 = vpop.permute.xlu0 %2191
        %v2194 = vmul.f32 %v2192, %v1622
        %2196 = vrot.lane.b32.xlu0 %v2194, 32
        %v2197 = vpop.permute.xlu0 %2196
        %v2199 = vadd.f32 %v2179, %v2197
        %2200 = vset.pattern.permute.xlu0 16
        %2201 = vperm.xlu0 %2200, %v1733
        %v2202 = vpop.permute.xlu0 %2201
        %v2204 = vmul.f32 %v2202, %v1642
        %v2205 = vadd.f32 %v2189, %v2204
        %2206 = vset.pattern.permute.xlu0 16
        %2207 = vperm.xlu0 %2206, %v1762
        %v2208 = vpop.permute.xlu0 %2207
        %v2210 = vmul.f32 %v2208, %v1642
        %v2211 = vadd.f32 %v2199, %v2210
        %2212 = vset.pattern.permute.xlu0 17
        %2213 = vperm.xlu0 %2212, %v1733
        %v2214 = vpop.permute.xlu0 %2213
        %v2216 = vmul.f32 %v2214, %v1642
        %2218 = vrot.lane.b32.xlu0 %v2216, 96
        %v2219 = vpop.permute.xlu0 %2218
        %v2221 = vadd.f32 %v2205, %v2219
        %2222 = vset.pattern.permute.xlu0 17
        %2223 = vperm.xlu0 %2222, %v1762
        %v2224 = vpop.permute.xlu0 %2223
        %v2226 = vmul.f32 %v2224, %v1642
        %2228 = vrot.lane.b32.xlu0 %v2226, 96
        %v2229 = vpop.permute.xlu0 %2228
        %v2231 = vadd.f32 %v2211, %v2229
        %2232 = vset.pattern.permute.xlu0 18
        %2233 = vperm.xlu0 %2232, %v1733
        %v2234 = vpop.permute.xlu0 %2233
        %v2236 = vmul.f32 %v2234, %v1642
        %2238 = vrot.lane.b32.xlu0 %v2236, 64
        %v2239 = vpop.permute.xlu0 %2238
        %v2241 = vadd.f32 %v2221, %v2239
        %2242 = vset.pattern.permute.xlu0 18
        %2243 = vperm.xlu0 %2242, %v1762
        %v2244 = vpop.permute.xlu0 %2243
        %v2246 = vmul.f32 %v2244, %v1642
        %2248 = vrot.lane.b32.xlu0 %v2246, 64
        %v2249 = vpop.permute.xlu0 %2248
        %v2251 = vadd.f32 %v2231, %v2249
        %2252 = vset.pattern.permute.xlu0 19
        %2253 = vperm.xlu0 %2252, %v1733
        %v2254 = vpop.permute.xlu0 %2253
        %v2256 = vmul.f32 %v2254, %v1642
        %2258 = vrot.lane.b32.xlu0 %v2256, 32
        %v2259 = vpop.permute.xlu0 %2258
        %v2261 = vadd.f32 %v2241, %v2259
        %2262 = vset.pattern.permute.xlu0 19
        %2263 = vperm.xlu0 %2262, %v1762
        %v2264 = vpop.permute.xlu0 %2263
        %v2266 = vmul.f32 %v2264, %v1642
        %2268 = vrot.lane.b32.xlu0 %v2266, 32
        %v2269 = vpop.permute.xlu0 %2268
        %v2271 = vadd.f32 %v2251, %v2269
        %2272 = vset.pattern.permute.xlu0 20
        %2273 = vperm.xlu0 %2272, %v1733
        %v2274 = vpop.permute.xlu0 %2273
        %v2276 = vmul.f32 %v2274, %v1662
        %v2277 = vadd.f32 %v2261, %v2276
        %2278 = vset.pattern.permute.xlu0 20
        %2279 = vperm.xlu0 %2278, %v1762
        %v2280 = vpop.permute.xlu0 %2279
        %v2282 = vmul.f32 %v2280, %v1662
        %v2283 = vadd.f32 %v2271, %v2282
        %2284 = vset.pattern.permute.xlu0 21
        %2285 = vperm.xlu0 %2284, %v1733
        %v2286 = vpop.permute.xlu0 %2285
        %v2288 = vmul.f32 %v2286, %v1662
        %2290 = vrot.lane.b32.xlu0 %v2288, 96
        %v2291 = vpop.permute.xlu0 %2290
        %v2293 = vadd.f32 %v2277, %v2291
        %2294 = vset.pattern.permute.xlu0 21
        %2295 = vperm.xlu0 %2294, %v1762
        %v2296 = vpop.permute.xlu0 %2295
        %v2298 = vmul.f32 %v2296, %v1662
        %2300 = vrot.lane.b32.xlu0 %v2298, 96
        %v2301 = vpop.permute.xlu0 %2300
        %v2303 = vadd.f32 %v2283, %v2301
        %2304 = vset.pattern.permute.xlu0 22
        %2305 = vperm.xlu0 %2304, %v1733
        %v2306 = vpop.permute.xlu0 %2305
        %v2308 = vmul.f32 %v2306, %v1662
        %2310 = vrot.lane.b32.xlu0 %v2308, 64
        %v2311 = vpop.permute.xlu0 %2310
        %v2313 = vadd.f32 %v2293, %v2311
        %2314 = vset.pattern.permute.xlu0 22
        %2315 = vperm.xlu0 %2314, %v1762
        %v2316 = vpop.permute.xlu0 %2315
        %v2318 = vmul.f32 %v2316, %v1662
        %2320 = vrot.lane.b32.xlu0 %v2318, 64
        %v2321 = vpop.permute.xlu0 %2320
        %v2323 = vadd.f32 %v2303, %v2321
        %2324 = vset.pattern.permute.xlu0 23
        %2325 = vperm.xlu0 %2324, %v1733
        %v2326 = vpop.permute.xlu0 %2325
        %v2328 = vmul.f32 %v2326, %v1662
        %2330 = vrot.lane.b32.xlu0 %v2328, 32
        %v2331 = vpop.permute.xlu0 %2330
        %v2333 = vadd.f32 %v2313, %v2331
        %2334 = vset.pattern.permute.xlu0 23
        %2335 = vperm.xlu0 %2334, %v1762
        %v2336 = vpop.permute.xlu0 %2335
        %v2338 = vmul.f32 %v2336, %v1662
        %2340 = vrot.lane.b32.xlu0 %v2338, 32
        %v2341 = vpop.permute.xlu0 %2340
        %v2343 = vadd.f32 %v2323, %v2341
        %2344 = vset.pattern.permute.xlu0 24
        %2345 = vperm.xlu0 %2344, %v1733
        %v2346 = vpop.permute.xlu0 %2345
        %v2348 = vmul.f32 %v2346, %v1682
        %v2349 = vadd.f32 %v2333, %v2348
        %2350 = vset.pattern.permute.xlu0 24
        %2351 = vperm.xlu0 %2350, %v1762
        %v2352 = vpop.permute.xlu0 %2351
        %v2354 = vmul.f32 %v2352, %v1682
        %v2355 = vadd.f32 %v2343, %v2354
        %2356 = vset.pattern.permute.xlu0 25
        %2357 = vperm.xlu0 %2356, %v1733
        %v2358 = vpop.permute.xlu0 %2357
        %v2360 = vmul.f32 %v2358, %v1682
        %2362 = vrot.lane.b32.xlu0 %v2360, 96
        %v2363 = vpop.permute.xlu0 %2362
        %v2365 = vadd.f32 %v2349, %v2363
        %2366 = vset.pattern.permute.xlu0 25
        %2367 = vperm.xlu0 %2366, %v1762
        %v2368 = vpop.permute.xlu0 %2367
        %v2370 = vmul.f32 %v2368, %v1682
        %2372 = vrot.lane.b32.xlu0 %v2370, 96
        %v2373 = vpop.permute.xlu0 %2372
        %v2375 = vadd.f32 %v2355, %v2373
        %2376 = vset.pattern.permute.xlu0 26
        %2377 = vperm.xlu0 %2376, %v1733
        %v2378 = vpop.permute.xlu0 %2377
        %v2380 = vmul.f32 %v2378, %v1682
        %2382 = vrot.lane.b32.xlu0 %v2380, 64
        %v2383 = vpop.permute.xlu0 %2382
        %v2385 = vadd.f32 %v2365, %v2383
        %2386 = vset.pattern.permute.xlu0 26
        %2387 = vperm.xlu0 %2386, %v1762
        %v2388 = vpop.permute.xlu0 %2387
        %v2390 = vmul.f32 %v2388, %v1682
        %2392 = vrot.lane.b32.xlu0 %v2390, 64
        %v2393 = vpop.permute.xlu0 %2392
        %v2395 = vadd.f32 %v2375, %v2393
        %2396 = vset.pattern.permute.xlu0 27
        %2397 = vperm.xlu0 %2396, %v1733
        %v2398 = vpop.permute.xlu0 %2397
        %v2400 = vmul.f32 %v2398, %v1682
        %2402 = vrot.lane.b32.xlu0 %v2400, 32
        %v2403 = vpop.permute.xlu0 %2402
        %v2405 = vadd.f32 %v2385, %v2403
        %2406 = vset.pattern.permute.xlu0 27
        %2407 = vperm.xlu0 %2406, %v1762
        %v2408 = vpop.permute.xlu0 %2407
        %v2410 = vmul.f32 %v2408, %v1682
        %2412 = vrot.lane.b32.xlu0 %v2410, 32
        %v2413 = vpop.permute.xlu0 %2412
        %v2415 = vadd.f32 %v2395, %v2413
        %2416 = vset.pattern.permute.xlu0 28
        %2417 = vperm.xlu0 %2416, %v1733
        %v2418 = vpop.permute.xlu0 %2417
        %v2420 = vmul.f32 %v2418, %v1702
        %v2421 = vadd.f32 %v2405, %v2420
        %2422 = vset.pattern.permute.xlu0 28
        %2423 = vperm.xlu0 %2422, %v1762
        %v2424 = vpop.permute.xlu0 %2423
        %v2426 = vmul.f32 %v2424, %v1702
        %v2427 = vadd.f32 %v2415, %v2426
        %2428 = vset.pattern.permute.xlu0 29
        %2429 = vperm.xlu0 %2428, %v1733
        %v2430 = vpop.permute.xlu0 %2429
        %v2432 = vmul.f32 %v2430, %v1702
        %2434 = vrot.lane.b32.xlu0 %v2432, 96
        %v2435 = vpop.permute.xlu0 %2434
        %v2437 = vadd.f32 %v2421, %v2435
        %2438 = vset.pattern.permute.xlu0 29
        %2439 = vperm.xlu0 %2438, %v1762
        %v2440 = vpop.permute.xlu0 %2439
        %v2442 = vmul.f32 %v2440, %v1702
        %2444 = vrot.lane.b32.xlu0 %v2442, 96
        %v2445 = vpop.permute.xlu0 %2444
        %v2447 = vadd.f32 %v2427, %v2445
        %2448 = vset.pattern.permute.xlu0 30
        %2449 = vperm.xlu0 %2448, %v1733
        %v2450 = vpop.permute.xlu0 %2449
        %v2452 = vmul.f32 %v2450, %v1702
        %2454 = vrot.lane.b32.xlu0 %v2452, 64
        %v2455 = vpop.permute.xlu0 %2454
        %v2457 = vadd.f32 %v2437, %v2455
        %2458 = vset.pattern.permute.xlu0 30
        %2459 = vperm.xlu0 %2458, %v1762
        %v2460 = vpop.permute.xlu0 %2459
        %v2462 = vmul.f32 %v2460, %v1702
        %2464 = vrot.lane.b32.xlu0 %v2462, 64
        %v2465 = vpop.permute.xlu0 %2464
        %v2467 = vadd.f32 %v2447, %v2465
        %2468 = vset.pattern.permute.xlu0 31
        %2469 = vperm.xlu0 %2468, %v1733
        %v2470 = vpop.permute.xlu0 %2469
        %v2472 = vmul.f32 %v2470, %v1702
        %2474 = vrot.lane.b32.xlu0 %v2472, 32
        %v2475 = vpop.permute.xlu0 %2474
        %v2477 = vadd.f32 %v2457, %v2475
        %2478 = vset.pattern.permute.xlu0 31
        %2479 = vperm.xlu0 %2478, %v1762
        %v2480 = vpop.permute.xlu0 %2479
        %v2482 = vmul.f32 %v2480, %v1702
        %2484 = vrot.lane.b32.xlu0 %v2482, 32
        %v2485 = vpop.permute.xlu0 %2484
        %v2487 = vadd.f32 %v2467, %v2485
        %vm2488 = vcmp.eq.f32.partialorder %v1296, -999.0
        %v2489 = vsel %vm2488, 1, 0
        %2490 = vset.pattern.permute.xlu0 0
        %2491 = vperm.xlu0 %2490, %v2489
        %v2492 = vpop.permute.xlu0 %2491
        %vm2493 = vcmp.eq.s32.totalorder %v2492, 1
        %v2494 = vsel %vm2493, 0.0, %v2477
        %v2495 = vmul.f32 %v1869, 0.17677669
        %v2496 = vmul.f32 %v2494, %v2495
        %v2497 = vsel %vm2493, 0.0, %v2487
        %v2498 = vmul.f32 %v1909, 0.17677669
        %v2499 = vmul.f32 %v2497, %v2498
        %v2500 = vperm.slane %v1298, 0
        %vm2501 = vcmp.eq.s32.totalorder %v1765, %v2500
        %v2502 = vsel %vm2501, 1, 0
        %v2503 = vcvt.s32.f32 %v2502
        %v2504 = vperm.slane %v1299, 0
        %vm2505 = vcmp.eq.s32.totalorder %v1765, %v2504
        %v2506 = vsel %vm2505, 1, 0
        %v2507 = vcvt.s32.f32 %v2506
        %vm2508 = vcmask 48128
        %v2510 = vsel %vm2508, %v2507, 0
        %vm2512 = vcmask 1045504
        %v2514 = vsel %vm2512, %v2499, 0
        %2516 = vmatpush.msra.mxu0 0.0
        %2517 = vmatpush.msra.mxu0 0.0
        %2518 = vmatpush.msra.mxu0 0.0
        %2519 = vmatpush.msra.mxu0 0.0
        %2520 = vmatpush.msra.mxu0 0.0
        %2521 = vmatpush.msra.mxu0 0.0
        %2522 = vmatpush.msra.mxu0 0.0
        %2523 = vmatpush.msra.mxu0 0.0
        %2524 = vmatpush.msra.mxu0 0.0
        %2525 = vmatpush.msra.mxu0 0.0
        %2526 = vmatpush.msra.mxu0 0.0
        %2527 = vmatpush.msra.mxu0 0.0
        %2528 = vmatpush.msra.mxu0 0.0
        %2529 = vmatpush.msra.mxu0 0.0
        %2530 = vmatpush.msra.mxu0 0.0
        %2531 = vmatpush.msra.mxu0 %v2514
        %2532 = vmatmul.f32.gmra.mxu0 %v2510
        %v2533 = vpop.f32.mrf.mxu0
        %v2534 = vadd.f32 0.0, %v2533
        %2535 = vdwg.mxu0
        %v2537 = vsel %vm2508, %v2503, 0
        %v2540 = vsel %vm2512, %v2496, 0
        %2542 = vmatpush.msra.mxu0 0.0
        %2543 = vmatpush.msra.mxu0 0.0
        %2544 = vmatpush.msra.mxu0 0.0
        %2545 = vmatpush.msra.mxu0 0.0
        %2546 = vmatpush.msra.mxu0 0.0
        %2547 = vmatpush.msra.mxu0 0.0
        %2548 = vmatpush.msra.mxu0 0.0
        %2549 = vmatpush.msra.mxu0 0.0
        %2550 = vmatpush.msra.mxu0 0.0
        %2551 = vmatpush.msra.mxu0 0.0
        %2552 = vmatpush.msra.mxu0 0.0
        %2553 = vmatpush.msra.mxu0 0.0
        %2554 = vmatpush.msra.mxu0 0.0
        %2555 = vmatpush.msra.mxu0 0.0
        %2556 = vmatpush.msra.mxu0 0.0
        %2557 = vmatpush.msra.mxu0 %v2540
        %2558 = vmatmul.f32.gmra.mxu0 %v2537
        %v2559 = vpop.f32.mrf.mxu0
        %v2560 = vadd.f32 %v2534, %v2559
        %2561 = vdwg.mxu0
        %2562 = vst.msk [vmem:[%s1133] sm:$0xff] %vm1180, %v2560
        %s2563 = sand.u32 %s638, 1
        %s2564 = scalar_lea.sflag [#allocation4], %s2563
        %s2565 = sand.u32 %s638, 1
        %s2566 = smul.addr %s2565, 8
        %s2567 = scalar_lea.vmem [#allocation31], %s2566
        // Predicated region
        $region197: #{tpu_custom_call.1} parent=123 // pred_check
          %p2568 = pneg %p648
        $region198: #{tpu_custom_call.1} parent=123 // pred_check_branch
          %2570 = sbr.rel (%p2568) target = $region200
        $region199: #{tpu_custom_call.1} parent=123 // pred_region
          %2572 = vsyncadd %s2564, 0
          %s2573 = smul.addr %s54, 8
          %s2574 = scalar_lea.hbm %s26, %s2573
          %s2576 = sshll.u32 %s2567, 4
          %s2577 = int_to_ptr.vmem [resolvable:$true] %s2576
          %s2578 = sshll.u32 %s2574, 4
          %s2579 = int_to_ptr.hbm [resolvable:$true] %s2578
          %2581 = dma.vmem_to_hbm [thread:$0]  %s2577, 128, %s2579, %s2564
        $region200: #{tpu_custom_call.1} parent=123 // pred_fallthru
          _
      $region124: #{tpu_custom_call.1} parent=5 // pred_fallthru
        _
      %p2582 = scmp.le.s32.totalorder 2, %s49
      // Predicated region
      $region201: #{tpu_custom_call.1} parent=5 // pred_check
        %p2583 = pneg %p2582
      $region202: #{tpu_custom_call.1} parent=5 // pred_check_branch
        %2585 = sbr.rel (%p2583) target = $region204
      $region203: #{tpu_custom_call.1} parent=5 // pred_region
        %s2586 = ssub.s32 %s49, 2
        // Predicated region
        $region205: #{tpu_custom_call.1} parent=203 // pred_check
          %p2587 = pneg %p654
        $region206: #{tpu_custom_call.1} parent=203 // pred_check_branch
          %2589 = sbr.rel (%p2587) target = $region208
        $region207: #{tpu_custom_call.1} parent=203 // pred_region
          %s2590 = sand.u32 %s639, 1
          %s2591 = scalar_lea.sflag [#allocation4], %s2590
          %s2592 = sand.u32 %s639, 1
          %s2593 = smul.addr %s2592, 8
          %s2594 = scalar_lea.vmem [#allocation31], %s2593
          %2596 = dma.done %s2591, 128
        $region208: #{tpu_custom_call.1} parent=203 // pred_fallthru
          _
      $region204: #{tpu_custom_call.1} parent=5 // pred_fallthru
        _
    $region6: #{tpu_custom_call.1} parent=1 // loop_footer
      %s53 = sadd.s32 1, %s49
    $region7: #{tpu_custom_call.1} parent=1 // loop_footer_branch
      %48 = sbr.rel target = $region3
    $region8: #{tpu_custom_call.1} parent=1 // loop_exit
      _
    %2597 = vsyncpa [#allocation3], 1
    %s2598 = scalar_lea.sflag [#allocation3], 1
    %2599 = vsyncpa %s2598, 1
    %2600 = vsyncpa [#allocation6], 1
    %s2601 = scalar_lea.sflag [#allocation6], 1
    %2602 = vsyncpa %s2601, 1
    %2603 = vsyncpa [#allocation9], 1
    %2604 = vsyncpa [#allocation12], 1
    %2605 = vsyncpa [#allocation15], 1
    %2606 = vsyncpa [#allocation18], 1
    %2607 = vsyncpa [#allocation21], 1
    %2608 = vsyncpa [#allocation24], 1
    %2609 = vsyncpa [#allocation27], 1
    %2610 = vsyncpa [#allocation30], 1
    %2611 = vsyncpa [#allocation4], 1
    %s2612 = scalar_lea.sflag [#allocation4], 1
    %2613 = vsyncpa %s2612, 1

// kernel: tpu_custom_call.1
$region0: #{tpu_custom_call.1}
  #allocation0 [shape = 'u32[]', space=smem, size = 0x4, offset = 0x4, fixed_abs, tag = 'smem constant byte address 0x4 - core index']
  #allocation1 [shape = 'u32[72,128]{1,0:T(1,128)}', space=vmem, size = 0x9000, scoped, tag = 'internal scratch']
  %s0 = inlined_call_operand.hbm [shape: f32[2,8,32], index: 0, kind: input, shape index: {}]
  %s1 = inlined_call_operand.vmem [shape: f32[2,6,8], index: 1, kind: input, shape index: {}]
  %s2 = inlined_call_operand.vmem [shape: f32[2,10,1], index: 2, kind: input, shape index: {}]
  %s3 = inlined_call_operand.vmem [shape: s32[2,6,2], index: 3, kind: input, shape index: {}]
  %s4 = inlined_call_operand.hbm [shape: s32[2,2,6], index: 4, kind: input, shape index: {}]
  %s5 = inlined_call_operand.vmem [shape: s32[2,1,10], index: 5, kind: input, shape index: {}]
  %s6 = inlined_call_operand.hbm [shape: f32[8,32], index: 6, kind: input, shape index: {}]
  %s7 = inlined_call_operand.vmem [shape: f32[1,32], index: 7, kind: input, shape index: {}]
  %s8 = inlined_call_operand.hbm [shape: f32[1,32], index: 8, kind: input, shape index: {}]
  %s9 = inlined_call_operand.hbm [shape: f32[1,32], index: 9, kind: input, shape index: {}]
  %s10 = inlined_call_operand.vmem [shape: f32[32,32], index: 10, kind: input, shape index: {}]
  %s11 = inlined_call_operand.hbm [shape: f32[1,32], index: 11, kind: input, shape index: {}]
  %s12 = inlined_call_operand.hbm [shape: f32[1,32], index: 12, kind: input, shape index: {}]
  %s13 = inlined_call_operand.hbm [shape: f32[1,32], index: 13, kind: input, shape index: {}]
  %s14 = inlined_call_operand.vmem [shape: f32[32,32], index: 14, kind: input, shape index: {}]
  %s15 = inlined_call_operand.hbm [shape: f32[1,32], index: 15, kind: input, shape index: {}]
  %s16 = inlined_call_operand.hbm [shape: f32[1,32], index: 16, kind: input, shape index: {}]
  %s17 = inlined_call_operand.hbm [shape: f32[1,32], index: 17, kind: input, shape index: {}]
  %s18 = inlined_call_operand.hbm [shape: f32[32,1024], index: 18, kind: input, shape index: {}]
  %s19 = inlined_call_operand.hbm [shape: f32[1,1024], index: 19, kind: input, shape index: {}]
  %s20 = inlined_call_operand.hbm [shape: f32[1,32], index: 20, kind: input, shape index: {}]
  %s21 = inlined_call_operand.hbm [shape: f32[1,32], index: 21, kind: input, shape index: {}]
  %s22 = inlined_call_operand.hbm [shape: f32[1,32], index: 22, kind: input, shape index: {}]
  %s23 = inlined_call_operand.hbm [shape: f32[1,32], index: 23, kind: input, shape index: {}]
  %s24 = inlined_call_operand.vmem [shape: f32[32,32], index: 24, kind: input, shape index: {}]
  %s25 = inlined_call_operand.hbm [shape: f32[1,32], index: 25, kind: input, shape index: {}]
  %s26 = inlined_call_operand.hbm [shape: f32[2,8,32], index: 26, kind: output, shape index: {}]
  %s27 = sld [smem:[#allocation0]]
  $region209: #{tpu_custom_call.1} parent=0
    _
  %s29 = ssub.s32 1, %s27
  %s30 = scalar_select 0, %s29, %s27
  $region1: #{tpu_custom_call.1} parent=0
    #allocation2 [shape = 'u8[8192]{0}', space=vmem, size = 0x2000, scoped, tag = 'input window, operand 0']
    #allocation3 [shape = 's32[2]{0}', space=sflag, size = 0x8, scoped, tag = 'scoped memory for tpu_custom_call.1']
    #allocation4 [shape = 's32[2]{0}', space=sflag, size = 0x8, scoped, tag = 'scoped memory for tpu_custom_call.1']
    #allocation5 [shape = 'u8[2048]{0}', space=vmem, size = 0x800, scoped, tag = 'input window, operand 4']
    #allocation6 [shape = 's32[2]{0}', space=sflag, size = 0x8, scoped, tag = 'scoped memory for tpu_custom_call.1']
    #allocation7 [shape = 'u8[4096]{0}', space=vmem, size = 0x1000, scoped, tag = 'input window, operand 6, single buffered']
    #allocation8 [shape = 'u8[512]{0}', space=vmem, size = 0x400, scoped, tag = 'input window, operand 8, single buffered']
    #allocation9 [shape = 's32[1]{0}', space=sflag, size = 0x4, scoped, tag = 'scoped memory for tpu_custom_call.1']
    #allocation10 [shape = 'u8[512]{0}', space=vmem, size = 0x400, scoped, tag = 'input window, operand 9, single buffered']
    #allocation11 [shape = 'u8[512]{0}', space=vmem, size = 0x400, scoped, tag = 'input window, operand 11, single buffered']
    #allocation12 [shape = 's32[1]{0}', space=sflag, size = 0x4, scoped, tag = 'scoped memory for tpu_custom_call.1']
    #allocation13 [shape = 'u8[512]{0}', space=vmem, size = 0x400, scoped, tag = 'input window, operand 12, single buffered']
    #allocation14 [shape = 'u8[512]{0}', space=vmem, size = 0x400, scoped, tag = 'input window, operand 13, single buffered']
    #allocation15 [shape = 's32[1]{0}', space=sflag, size = 0x4, scoped, tag = 'scoped memory for tpu_custom_call.1']
    #allocation16 [shape = 'u8[512]{0}', space=vmem, size = 0x400, scoped, tag = 'input window, operand 15, single buffered']
    #allocation17 [shape = 'u8[512]{0}', space=vmem, size = 0x400, scoped, tag = 'input window, operand 16, single buffered']
    #allocation18 [shape = 's32[1]{0}', space=sflag, size = 0x4, scoped, tag = 'scoped memory for tpu_custom_call.1']
    #allocation19 [shape = 'u8[512]{0}', space=vmem, size = 0x400, scoped, tag = 'input window, operand 17, single buffered']
    #allocation20 [shape = 'u8[131072]{0}', space=vmem, size = 0x20000, scoped, tag = 'input window, operand 18, single buffered']
    #allocation21 [shape = 's32[1]{0}', space=sflag, size = 0x4, scoped, tag = 'scoped memory for tpu_custom_call.1']
    #allocation22 [shape = 'u8[4096]{0}', space=vmem, size = 0x1000, scoped, tag = 'input window, operand 19, single buffered']
    #allocation23 [shape = 'u8[512]{0}', space=vmem, size = 0x400, scoped, tag = 'input window, operand 20, single buffered']
    #allocation24 [shape = 's32[1]{0}', space=sflag, size = 0x4, scoped, tag = 'scoped memory for tpu_custom_call.1']
    #allocation25 [shape = 'u8[512]{0}', space=vmem, size = 0x400, scoped, tag = 'input window, operand 21, single buffered']
    #allocation26 [shape = 'u8[512]{0}', space=vmem, size = 0x400, scoped, tag = 'input window, operand 22, single buffered']
    #allocation27 [shape = 's32[1]{0}', space=sflag, size = 0x4, scoped, tag = 'scoped memory for tpu_custom_call.1']
    #allocation28 [shape = 'u8[512]{0}', space=vmem, size = 0x400, scoped, tag = 'input window, operand 23, single buffered']
    #allocation29 [shape = 'u8[512]{0}', space=vmem, size = 0x400, scoped, tag = 'input window, operand 25, single buffered']
    #allocation30 [shape = 's32[1]{0}', space=sflag, size = 0x4, scoped, tag = 'scoped memory for tpu_custom_call.1']
    #allocation31 [shape = 'u8[8192]{0}', space=vmem, size = 0x2000, scoped, tag = 'output window, operand 0']
    %31 = vsyncpa [#allocation3], 0
    %s32 = scalar_lea.sflag [#allocation3], 1
    %33 = vsyncpa %s32, 0
    %34 = vsyncpa [#allocation6], 0
    %s35 = scalar_lea.sflag [#allocation6], 1
    %36 = vsyncpa %s35, 0
    %37 = vsyncpa [#allocation9], 0
    %38 = vsyncpa [#allocation12], 0
    %39 = vsyncpa [#allocation15], 0
    %40 = vsyncpa [#allocation18], 0
    %41 = vsyncpa [#allocation21], 0
    %42 = vsyncpa [#allocation24], 0
    %43 = vsyncpa [#allocation27], 0
    %44 = vsyncpa [#allocation30], 0
    %45 = vsyncpa [#allocation4], 0
    %s46 = scalar_lea.sflag [#allocation4], 1
    %47 = vsyncpa %s46, 0
    loop: start=0, step=1, limit=4
    $region2: #{tpu_custom_call.1} parent=1 // loop_pre_header
      _
    $region3: #{tpu_custom_call.1} parent=1 // loop_header
      %s49 = sphi 0, %s53
      %p50 = scmp.ge.s32.totalorder %s49, 4
      %s59 = sphi 0, %s61
      %s62 = sphi 0, %s59
      %s63 = sphi 0, %s62
      %s79 = sphi 0, %s63
      %s85 = sphi 0, %s87
      %s88 = sphi 0, %s85
      %s89 = sphi 0, %s88
      %s105 = sphi 0, %s89
      %s111 = sphi 0, %s113
      %s114 = sphi 0, %s111
      %s115 = sphi 0, %s114
      %s131 = sphi 0, %s115
      %s137 = sphi 0, %s139
      %s140 = sphi 0, %s137
      %s141 = sphi 0, %s140
      %s157 = sphi 0, %s141
      %s163 = sphi 0, %s165
      %s166 = sphi 0, %s163
      %s167 = sphi 0, %s166
      %s183 = sphi 0, %s167
      %s189 = sphi 0, %s191
      %s192 = sphi 0, %s189
      %s193 = sphi 0, %s192
      %s209 = sphi 0, %s193
      %s213 = sphi 0, %s213
      %s215 = sphi 0, %s213
      %s216 = sphi 0, %s215
      %s230 = sphi 0, %s216
      %s234 = sphi 0, %s234
      %s236 = sphi 0, %s234
      %s237 = sphi 0, %s236
      %s251 = sphi 0, %s237
      %s255 = sphi 0, %s255
      %s257 = sphi 0, %s255
      %s258 = sphi 0, %s257
      %s272 = sphi 0, %s258
      %s276 = sphi 0, %s276
      %s278 = sphi 0, %s276
      %s279 = sphi 0, %s278
      %s293 = sphi 0, %s279
      %s297 = sphi 0, %s297
      %s299 = sphi 0, %s297
      %s300 = sphi 0, %s299
      %s314 = sphi 0, %s300
      %s318 = sphi 0, %s318
      %s320 = sphi 0, %s318
      %s321 = sphi 0, %s320
      %s335 = sphi 0, %s321
      %s339 = sphi 0, %s339
      %s341 = sphi 0, %s339
      %s342 = sphi 0, %s341
      %s356 = sphi 0, %s342
      %s360 = sphi 0, %s360
      %s362 = sphi 0, %s360
      %s363 = sphi 0, %s362
      %s377 = sphi 0, %s363
      %s381 = sphi 0, %s381
      %s383 = sphi 0, %s381
      %s384 = sphi 0, %s383
      %s398 = sphi 0, %s384
      %s402 = sphi 0, %s402
      %s404 = sphi 0, %s402
      %s405 = sphi 0, %s404
      %s419 = sphi 0, %s405
      %s423 = sphi 0, %s423
      %s425 = sphi 0, %s423
      %s426 = sphi 0, %s425
      %s440 = sphi 0, %s426
      %s444 = sphi 0, %s444
      %s446 = sphi 0, %s444
      %s447 = sphi 0, %s446
      %s461 = sphi 0, %s447
      %s465 = sphi 0, %s465
      %s467 = sphi 0, %s465
      %s468 = sphi 0, %s467
      %s482 = sphi 0, %s468
      %s486 = sphi 0, %s486
      %s488 = sphi 0, %s486
      %s489 = sphi 0, %s488
      %s503 = sphi 0, %s489
      %s507 = sphi 0, %s507
      %s509 = sphi 0, %s507
      %s510 = sphi 0, %s509
      %s524 = sphi 0, %s510
      %s528 = sphi 0, %s528
      %s530 = sphi 0, %s528
      %s531 = sphi 0, %s530
      %s545 = sphi 0, %s531
      %s549 = sphi 0, %s549
      %s551 = sphi 0, %s549
      %s552 = sphi 0, %s551
      %s566 = sphi 0, %s552
      %s570 = sphi 0, %s570
      %s572 = sphi 0, %s570
      %s573 = sphi 0, %s572
      %s587 = sphi 0, %s573
      %s591 = sphi 0, %s591
      %s593 = sphi 0, %s591
      %s594 = sphi 0, %s593
      %s608 = sphi 0, %s594
      %s612 = sphi 0, %s612
      %s614 = sphi 0, %s612
      %s615 = sphi 0, %s614
      %s629 = sphi 0, %s615
      %s635 = sphi 0, %s637
      %s638 = sphi 0, %s635
      %s639 = sphi 0, %s638
      %s655 = sphi 0, %s639
    $region4: #{tpu_custom_call.1} parent=1 // loop_header_branch
      %52 = sbr.rel (%p50) target = $region8
    $region5: #{tpu_custom_call.1} parent=1 // loop_body
      %s54 = ssub.s32 %s49, 1
      %s55 = ssub.s32 %s49, 2
      %s56 = sadd.s32 %s49, 1
      %s57 = ssub.s32 %s49, %s56
      %p58 = scmp.eq.s32.totalorder %s57, 0
      %s60 = sadd.s32 %s59, 1
      %s61 = scalar_select %p58, %s59, %s60
      %p64 = pneg %p58
      %p65 = scmp.eq.s32.totalorder %s49, 1
      %p66 = por %p64, %p65
      %p67 = scmp.ne.s32.totalorder %s59, %s62
      %p68 = scmp.eq.s32.totalorder %s49, 0
      %p69 = por %p67, %p68
      %p70 = scmp.ne.s32.totalorder %s59, %s62
      %p71 = scmp.eq.s32.totalorder %s54, 1
      %p72 = por %p70, %p71
      %p73 = scmp.ne.s32.totalorder %s62, %s63
      %p74 = scmp.eq.s32.totalorder %s54, 0
      %p75 = por %p73, %p74
      %p76 = scmp.ne.s32.totalorder %s62, %s63
      %p77 = scmp.eq.s32.totalorder %s55, 1
      %p78 = por %p76, %p77
      %p80 = scmp.ne.s32.totalorder %s63, %s79
      %p81 = scmp.eq.s32.totalorder %s55, 0
      %p82 = por %p80, %p81
      %s83 = ssub.s32 %s49, %s56
      %p84 = scmp.eq.s32.totalorder %s83, 0
      %s86 = sadd.s32 %s85, 1
      %s87 = scalar_select %p84, %s85, %s86
      %p90 = pneg %p84
      %p91 = scmp.eq.s32.totalorder %s49, 1
      %p92 = por %p90, %p91
      %p93 = scmp.ne.s32.totalorder %s85, %s88
      %p94 = scmp.eq.s32.totalorder %s49, 0
      %p95 = por %p93, %p94
      %p96 = scmp.ne.s32.totalorder %s85, %s88
      %p97 = scmp.eq.s32.totalorder %s54, 1
      %p98 = por %p96, %p97
      %p99 = scmp.ne.s32.totalorder %s88, %s89
      %p100 = scmp.eq.s32.totalorder %s54, 0
      %p101 = por %p99, %p100
      %p102 = scmp.ne.s32.totalorder %s88, %s89
      %p103 = scmp.eq.s32.totalorder %s55, 1
      %p104 = por %p102, %p103
      %p106 = scmp.ne.s32.totalorder %s89, %s105
      %p107 = scmp.eq.s32.totalorder %s55, 0
      %p108 = por %p106, %p107
      %s109 = ssub.s32 %s49, %s56
      %p110 = scmp.eq.s32.totalorder %s109, 0
      %s112 = sadd.s32 %s111, 1
      %s113 = scalar_select %p110, %s111, %s112
      %p116 = pneg %p110
      %p117 = scmp.eq.s32.totalorder %s49, 1
      %p118 = por %p116, %p117
      %p119 = scmp.ne.s32.totalorder %s111, %s114
      %p120 = scmp.eq.s32.totalorder %s49, 0
      %p121 = por %p119, %p120
      %p122 = scmp.ne.s32.totalorder %s111, %s114
      %p123 = scmp.eq.s32.totalorder %s54, 1
      %p124 = por %p122, %p123
      %p125 = scmp.ne.s32.totalorder %s114, %s115
      %p126 = scmp.eq.s32.totalorder %s54, 0
      %p127 = por %p125, %p126
      %p128 = scmp.ne.s32.totalorder %s114, %s115
      %p129 = scmp.eq.s32.totalorder %s55, 1
      %p130 = por %p128, %p129
      %p132 = scmp.ne.s32.totalorder %s115, %s131
      %p133 = scmp.eq.s32.totalorder %s55, 0
      %p134 = por %p132, %p133
      %s135 = ssub.s32 %s49, %s56
      %p136 = scmp.eq.s32.totalorder %s135, 0
      %s138 = sadd.s32 %s137, 1
      %s139 = scalar_select %p136, %s137, %s138
      %p142 = pneg %p136
      %p143 = scmp.eq.s32.totalorder %s49, 1
      %p144 = por %p142, %p143
      %p145 = scmp.ne.s32.totalorder %s137, %s140
      %p146 = scmp.eq.s32.totalorder %s49, 0
      %p147 = por %p145, %p146
      %p148 = scmp.ne.s32.totalorder %s137, %s140
      %p149 = scmp.eq.s32.totalorder %s54, 1
      %p150 = por %p148, %p149
      %p151 = scmp.ne.s32.totalorder %s140, %s141
      %p152 = scmp.eq.s32.totalorder %s54, 0
      %p153 = por %p151, %p152
      %p154 = scmp.ne.s32.totalorder %s140, %s141
      %p155 = scmp.eq.s32.totalorder %s55, 1
      %p156 = por %p154, %p155
      %p158 = scmp.ne.s32.totalorder %s141, %s157
      %p159 = scmp.eq.s32.totalorder %s55, 0
      %p160 = por %p158, %p159
      %s161 = ssub.s32 %s49, %s56
      %p162 = scmp.eq.s32.totalorder %s161, 0
      %s164 = sadd.s32 %s163, 1
      %s165 = scalar_select %p162, %s163, %s164
      %p168 = pneg %p162
      %p169 = scmp.eq.s32.totalorder %s49, 1
      %p170 = por %p168, %p169
      %p171 = scmp.ne.s32.totalorder %s163, %s166
      %p172 = scmp.eq.s32.totalorder %s49, 0
      %p173 = por %p171, %p172
      %p174 = scmp.ne.s32.totalorder %s163, %s166
      %p175 = scmp.eq.s32.totalorder %s54, 1
      %p176 = por %p174, %p175
      %p177 = scmp.ne.s32.totalorder %s166, %s167
      %p178 = scmp.eq.s32.totalorder %s54, 0
      %p179 = por %p177, %p178
      %p180 = scmp.ne.s32.totalorder %s166, %s167
      %p181 = scmp.eq.s32.totalorder %s55, 1
      %p182 = por %p180, %p181
      %p184 = scmp.ne.s32.totalorder %s167, %s183
      %p185 = scmp.eq.s32.totalorder %s55, 0
      %p186 = por %p184, %p185
      %s187 = ssub.s32 %s49, %s56
      %p188 = scmp.eq.s32.totalorder %s187, 0
      %s190 = sadd.s32 %s189, 1
      %s191 = scalar_select %p188, %s189, %s190
      %p194 = pneg %p188
      %p195 = scmp.eq.s32.totalorder %s49, 1
      %p196 = por %p194, %p195
      %p197 = scmp.ne.s32.totalorder %s189, %s192
      %p198 = scmp.eq.s32.totalorder %s49, 0
      %p199 = por %p197, %p198
      %p200 = scmp.ne.s32.totalorder %s189, %s192
      %p201 = scmp.eq.s32.totalorder %s54, 1
      %p202 = por %p200, %p201
      %p203 = scmp.ne.s32.totalorder %s192, %s193
      %p204 = scmp.eq.s32.totalorder %s54, 0
      %p205 = por %p203, %p204
      %p206 = scmp.ne.s32.totalorder %s192, %s193
      %p207 = scmp.eq.s32.totalorder %s55, 1
      %p208 = por %p206, %p207
      %p210 = scmp.ne.s32.totalorder %s193, %s209
      %p211 = scmp.eq.s32.totalorder %s55, 0
      %p212 = por %p210, %p211
      %s214 = sadd.s32 %s213, 1
      %p217 = scmp.eq.s32.totalorder %s49, 1
      %p218 = scmp.ne.s32.totalorder %s213, %s215
      %p219 = scmp.eq.s32.totalorder %s49, 0
      %p220 = por %p218, %p219
      %p221 = scmp.ne.s32.totalorder %s213, %s215
      %p222 = scmp.eq.s32.totalorder %s54, 1
      %p223 = por %p221, %p222
      %p224 = scmp.ne.s32.totalorder %s215, %s216
      %p225 = scmp.eq.s32.totalorder %s54, 0
      %p226 = por %p224, %p225
      %p227 = scmp.ne.s32.totalorder %s215, %s216
      %p228 = scmp.eq.s32.totalorder %s55, 1
      %p229 = por %p227, %p228
      %p231 = scmp.ne.s32.totalorder %s216, %s230
      %p232 = scmp.eq.s32.totalorder %s55, 0
      %p233 = por %p231, %p232
      %s235 = sadd.s32 %s234, 1
      %p238 = scmp.eq.s32.totalorder %s49, 1
      %p239 = scmp.ne.s32.totalorder %s234, %s236
      %p240 = scmp.eq.s32.totalorder %s49, 0
      %p241 = por %p239, %p240
      %p242 = scmp.ne.s32.totalorder %s234, %s236
      %p243 = scmp.eq.s32.totalorder %s54, 1
      %p244 = por %p242, %p243
      %p245 = scmp.ne.s32.totalorder %s236, %s237
      %p246 = scmp.eq.s32.totalorder %s54, 0
      %p247 = por %p245, %p246
      %p248 = scmp.ne.s32.totalorder %s236, %s237
      %p249 = scmp.eq.s32.totalorder %s55, 1
      %p250 = por %p248, %p249
      %p252 = scmp.ne.s32.totalorder %s237, %s251
      %p253 = scmp.eq.s32.totalorder %s55, 0
      %p254 = por %p252, %p253
      %s256 = sadd.s32 %s255, 1
      %p259 = scmp.eq.s32.totalorder %s49, 1
      %p260 = scmp.ne.s32.totalorder %s255, %s257
      %p261 = scmp.eq.s32.totalorder %s49, 0
      %p262 = por %p260, %p261
      %p263 = scmp.ne.s32.totalorder %s255, %s257
      %p264 = scmp.eq.s32.totalorder %s54, 1
      %p265 = por %p263, %p264
      %p266 = scmp.ne.s32.totalorder %s257, %s258
      %p267 = scmp.eq.s32.totalorder %s54, 0
      %p268 = por %p266, %p267
      %p269 = scmp.ne.s32.totalorder %s257, %s258
      %p270 = scmp.eq.s32.totalorder %s55, 1
      %p271 = por %p269, %p270
      %p273 = scmp.ne.s32.totalorder %s258, %s272
      %p274 = scmp.eq.s32.totalorder %s55, 0
      %p275 = por %p273, %p274
      %s277 = sadd.s32 %s276, 1
      %p280 = scmp.eq.s32.totalorder %s49, 1
      %p281 = scmp.ne.s32.totalorder %s276, %s278
      %p282 = scmp.eq.s32.totalorder %s49, 0
      %p283 = por %p281, %p282
      %p284 = scmp.ne.s32.totalorder %s276, %s278
      %p285 = scmp.eq.s32.totalorder %s54, 1
      %p286 = por %p284, %p285
      %p287 = scmp.ne.s32.totalorder %s278, %s279
      %p288 = scmp.eq.s32.totalorder %s54, 0
      %p289 = por %p287, %p288
      %p290 = scmp.ne.s32.totalorder %s278, %s279
      %p291 = scmp.eq.s32.totalorder %s55, 1
      %p292 = por %p290, %p291
      %p294 = scmp.ne.s32.totalorder %s279, %s293
      %p295 = scmp.eq.s32.totalorder %s55, 0
      %p296 = por %p294, %p295
      %s298 = sadd.s32 %s297, 1
      %p301 = scmp.eq.s32.totalorder %s49, 1
      %p302 = scmp.ne.s32.totalorder %s297, %s299
      %p303 = scmp.eq.s32.totalorder %s49, 0
      %p304 = por %p302, %p303
      %p305 = scmp.ne.s32.totalorder %s297, %s299
      %p306 = scmp.eq.s32.totalorder %s54, 1
      %p307 = por %p305, %p306
      %p308 = scmp.ne.s32.totalorder %s299, %s300
      %p309 = scmp.eq.s32.totalorder %s54, 0
      %p310 = por %p308, %p309
      %p311 = scmp.ne.s32.totalorder %s299, %s300
      %p312 = scmp.eq.s32.totalorder %s55, 1
      %p313 = por %p311, %p312
      %p315 = scmp.ne.s32.totalorder %s300, %s314
      %p316 = scmp.eq.s32.totalorder %s55, 0
      %p317 = por %p315, %p316
      %s319 = sadd.s32 %s318, 1
      %p322 = scmp.eq.s32.totalorder %s49, 1
      %p323 = scmp.ne.s32.totalorder %s318, %s320
      %p324 = scmp.eq.s32.totalorder %s49, 0
      %p325 = por %p323, %p324
      %p326 = scmp.ne.s32.totalorder %s318, %s320
      %p327 = scmp.eq.s32.totalorder %s54, 1
      %p328 = por %p326, %p327
      %p329 = scmp.ne.s32.totalorder %s320, %s321
      %p330 = scmp.eq.s32.totalorder %s54, 0
      %p331 = por %p329, %p330
      %p332 = scmp.ne.s32.totalorder %s320, %s321
      %p333 = scmp.eq.s32.totalorder %s55, 1
      %p334 = por %p332, %p333
      %p336 = scmp.ne.s32.totalorder %s321, %s335
      %p337 = scmp.eq.s32.totalorder %s55, 0
      %p338 = por %p336, %p337
      %s340 = sadd.s32 %s339, 1
      %p343 = scmp.eq.s32.totalorder %s49, 1
      %p344 = scmp.ne.s32.totalorder %s339, %s341
      %p345 = scmp.eq.s32.totalorder %s49, 0
      %p346 = por %p344, %p345
      %p347 = scmp.ne.s32.totalorder %s339, %s341
      %p348 = scmp.eq.s32.totalorder %s54, 1
      %p349 = por %p347, %p348
      %p350 = scmp.ne.s32.totalorder %s341, %s342
      %p351 = scmp.eq.s32.totalorder %s54, 0
      %p352 = por %p350, %p351
      %p353 = scmp.ne.s32.totalorder %s341, %s342
      %p354 = scmp.eq.s32.totalorder %s55, 1
      %p355 = por %p353, %p354
      %p357 = scmp.ne.s32.totalorder %s342, %s356
      %p358 = scmp.eq.s32.totalorder %s55, 0
      %p359 = por %p357, %p358
      %s361 = sadd.s32 %s360, 1
      %p364 = scmp.eq.s32.totalorder %s49, 1
      %p365 = scmp.ne.s32.totalorder %s360, %s362
      %p366 = scmp.eq.s32.totalorder %s49, 0
      %p367 = por %p365, %p366
      %p368 = scmp.ne.s32.totalorder %s360, %s362
      %p369 = scmp.eq.s32.totalorder %s54, 1
      %p370 = por %p368, %p369
      %p371 = scmp.ne.s32.totalorder %s362, %s363
      %p372 = scmp.eq.s32.totalorder %s54, 0
      %p373 = por %p371, %p372
      %p374 = scmp.ne.s32.totalorder %s362, %s363
      %p375 = scmp.eq.s32.totalorder %s55, 1
      %p376 = por %p374, %p375
      %p378 = scmp.ne.s32.totalorder %s363, %s377
      %p379 = scmp.eq.s32.totalorder %s55, 0
      %p380 = por %p378, %p379
      %s382 = sadd.s32 %s381, 1
      %p385 = scmp.eq.s32.totalorder %s49, 1
      %p386 = scmp.ne.s32.totalorder %s381, %s383
      %p387 = scmp.eq.s32.totalorder %s49, 0
      %p388 = por %p386, %p387
      %p389 = scmp.ne.s32.totalorder %s381, %s383
      %p390 = scmp.eq.s32.totalorder %s54, 1
      %p391 = por %p389, %p390
      %p392 = scmp.ne.s32.totalorder %s383, %s384
      %p393 = scmp.eq.s32.totalorder %s54, 0
      %p394 = por %p392, %p393
      %p395 = scmp.ne.s32.totalorder %s383, %s384
      %p396 = scmp.eq.s32.totalorder %s55, 1
      %p397 = por %p395, %p396
      %p399 = scmp.ne.s32.totalorder %s384, %s398
      %p400 = scmp.eq.s32.totalorder %s55, 0
      %p401 = por %p399, %p400
      %s403 = sadd.s32 %s402, 1
      %p406 = scmp.eq.s32.totalorder %s49, 1
      %p407 = scmp.ne.s32.totalorder %s402, %s404
      %p408 = scmp.eq.s32.totalorder %s49, 0
      %p409 = por %p407, %p408
      %p410 = scmp.ne.s32.totalorder %s402, %s404
      %p411 = scmp.eq.s32.totalorder %s54, 1
      %p412 = por %p410, %p411
      %p413 = scmp.ne.s32.totalorder %s404, %s405
      %p414 = scmp.eq.s32.totalorder %s54, 0
      %p415 = por %p413, %p414
      %p416 = scmp.ne.s32.totalorder %s404, %s405
      %p417 = scmp.eq.s32.totalorder %s55, 1
      %p418 = por %p416, %p417
      %p420 = scmp.ne.s32.totalorder %s405, %s419
      %p421 = scmp.eq.s32.totalorder %s55, 0
      %p422 = por %p420, %p421
      %s424 = sadd.s32 %s423, 1
      %p427 = scmp.eq.s32.totalorder %s49, 1
      %p428 = scmp.ne.s32.totalorder %s423, %s425
      %p429 = scmp.eq.s32.totalorder %s49, 0
      %p430 = por %p428, %p429
      %p431 = scmp.ne.s32.totalorder %s423, %s425
      %p432 = scmp.eq.s32.totalorder %s54, 1
      %p433 = por %p431, %p432
      %p434 = scmp.ne.s32.totalorder %s425, %s426
      %p435 = scmp.eq.s32.totalorder %s54, 0
      %p436 = por %p434, %p435
      %p437 = scmp.ne.s32.totalorder %s425, %s426
      %p438 = scmp.eq.s32.totalorder %s55, 1
      %p439 = por %p437, %p438
      %p441 = scmp.ne.s32.totalorder %s426, %s440
      %p442 = scmp.eq.s32.totalorder %s55, 0
      %p443 = por %p441, %p442
      %s445 = sadd.s32 %s444, 1
      %p448 = scmp.eq.s32.totalorder %s49, 1
      %p449 = scmp.ne.s32.totalorder %s444, %s446
      %p450 = scmp.eq.s32.totalorder %s49, 0
      %p451 = por %p449, %p450
      %p452 = scmp.ne.s32.totalorder %s444, %s446
      %p453 = scmp.eq.s32.totalorder %s54, 1
      %p454 = por %p452, %p453
      %p455 = scmp.ne.s32.totalorder %s446, %s447
      %p456 = scmp.eq.s32.totalorder %s54, 0
      %p457 = por %p455, %p456
      %p458 = scmp.ne.s32.totalorder %s446, %s447
      %p459 = scmp.eq.s32.totalorder %s55, 1
      %p460 = por %p458, %p459
      %p462 = scmp.ne.s32.totalorder %s447, %s461
      %p463 = scmp.eq.s32.totalorder %s55, 0
      %p464 = por %p462, %p463
      %s466 = sadd.s32 %s465, 1
      %p469 = scmp.eq.s32.totalorder %s49, 1
      %p470 = scmp.ne.s32.totalorder %s465, %s467
      %p471 = scmp.eq.s32.totalorder %s49, 0
      %p472 = por %p470, %p471
      %p473 = scmp.ne.s32.totalorder %s465, %s467
      %p474 = scmp.eq.s32.totalorder %s54, 1
      %p475 = por %p473, %p474
      %p476 = scmp.ne.s32.totalorder %s467, %s468
      %p477 = scmp.eq.s32.totalorder %s54, 0
      %p478 = por %p476, %p477
      %p479 = scmp.ne.s32.totalorder %s467, %s468
      %p480 = scmp.eq.s32.totalorder %s55, 1
      %p481 = por %p479, %p480
      %p483 = scmp.ne.s32.totalorder %s468, %s482
      %p484 = scmp.eq.s32.totalorder %s55, 0
      %p485 = por %p483, %p484
      %s487 = sadd.s32 %s486, 1
      %p490 = scmp.eq.s32.totalorder %s49, 1
      %p491 = scmp.ne.s32.totalorder %s486, %s488
      %p492 = scmp.eq.s32.totalorder %s49, 0
      %p493 = por %p491, %p492
      %p494 = scmp.ne.s32.totalorder %s486, %s488
      %p495 = scmp.eq.s32.totalorder %s54, 1
      %p496 = por %p494, %p495
      %p497 = scmp.ne.s32.totalorder %s488, %s489
      %p498 = scmp.eq.s32.totalorder %s54, 0
      %p499 = por %p497, %p498
      %p500 = scmp.ne.s32.totalorder %s488, %s489
      %p501 = scmp.eq.s32.totalorder %s55, 1
      %p502 = por %p500, %p501
      %p504 = scmp.ne.s32.totalorder %s489, %s503
      %p505 = scmp.eq.s32.totalorder %s55, 0
      %p506 = por %p504, %p505
      %s508 = sadd.s32 %s507, 1
      %p511 = scmp.eq.s32.totalorder %s49, 1
      %p512 = scmp.ne.s32.totalorder %s507, %s509
      %p513 = scmp.eq.s32.totalorder %s49, 0
      %p514 = por %p512, %p513
      %p515 = scmp.ne.s32.totalorder %s507, %s509
      %p516 = scmp.eq.s32.totalorder %s54, 1
      %p517 = por %p515, %p516
      %p518 = scmp.ne.s32.totalorder %s509, %s510
      %p519 = scmp.eq.s32.totalorder %s54, 0
      %p520 = por %p518, %p519
      %p521 = scmp.ne.s32.totalorder %s509, %s510
      %p522 = scmp.eq.s32.totalorder %s55, 1
      %p523 = por %p521, %p522
      %p525 = scmp.ne.s32.totalorder %s510, %s524
      %p526 = scmp.eq.s32.totalorder %s55, 0
      %p527 = por %p525, %p526
      %s529 = sadd.s32 %s528, 1
      %p532 = scmp.eq.s32.totalorder %s49, 1
      %p533 = scmp.ne.s32.totalorder %s528, %s530
      %p534 = scmp.eq.s32.totalorder %s49, 0
      %p535 = por %p533, %p534
      %p536 = scmp.ne.s32.totalorder %s528, %s530
      %p537 = scmp.eq.s32.totalorder %s54, 1
      %p538 = por %p536, %p537
      %p539 = scmp.ne.s32.totalorder %s530, %s531
      %p540 = scmp.eq.s32.totalorder %s54, 0
      %p541 = por %p539, %p540
      %p542 = scmp.ne.s32.totalorder %s530, %s531
      %p543 = scmp.eq.s32.totalorder %s55, 1
      %p544 = por %p542, %p543
      %p546 = scmp.ne.s32.totalorder %s531, %s545
      %p547 = scmp.eq.s32.totalorder %s55, 0
      %p548 = por %p546, %p547
      %s550 = sadd.s32 %s549, 1
      %p553 = scmp.eq.s32.totalorder %s49, 1
      %p554 = scmp.ne.s32.totalorder %s549, %s551
      %p555 = scmp.eq.s32.totalorder %s49, 0
      %p556 = por %p554, %p555
      %p557 = scmp.ne.s32.totalorder %s549, %s551
      %p558 = scmp.eq.s32.totalorder %s54, 1
      %p559 = por %p557, %p558
      %p560 = scmp.ne.s32.totalorder %s551, %s552
      %p561 = scmp.eq.s32.totalorder %s54, 0
      %p562 = por %p560, %p561
      %p563 = scmp.ne.s32.totalorder %s551, %s552
      %p564 = scmp.eq.s32.totalorder %s55, 1
      %p565 = por %p563, %p564
      %p567 = scmp.ne.s32.totalorder %s552, %s566
      %p568 = scmp.eq.s32.totalorder %s55, 0
      %p569 = por %p567, %p568
      %s571 = sadd.s32 %s570, 1
      %p574 = scmp.eq.s32.totalorder %s49, 1
      %p575 = scmp.ne.s32.totalorder %s570, %s572
      %p576 = scmp.eq.s32.totalorder %s49, 0
      %p577 = por %p575, %p576
      %p578 = scmp.ne.s32.totalorder %s570, %s572
      %p579 = scmp.eq.s32.totalorder %s54, 1
      %p580 = por %p578, %p579
      %p581 = scmp.ne.s32.totalorder %s572, %s573
      %p582 = scmp.eq.s32.totalorder %s54, 0
      %p583 = por %p581, %p582
      %p584 = scmp.ne.s32.totalorder %s572, %s573
      %p585 = scmp.eq.s32.totalorder %s55, 1
      %p586 = por %p584, %p585
      %p588 = scmp.ne.s32.totalorder %s573, %s587
      %p589 = scmp.eq.s32.totalorder %s55, 0
      %p590 = por %p588, %p589
      %s592 = sadd.s32 %s591, 1
      %p595 = scmp.eq.s32.totalorder %s49, 1
      %p596 = scmp.ne.s32.totalorder %s591, %s593
      %p597 = scmp.eq.s32.totalorder %s49, 0
      %p598 = por %p596, %p597
      %p599 = scmp.ne.s32.totalorder %s591, %s593
      %p600 = scmp.eq.s32.totalorder %s54, 1
      %p601 = por %p599, %p600
      %p602 = scmp.ne.s32.totalorder %s593, %s594
      %p603 = scmp.eq.s32.totalorder %s54, 0
      %p604 = por %p602, %p603
      %p605 = scmp.ne.s32.totalorder %s593, %s594
      %p606 = scmp.eq.s32.totalorder %s55, 1
      %p607 = por %p605, %p606
      %p609 = scmp.ne.s32.totalorder %s594, %s608
      %p610 = scmp.eq.s32.totalorder %s55, 0
      %p611 = por %p609, %p610
      %s613 = sadd.s32 %s612, 1
      %p616 = scmp.eq.s32.totalorder %s49, 1
      %p617 = scmp.ne.s32.totalorder %s612, %s614
      %p618 = scmp.eq.s32.totalorder %s49, 0
      %p619 = por %p617, %p618
      %p620 = scmp.ne.s32.totalorder %s612, %s614
      %p621 = scmp.eq.s32.totalorder %s54, 1
      %p622 = por %p620, %p621
      %p623 = scmp.ne.s32.totalorder %s614, %s615
      %p624 = scmp.eq.s32.totalorder %s54, 0
      %p625 = por %p623, %p624
      %p626 = scmp.ne.s32.totalorder %s614, %s615
      %p627 = scmp.eq.s32.totalorder %s55, 1
      %p628 = por %p626, %p627
      %p630 = scmp.ne.s32.totalorder %s615, %s629
      %p631 = scmp.eq.s32.totalorder %s55, 0
      %p632 = por %p630, %p631
      %s633 = ssub.s32 %s49, %s56
      %p634 = scmp.eq.s32.totalorder %s633, 0
      %s636 = sadd.s32 %s635, 1
      %s637 = scalar_select %p634, %s635, %s636
      %p640 = pneg %p634
      %p641 = scmp.eq.s32.totalorder %s49, 1
      %p642 = por %p640, %p641
      %p643 = scmp.ne.s32.totalorder %s635, %s638
      %p644 = scmp.eq.s32.totalorder %s49, 0
      %p645 = por %p643, %p644
      %p646 = scmp.ne.s32.totalorder %s635, %s638
      %p647 = scmp.eq.s32.totalorder %s54, 1
      %p648 = por %p646, %p647
      %p649 = scmp.ne.s32.totalorder %s638, %s639
      %p650 = scmp.eq.s32.totalorder %s54, 0
      %p651 = por %p649, %p650
      %p652 = scmp.ne.s32.totalorder %s638, %s639
      %p653 = scmp.eq.s32.totalorder %s55, 1
      %p654 = por %p652, %p653
      %p656 = scmp.ne.s32.totalorder %s639, %s655
      %p657 = scmp.eq.s32.totalorder %s55, 0
      %p658 = por %p656, %p657
      %p659 = scmp.le.s32.totalorder 1, %s49
      %p660 = scmp.lt.s32.totalorder %s49, 3
      %p661 = pnand %p659, %p660
      %p662 = pneg %p661
      // Predicated region
      $region9: #{tpu_custom_call.1} parent=5 // pred_check
        _
      $region10: #{tpu_custom_call.1} parent=5 // pred_check_branch
        %664 = sbr.rel (%p661) target = $region12
      $region11: #{tpu_custom_call.1} parent=5 // pred_region
        %s665 = ssub.s32 %s49, 1
        // Predicated region
        $region13: #{tpu_custom_call.1} parent=11 // pred_check
          %p666 = pneg %p226
        $region14: #{tpu_custom_call.1} parent=11 // pred_check_branch
          %668 = sbr.rel (%p666) target = $region16
        $region15: #{tpu_custom_call.1} parent=11 // pred_region
          %670 = vsyncadd [#allocation6], 0
          %s672 = sshll.u32 %s6, 4
          %s673 = int_to_ptr.hbm [resolvable:$true] %s672
          %s674 = sshll.u32 [#allocation7], 4
          %s675 = int_to_ptr.vmem [resolvable:$true] %s674
          %677 = dma.hbm_to_vmem [thread:$0]  %s673, 128, %s675, [#allocation6]
        $region16: #{tpu_custom_call.1} parent=11 // pred_fallthru
          _
        // Predicated region
        $region17: #{tpu_custom_call.1} parent=11 // pred_check
          %p678 = pneg %p247
        $region18: #{tpu_custom_call.1} parent=11 // pred_check_branch
          %680 = sbr.rel (%p678) target = $region20
        $region19: #{tpu_custom_call.1} parent=11 // pred_region
          _
        $region20: #{tpu_custom_call.1} parent=11 // pred_fallthru
          _
        // Predicated region
        $region21: #{tpu_custom_call.1} parent=11 // pred_check
          %p681 = pneg %p268
        $region22: #{tpu_custom_call.1} parent=11 // pred_check_branch
          %683 = sbr.rel (%p681) target = $region24
        $region23: #{tpu_custom_call.1} parent=11 // pred_region
          %685 = vsyncadd [#allocation9], 0
          %s687 = sshll.u32 %s8, 4
          %s688 = int_to_ptr.hbm [resolvable:$true] %s687
          %s689 = sshll.u32 [#allocation8], 4
          %s690 = int_to_ptr.vmem [resolvable:$true] %s689
          %692 = dma.hbm_to_vmem [thread:$0]  %s688, 16, %s690, [#allocation9]
        $region24: #{tpu_custom_call.1} parent=11 // pred_fallthru
          _
        // Predicated region
        $region25: #{tpu_custom_call.1} parent=11 // pred_check
          %p693 = pneg %p289
        $region26: #{tpu_custom_call.1} parent=11 // pred_check_branch
          %695 = sbr.rel (%p693) target = $region28
        $region27: #{tpu_custom_call.1} parent=11 // pred_region
          %697 = vsyncadd [#allocation9], 0
          %s699 = sshll.u32 %s9, 4
          %s700 = int_to_ptr.hbm [resolvable:$true] %s699
          %s701 = sshll.u32 [#allocation10], 4
          %s702 = int_to_ptr.vmem [resolvable:$true] %s701
          %704 = dma.hbm_to_vmem [thread:$0]  %s700, 16, %s702, [#allocation9]
        $region28: #{tpu_custom_call.1} parent=11 // pred_fallthru
          _
        // Predicated region
        $region29: #{tpu_custom_call.1} parent=11 // pred_check
          %p705 = pneg %p310
        $region30: #{tpu_custom_call.1} parent=11 // pred_check_branch
          %707 = sbr.rel (%p705) target = $region32
        $region31: #{tpu_custom_call.1} parent=11 // pred_region
          _
        $region32: #{tpu_custom_call.1} parent=11 // pred_fallthru
          _
        // Predicated region
        $region33: #{tpu_custom_call.1} parent=11 // pred_check
          %p708 = pneg %p331
        $region34: #{tpu_custom_call.1} parent=11 // pred_check_branch
          %710 = sbr.rel (%p708) target = $region36
        $region35: #{tpu_custom_call.1} parent=11 // pred_region
          %712 = vsyncadd [#allocation12], 0
          %s714 = sshll.u32 %s11, 4
          %s715 = int_to_ptr.hbm [resolvable:$true] %s714
          %s716 = sshll.u32 [#allocation11], 4
          %s717 = int_to_ptr.vmem [resolvable:$true] %s716
          %719 = dma.hbm_to_vmem [thread:$0]  %s715, 16, %s717, [#allocation12]
        $region36: #{tpu_custom_call.1} parent=11 // pred_fallthru
          _
        // Predicated region
        $region37: #{tpu_custom_call.1} parent=11 // pred_check
          %p720 = pneg %p352
        $region38: #{tpu_custom_call.1} parent=11 // pred_check_branch
          %722 = sbr.rel (%p720) target = $region40
        $region39: #{tpu_custom_call.1} parent=11 // pred_region
          %724 = vsyncadd [#allocation12], 0
          %s726 = sshll.u32 %s12, 4
          %s727 = int_to_ptr.hbm [resolvable:$true] %s726
          %s728 = sshll.u32 [#allocation13], 4
          %s729 = int_to_ptr.vmem [resolvable:$true] %s728
          %731 = dma.hbm_to_vmem [thread:$0]  %s727, 16, %s729, [#allocation12]
        $region40: #{tpu_custom_call.1} parent=11 // pred_fallthru
          _
        // Predicated region
        $region41: #{tpu_custom_call.1} parent=11 // pred_check
          %p732 = pneg %p373
        $region42: #{tpu_custom_call.1} parent=11 // pred_check_branch
          %734 = sbr.rel (%p732) target = $region44
        $region43: #{tpu_custom_call.1} parent=11 // pred_region
          %736 = vsyncadd [#allocation15], 0
          %s738 = sshll.u32 %s13, 4
          %s739 = int_to_ptr.hbm [resolvable:$true] %s738
          %s740 = sshll.u32 [#allocation14], 4
          %s741 = int_to_ptr.vmem [resolvable:$true] %s740
          %743 = dma.hbm_to_vmem [thread:$0]  %s739, 16, %s741, [#allocation15]
        $region44: #{tpu_custom_call.1} parent=11 // pred_fallthru
          _
        // Predicated region
        $region45: #{tpu_custom_call.1} parent=11 // pred_check
          %p744 = pneg %p394
        $region46: #{tpu_custom_call.1} parent=11 // pred_check_branch
          %746 = sbr.rel (%p744) target = $region48
        $region47: #{tpu_custom_call.1} parent=11 // pred_region
          _
        $region48: #{tpu_custom_call.1} parent=11 // pred_fallthru
          _
        // Predicated region
        $region49: #{tpu_custom_call.1} parent=11 // pred_check
          %p747 = pneg %p415
        $region50: #{tpu_custom_call.1} parent=11 // pred_check_branch
          %749 = sbr.rel (%p747) target = $region52
        $region51: #{tpu_custom_call.1} parent=11 // pred_region
          %751 = vsyncadd [#allocation15], 0
          %s753 = sshll.u32 %s15, 4
          %s754 = int_to_ptr.hbm [resolvable:$true] %s753
          %s755 = sshll.u32 [#allocation16], 4
          %s756 = int_to_ptr.vmem [resolvable:$true] %s755
          %758 = dma.hbm_to_vmem [thread:$0]  %s754, 16, %s756, [#allocation15]
        $region52: #{tpu_custom_call.1} parent=11 // pred_fallthru
          _
        // Predicated region
        $region53: #{tpu_custom_call.1} parent=11 // pred_check
          %p759 = pneg %p436
        $region54: #{tpu_custom_call.1} parent=11 // pred_check_branch
          %761 = sbr.rel (%p759) target = $region56
        $region55: #{tpu_custom_call.1} parent=11 // pred_region
          %763 = vsyncadd [#allocation18], 0
          %s765 = sshll.u32 %s16, 4
          %s766 = int_to_ptr.hbm [resolvable:$true] %s765
          %s767 = sshll.u32 [#allocation17], 4
          %s768 = int_to_ptr.vmem [resolvable:$true] %s767
          %770 = dma.hbm_to_vmem [thread:$0]  %s766, 16, %s768, [#allocation18]
        $region56: #{tpu_custom_call.1} parent=11 // pred_fallthru
          _
        // Predicated region
        $region57: #{tpu_custom_call.1} parent=11 // pred_check
          %p771 = pneg %p457
        $region58: #{tpu_custom_call.1} parent=11 // pred_check_branch
          %773 = sbr.rel (%p771) target = $region60
        $region59: #{tpu_custom_call.1} parent=11 // pred_region
          %775 = vsyncadd [#allocation18], 0
          %s777 = sshll.u32 %s17, 4
          %s778 = int_to_ptr.hbm [resolvable:$true] %s777
          %s779 = sshll.u32 [#allocation19], 4
          %s780 = int_to_ptr.vmem [resolvable:$true] %s779
          %782 = dma.hbm_to_vmem [thread:$0]  %s778, 16, %s780, [#allocation18]
        $region60: #{tpu_custom_call.1} parent=11 // pred_fallthru
          _
        // Predicated region
        $region61: #{tpu_custom_call.1} parent=11 // pred_check
          %p783 = pneg %p478
        $region62: #{tpu_custom_call.1} parent=11 // pred_check_branch
          %785 = sbr.rel (%p783) target = $region64
        $region63: #{tpu_custom_call.1} parent=11 // pred_region
          %787 = vsyncadd [#allocation21], 0
          %s788 = sshll.u32 %s18, 4
          %s789 = int_to_ptr.hbm [resolvable:$true] %s788
          %s790 = sshll.u32 [#allocation20], 4
          %s791 = int_to_ptr.vmem [resolvable:$true] %s790
          %796 = dma.hbm_to_vmem [thread:$0]  %s789, 4096, %s791, [#allocation21], 1024, 1024, 64
        $region64: #{tpu_custom_call.1} parent=11 // pred_fallthru
          _
        // Predicated region
        $region65: #{tpu_custom_call.1} parent=11 // pred_check
          %p797 = pneg %p499
        $region66: #{tpu_custom_call.1} parent=11 // pred_check_branch
          %799 = sbr.rel (%p797) target = $region68
        $region67: #{tpu_custom_call.1} parent=11 // pred_region
          %801 = vsyncadd [#allocation21], 0
          %s803 = sshll.u32 %s19, 4
          %s804 = int_to_ptr.hbm [resolvable:$true] %s803
          %s805 = sshll.u32 [#allocation22], 4
          %s806 = int_to_ptr.vmem [resolvable:$true] %s805
          %808 = dma.hbm_to_vmem [thread:$0]  %s804, 128, %s806, [#allocation21]
        $region68: #{tpu_custom_call.1} parent=11 // pred_fallthru
          _
        // Predicated region
        $region69: #{tpu_custom_call.1} parent=11 // pred_check
          %p809 = pneg %p520
        $region70: #{tpu_custom_call.1} parent=11 // pred_check_branch
          %811 = sbr.rel (%p809) target = $region72
        $region71: #{tpu_custom_call.1} parent=11 // pred_region
          %813 = vsyncadd [#allocation24], 0
          %s815 = sshll.u32 %s20, 4
          %s816 = int_to_ptr.hbm [resolvable:$true] %s815
          %s817 = sshll.u32 [#allocation23], 4
          %s818 = int_to_ptr.vmem [resolvable:$true] %s817
          %820 = dma.hbm_to_vmem [thread:$0]  %s816, 16, %s818, [#allocation24]
        $region72: #{tpu_custom_call.1} parent=11 // pred_fallthru
          _
        // Predicated region
        $region73: #{tpu_custom_call.1} parent=11 // pred_check
          %p821 = pneg %p541
        $region74: #{tpu_custom_call.1} parent=11 // pred_check_branch
          %823 = sbr.rel (%p821) target = $region76
        $region75: #{tpu_custom_call.1} parent=11 // pred_region
          %825 = vsyncadd [#allocation24], 0
          %s827 = sshll.u32 %s21, 4
          %s828 = int_to_ptr.hbm [resolvable:$true] %s827
          %s829 = sshll.u32 [#allocation25], 4
          %s830 = int_to_ptr.vmem [resolvable:$true] %s829
          %832 = dma.hbm_to_vmem [thread:$0]  %s828, 16, %s830, [#allocation24]
        $region76: #{tpu_custom_call.1} parent=11 // pred_fallthru
          _
        // Predicated region
        $region77: #{tpu_custom_call.1} parent=11 // pred_check
          %p833 = pneg %p562
        $region78: #{tpu_custom_call.1} parent=11 // pred_check_branch
          %835 = sbr.rel (%p833) target = $region80
        $region79: #{tpu_custom_call.1} parent=11 // pred_region
          %837 = vsyncadd [#allocation27], 0
          %s839 = sshll.u32 %s22, 4
          %s840 = int_to_ptr.hbm [resolvable:$true] %s839
          %s841 = sshll.u32 [#allocation26], 4
          %s842 = int_to_ptr.vmem [resolvable:$true] %s841
          %844 = dma.hbm_to_vmem [thread:$0]  %s840, 16, %s842, [#allocation27]
        $region80: #{tpu_custom_call.1} parent=11 // pred_fallthru
          _
        // Predicated region
        $region81: #{tpu_custom_call.1} parent=11 // pred_check
          %p845 = pneg %p583
        $region82: #{tpu_custom_call.1} parent=11 // pred_check_branch
          %847 = sbr.rel (%p845) target = $region84
        $region83: #{tpu_custom_call.1} parent=11 // pred_region
          %849 = vsyncadd [#allocation27], 0
          %s851 = sshll.u32 %s23, 4
          %s852 = int_to_ptr.hbm [resolvable:$true] %s851
          %s853 = sshll.u32 [#allocation28], 4
          %s854 = int_to_ptr.vmem [resolvable:$true] %s853
          %856 = dma.hbm_to_vmem [thread:$0]  %s852, 16, %s854, [#allocation27]
        $region84: #{tpu_custom_call.1} parent=11 // pred_fallthru
          _
        // Predicated region
        $region85: #{tpu_custom_call.1} parent=11 // pred_check
          %p857 = pneg %p604
        $region86: #{tpu_custom_call.1} parent=11 // pred_check_branch
          %859 = sbr.rel (%p857) target = $region88
        $region87: #{tpu_custom_call.1} parent=11 // pred_region
          _
        $region88: #{tpu_custom_call.1} parent=11 // pred_fallthru
          _
        // Predicated region
        $region89: #{tpu_custom_call.1} parent=11 // pred_check
          %p860 = pneg %p625
        $region90: #{tpu_custom_call.1} parent=11 // pred_check_branch
          %862 = sbr.rel (%p860) target = $region92
        $region91: #{tpu_custom_call.1} parent=11 // pred_region
          %864 = vsyncadd [#allocation30], 0
          %s866 = sshll.u32 %s25, 4
          %s867 = int_to_ptr.hbm [resolvable:$true] %s866
          %s868 = sshll.u32 [#allocation29], 4
          %s869 = int_to_ptr.vmem [resolvable:$true] %s868
          %871 = dma.hbm_to_vmem [thread:$0]  %s867, 16, %s869, [#allocation30]
        $region92: #{tpu_custom_call.1} parent=11 // pred_fallthru
          _
      $region12: #{tpu_custom_call.1} parent=5 // pred_fallthru
        _
      %p872 = scmp.lt.s32.totalorder %s49, 2
      // Predicated region
      $region93: #{tpu_custom_call.1} parent=5 // pred_check
        %p873 = pneg %p872
      $region94: #{tpu_custom_call.1} parent=5 // pred_check_branch
        %875 = sbr.rel (%p873) target = $region96
      $region95: #{tpu_custom_call.1} parent=5 // pred_region
        // Predicated region
        $region97: #{tpu_custom_call.1} parent=95 // pred_check
          %p876 = pneg %p69
        $region98: #{tpu_custom_call.1} parent=95 // pred_check_branch
          %878 = sbr.rel (%p876) target = $region100
        $region99: #{tpu_custom_call.1} parent=95 // pred_region
          %s879 = sand.u32 %s59, 1
          %s880 = scalar_lea.sflag [#allocation3], %s879
          %s881 = sand.u32 %s59, 1
          %s882 = smul.addr %s881, 8
          %s883 = scalar_lea.vmem [#allocation2], %s882
          %885 = vsyncadd %s880, 0
          %s886 = smul.addr %s49, 8
          %s887 = scalar_lea.hbm %s0, %s886
          %s889 = sshll.u32 %s887, 4
          %s890 = int_to_ptr.hbm [resolvable:$true] %s889
          %s891 = sshll.u32 %s883, 4
          %s892 = int_to_ptr.vmem [resolvable:$true] %s891
          %894 = dma.hbm_to_vmem [thread:$0]  %s890, 128, %s892, %s880
        $region100: #{tpu_custom_call.1} parent=95 // pred_fallthru
          _
        // Predicated region
        $region101: #{tpu_custom_call.1} parent=95 // pred_check
          %p895 = pneg %p95
        $region102: #{tpu_custom_call.1} parent=95 // pred_check_branch
          %897 = sbr.rel (%p895) target = $region104
        $region103: #{tpu_custom_call.1} parent=95 // pred_region
          %p898 = scmp.lt.s32.totalorder %s49, 1
          %s899 = scalar_select %p898, %s49, 1
          %s900 = smul.addr %s899, 8
          %s901 = scalar_lea.vmem %s1, %s900
        $region104: #{tpu_custom_call.1} parent=95 // pred_fallthru
          _
        // Predicated region
        $region105: #{tpu_custom_call.1} parent=95 // pred_check
          %p902 = pneg %p121
        $region106: #{tpu_custom_call.1} parent=95 // pred_check_branch
          %904 = sbr.rel (%p902) target = $region108
        $region107: #{tpu_custom_call.1} parent=95 // pred_region
          %p905 = scmp.lt.s32.totalorder %s49, 1
          %s906 = scalar_select %p905, %s49, 1
          %s907 = smul.addr %s906, 2
          %s908 = smul.addr %s907, 8
          %s909 = scalar_lea.vmem %s2, %s908
        $region108: #{tpu_custom_call.1} parent=95 // pred_fallthru
          _
        // Predicated region
        $region109: #{tpu_custom_call.1} parent=95 // pred_check
          %p910 = pneg %p147
        $region110: #{tpu_custom_call.1} parent=95 // pred_check_branch
          %912 = sbr.rel (%p910) target = $region112
        $region111: #{tpu_custom_call.1} parent=95 // pred_region
          %p913 = scmp.lt.s32.totalorder %s49, 1
          %s914 = scalar_select %p913, %s49, 1
          %s915 = smul.addr %s914, 8
          %s916 = scalar_lea.vmem %s3, %s915
        $region112: #{tpu_custom_call.1} parent=95 // pred_fallthru
          _
        // Predicated region
        $region113: #{tpu_custom_call.1} parent=95 // pred_check
          %p917 = pneg %p173
        $region114: #{tpu_custom_call.1} parent=95 // pred_check_branch
          %919 = sbr.rel (%p917) target = $region116
        $region115: #{tpu_custom_call.1} parent=95 // pred_region
          %s920 = sand.u32 %s49, 1
          %s921 = scalar_lea.sflag [#allocation6], %s920
          %s922 = sand.u32 %s163, 1
          %s923 = smul.addr %s922, 2
          %s924 = scalar_lea.vmem [#allocation5], %s923
          %926 = vsyncadd %s921, 0
          %s927 = smul.addr %s49, 2
          %s928 = scalar_lea.hbm %s4, %s927
          %s930 = sshll.u32 %s928, 4
          %s931 = int_to_ptr.hbm [resolvable:$true] %s930
          %s932 = sshll.u32 %s924, 4
          %s933 = int_to_ptr.vmem [resolvable:$true] %s932
          %935 = dma.hbm_to_vmem [thread:$0]  %s931, 32, %s933, %s921
        $region116: #{tpu_custom_call.1} parent=95 // pred_fallthru
          _
        // Predicated region
        $region117: #{tpu_custom_call.1} parent=95 // pred_check
          %p936 = pneg %p199
        $region118: #{tpu_custom_call.1} parent=95 // pred_check_branch
          %938 = sbr.rel (%p936) target = $region120
        $region119: #{tpu_custom_call.1} parent=95 // pred_region
          %p939 = scmp.lt.s32.totalorder %s49, 1
          %s940 = scalar_select %p939, %s49, 1
          %s941 = scalar_lea.vmem %s5, %s940
        $region120: #{tpu_custom_call.1} parent=95 // pred_fallthru
          _
      $region96: #{tpu_custom_call.1} parent=5 // pred_fallthru
        _
      %p942 = scmp.le.s32.totalorder 1, %s49
      %p943 = scmp.lt.s32.totalorder %s49, 3
      %p944 = pnand %p942, %p943
      %p945 = pneg %p944
      // Predicated region
      $region121: #{tpu_custom_call.1} parent=5 // pred_check
        _
      $region122: #{tpu_custom_call.1} parent=5 // pred_check_branch
        %947 = sbr.rel (%p944) target = $region124
      $region123: #{tpu_custom_call.1} parent=5 // pred_region
        %s948 = ssub.s32 %s49, 1
        %s949 = sand.u32 %s62, 1
        %s950 = scalar_lea.sflag [#allocation3], %s949
        %s951 = sand.u32 %s62, 1
        %s952 = smul.addr %s951, 8
        %s953 = scalar_lea.vmem [#allocation2], %s952
        // Predicated region
        $region125: #{tpu_custom_call.1} parent=123 // pred_check
          %p954 = pneg %p75
        $region126: #{tpu_custom_call.1} parent=123 // pred_check_branch
          %956 = sbr.rel (%p954) target = $region128
        $region127: #{tpu_custom_call.1} parent=123 // pred_region
          %958 = dma.done %s950, 128
        $region128: #{tpu_custom_call.1} parent=123 // pred_fallthru
          _
        %s959 = sand.u32 %s54, 1
        %s960 = scalar_lea.sflag [#allocation6], %s959
        %s961 = sand.u32 %s166, 1
        %s962 = smul.addr %s961, 2
        %s963 = scalar_lea.vmem [#allocation5], %s962
        // Predicated region
        $region129: #{tpu_custom_call.1} parent=123 // pred_check
          %p964 = pneg %p179
        $region130: #{tpu_custom_call.1} parent=123 // pred_check_branch
          %966 = sbr.rel (%p964) target = $region132
        $region131: #{tpu_custom_call.1} parent=123 // pred_region
          %968 = dma.done %s960, 32
        $region132: #{tpu_custom_call.1} parent=123 // pred_fallthru
          _
        // Predicated region
        $region133: #{tpu_custom_call.1} parent=123 // pred_check
          %p969 = pneg %p226
        $region134: #{tpu_custom_call.1} parent=123 // pred_check_branch
          %971 = sbr.rel (%p969) target = $region136
        $region135: #{tpu_custom_call.1} parent=123 // pred_region
          %973 = dma.done [#allocation6], 128
        $region136: #{tpu_custom_call.1} parent=123 // pred_fallthru
          _
        // Predicated region
        $region137: #{tpu_custom_call.1} parent=123 // pred_check
          %p974 = pneg %p268
        $region138: #{tpu_custom_call.1} parent=123 // pred_check_branch
          %976 = sbr.rel (%p974) target = $region140
        $region139: #{tpu_custom_call.1} parent=123 // pred_region
          %978 = dma.done [#allocation9], 16
        $region140: #{tpu_custom_call.1} parent=123 // pred_fallthru
          _
        // Predicated region
        $region141: #{tpu_custom_call.1} parent=123 // pred_check
          %p979 = pneg %p289
        $region142: #{tpu_custom_call.1} parent=123 // pred_check_branch
          %981 = sbr.rel (%p979) target = $region144
        $region143: #{tpu_custom_call.1} parent=123 // pred_region
          %983 = dma.done [#allocation9], 16
        $region144: #{tpu_custom_call.1} parent=123 // pred_fallthru
          _
        // Predicated region
        $region145: #{tpu_custom_call.1} parent=123 // pred_check
          %p984 = pneg %p331
        $region146: #{tpu_custom_call.1} parent=123 // pred_check_branch
          %986 = sbr.rel (%p984) target = $region148
        $region147: #{tpu_custom_call.1} parent=123 // pred_region
          %988 = dma.done [#allocation12], 16
        $region148: #{tpu_custom_call.1} parent=123 // pred_fallthru
          _
        // Predicated region
        $region149: #{tpu_custom_call.1} parent=123 // pred_check
          %p989 = pneg %p352
        $region150: #{tpu_custom_call.1} parent=123 // pred_check_branch
          %991 = sbr.rel (%p989) target = $region152
        $region151: #{tpu_custom_call.1} parent=123 // pred_region
          %993 = dma.done [#allocation12], 16
        $region152: #{tpu_custom_call.1} parent=123 // pred_fallthru
          _
        // Predicated region
        $region153: #{tpu_custom_call.1} parent=123 // pred_check
          %p994 = pneg %p373
        $region154: #{tpu_custom_call.1} parent=123 // pred_check_branch
          %996 = sbr.rel (%p994) target = $region156
        $region155: #{tpu_custom_call.1} parent=123 // pred_region
          %998 = dma.done [#allocation15], 16
        $region156: #{tpu_custom_call.1} parent=123 // pred_fallthru
          _
        // Predicated region
        $region157: #{tpu_custom_call.1} parent=123 // pred_check
          %p999 = pneg %p415
        $region158: #{tpu_custom_call.1} parent=123 // pred_check_branch
          %1001 = sbr.rel (%p999) target = $region160
        $region159: #{tpu_custom_call.1} parent=123 // pred_region
          %1003 = dma.done [#allocation15], 16
        $region160: #{tpu_custom_call.1} parent=123 // pred_fallthru
          _
        // Predicated region
        $region161: #{tpu_custom_call.1} parent=123 // pred_check
          %p1004 = pneg %p436
        $region162: #{tpu_custom_call.1} parent=123 // pred_check_branch
          %1006 = sbr.rel (%p1004) target = $region164
        $region163: #{tpu_custom_call.1} parent=123 // pred_region
          %1008 = dma.done [#allocation18], 16
        $region164: #{tpu_custom_call.1} parent=123 // pred_fallthru
          _
        // Predicated region
        $region165: #{tpu_custom_call.1} parent=123 // pred_check
          %p1009 = pneg %p457
        $region166: #{tpu_custom_call.1} parent=123 // pred_check_branch
          %1011 = sbr.rel (%p1009) target = $region168
        $region167: #{tpu_custom_call.1} parent=123 // pred_region
          %1013 = dma.done [#allocation18], 16
        $region168: #{tpu_custom_call.1} parent=123 // pred_fallthru
          _
        // Predicated region
        $region169: #{tpu_custom_call.1} parent=123 // pred_check
          %p1014 = pneg %p478
        $region170: #{tpu_custom_call.1} parent=123 // pred_check_branch
          %1016 = sbr.rel (%p1014) target = $region172
        $region171: #{tpu_custom_call.1} parent=123 // pred_region
          %1018 = dma.done [#allocation21], 4096
        $region172: #{tpu_custom_call.1} parent=123 // pred_fallthru
          _
        // Predicated region
        $region173: #{tpu_custom_call.1} parent=123 // pred_check
          %p1019 = pneg %p499
        $region174: #{tpu_custom_call.1} parent=123 // pred_check_branch
          %1021 = sbr.rel (%p1019) target = $region176
        $region175: #{tpu_custom_call.1} parent=123 // pred_region
          %1023 = dma.done [#allocation21], 128
        $region176: #{tpu_custom_call.1} parent=123 // pred_fallthru
          _
        // Predicated region
        $region177: #{tpu_custom_call.1} parent=123 // pred_check
          %p1024 = pneg %p520
        $region178: #{tpu_custom_call.1} parent=123 // pred_check_branch
          %1026 = sbr.rel (%p1024) target = $region180
        $region179: #{tpu_custom_call.1} parent=123 // pred_region
          %1028 = dma.done [#allocation24], 16
        $region180: #{tpu_custom_call.1} parent=123 // pred_fallthru
          _
        // Predicated region
        $region181: #{tpu_custom_call.1} parent=123 // pred_check
          %p1029 = pneg %p541
        $region182: #{tpu_custom_call.1} parent=123 // pred_check_branch
          %1031 = sbr.rel (%p1029) target = $region184
        $region183: #{tpu_custom_call.1} parent=123 // pred_region
          %1033 = dma.done [#allocation24], 16
        $region184: #{tpu_custom_call.1} parent=123 // pred_fallthru
          _
        // Predicated region
        $region185: #{tpu_custom_call.1} parent=123 // pred_check
          %p1034 = pneg %p562
        $region186: #{tpu_custom_call.1} parent=123 // pred_check_branch
          %1036 = sbr.rel (%p1034) target = $region188
        $region187: #{tpu_custom_call.1} parent=123 // pred_region
          %1038 = dma.done [#allocation27], 16
        $region188: #{tpu_custom_call.1} parent=123 // pred_fallthru
          _
        // Predicated region
        $region189: #{tpu_custom_call.1} parent=123 // pred_check
          %p1039 = pneg %p583
        $region190: #{tpu_custom_call.1} parent=123 // pred_check_branch
          %1041 = sbr.rel (%p1039) target = $region192
        $region191: #{tpu_custom_call.1} parent=123 // pred_region
          %1043 = dma.done [#allocation27], 16
        $region192: #{tpu_custom_call.1} parent=123 // pred_fallthru
          _
        // Predicated region
        $region193: #{tpu_custom_call.1} parent=123 // pred_check
          %p1044 = pneg %p625
        $region194: #{tpu_custom_call.1} parent=123 // pred_check_branch
          %1046 = sbr.rel (%p1044) target = $region196
        $region195: #{tpu_custom_call.1} parent=123 // pred_region
          %1048 = dma.done [#allocation30], 16
        $region196: #{tpu_custom_call.1} parent=123 // pred_fallthru
          _
        %s1049 = sand.u32 %s62, 1
        %s1050 = scalar_lea.sflag [#allocation3], %s1049
        %s1051 = sand.u32 %s62, 1
        %s1052 = smul.addr %s1051, 8
        %s1053 = scalar_lea.vmem [#allocation2], %s1052
        %p1054 = pneg %p75
        %p1055 = pneg %p72
        %p1056 = scmp.lt.s32.totalorder %s54, 1
        %s1057 = scalar_select %p1056, %s54, 1
        %s1058 = smul.addr %s1057, 8
        %s1059 = scalar_lea.vmem %s1, %s1058
        %p1060 = pneg %p101
        %p1061 = pneg %p98
        %p1062 = scmp.lt.s32.totalorder %s54, 1
        %s1063 = scalar_select %p1062, %s54, 1
        %s1064 = smul.addr %s1063, 2
        %s1065 = smul.addr %s1064, 8
        %s1066 = scalar_lea.vmem %s2, %s1065
        %p1067 = pneg %p127
        %p1068 = pneg %p124
        %p1069 = scmp.lt.s32.totalorder %s54, 1
        %s1070 = scalar_select %p1069, %s54, 1
        %s1071 = smul.addr %s1070, 8
        %s1072 = scalar_lea.vmem %s3, %s1071
        %p1073 = pneg %p153
        %p1074 = pneg %p150
        %s1075 = sand.u32 %s54, 1
        %s1076 = scalar_lea.sflag [#allocation6], %s1075
        %s1077 = sand.u32 %s166, 1
        %s1078 = smul.addr %s1077, 2
        %s1079 = scalar_lea.vmem [#allocation5], %s1078
        %p1080 = pneg %p179
        %p1081 = pneg %p176
        %p1082 = scmp.lt.s32.totalorder %s54, 1
        %s1083 = scalar_select %p1082, %s54, 1
        %s1084 = scalar_lea.vmem %s5, %s1083
        %p1085 = pneg %p205
        %p1086 = pneg %p202
        %p1087 = pneg %p226
        %p1088 = pneg %p223
        %p1089 = pneg %p247
        %p1090 = pneg %p244
        %p1091 = pneg %p268
        %p1092 = pneg %p265
        %p1093 = pneg %p289
        %p1094 = pneg %p286
        %p1095 = pneg %p310
        %p1096 = pneg %p307
        %p1097 = pneg %p331
        %p1098 = pneg %p328
        %p1099 = pneg %p352
        %p1100 = pneg %p349
        %p1101 = pneg %p373
        %p1102 = pneg %p370
        %p1103 = pneg %p394
        %p1104 = pneg %p391
        %p1105 = pneg %p415
        %p1106 = pneg %p412
        %p1107 = pneg %p436
        %p1108 = pneg %p433
        %p1109 = pneg %p457
        %p1110 = pneg %p454
        %p1111 = pneg %p478
        %p1112 = pneg %p475
        %p1113 = pneg %p499
        %p1114 = pneg %p496
        %p1115 = pneg %p520
        %p1116 = pneg %p517
        %p1117 = pneg %p541
        %p1118 = pneg %p538
        %p1119 = pneg %p562
        %p1120 = pneg %p559
        %p1121 = pneg %p583
        %p1122 = pneg %p580
        %p1123 = pneg %p604
        %p1124 = pneg %p601
        %p1125 = pneg %p625
        %p1126 = pneg %p622
        %p1127 = pneg %p651
        %p1128 = pneg %p648
        %s1129 = sand.u32 %s638, 1
        %s1130 = scalar_lea.sflag [#allocation4], %s1129
        %s1131 = sand.u32 %s638, 1
        %s1132 = smul.addr %s1131, 8
        %s1133 = scalar_lea.vmem [#allocation31], %s1132
        %p1134 = scmp.lt.s32.totalorder %s54, 1
        %s1135 = scalar_select %p1134, %s54, 1
        %s1136 = smul.addr %s1135, 8
        %s1137 = scalar_lea.vmem %s1, %s1136
        %p1138 = scmp.lt.s32.totalorder %s54, 1
        %s1139 = scalar_select %p1138, %s54, 1
        %s1140 = smul.addr %s1139, 2
        %s1141 = smul.addr %s1140, 8
        %s1142 = scalar_lea.vmem %s2, %s1141
        %p1143 = scmp.lt.s32.totalorder %s54, 1
        %s1144 = scalar_select %p1143, %s54, 1
        %s1145 = smul.addr %s1144, 8
        %s1146 = scalar_lea.vmem %s3, %s1145
        %p1147 = scmp.lt.s32.totalorder %s54, 1
        %s1148 = scalar_select %p1147, %s54, 1
        %s1149 = scalar_lea.vmem %s5, %s1148
        %v1150 = vld [vmem:[%s953] sm:$0xff]
        %v1151 = vld [vmem:[%s1142] sm:$0xff]
        %v1152 = vld [vmem:[%s1142 + $0x8] sm:$0x3]
        %v1153 = vld [vmem:[%s1149] sm:$0x1]
        %v1154 = vld [vmem:[#allocation23] sm:$0x1]
        %1156 = vset.pattern.permute.xlu0 0
        %1157 = vperm.xlu0 %1156, %v1151
        %v1158 = vpop.permute.xlu0 %1157
        %1161 = vset.pattern.permute.xlu0 0
        %1162 = vperm.xlu0 %1161, %v1152
        %v1163 = vpop.permute.xlu0 %1162
        %v1166 = vperm.slane %v1154, 0
        %v1168 = vmul.f32 %v1158, %v1166
        %v1169 = vmul.f32 %v1163, %v1166
        %v1170 = vld [vmem:[#allocation25] sm:$0x1]
        %v1172 = vperm.slane %v1170, 0
        %v1174 = vadd.f32 %v1168, %v1172
        %v1175 = vadd.f32 %v1169, %v1172
        %v1176 = vmax.f32 %v1174, 0.0
        %v1177 = vmax.f32 %v1175, 0.0
        %v1178 = vld [vmem:[#allocation26] sm:$0x1]
        %v1179 = vld [vmem:[#allocation28] sm:$0x1]
        %vm1180 = vcmask 261120
        %v1181 = vsel %vm1180, %v1176, 0.0
        %1182 = vadd.xlane.f32.xlu0 %v1181
        %v1183 = vpop.xlane.xlu0 %1182
        %vm1184 = vcmask 254976
        %v1185 = vsel %vm1184, %v1177, 0.0
        %1186 = vadd.xlane.f32.xlu0 %v1185
        %v1187 = vpop.xlane.xlu0 %1186
        %v1188 = vrcp.pop 32.0
        %v1189 = vmul.f32 32.0, %v1188
        %v1190 = vsub.f32 1.0, %v1189
        %v1191 = vmul.f32 %v1188, %v1190
        %v1192 = vadd.f32 %v1188, %v1191
        %vm1193 = vweird.f32 %v1188
        %v1194 = vsel %vm1193, %v1188, %v1192
        %v1195 = vmul.f32 %v1183, %v1194
        %v1196 = vmul.f32 %v1187, %v1194
        %v1197 = vsub.f32 %v1176, %v1195
        %v1198 = vsub.f32 %v1177, %v1196
        %v1199 = vmul.f32 %v1197, %v1197
        %v1200 = vmul.f32 %v1198, %v1198
        %v1201 = vsel %vm1180, %v1199, 0.0
        %1202 = vadd.xlane.f32.xlu0 %v1201
        %v1203 = vpop.xlane.xlu0 %1202
        %v1204 = vsel %vm1184, %v1200, 0.0
        %1205 = vadd.xlane.f32.xlu0 %v1204
        %v1206 = vpop.xlane.xlu0 %1205
        %v1207 = vmul.f32 %v1203, %v1194
        %v1208 = vmul.f32 %v1206, %v1194
        %v1209 = vadd.f32 %v1207, 1e-05
        %v1210 = vadd.f32 %v1208, 1e-05
        %v1211 = vrsqrt.pop %v1209
        %v1212 = vmul.f32 %v1211, %v1209
        %v1213 = vmul.f32 %v1212, %v1211
        %v1214 = vmul.f32 0.5, %v1213
        %v1215 = vsub.f32 1.5, %v1214
        %v1216 = vmul.f32 %v1211, %v1215
        %vm1217 = vweird.f32 %v1209
        %vm1218 = vweird.f32 %v1211
        %vm1219 = vmor %vm1217, %vm1218
        %v1220 = vsel %vm1219, %v1211, %v1216
        %v1221 = vrsqrt.pop %v1210
        %v1222 = vmul.f32 %v1221, %v1210
        %v1223 = vmul.f32 %v1222, %v1221
        %v1224 = vmul.f32 0.5, %v1223
        %v1225 = vsub.f32 1.5, %v1224
        %v1226 = vmul.f32 %v1221, %v1225
        %vm1227 = vweird.f32 %v1210
        %vm1228 = vweird.f32 %v1221
        %vm1229 = vmor %vm1227, %vm1228
        %v1230 = vsel %vm1229, %v1221, %v1226
        %v1231 = vmul.f32 %v1197, %v1220
        %v1232 = vmul.f32 %v1198, %v1230
        %v1234 = vperm.slane %v1178, 0
        %v1236 = vmul.f32 %v1231, %v1234
        %v1237 = vmul.f32 %v1232, %v1234
        %v1239 = vperm.slane %v1179, 0
        %v1241 = vadd.f32 %v1236, %v1239
        %v1242 = vadd.f32 %v1237, %v1239
        %v1243 = vld [vmem:[%s24] sm:$0xff]
        %v1244 = vld [vmem:[%s24 + $0x8] sm:$0xff]
        %v1245 = vld [vmem:[%s24 + $0x10] sm:$0xff]
        %v1246 = vld [vmem:[%s24 + $0x18] sm:$0xff]
        %v1247 = vld [vmem:[#allocation29] sm:$0x1]
        %v1249 = vperm.slane %v1247, 0
        %v1252 = vsel %vm1180, %v1241, 0
        %v1255 = vsel %vm1180, %v1242, 0
        %1257 = vmatpush.msra.mxu0 0.0
        %1258 = vmatpush.msra.mxu0 0.0
        %1259 = vmatpush.msra.mxu0 0.0
        %1260 = vmatpush.msra.mxu0 0.0
        %1261 = vmatpush.msra.mxu0 0.0
        %1262 = vmatpush.msra.mxu0 0.0
        %1263 = vmatpush.msra.mxu0 0.0
        %1264 = vmatpush.msra.mxu0 0.0
        %1265 = vmatpush.msra.mxu0 0.0
        %1266 = vmatpush.msra.mxu0 0.0
        %1267 = vmatpush.msra.mxu0 0.0
        %1268 = vmatpush.msra.mxu0 0.0
        %1269 = vmatpush.msra.mxu0 %v1246
        %1270 = vmatpush.msra.mxu0 %v1245
        %1271 = vmatpush.msra.mxu0 %v1244
        %1272 = vmatpush.msra.mxu0 %v1243
        %1273 = vmatmul.f32.gmra.mxu0 %v1252
        %v1274 = vpop.f32.mrf.mxu0
        %v1275 = vadd.f32 %v1249, %v1274
        %1276 = vmatmul.f32.gmra.mxu0 %v1255
        %v1277 = vpop.f32.mrf.mxu0
        %v1278 = vadd.f32 %v1249, %v1277
        %1279 = vdwg.mxu0
        %v1280 = vtanh.pop %v1275
        %v1281 = vtanh.pop %v1278
        %vm1282 = vcmp.eq.f32.partialorder %v1151, -999.0
        %vm1283 = vcmp.eq.f32.partialorder %v1152, -999.0
        %v1284 = vsel %vm1282, 1, 0
        %v1285 = vsel %vm1283, 1, 0
        %1286 = vset.pattern.permute.xlu0 0
        %1287 = vperm.xlu0 %1286, %v1284
        %v1288 = vpop.permute.xlu0 %1287
        %1289 = vset.pattern.permute.xlu0 0
        %1290 = vperm.xlu0 %1289, %v1285
        %v1291 = vpop.permute.xlu0 %1290
        %vm1292 = vcmp.eq.s32.totalorder %v1288, 1
        %vm1293 = vcmp.eq.s32.totalorder %v1291, 1
        %v1294 = vsel %vm1292, 0.0, %v1280
        %v1295 = vsel %vm1293, 0.0, %v1281
        %v1296 = vld [vmem:[%s1137] sm:$0x3f]
        %v1297 = vld [vmem:[%s1146] sm:$0x3f]
        %v1298 = vld [vmem:[%s963] sm:$0x1]
        %v1299 = vld [vmem:[%s963 + $0x1] sm:$0x1]
        %v1300 = vld [vmem:[#allocation7] sm:$0xff]
        %v1301 = vld [vmem:[%s7] sm:$0x1]
        %v1303 = vperm.slane %v1301, 0
        %vm1305 = vcmask 64512
        %v1307 = vsel %vm1305, %v1296, 0
        %1309 = vmatpush.msra.mxu0 0.0
        %1310 = vmatpush.msra.mxu0 0.0
        %1311 = vmatpush.msra.mxu0 0.0
        %1312 = vmatpush.msra.mxu0 0.0
        %1313 = vmatpush.msra.mxu0 0.0
        %1314 = vmatpush.msra.mxu0 0.0
        %1315 = vmatpush.msra.mxu0 0.0
        %1316 = vmatpush.msra.mxu0 0.0
        %1317 = vmatpush.msra.mxu0 0.0
        %1318 = vmatpush.msra.mxu0 0.0
        %1319 = vmatpush.msra.mxu0 0.0
        %1320 = vmatpush.msra.mxu0 0.0
        %1321 = vmatpush.msra.mxu0 0.0
        %1322 = vmatpush.msra.mxu0 0.0
        %1323 = vmatpush.msra.mxu0 0.0
        %1324 = vmatpush.msra.mxu0 %v1300
        %1325 = vmatmul.f32.gmra.mxu0 %v1307
        %v1326 = vpop.f32.mrf.mxu0
        %v1327 = vadd.f32 %v1303, %v1326
        %1328 = vdwg.mxu0
        %v1329 = vmax.f32 %v1327, 0.0
        %v1330 = vld [vmem:[#allocation8] sm:$0x1]
        %v1331 = vld [vmem:[#allocation10] sm:$0x1]
        %vm1332 = vcmask 259072
        %v1333 = vsel %vm1332, %v1329, 0.0
        %1334 = vadd.xlane.f32.xlu0 %v1333
        %v1335 = vpop.xlane.xlu0 %1334
        %v1336 = vmul.f32 %v1335, %v1194
        %v1337 = vsub.f32 %v1329, %v1336
        %v1338 = vmul.f32 %v1337, %v1337
        %v1339 = vsel %vm1332, %v1338, 0.0
        %1340 = vadd.xlane.f32.xlu0 %v1339
        %v1341 = vpop.xlane.xlu0 %1340
        %v1342 = vmul.f32 %v1341, %v1194
        %v1343 = vadd.f32 %v1342, 1e-05
        %v1344 = vrsqrt.pop %v1343
        %v1345 = vmul.f32 %v1344, %v1343
        %v1346 = vmul.f32 %v1345, %v1344
        %v1347 = vmul.f32 0.5, %v1346
        %v1348 = vsub.f32 1.5, %v1347
        %v1349 = vmul.f32 %v1344, %v1348
        %vm1350 = vweird.f32 %v1343
        %vm1351 = vweird.f32 %v1344
        %vm1352 = vmor %vm1350, %vm1351
        %v1353 = vsel %vm1352, %v1344, %v1349
        %v1354 = vmul.f32 %v1337, %v1353
        %v1356 = vperm.slane %v1330, 0
        %v1358 = vmul.f32 %v1354, %v1356
        %v1360 = vperm.slane %v1331, 0
        %v1362 = vadd.f32 %v1358, %v1360
        %v1363 = vld [vmem:[%s10] sm:$0xff]
        %v1364 = vld [vmem:[%s10 + $0x8] sm:$0xff]
        %v1365 = vld [vmem:[%s10 + $0x10] sm:$0xff]
        %v1366 = vld [vmem:[%s10 + $0x18] sm:$0xff]
        %v1367 = vld [vmem:[#allocation11] sm:$0x1]
        %v1369 = vperm.slane %v1367, 0
        %v1372 = vsel %vm1180, %v1362, 0
        %1374 = vmatpush.msra.mxu0 0.0
        %1375 = vmatpush.msra.mxu0 0.0
        %1376 = vmatpush.msra.mxu0 0.0
        %1377 = vmatpush.msra.mxu0 0.0
        %1378 = vmatpush.msra.mxu0 0.0
        %1379 = vmatpush.msra.mxu0 0.0
        %1380 = vmatpush.msra.mxu0 0.0
        %1381 = vmatpush.msra.mxu0 0.0
        %1382 = vmatpush.msra.mxu0 0.0
        %1383 = vmatpush.msra.mxu0 0.0
        %1384 = vmatpush.msra.mxu0 0.0
        %1385 = vmatpush.msra.mxu0 0.0
        %1386 = vmatpush.msra.mxu0 %v1366
        %1387 = vmatpush.msra.mxu0 %v1365
        %1388 = vmatpush.msra.mxu0 %v1364
        %1389 = vmatpush.msra.mxu0 %v1363
        %1390 = vmatmul.f32.gmra.mxu0 %v1372
        %v1391 = vpop.f32.mrf.mxu0
        %v1392 = vadd.f32 %v1369, %v1391
        %1393 = vdwg.mxu0
        %v1394 = vmax.f32 %v1392, 0.0
        %v1395 = vld [vmem:[#allocation13] sm:$0x1]
        %v1396 = vld [vmem:[#allocation14] sm:$0x1]
        %v1397 = vsel %vm1332, %v1394, 0.0
        %1398 = vadd.xlane.f32.xlu0 %v1397
        %v1399 = vpop.xlane.xlu0 %1398
        %v1400 = vmul.f32 %v1399, %v1194
        %v1401 = vsub.f32 %v1394, %v1400
        %v1402 = vmul.f32 %v1401, %v1401
        %v1403 = vsel %vm1332, %v1402, 0.0
        %1404 = vadd.xlane.f32.xlu0 %v1403
        %v1405 = vpop.xlane.xlu0 %1404
        %v1406 = vmul.f32 %v1405, %v1194
        %v1407 = vadd.f32 %v1406, 1e-05
        %v1408 = vrsqrt.pop %v1407
        %v1409 = vmul.f32 %v1408, %v1407
        %v1410 = vmul.f32 %v1409, %v1408
        %v1411 = vmul.f32 0.5, %v1410
        %v1412 = vsub.f32 1.5, %v1411
        %v1413 = vmul.f32 %v1408, %v1412
        %vm1414 = vweird.f32 %v1407
        %vm1415 = vweird.f32 %v1408
        %vm1416 = vmor %vm1414, %vm1415
        %v1417 = vsel %vm1416, %v1408, %v1413
        %v1418 = vmul.f32 %v1401, %v1417
        %v1420 = vperm.slane %v1395, 0
        %v1422 = vmul.f32 %v1418, %v1420
        %v1424 = vperm.slane %v1396, 0
        %v1426 = vadd.f32 %v1422, %v1424
        %v1427 = vld [vmem:[%s14] sm:$0xff]
        %v1428 = vld [vmem:[%s14 + $0x8] sm:$0xff]
        %v1429 = vld [vmem:[%s14 + $0x10] sm:$0xff]
        %v1430 = vld [vmem:[%s14 + $0x18] sm:$0xff]
        %v1431 = vld [vmem:[#allocation16] sm:$0x1]
        %v1433 = vperm.slane %v1431, 0
        %v1436 = vsel %vm1180, %v1426, 0
        %1438 = vmatpush.msra.mxu0 0.0
        %1439 = vmatpush.msra.mxu0 0.0
        %1440 = vmatpush.msra.mxu0 0.0
        %1441 = vmatpush.msra.mxu0 0.0
        %1442 = vmatpush.msra.mxu0 0.0
        %1443 = vmatpush.msra.mxu0 0.0
        %1444 = vmatpush.msra.mxu0 0.0
        %1445 = vmatpush.msra.mxu0 0.0
        %1446 = vmatpush.msra.mxu0 0.0
        %1447 = vmatpush.msra.mxu0 0.0
        %1448 = vmatpush.msra.mxu0 0.0
        %1449 = vmatpush.msra.mxu0 0.0
        %1450 = vmatpush.msra.mxu0 %v1430
        %1451 = vmatpush.msra.mxu0 %v1429
        %1452 = vmatpush.msra.mxu0 %v1428
        %1453 = vmatpush.msra.mxu0 %v1427
        %1454 = vmatmul.f32.gmra.mxu0 %v1436
        %v1455 = vpop.f32.mrf.mxu0
        %v1456 = vadd.f32 %v1433, %v1455
        %1457 = vdwg.mxu0
        %v1458 = vmax.f32 %v1456, 0.0
        %v1459 = vld [vmem:[#allocation17] sm:$0x1]
        %v1460 = vld [vmem:[#allocation19] sm:$0x1]
        %v1461 = vsel %vm1332, %v1458, 0.0
        %1462 = vadd.xlane.f32.xlu0 %v1461
        %v1463 = vpop.xlane.xlu0 %1462
        %v1464 = vmul.f32 %v1463, %v1194
        %v1465 = vsub.f32 %v1458, %v1464
        %v1466 = vmul.f32 %v1465, %v1465
        %v1467 = vsel %vm1332, %v1466, 0.0
        %1468 = vadd.xlane.f32.xlu0 %v1467
        %v1469 = vpop.xlane.xlu0 %1468
        %v1470 = vmul.f32 %v1469, %v1194
        %v1471 = vadd.f32 %v1470, 1e-05
        %v1472 = vrsqrt.pop %v1471
        %v1473 = vmul.f32 %v1472, %v1471
        %v1474 = vmul.f32 %v1473, %v1472
        %v1475 = vmul.f32 0.5, %v1474
        %v1476 = vsub.f32 1.5, %v1475
        %v1477 = vmul.f32 %v1472, %v1476
        %vm1478 = vweird.f32 %v1471
        %vm1479 = vweird.f32 %v1472
        %vm1480 = vmor %vm1478, %vm1479
        %v1481 = vsel %vm1480, %v1472, %v1477
        %v1482 = vmul.f32 %v1465, %v1481
        %v1484 = vperm.slane %v1459, 0
        %v1486 = vmul.f32 %v1482, %v1484
        %v1488 = vperm.slane %v1460, 0
        %v1490 = vadd.f32 %v1486, %v1488
        %v1491 = vld [vmem:[#allocation20] sm:$0xff]
        %v1492 = vld [vmem:[#allocation20 + $0x8] sm:$0xff]
        %v1493 = vld [vmem:[#allocation20 + $0x10] sm:$0xff]
        %v1494 = vld [vmem:[#allocation20 + $0x18] sm:$0xff]
        %v1495 = vld [vmem:[#allocation20 + $0x20] sm:$0xff]
        %v1496 = vld [vmem:[#allocation20 + $0x28] sm:$0xff]
        %v1497 = vld [vmem:[#allocation20 + $0x30] sm:$0xff]
        %v1498 = vld [vmem:[#allocation20 + $0x38] sm:$0xff]
        %v1499 = vld [vmem:[#allocation20 + $0x40] sm:$0xff]
        %v1500 = vld [vmem:[#allocation20 + $0x48] sm:$0xff]
        %v1501 = vld [vmem:[#allocation20 + $0x50] sm:$0xff]
        %v1502 = vld [vmem:[#allocation20 + $0x58] sm:$0xff]
        %v1503 = vld [vmem:[#allocation20 + $0x60] sm:$0xff]
        %v1504 = vld [vmem:[#allocation20 + $0x68] sm:$0xff]
        %v1505 = vld [vmem:[#allocation20 + $0x70] sm:$0xff]
        %v1506 = vld [vmem:[#allocation20 + $0x78] sm:$0xff]
        %v1507 = vld [vmem:[#allocation20 + $0x80] sm:$0xff]
        %v1508 = vld [vmem:[#allocation20 + $0x88] sm:$0xff]
        %v1509 = vld [vmem:[#allocation20 + $0x90] sm:$0xff]
        %v1510 = vld [vmem:[#allocation20 + $0x98] sm:$0xff]
        %v1511 = vld [vmem:[#allocation20 + $0xa0] sm:$0xff]
        %v1512 = vld [vmem:[#allocation20 + $0xa8] sm:$0xff]
        %v1513 = vld [vmem:[#allocation20 + $0xb0] sm:$0xff]
        %v1514 = vld [vmem:[#allocation20 + $0xb8] sm:$0xff]
        %v1515 = vld [vmem:[#allocation20 + $0xc0] sm:$0xff]
        %v1516 = vld [vmem:[#allocation20 + $0xc8] sm:$0xff]
        %v1517 = vld [vmem:[#allocation20 + $0xd0] sm:$0xff]
        %v1518 = vld [vmem:[#allocation20 + $0xd8] sm:$0xff]
        %v1519 = vld [vmem:[#allocation20 + $0xe0] sm:$0xff]
        %v1520 = vld [vmem:[#allocation20 + $0xe8] sm:$0xff]
        %v1521 = vld [vmem:[#allocation20 + $0xf0] sm:$0xff]
        %v1522 = vld [vmem:[#allocation20 + $0xf8] sm:$0xff]
        %v1523 = vld [vmem:[#allocation22] sm:$0xff]
        %v1525 = vperm.slane %v1523, 0
        %v1526 = vperm.slane %v1523, 1
        %v1527 = vperm.slane %v1523, 2
        %v1528 = vperm.slane %v1523, 3
        %v1529 = vperm.slane %v1523, 4
        %v1530 = vperm.slane %v1523, 5
        %v1531 = vperm.slane %v1523, 6
        %v1532 = vperm.slane %v1523, 7
        %v1542 = vsel %vm1180, %v1490, 0
        %1544 = vmatpush.msra.mxu0 0.0
        %1545 = vmatpush.msra.mxu0 0.0
        %1546 = vmatpush.msra.mxu0 0.0
        %1547 = vmatpush.msra.mxu0 0.0
        %1548 = vmatpush.msra.mxu0 0.0
        %1549 = vmatpush.msra.mxu0 0.0
        %1550 = vmatpush.msra.mxu0 0.0
        %1551 = vmatpush.msra.mxu0 0.0
        %1552 = vmatpush.msra.mxu0 0.0
        %1553 = vmatpush.msra.mxu0 0.0
        %1554 = vmatpush.msra.mxu0 0.0
        %1555 = vmatpush.msra.mxu0 0.0
        %1556 = vmatpush.msra.mxu0 %v1515
        %1557 = vmatpush.msra.mxu0 %v1507
        %1558 = vmatpush.msra.mxu0 %v1499
        %1559 = vmatpush.msra.mxu0 %v1491
        %1560 = vmatmul.f32.gmra.mxu0 %v1542
        %v1561 = vpop.f32.mrf.mxu0
        %v1562 = vadd.f32 %v1525, %v1561
        %1563 = vdwg.mxu0
        %1564 = vmatpush.msra.mxu0 0.0
        %1565 = vmatpush.msra.mxu0 0.0
        %1566 = vmatpush.msra.mxu0 0.0
        %1567 = vmatpush.msra.mxu0 0.0
        %1568 = vmatpush.msra.mxu0 0.0
        %1569 = vmatpush.msra.mxu0 0.0
        %1570 = vmatpush.msra.mxu0 0.0
        %1571 = vmatpush.msra.mxu0 0.0
        %1572 = vmatpush.msra.mxu0 0.0
        %1573 = vmatpush.msra.mxu0 0.0
        %1574 = vmatpush.msra.mxu0 0.0
        %1575 = vmatpush.msra.mxu0 0.0
        %1576 = vmatpush.msra.mxu0 %v1516
        %1577 = vmatpush.msra.mxu0 %v1508
        %1578 = vmatpush.msra.mxu0 %v1500
        %1579 = vmatpush.msra.mxu0 %v1492
        %1580 = vmatmul.f32.gmra.mxu0 %v1542
        %v1581 = vpop.f32.mrf.mxu0
        %v1582 = vadd.f32 %v1526, %v1581
        %1583 = vdwg.mxu0
        %1584 = vmatpush.msra.mxu0 0.0
        %1585 = vmatpush.msra.mxu0 0.0
        %1586 = vmatpush.msra.mxu0 0.0
        %1587 = vmatpush.msra.mxu0 0.0
        %1588 = vmatpush.msra.mxu0 0.0
        %1589 = vmatpush.msra.mxu0 0.0
        %1590 = vmatpush.msra.mxu0 0.0
        %1591 = vmatpush.msra.mxu0 0.0
        %1592 = vmatpush.msra.mxu0 0.0
        %1593 = vmatpush.msra.mxu0 0.0
        %1594 = vmatpush.msra.mxu0 0.0
        %1595 = vmatpush.msra.mxu0 0.0
        %1596 = vmatpush.msra.mxu0 %v1517
        %1597 = vmatpush.msra.mxu0 %v1509
        %1598 = vmatpush.msra.mxu0 %v1501
        %1599 = vmatpush.msra.mxu0 %v1493
        %1600 = vmatmul.f32.gmra.mxu0 %v1542
        %v1601 = vpop.f32.mrf.mxu0
        %v1602 = vadd.f32 %v1527, %v1601
        %1603 = vdwg.mxu0
        %1604 = vmatpush.msra.mxu0 0.0
        %1605 = vmatpush.msra.mxu0 0.0
        %1606 = vmatpush.msra.mxu0 0.0
        %1607 = vmatpush.msra.mxu0 0.0
        %1608 = vmatpush.msra.mxu0 0.0
        %1609 = vmatpush.msra.mxu0 0.0
        %1610 = vmatpush.msra.mxu0 0.0
        %1611 = vmatpush.msra.mxu0 0.0
        %1612 = vmatpush.msra.mxu0 0.0
        %1613 = vmatpush.msra.mxu0 0.0
        %1614 = vmatpush.msra.mxu0 0.0
        %1615 = vmatpush.msra.mxu0 0.0
        %1616 = vmatpush.msra.mxu0 %v1518
        %1617 = vmatpush.msra.mxu0 %v1510
        %1618 = vmatpush.msra.mxu0 %v1502
        %1619 = vmatpush.msra.mxu0 %v1494
        %1620 = vmatmul.f32.gmra.mxu0 %v1542
        %v1621 = vpop.f32.mrf.mxu0
        %v1622 = vadd.f32 %v1528, %v1621
        %1623 = vdwg.mxu0
        %1624 = vmatpush.msra.mxu0 0.0
        %1625 = vmatpush.msra.mxu0 0.0
        %1626 = vmatpush.msra.mxu0 0.0
        %1627 = vmatpush.msra.mxu0 0.0
        %1628 = vmatpush.msra.mxu0 0.0
        %1629 = vmatpush.msra.mxu0 0.0
        %1630 = vmatpush.msra.mxu0 0.0
        %1631 = vmatpush.msra.mxu0 0.0
        %1632 = vmatpush.msra.mxu0 0.0
        %1633 = vmatpush.msra.mxu0 0.0
        %1634 = vmatpush.msra.mxu0 0.0
        %1635 = vmatpush.msra.mxu0 0.0
        %1636 = vmatpush.msra.mxu0 %v1519
        %1637 = vmatpush.msra.mxu0 %v1511
        %1638 = vmatpush.msra.mxu0 %v1503
        %1639 = vmatpush.msra.mxu0 %v1495
        %1640 = vmatmul.f32.gmra.mxu0 %v1542
        %v1641 = vpop.f32.mrf.mxu0
        %v1642 = vadd.f32 %v1529, %v1641
        %1643 = vdwg.mxu0
        %1644 = vmatpush.msra.mxu0 0.0
        %1645 = vmatpush.msra.mxu0 0.0
        %1646 = vmatpush.msra.mxu0 0.0
        %1647 = vmatpush.msra.mxu0 0.0
        %1648 = vmatpush.msra.mxu0 0.0
        %1649 = vmatpush.msra.mxu0 0.0
        %1650 = vmatpush.msra.mxu0 0.0
        %1651 = vmatpush.msra.mxu0 0.0
        %1652 = vmatpush.msra.mxu0 0.0
        %1653 = vmatpush.msra.mxu0 0.0
        %1654 = vmatpush.msra.mxu0 0.0
        %1655 = vmatpush.msra.mxu0 0.0
        %1656 = vmatpush.msra.mxu0 %v1520
        %1657 = vmatpush.msra.mxu0 %v1512
        %1658 = vmatpush.msra.mxu0 %v1504
        %1659 = vmatpush.msra.mxu0 %v1496
        %1660 = vmatmul.f32.gmra.mxu0 %v1542
        %v1661 = vpop.f32.mrf.mxu0
        %v1662 = vadd.f32 %v1530, %v1661
        %1663 = vdwg.mxu0
        %1664 = vmatpush.msra.mxu0 0.0
        %1665 = vmatpush.msra.mxu0 0.0
        %1666 = vmatpush.msra.mxu0 0.0
        %1667 = vmatpush.msra.mxu0 0.0
        %1668 = vmatpush.msra.mxu0 0.0
        %1669 = vmatpush.msra.mxu0 0.0
        %1670 = vmatpush.msra.mxu0 0.0
        %1671 = vmatpush.msra.mxu0 0.0
        %1672 = vmatpush.msra.mxu0 0.0
        %1673 = vmatpush.msra.mxu0 0.0
        %1674 = vmatpush.msra.mxu0 0.0
        %1675 = vmatpush.msra.mxu0 0.0
        %1676 = vmatpush.msra.mxu0 %v1521
        %1677 = vmatpush.msra.mxu0 %v1513
        %1678 = vmatpush.msra.mxu0 %v1505
        %1679 = vmatpush.msra.mxu0 %v1497
        %1680 = vmatmul.f32.gmra.mxu0 %v1542
        %v1681 = vpop.f32.mrf.mxu0
        %v1682 = vadd.f32 %v1531, %v1681
        %1683 = vdwg.mxu0
        %1684 = vmatpush.msra.mxu0 0.0
        %1685 = vmatpush.msra.mxu0 0.0
        %1686 = vmatpush.msra.mxu0 0.0
        %1687 = vmatpush.msra.mxu0 0.0
        %1688 = vmatpush.msra.mxu0 0.0
        %1689 = vmatpush.msra.mxu0 0.0
        %1690 = vmatpush.msra.mxu0 0.0
        %1691 = vmatpush.msra.mxu0 0.0
        %1692 = vmatpush.msra.mxu0 0.0
        %1693 = vmatpush.msra.mxu0 0.0
        %1694 = vmatpush.msra.mxu0 0.0
        %1695 = vmatpush.msra.mxu0 0.0
        %1696 = vmatpush.msra.mxu0 %v1522
        %1697 = vmatpush.msra.mxu0 %v1514
        %1698 = vmatpush.msra.mxu0 %v1506
        %1699 = vmatpush.msra.mxu0 %v1498
        %1700 = vmatmul.f32.gmra.mxu0 %v1542
        %v1701 = vpop.f32.mrf.mxu0
        %v1702 = vadd.f32 %v1532, %v1701
        %1703 = vdwg.mxu0
        %v1704 = vlaneseq
        %v1705 = vand.u32 %v1704, 127
        %1706 = vset.pattern.permute.xlu0 1
        %1707 = vperm.xlu0 %1706, %v1297
        %v1708 = vpop.permute.xlu0 %1707
        %vm1709 = vcmp.eq.s32.totalorder %v1708, %v1705
        %v1710 = vsel %vm1709, 1, 0
        %v1711 = vcvt.s32.f32 %v1710
        %v1713 = vsel %vm1305, %v1711, 0
        %1715 = vmatpush.msra.mxu0 0.0
        %1716 = vmatpush.msra.mxu0 0.0
        %1717 = vmatpush.msra.mxu0 0.0
        %1718 = vmatpush.msra.mxu0 0.0
        %1719 = vmatpush.msra.mxu0 0.0
        %1720 = vmatpush.msra.mxu0 0.0
        %1721 = vmatpush.msra.mxu0 0.0
        %1722 = vmatpush.msra.mxu0 0.0
        %1723 = vmatpush.msra.mxu0 0.0
        %1724 = vmatpush.msra.mxu0 0.0
        %1725 = vmatpush.msra.mxu0 0.0
        %1726 = vmatpush.msra.mxu0 0.0
        %1727 = vmatpush.msra.mxu0 0.0
        %1728 = vmatpush.msra.mxu0 0.0
        %1729 = vmatpush.msra.mxu0 0.0
        %1730 = vmatpush.msra.mxu0 %v1150
        %1731 = vmatmul.f32.gmra.mxu0 %v1713
        %v1732 = vpop.f32.mrf.mxu0
        %v1733 = vadd.f32 0.0, %v1732
        %1734 = vdwg.mxu0
        %1735 = vset.pattern.permute.xlu0 0
        %1736 = vperm.xlu0 %1735, %v1297
        %v1737 = vpop.permute.xlu0 %1736
        %vm1738 = vcmp.eq.s32.totalorder %v1737, %v1705
        %v1739 = vsel %vm1738, 1, 0
        %v1740 = vcvt.s32.f32 %v1739
        %v1742 = vsel %vm1305, %v1740, 0
        %1744 = vmatpush.msra.mxu0 0.0
        %1745 = vmatpush.msra.mxu0 0.0
        %1746 = vmatpush.msra.mxu0 0.0
        %1747 = vmatpush.msra.mxu0 0.0
        %1748 = vmatpush.msra.mxu0 0.0
        %1749 = vmatpush.msra.mxu0 0.0
        %1750 = vmatpush.msra.mxu0 0.0
        %1751 = vmatpush.msra.mxu0 0.0
        %1752 = vmatpush.msra.mxu0 0.0
        %1753 = vmatpush.msra.mxu0 0.0
        %1754 = vmatpush.msra.mxu0 0.0
        %1755 = vmatpush.msra.mxu0 0.0
        %1756 = vmatpush.msra.mxu0 0.0
        %1757 = vmatpush.msra.mxu0 0.0
        %1758 = vmatpush.msra.mxu0 0.0
        %1759 = vmatpush.msra.mxu0 %v1150
        %1760 = vmatmul.f32.gmra.mxu0 %v1742
        %v1761 = vpop.f32.mrf.mxu0
        %v1762 = vadd.f32 0.0, %v1761
        %1763 = vdwg.mxu0
        %v1764 = vlaneseq
        %v1765 = vshrl.u32 %v1764, 7
        %v1766 = vperm.slane %v1153, 0
        %vm1767 = vcmp.eq.s32.totalorder %v1765, %v1766
        %v1768 = vsel %vm1767, 1, 0
        %v1769 = vcvt.s32.f32 %v1768
        %v1770 = vadd.s32 %v1765, 6
        %vm1771 = vcmp.eq.s32.totalorder %v1770, %v1766
        %v1772 = vsel %vm1771, 1, 0
        %v1773 = vcvt.s32.f32 %v1772
        %vm1774 = vcmask 80896
        %v1776 = vsel %vm1774, %v1769, 0
        %vm1778 = vcmask 1041408
        %v1780 = vsel %vm1778, 1.0, 0
        %1782 = vmatpush.msra.mxu0 0.0
        %1783 = vmatpush.msra.mxu0 0.0
        %1784 = vmatpush.msra.mxu0 0.0
        %1785 = vmatpush.msra.mxu0 0.0
        %1786 = vmatpush.msra.mxu0 0.0
        %1787 = vmatpush.msra.mxu0 0.0
        %1788 = vmatpush.msra.mxu0 0.0
        %1789 = vmatpush.msra.mxu0 0.0
        %1790 = vmatpush.msra.mxu0 0.0
        %1791 = vmatpush.msra.mxu0 0.0
        %1792 = vmatpush.msra.mxu0 0.0
        %1793 = vmatpush.msra.mxu0 0.0
        %1794 = vmatpush.msra.mxu0 0.0
        %1795 = vmatpush.msra.mxu0 0.0
        %1796 = vmatpush.msra.mxu0 %v1780
        %1797 = vmatpush.msra.mxu0 1.0
        %1798 = vmatmul.f32.gmra.mxu0 %v1776
        %v1799 = vpop.f32.mrf.mxu0
        %v1800 = vadd.f32 0.0, %v1799
        %1801 = vdwg.mxu0
        %v1802 = vmax.f32 %v1800, 1.0
        %v1804 = vsel %vm1774, %v1773, 0
        %1806 = vmatpush.msra.mxu0 0.0
        %1807 = vmatpush.msra.mxu0 0.0
        %1808 = vmatpush.msra.mxu0 0.0
        %1809 = vmatpush.msra.mxu0 0.0
        %1810 = vmatpush.msra.mxu0 0.0
        %1811 = vmatpush.msra.mxu0 0.0
        %1812 = vmatpush.msra.mxu0 0.0
        %1813 = vmatpush.msra.mxu0 0.0
        %1814 = vmatpush.msra.mxu0 0.0
        %1815 = vmatpush.msra.mxu0 0.0
        %1816 = vmatpush.msra.mxu0 0.0
        %1817 = vmatpush.msra.mxu0 0.0
        %1818 = vmatpush.msra.mxu0 0.0
        %1819 = vmatpush.msra.mxu0 0.0
        %1820 = vmatpush.msra.mxu0 %v1780
        %1821 = vmatpush.msra.mxu0 1.0
        %1822 = vmatmul.f32.gmra.mxu0 %v1804
        %v1823 = vpop.f32.mrf.mxu0
        %v1824 = vadd.f32 0.0, %v1823
        %1825 = vdwg.mxu0
        %v1826 = vmax.f32 %v1824, 1.0
        %v1828 = vsel %vm1778, %v1295, 0
        %1830 = vmatpush.msra.mxu0 0.0
        %1831 = vmatpush.msra.mxu0 0.0
        %1832 = vmatpush.msra.mxu0 0.0
        %1833 = vmatpush.msra.mxu0 0.0
        %1834 = vmatpush.msra.mxu0 0.0
        %1835 = vmatpush.msra.mxu0 0.0
        %1836 = vmatpush.msra.mxu0 0.0
        %1837 = vmatpush.msra.mxu0 0.0
        %1838 = vmatpush.msra.mxu0 0.0
        %1839 = vmatpush.msra.mxu0 0.0
        %1840 = vmatpush.msra.mxu0 0.0
        %1841 = vmatpush.msra.mxu0 0.0
        %1842 = vmatpush.msra.mxu0 0.0
        %1843 = vmatpush.msra.mxu0 0.0
        %1844 = vmatpush.msra.mxu0 %v1828
        %1845 = vmatpush.msra.mxu0 %v1294
        %1846 = vmatmul.f32.gmra.mxu0 %v1776
        %v1847 = vpop.f32.mrf.mxu0
        %v1848 = vadd.f32 1.0, %v1847
        %1849 = vdwg.mxu0
        %1851 = vset.pattern.permute.xlu0 0
        %1852 = vperm.xlu0 %1851, %v1802
        %v1853 = vpop.permute.xlu0 %1852
        %v1855 = vrcp.pop %v1853
        %v1856 = vmul.f32 %v1853, %v1855
        %v1857 = vsub.f32 1.0, %v1856
        %v1858 = vmul.f32 %v1855, %v1857
        %v1859 = vadd.f32 %v1855, %v1858
        %vm1860 = vweird.f32 %v1853
        %vm1861 = vweird.f32 %v1855
        %vm1862 = vmor %vm1860, %vm1861
        %v1863 = vsel %vm1862, %v1855, %v1859
        %v1864 = vand.u32 2147483647, %v1853
        %vm1865 = vcmp.eq.f32.partialorder %v1864, 8.507059e+37
        %v1866 = vand.u32 %v1853, 2147483648
        %v1867 = vor.u32 1.1754944e-38, %v1866
        %v1868 = vsel %vm1865, %v1867, %v1863
        %v1869 = vmul.f32 %v1848, %v1868
        %1870 = vmatpush.msra.mxu0 0.0
        %1871 = vmatpush.msra.mxu0 0.0
        %1872 = vmatpush.msra.mxu0 0.0
        %1873 = vmatpush.msra.mxu0 0.0
        %1874 = vmatpush.msra.mxu0 0.0
        %1875 = vmatpush.msra.mxu0 0.0
        %1876 = vmatpush.msra.mxu0 0.0
        %1877 = vmatpush.msra.mxu0 0.0
        %1878 = vmatpush.msra.mxu0 0.0
        %1879 = vmatpush.msra.mxu0 0.0
        %1880 = vmatpush.msra.mxu0 0.0
        %1881 = vmatpush.msra.mxu0 0.0
        %1882 = vmatpush.msra.mxu0 0.0
        %1883 = vmatpush.msra.mxu0 0.0
        %1884 = vmatpush.msra.mxu0 %v1828
        %1885 = vmatpush.msra.mxu0 %v1294
        %1886 = vmatmul.f32.gmra.mxu0 %v1804
        %v1887 = vpop.f32.mrf.mxu0
        %v1888 = vadd.f32 1.0, %v1887
        %1889 = vdwg.mxu0
        %1891 = vset.pattern.permute.xlu0 0
        %1892 = vperm.xlu0 %1891, %v1826
        %v1893 = vpop.permute.xlu0 %1892
        %v1895 = vrcp.pop %v1893
        %v1896 = vmul.f32 %v1893, %v1895
        %v1897 = vsub.f32 1.0, %v1896
        %v1898 = vmul.f32 %v1895, %v1897
        %v1899 = vadd.f32 %v1895, %v1898
        %vm1900 = vweird.f32 %v1893
        %vm1901 = vweird.f32 %v1895
        %vm1902 = vmor %vm1900, %vm1901
        %v1903 = vsel %vm1902, %v1895, %v1899
        %v1904 = vand.u32 2147483647, %v1893
        %vm1905 = vcmp.eq.f32.partialorder %v1904, 8.507059e+37
        %v1906 = vand.u32 %v1893, 2147483648
        %v1907 = vor.u32 1.1754944e-38, %v1906
        %v1908 = vsel %vm1905, %v1907, %v1903
        %v1909 = vmul.f32 %v1888, %v1908
        %1911 = vset.pattern.permute.xlu0 0
        %1912 = vperm.xlu0 %1911, %v1733
        %v1913 = vpop.permute.xlu0 %1912
        %v1915 = vmul.f32 %v1913, %v1562
        %v1916 = vadd.f32 %v1915, 0.0
        %1918 = vset.pattern.permute.xlu0 0
        %1919 = vperm.xlu0 %1918, %v1762
        %v1920 = vpop.permute.xlu0 %1919
        %v1922 = vmul.f32 %v1920, %v1562
        %v1923 = vadd.f32 %v1922, 0.0
        %1924 = vset.pattern.permute.xlu0 1
        %1925 = vperm.xlu0 %1924, %v1733
        %v1926 = vpop.permute.xlu0 %1925
        %v1928 = vmul.f32 %v1926, %v1562
        %1930 = vrot.lane.b32.xlu0 %v1928, 96
        %v1931 = vpop.permute.xlu0 %1930
        %v1933 = vadd.f32 %v1916, %v1931
        %1934 = vset.pattern.permute.xlu0 1
        %1935 = vperm.xlu0 %1934, %v1762
        %v1936 = vpop.permute.xlu0 %1935
        %v1938 = vmul.f32 %v1936, %v1562
        %1940 = vrot.lane.b32.xlu0 %v1938, 96
        %v1941 = vpop.permute.xlu0 %1940
        %v1943 = vadd.f32 %v1923, %v1941
        %1944 = vset.pattern.permute.xlu0 2
        %1945 = vperm.xlu0 %1944, %v1733
        %v1946 = vpop.permute.xlu0 %1945
        %v1948 = vmul.f32 %v1946, %v1562
        %1950 = vrot.lane.b32.xlu0 %v1948, 64
        %v1951 = vpop.permute.xlu0 %1950
        %v1953 = vadd.f32 %v1933, %v1951
        %1954 = vset.pattern.permute.xlu0 2
        %1955 = vperm.xlu0 %1954, %v1762
        %v1956 = vpop.permute.xlu0 %1955
        %v1958 = vmul.f32 %v1956, %v1562
        %1960 = vrot.lane.b32.xlu0 %v1958, 64
        %v1961 = vpop.permute.xlu0 %1960
        %v1963 = vadd.f32 %v1943, %v1961
        %1964 = vset.pattern.permute.xlu0 3
        %1965 = vperm.xlu0 %1964, %v1733
        %v1966 = vpop.permute.xlu0 %1965
        %v1968 = vmul.f32 %v1966, %v1562
        %1970 = vrot.lane.b32.xlu0 %v1968, 32
        %v1971 = vpop.permute.xlu0 %1970
        %v1973 = vadd.f32 %v1953, %v1971
        %1974 = vset.pattern.permute.xlu0 3
        %1975 = vperm.xlu0 %1974, %v1762
        %v1976 = vpop.permute.xlu0 %1975
        %v1978 = vmul.f32 %v1976, %v1562
        %1980 = vrot.lane.b32.xlu0 %v1978, 32
        %v1981 = vpop.permute.xlu0 %1980
        %v1983 = vadd.f32 %v1963, %v1981
        %1984 = vset.pattern.permute.xlu0 4
        %1985 = vperm.xlu0 %1984, %v1733
        %v1986 = vpop.permute.xlu0 %1985
        %v1988 = vmul.f32 %v1986, %v1582
        %v1989 = vadd.f32 %v1973, %v1988
        %1990 = vset.pattern.permute.xlu0 4
        %1991 = vperm.xlu0 %1990, %v1762
        %v1992 = vpop.permute.xlu0 %1991
        %v1994 = vmul.f32 %v1992, %v1582
        %v1995 = vadd.f32 %v1983, %v1994
        %1996 = vset.pattern.permute.xlu0 5
        %1997 = vperm.xlu0 %1996, %v1733
        %v1998 = vpop.permute.xlu0 %1997
        %v2000 = vmul.f32 %v1998, %v1582
        %2002 = vrot.lane.b32.xlu0 %v2000, 96
        %v2003 = vpop.permute.xlu0 %2002
        %v2005 = vadd.f32 %v1989, %v2003
        %2006 = vset.pattern.permute.xlu0 5
        %2007 = vperm.xlu0 %2006, %v1762
        %v2008 = vpop.permute.xlu0 %2007
        %v2010 = vmul.f32 %v2008, %v1582
        %2012 = vrot.lane.b32.xlu0 %v2010, 96
        %v2013 = vpop.permute.xlu0 %2012
        %v2015 = vadd.f32 %v1995, %v2013
        %2016 = vset.pattern.permute.xlu0 6
        %2017 = vperm.xlu0 %2016, %v1733
        %v2018 = vpop.permute.xlu0 %2017
        %v2020 = vmul.f32 %v2018, %v1582
        %2022 = vrot.lane.b32.xlu0 %v2020, 64
        %v2023 = vpop.permute.xlu0 %2022
        %v2025 = vadd.f32 %v2005, %v2023
        %2026 = vset.pattern.permute.xlu0 6
        %2027 = vperm.xlu0 %2026, %v1762
        %v2028 = vpop.permute.xlu0 %2027
        %v2030 = vmul.f32 %v2028, %v1582
        %2032 = vrot.lane.b32.xlu0 %v2030, 64
        %v2033 = vpop.permute.xlu0 %2032
        %v2035 = vadd.f32 %v2015, %v2033
        %2036 = vset.pattern.permute.xlu0 7
        %2037 = vperm.xlu0 %2036, %v1733
        %v2038 = vpop.permute.xlu0 %2037
        %v2040 = vmul.f32 %v2038, %v1582
        %2042 = vrot.lane.b32.xlu0 %v2040, 32
        %v2043 = vpop.permute.xlu0 %2042
        %v2045 = vadd.f32 %v2025, %v2043
        %2046 = vset.pattern.permute.xlu0 7
        %2047 = vperm.xlu0 %2046, %v1762
        %v2048 = vpop.permute.xlu0 %2047
        %v2050 = vmul.f32 %v2048, %v1582
        %2052 = vrot.lane.b32.xlu0 %v2050, 32
        %v2053 = vpop.permute.xlu0 %2052
        %v2055 = vadd.f32 %v2035, %v2053
        %2056 = vset.pattern.permute.xlu0 8
        %2057 = vperm.xlu0 %2056, %v1733
        %v2058 = vpop.permute.xlu0 %2057
        %v2060 = vmul.f32 %v2058, %v1602
        %v2061 = vadd.f32 %v2045, %v2060
        %2062 = vset.pattern.permute.xlu0 8
        %2063 = vperm.xlu0 %2062, %v1762
        %v2064 = vpop.permute.xlu0 %2063
        %v2066 = vmul.f32 %v2064, %v1602
        %v2067 = vadd.f32 %v2055, %v2066
        %2068 = vset.pattern.permute.xlu0 9
        %2069 = vperm.xlu0 %2068, %v1733
        %v2070 = vpop.permute.xlu0 %2069
        %v2072 = vmul.f32 %v2070, %v1602
        %2074 = vrot.lane.b32.xlu0 %v2072, 96
        %v2075 = vpop.permute.xlu0 %2074
        %v2077 = vadd.f32 %v2061, %v2075
        %2078 = vset.pattern.permute.xlu0 9
        %2079 = vperm.xlu0 %2078, %v1762
        %v2080 = vpop.permute.xlu0 %2079
        %v2082 = vmul.f32 %v2080, %v1602
        %2084 = vrot.lane.b32.xlu0 %v2082, 96
        %v2085 = vpop.permute.xlu0 %2084
        %v2087 = vadd.f32 %v2067, %v2085
        %2088 = vset.pattern.permute.xlu0 10
        %2089 = vperm.xlu0 %2088, %v1733
        %v2090 = vpop.permute.xlu0 %2089
        %v2092 = vmul.f32 %v2090, %v1602
        %2094 = vrot.lane.b32.xlu0 %v2092, 64
        %v2095 = vpop.permute.xlu0 %2094
        %v2097 = vadd.f32 %v2077, %v2095
        %2098 = vset.pattern.permute.xlu0 10
        %2099 = vperm.xlu0 %2098, %v1762
        %v2100 = vpop.permute.xlu0 %2099
        %v2102 = vmul.f32 %v2100, %v1602
        %2104 = vrot.lane.b32.xlu0 %v2102, 64
        %v2105 = vpop.permute.xlu0 %2104
        %v2107 = vadd.f32 %v2087, %v2105
        %2108 = vset.pattern.permute.xlu0 11
        %2109 = vperm.xlu0 %2108, %v1733
        %v2110 = vpop.permute.xlu0 %2109
        %v2112 = vmul.f32 %v2110, %v1602
        %2114 = vrot.lane.b32.xlu0 %v2112, 32
        %v2115 = vpop.permute.xlu0 %2114
        %v2117 = vadd.f32 %v2097, %v2115
        %2118 = vset.pattern.permute.xlu0 11
        %2119 = vperm.xlu0 %2118, %v1762
        %v2120 = vpop.permute.xlu0 %2119
        %v2122 = vmul.f32 %v2120, %v1602
        %2124 = vrot.lane.b32.xlu0 %v2122, 32
        %v2125 = vpop.permute.xlu0 %2124
        %v2127 = vadd.f32 %v2107, %v2125
        %2128 = vset.pattern.permute.xlu0 12
        %2129 = vperm.xlu0 %2128, %v1733
        %v2130 = vpop.permute.xlu0 %2129
        %v2132 = vmul.f32 %v2130, %v1622
        %v2133 = vadd.f32 %v2117, %v2132
        %2134 = vset.pattern.permute.xlu0 12
        %2135 = vperm.xlu0 %2134, %v1762
        %v2136 = vpop.permute.xlu0 %2135
        %v2138 = vmul.f32 %v2136, %v1622
        %v2139 = vadd.f32 %v2127, %v2138
        %2140 = vset.pattern.permute.xlu0 13
        %2141 = vperm.xlu0 %2140, %v1733
        %v2142 = vpop.permute.xlu0 %2141
        %v2144 = vmul.f32 %v2142, %v1622
        %2146 = vrot.lane.b32.xlu0 %v2144, 96
        %v2147 = vpop.permute.xlu0 %2146
        %v2149 = vadd.f32 %v2133, %v2147
        %2150 = vset.pattern.permute.xlu0 13
        %2151 = vperm.xlu0 %2150, %v1762
        %v2152 = vpop.permute.xlu0 %2151
        %v2154 = vmul.f32 %v2152, %v1622
        %2156 = vrot.lane.b32.xlu0 %v2154, 96
        %v2157 = vpop.permute.xlu0 %2156
        %v2159 = vadd.f32 %v2139, %v2157
        %2160 = vset.pattern.permute.xlu0 14
        %2161 = vperm.xlu0 %2160, %v1733
        %v2162 = vpop.permute.xlu0 %2161
        %v2164 = vmul.f32 %v2162, %v1622
        %2166 = vrot.lane.b32.xlu0 %v2164, 64
        %v2167 = vpop.permute.xlu0 %2166
        %v2169 = vadd.f32 %v2149, %v2167
        %2170 = vset.pattern.permute.xlu0 14
        %2171 = vperm.xlu0 %2170, %v1762
        %v2172 = vpop.permute.xlu0 %2171
        %v2174 = vmul.f32 %v2172, %v1622
        %2176 = vrot.lane.b32.xlu0 %v2174, 64
        %v2177 = vpop.permute.xlu0 %2176
        %v2179 = vadd.f32 %v2159, %v2177
        %2180 = vset.pattern.permute.xlu0 15
        %2181 = vperm.xlu0 %2180, %v1733
        %v2182 = vpop.permute.xlu0 %2181
        %v2184 = vmul.f32 %v2182, %v1622
        %2186 = vrot.lane.b32.xlu0 %v2184, 32
        %v2187 = vpop.permute.xlu0 %2186
        %v2189 = vadd.f32 %v2169, %v2187
        %2190 = vset.pattern.permute.xlu0 15
        %2191 = vperm.xlu0 %2190, %v1762
        %v2192 = vpop.permute.xlu0 %2191
        %v2194 = vmul.f32 %v2192, %v1622
        %2196 = vrot.lane.b32.xlu0 %v2194, 32
        %v2197 = vpop.permute.xlu0 %2196
        %v2199 = vadd.f32 %v2179, %v2197
        %2200 = vset.pattern.permute.xlu0 16
        %2201 = vperm.xlu0 %2200, %v1733
        %v2202 = vpop.permute.xlu0 %2201
        %v2204 = vmul.f32 %v2202, %v1642
        %v2205 = vadd.f32 %v2189, %v2204
        %2206 = vset.pattern.permute.xlu0 16
        %2207 = vperm.xlu0 %2206, %v1762
        %v2208 = vpop.permute.xlu0 %2207
        %v2210 = vmul.f32 %v2208, %v1642
        %v2211 = vadd.f32 %v2199, %v2210
        %2212 = vset.pattern.permute.xlu0 17
        %2213 = vperm.xlu0 %2212, %v1733
        %v2214 = vpop.permute.xlu0 %2213
        %v2216 = vmul.f32 %v2214, %v1642
        %2218 = vrot.lane.b32.xlu0 %v2216, 96
        %v2219 = vpop.permute.xlu0 %2218
        %v2221 = vadd.f32 %v2205, %v2219
        %2222 = vset.pattern.permute.xlu0 17
        %2223 = vperm.xlu0 %2222, %v1762
        %v2224 = vpop.permute.xlu0 %2223
        %v2226 = vmul.f32 %v2224, %v1642
        %2228 = vrot.lane.b32.xlu0 %v2226, 96
        %v2229 = vpop.permute.xlu0 %2228
        %v2231 = vadd.f32 %v2211, %v2229
        %2232 = vset.pattern.permute.xlu0 18
        %2233 = vperm.xlu0 %2232, %v1733
        %v2234 = vpop.permute.xlu0 %2233
        %v2236 = vmul.f32 %v2234, %v1642
        %2238 = vrot.lane.b32.xlu0 %v2236, 64
        %v2239 = vpop.permute.xlu0 %2238
        %v2241 = vadd.f32 %v2221, %v2239
        %2242 = vset.pattern.permute.xlu0 18
        %2243 = vperm.xlu0 %2242, %v1762
        %v2244 = vpop.permute.xlu0 %2243
        %v2246 = vmul.f32 %v2244, %v1642
        %2248 = vrot.lane.b32.xlu0 %v2246, 64
        %v2249 = vpop.permute.xlu0 %2248
        %v2251 = vadd.f32 %v2231, %v2249
        %2252 = vset.pattern.permute.xlu0 19
        %2253 = vperm.xlu0 %2252, %v1733
        %v2254 = vpop.permute.xlu0 %2253
        %v2256 = vmul.f32 %v2254, %v1642
        %2258 = vrot.lane.b32.xlu0 %v2256, 32
        %v2259 = vpop.permute.xlu0 %2258
        %v2261 = vadd.f32 %v2241, %v2259
        %2262 = vset.pattern.permute.xlu0 19
        %2263 = vperm.xlu0 %2262, %v1762
        %v2264 = vpop.permute.xlu0 %2263
        %v2266 = vmul.f32 %v2264, %v1642
        %2268 = vrot.lane.b32.xlu0 %v2266, 32
        %v2269 = vpop.permute.xlu0 %2268
        %v2271 = vadd.f32 %v2251, %v2269
        %2272 = vset.pattern.permute.xlu0 20
        %2273 = vperm.xlu0 %2272, %v1733
        %v2274 = vpop.permute.xlu0 %2273
        %v2276 = vmul.f32 %v2274, %v1662
        %v2277 = vadd.f32 %v2261, %v2276
        %2278 = vset.pattern.permute.xlu0 20
        %2279 = vperm.xlu0 %2278, %v1762
        %v2280 = vpop.permute.xlu0 %2279
        %v2282 = vmul.f32 %v2280, %v1662
        %v2283 = vadd.f32 %v2271, %v2282
        %2284 = vset.pattern.permute.xlu0 21
        %2285 = vperm.xlu0 %2284, %v1733
        %v2286 = vpop.permute.xlu0 %2285
        %v2288 = vmul.f32 %v2286, %v1662
        %2290 = vrot.lane.b32.xlu0 %v2288, 96
        %v2291 = vpop.permute.xlu0 %2290
        %v2293 = vadd.f32 %v2277, %v2291
        %2294 = vset.pattern.permute.xlu0 21
        %2295 = vperm.xlu0 %2294, %v1762
        %v2296 = vpop.permute.xlu0 %2295
        %v2298 = vmul.f32 %v2296, %v1662
        %2300 = vrot.lane.b32.xlu0 %v2298, 96
        %v2301 = vpop.permute.xlu0 %2300
        %v2303 = vadd.f32 %v2283, %v2301
        %2304 = vset.pattern.permute.xlu0 22
        %2305 = vperm.xlu0 %2304, %v1733
        %v2306 = vpop.permute.xlu0 %2305
        %v2308 = vmul.f32 %v2306, %v1662
        %2310 = vrot.lane.b32.xlu0 %v2308, 64
        %v2311 = vpop.permute.xlu0 %2310
        %v2313 = vadd.f32 %v2293, %v2311
        %2314 = vset.pattern.permute.xlu0 22
        %2315 = vperm.xlu0 %2314, %v1762
        %v2316 = vpop.permute.xlu0 %2315
        %v2318 = vmul.f32 %v2316, %v1662
        %2320 = vrot.lane.b32.xlu0 %v2318, 64
        %v2321 = vpop.permute.xlu0 %2320
        %v2323 = vadd.f32 %v2303, %v2321
        %2324 = vset.pattern.permute.xlu0 23
        %2325 = vperm.xlu0 %2324, %v1733
        %v2326 = vpop.permute.xlu0 %2325
        %v2328 = vmul.f32 %v2326, %v1662
        %2330 = vrot.lane.b32.xlu0 %v2328, 32
        %v2331 = vpop.permute.xlu0 %2330
        %v2333 = vadd.f32 %v2313, %v2331
        %2334 = vset.pattern.permute.xlu0 23
        %2335 = vperm.xlu0 %2334, %v1762
        %v2336 = vpop.permute.xlu0 %2335
        %v2338 = vmul.f32 %v2336, %v1662
        %2340 = vrot.lane.b32.xlu0 %v2338, 32
        %v2341 = vpop.permute.xlu0 %2340
        %v2343 = vadd.f32 %v2323, %v2341
        %2344 = vset.pattern.permute.xlu0 24
        %2345 = vperm.xlu0 %2344, %v1733
        %v2346 = vpop.permute.xlu0 %2345
        %v2348 = vmul.f32 %v2346, %v1682
        %v2349 = vadd.f32 %v2333, %v2348
        %2350 = vset.pattern.permute.xlu0 24
        %2351 = vperm.xlu0 %2350, %v1762
        %v2352 = vpop.permute.xlu0 %2351
        %v2354 = vmul.f32 %v2352, %v1682
        %v2355 = vadd.f32 %v2343, %v2354
        %2356 = vset.pattern.permute.xlu0 25
        %2357 = vperm.xlu0 %2356, %v1733
        %v2358 = vpop.permute.xlu0 %2357
        %v2360 = vmul.f32 %v2358, %v1682
        %2362 = vrot.lane.b32.xlu0 %v2360, 96
        %v2363 = vpop.permute.xlu0 %2362
        %v2365 = vadd.f32 %v2349, %v2363
        %2366 = vset.pattern.permute.xlu0 25
        %2367 = vperm.xlu0 %2366, %v1762
        %v2368 = vpop.permute.xlu0 %2367
        %v2370 = vmul.f32 %v2368, %v1682
        %2372 = vrot.lane.b32.xlu0 %v2370, 96
        %v2373 = vpop.permute.xlu0 %2372
        %v2375 = vadd.f32 %v2355, %v2373
        %2376 = vset.pattern.permute.xlu0 26
        %2377 = vperm.xlu0 %2376, %v1733
        %v2378 = vpop.permute.xlu0 %2377
        %v2380 = vmul.f32 %v2378, %v1682
        %2382 = vrot.lane.b32.xlu0 %v2380, 64
        %v2383 = vpop.permute.xlu0 %2382
        %v2385 = vadd.f32 %v2365, %v2383
        %2386 = vset.pattern.permute.xlu0 26
        %2387 = vperm.xlu0 %2386, %v1762
        %v2388 = vpop.permute.xlu0 %2387
        %v2390 = vmul.f32 %v2388, %v1682
        %2392 = vrot.lane.b32.xlu0 %v2390, 64
        %v2393 = vpop.permute.xlu0 %2392
        %v2395 = vadd.f32 %v2375, %v2393
        %2396 = vset.pattern.permute.xlu0 27
        %2397 = vperm.xlu0 %2396, %v1733
        %v2398 = vpop.permute.xlu0 %2397
        %v2400 = vmul.f32 %v2398, %v1682
        %2402 = vrot.lane.b32.xlu0 %v2400, 32
        %v2403 = vpop.permute.xlu0 %2402
        %v2405 = vadd.f32 %v2385, %v2403
        %2406 = vset.pattern.permute.xlu0 27
        %2407 = vperm.xlu0 %2406, %v1762
        %v2408 = vpop.permute.xlu0 %2407
        %v2410 = vmul.f32 %v2408, %v1682
        %2412 = vrot.lane.b32.xlu0 %v2410, 32
        %v2413 = vpop.permute.xlu0 %2412
        %v2415 = vadd.f32 %v2395, %v2413
        %2416 = vset.pattern.permute.xlu0 28
        %2417 = vperm.xlu0 %2416, %v1733
        %v2418 = vpop.permute.xlu0 %2417
        %v2420 = vmul.f32 %v2418, %v1702
        %v2421 = vadd.f32 %v2405, %v2420
        %2422 = vset.pattern.permute.xlu0 28
        %2423 = vperm.xlu0 %2422, %v1762
        %v2424 = vpop.permute.xlu0 %2423
        %v2426 = vmul.f32 %v2424, %v1702
        %v2427 = vadd.f32 %v2415, %v2426
        %2428 = vset.pattern.permute.xlu0 29
        %2429 = vperm.xlu0 %2428, %v1733
        %v2430 = vpop.permute.xlu0 %2429
        %v2432 = vmul.f32 %v2430, %v1702
        %2434 = vrot.lane.b32.xlu0 %v2432, 96
        %v2435 = vpop.permute.xlu0 %2434
        %v2437 = vadd.f32 %v2421, %v2435
        %2438 = vset.pattern.permute.xlu0 29
        %2439 = vperm.xlu0 %2438, %v1762
        %v2440 = vpop.permute.xlu0 %2439
        %v2442 = vmul.f32 %v2440, %v1702
        %2444 = vrot.lane.b32.xlu0 %v2442, 96
        %v2445 = vpop.permute.xlu0 %2444
        %v2447 = vadd.f32 %v2427, %v2445
        %2448 = vset.pattern.permute.xlu0 30
        %2449 = vperm.xlu0 %2448, %v1733
        %v2450 = vpop.permute.xlu0 %2449
        %v2452 = vmul.f32 %v2450, %v1702
        %2454 = vrot.lane.b32.xlu0 %v2452, 64
        %v2455 = vpop.permute.xlu0 %2454
        %v2457 = vadd.f32 %v2437, %v2455
        %2458 = vset.pattern.permute.xlu0 30
        %2459 = vperm.xlu0 %2458, %v1762
        %v2460 = vpop.permute.xlu0 %2459
        %v2462 = vmul.f32 %v2460, %v1702
        %2464 = vrot.lane.b32.xlu0 %v2462, 64
        %v2465 = vpop.permute.xlu0 %2464
        %v2467 = vadd.f32 %v2447, %v2465
        %2468 = vset.pattern.permute.xlu0 31
        %2469 = vperm.xlu0 %2468, %v1733
        %v2470 = vpop.permute.xlu0 %2469
        %v2472 = vmul.f32 %v2470, %v1702
        %2474 = vrot.lane.b32.xlu0 %v2472, 32
        %v2475 = vpop.permute.xlu0 %2474
        %v2477 = vadd.f32 %v2457, %v2475
        %2478 = vset.pattern.permute.xlu0 31
        %2479 = vperm.xlu0 %2478, %v1762
        %v2480 = vpop.permute.xlu0 %2479
        %v2482 = vmul.f32 %v2480, %v1702
        %2484 = vrot.lane.b32.xlu0 %v2482, 32
        %v2485 = vpop.permute.xlu0 %2484
        %v2487 = vadd.f32 %v2467, %v2485
        %vm2488 = vcmp.eq.f32.partialorder %v1296, -999.0
        %v2489 = vsel %vm2488, 1, 0
        %2490 = vset.pattern.permute.xlu0 0
        %2491 = vperm.xlu0 %2490, %v2489
        %v2492 = vpop.permute.xlu0 %2491
        %vm2493 = vcmp.eq.s32.totalorder %v2492, 1
        %v2494 = vsel %vm2493, 0.0, %v2477
        %v2495 = vmul.f32 %v1869, 0.17677669
        %v2496 = vmul.f32 %v2494, %v2495
        %v2497 = vsel %vm2493, 0.0, %v2487
        %v2498 = vmul.f32 %v1909, 0.17677669
        %v2499 = vmul.f32 %v2497, %v2498
        %v2500 = vperm.slane %v1298, 0
        %vm2501 = vcmp.eq.s32.totalorder %v1765, %v2500
        %v2502 = vsel %vm2501, 1, 0
        %v2503 = vcvt.s32.f32 %v2502
        %v2504 = vperm.slane %v1299, 0
        %vm2505 = vcmp.eq.s32.totalorder %v1765, %v2504
        %v2506 = vsel %vm2505, 1, 0
        %v2507 = vcvt.s32.f32 %v2506
        %vm2508 = vcmask 48128
        %v2510 = vsel %vm2508, %v2507, 0
        %vm2512 = vcmask 1045504
        %v2514 = vsel %vm2512, %v2499, 0
        %2516 = vmatpush.msra.mxu0 0.0
        %2517 = vmatpush.msra.mxu0 0.0
        %2518 = vmatpush.msra.mxu0 0.0
        %2519 = vmatpush.msra.mxu0 0.0
        %2520 = vmatpush.msra.mxu0 0.0
        %2521 = vmatpush.msra.mxu0 0.0
        %2522 = vmatpush.msra.mxu0 0.0
        %2523 = vmatpush.msra.mxu0 0.0
        %2524 = vmatpush.msra.mxu0 0.0
        %2525 = vmatpush.msra.mxu0 0.0
        %2526 = vmatpush.msra.mxu0 0.0
        %2527 = vmatpush.msra.mxu0 0.0
        %2528 = vmatpush.msra.mxu0 0.0
        %2529 = vmatpush.msra.mxu0 0.0
        %2530 = vmatpush.msra.mxu0 0.0
        %2531 = vmatpush.msra.mxu0 %v2514
        %2532 = vmatmul.f32.gmra.mxu0 %v2510
        %v2533 = vpop.f32.mrf.mxu0
        %v2534 = vadd.f32 0.0, %v2533
        %2535 = vdwg.mxu0
        %v2537 = vsel %vm2508, %v2503, 0
        %v2540 = vsel %vm2512, %v2496, 0
        %2542 = vmatpush.msra.mxu0 0.0
        %2543 = vmatpush.msra.mxu0 0.0
        %2544 = vmatpush.msra.mxu0 0.0
        %2545 = vmatpush.msra.mxu0 0.0
        %2546 = vmatpush.msra.mxu0 0.0
        %2547 = vmatpush.msra.mxu0 0.0
        %2548 = vmatpush.msra.mxu0 0.0
        %2549 = vmatpush.msra.mxu0 0.0
        %2550 = vmatpush.msra.mxu0 0.0
        %2551 = vmatpush.msra.mxu0 0.0
        %2552 = vmatpush.msra.mxu0 0.0
        %2553 = vmatpush.msra.mxu0 0.0
        %2554 = vmatpush.msra.mxu0 0.0
        %2555 = vmatpush.msra.mxu0 0.0
        %2556 = vmatpush.msra.mxu0 0.0
        %2557 = vmatpush.msra.mxu0 %v2540
        %2558 = vmatmul.f32.gmra.mxu0 %v2537
        %v2559 = vpop.f32.mrf.mxu0
        %v2560 = vadd.f32 %v2534, %v2559
        %2561 = vdwg.mxu0
        %2562 = vst.msk [vmem:[%s1133] sm:$0xff] %vm1180, %v2560
        %s2563 = sand.u32 %s638, 1
        %s2564 = scalar_lea.sflag [#allocation4], %s2563
        %s2565 = sand.u32 %s638, 1
        %s2566 = smul.addr %s2565, 8
        %s2567 = scalar_lea.vmem [#allocation31], %s2566
        // Predicated region
        $region197: #{tpu_custom_call.1} parent=123 // pred_check
          %p2568 = pneg %p648
        $region198: #{tpu_custom_call.1} parent=123 // pred_check_branch
          %2570 = sbr.rel (%p2568) target = $region200
        $region199: #{tpu_custom_call.1} parent=123 // pred_region
          %2572 = vsyncadd %s2564, 0
          %s2573 = smul.addr %s54, 8
          %s2574 = scalar_lea.hbm %s26, %s2573
          %s2576 = sshll.u32 %s2567, 4
          %s2577 = int_to_ptr.vmem [resolvable:$true] %s2576
          %s2578 = sshll.u32 %s2574, 4
          %s2579 = int_to_ptr.hbm [resolvable:$true] %s2578
          %2581 = dma.vmem_to_hbm [thread:$0]  %s2577, 128, %s2579, %s2564
        $region200: #{tpu_custom_call.1} parent=123 // pred_fallthru
          _
      $region124: #{tpu_custom_call.1} parent=5 // pred_fallthru
        _
      %p2582 = scmp.le.s32.totalorder 2, %s49
      // Predicated region
      $region201: #{tpu_custom_call.1} parent=5 // pred_check
        %p2583 = pneg %p2582
      $region202: #{tpu_custom_call.1} parent=5 // pred_check_branch
        %2585 = sbr.rel (%p2583) target = $region204
      $region203: #{tpu_custom_call.1} parent=5 // pred_region
        %s2586 = ssub.s32 %s49, 2
        // Predicated region
        $region205: #{tpu_custom_call.1} parent=203 // pred_check
          %p2587 = pneg %p654
        $region206: #{tpu_custom_call.1} parent=203 // pred_check_branch
          %2589 = sbr.rel (%p2587) target = $region208
        $region207: #{tpu_custom_call.1} parent=203 // pred_region
          %s2590 = sand.u32 %s639, 1
          %s2591 = scalar_lea.sflag [#allocation4], %s2590
          %s2592 = sand.u32 %s639, 1
          %s2593 = smul.addr %s2592, 8
          %s2594 = scalar_lea.vmem [#allocation31], %s2593
          %2596 = dma.done %s2591, 128
        $region208: #{tpu_custom_call.1} parent=203 // pred_fallthru
          _
      $region204: #{tpu_custom_call.1} parent=5 // pred_fallthru
        _
    $region6: #{tpu_custom_call.1} parent=1 // loop_footer
      %s53 = sadd.s32 1, %s49
    $region7: #{tpu_custom_call.1} parent=1 // loop_footer_branch
      %48 = sbr.rel target = $region3
    $region8: #{tpu_custom_call.1} parent=1 // loop_exit
      _
    %2597 = vsyncpa [#allocation3], 1
    %s2598 = scalar_lea.sflag [#allocation3], 1
    %2599 = vsyncpa %s2598, 1
    %2600 = vsyncpa [#allocation6], 1
    %s2601 = scalar_lea.sflag [#allocation6], 1
    %2602 = vsyncpa %s2601, 1
    %2603 = vsyncpa [#allocation9], 1
    %2604 = vsyncpa [#allocation12], 1
    %2605 = vsyncpa [#allocation15], 1
    %2606 = vsyncpa [#allocation18], 1
    %2607 = vsyncpa [#allocation21], 1
    %2608 = vsyncpa [#allocation24], 1
    %2609 = vsyncpa [#allocation27], 1
    %2610 = vsyncpa [#allocation30], 1
    %2611 = vsyncpa [#allocation4], 1
    %s2612 = scalar_lea.sflag [#allocation4], 1
    %2613 = vsyncpa %s2612, 1

</llo_original>
